<compile_context>
chip_gen: v6e
topology: v6e:2x2x1
jax: 0.10.0
libtpu: 0.0.40
codegen_flags: <defaults>
</compile_context>

<pallas_src>
import functools

import jax
import jax.numpy as jnp
from jax.experimental import pallas as pl
from jax.experimental.pallas import tpu as pltpu

BN_EPS = 1e-5  # nn.BatchNorm2d default eps


# ------------------------------ Pallas kernel --------------------------------

def _fused_block_kernel(x_ref, w1_ref, w2_ref, p1_ref, p2_ref, o_ref, mid_ref,
                        *, pad):
    """Conv3x3 + bias + ReLU + BN, twice, for one batch element.

    x_ref  : (1, Hp, Wp, Cin)     spatially pre-padded input (Hp = H + 2*pad)
    w1_ref : (9, Cin, Cmid)       conv1 weights, tap-major (kh*3 + kw)
    w2_ref : (9, Cmid, Cout)      conv2 weights
    p1_ref : (3, Cmid)            rows = [conv bias, bn scale, bn shift]
    p2_ref : (3, Cout)
    o_ref  : (1, Ho2, Wo2, Cout)  output block
    mid_ref: (Ho1+2*pad, Wo1+2*pad, Cmid) VMEM scratch for the intermediate
    """
    _, hp, wp, cin = x_ref.shape
    _, ho2, wo2, cout = o_ref.shape
    cmid = w1_ref.shape[2]
    ho1, wo1 = hp - 2, wp - 2                   # conv1 output spatial extent

    # ---- conv1: 9 shifted MXU matmuls, f32 accumulation ----
    acc1 = jnp.zeros((ho1 * wo1, cmid), jnp.float32)
    for kh in range(3):
        for kw in range(3):
            patch = x_ref[0, kh:kh + ho1, kw:kw + wo1, :].reshape(ho1 * wo1, cin)
            acc1 = acc1 + jnp.dot(patch, w1_ref[kh * 3 + kw],
                                  preferred_element_type=jnp.float32)
    y = acc1 + p1_ref[0:1, :]                   # conv bias
    y = jnp.maximum(y, 0.0)                     # ReLU (single VALU op)
    y = y * p1_ref[1:2, :] + p1_ref[2:3, :]     # folded inference-mode BN

    # Intermediate stays in VMEM; re-pad it for conv2 inside the scratch.
    if pad:
        mid_ref[...] = jnp.zeros_like(mid_ref)
    mid_ref[pad:pad + ho1, pad:pad + wo1, :] = y.reshape(ho1, wo1, cmid)

    # ---- conv2: 9 shifted MXU matmuls, f32 accumulation ----
    acc2 = jnp.zeros((ho2 * wo2, cout), jnp.float32)
    for kh in range(3):
        for kw in range(3):
            patch = mid_ref[kh:kh + ho2, kw:kw + wo2, :].reshape(ho2 * wo2, cmid)
            acc2 = acc2 + jnp.dot(patch, w2_ref[kh * 3 + kw],
                                  preferred_element_type=jnp.float32)
    z = acc2 + p2_ref[0:1, :]
    z = jnp.maximum(z, 0.0)
    z = z * p2_ref[1:2, :] + p2_ref[2:3, :]
    o_ref[0] = z.reshape(ho2, wo2, cout).astype(o_ref.dtype)


# ------------------------------ wrapper ---------------------------------------

def _vmem_limit_bytes():
    """Per-generation scoped-VMEM budget (v5e/v6e: 128 MiB, v7x: 64 MiB)."""
    try:
        cap = getattr(pltpu.get_tpu_info(), "vmem_capacity_bytes", None)
    except Exception:
        cap = None
    if not cap:
        cap = 64 * 1024 * 1024            # conservative fallback: v7x physical
    return min(int(cap * 0.7), 112 * 1024 * 1024)


def fused_conv_block(x_padded, w1_taps, w2_taps, p1, p2, *, pad, out_hw):
    """One pallas_call for Conv+ReLU+BN -> Conv+ReLU+BN on NHWC input."""
    n, hp, wp, cin = x_padded.shape
    cmid = w1_taps.shape[2]
    cout = w2_taps.shape[2]
    ho2, wo2 = out_hw
    ho1, wo1 = hp - 2, wp - 2

    flops = 2 * n * 9 * (ho1 * wo1 * cin * cmid + ho2 * wo2 * cmid * cout)
    bytes_accessed = 4 * (x_padded.size + w1_taps.size + w2_taps.size
                          + p1.size + p2.size + n * ho2 * wo2 * cout)

    return pl.pallas_call(
        functools.partial(_fused_block_kernel, pad=pad),
        out_shape=jax.ShapeDtypeStruct((n, ho2, wo2, cout), jnp.float32),
        grid=(n,),
        in_specs=[
            # Streaming operand: one image per grid step (auto double-buffered).
            pl.BlockSpec((1, hp, wp, cin), lambda i: (i, 0, 0, 0)),
            # Constant-index-map operands (resident across the grid).
            pl.BlockSpec((9, cin, cmid), lambda i: (0, 0, 0)),
            pl.BlockSpec((9, cmid, cout), lambda i: (0, 0, 0)),
            pl.BlockSpec((3, cmid), lambda i: (0, 0)),
            pl.BlockSpec((3, cout), lambda i: (0, 0)),
        ],
        out_specs=pl.BlockSpec((1, ho2, wo2, cout), lambda i: (i, 0, 0, 0)),
        scratch_shapes=[
            pltpu.VMEM((ho1 + 2 * pad, wo1 + 2 * pad, cmid), jnp.float32)],
        compiler_params=pltpu.CompilerParams(
            dimension_semantics=("parallel",),          # megacore on v7x
            vmem_limit_bytes=_vmem_limit_bytes()),
        cost_estimate=pl.CostEstimate(flops=flops, transcendentals=0,
                                      bytes_accessed=bytes_accessed),
    )(x_padded, w1_taps, w2_taps, p1, p2)


# ------------------------------- JAX glue -------------------------------------

def unet_conv_block(x_nchw, params, *, padding, batch_norm):
    """Forward of UNetConvBlock. x: (N, Cin, H, W) f32 -> (N, Cout, Ho, Wo)."""
    assert len(params["layers"]) == 2
    pad = int(padding)
    x = jnp.transpose(x_nchw, (0, 2, 3, 1))             # NCHW -> NHWC (once)
    if pad:
        x = jnp.pad(x, ((0, 0), (pad, pad), (pad, pad), (0, 0)))

    taps, packed = [], []
    for (w, b, gamma, beta, rmean, rvar) in params["layers"]:
        cin_l, cout_l = w.shape[2], w.shape[3]
        if batch_norm:
            # Inference-mode BN folded to a per-channel affine applied AFTER
            # ReLU (Conv -> ReLU -> BN, matching the reference block order).
            scale = gamma / jnp.sqrt(rvar + BN_EPS)
            shift = beta - rmean * scale
        else:
            scale = jnp.ones((cout_l,), jnp.float32)
            shift = jnp.zeros((cout_l,), jnp.float32)
        taps.append(w.reshape(9, cin_l, cout_l))          # (kh,kw) -> tap index
        packed.append(jnp.stack([b, scale, shift], axis=0))   # (3, Cout)

    _, hp, wp, _ = x.shape
    ho2 = hp - 2 + 2 * pad - 2
    wo2 = wp - 2 + 2 * pad - 2
    out = fused_conv_block(x, taps[0], taps[1], packed[0], packed[1],
                           pad=pad, out_hw=(ho2, wo2))
    return jnp.transpose(out, (0, 3, 1, 2))               # NHWC -> NCHW (once)


# -------------------------- reference (pure JAX) ------------------------------

def reference_forward(x_nchw, params, *, padding, batch_norm):
    p = int(padding)
    x = x_nchw
    for (w, b, gamma, beta, rmean, rvar) in params["layers"]:
        y = jax.lax.conv_general_dilated(
            x, w, window_strides=(1, 1), padding=[(p, p), (p, p)],
            dimension_numbers=("NCHW", "HWIO", "NCHW"),
            precision=jax.lax.Precision.HIGHEST)
        y = y + b.reshape(1, -1, 1, 1)
        y = jnp.maximum(y, 0.0)
        if batch_norm:
            scale = gamma / jnp.sqrt(rvar + BN_EPS)
            shift = beta - rmean * scale
            y = y * scale.reshape(1, -1, 1, 1) + shift.reshape(1, -1, 1, 1)
        x = y
    return x


# --------------------------------- init ---------------------------------------

def init_params(in_size, out_size, key):
    layers = []
    sizes = [(in_size, out_size), (out_size, out_size)]
    keys = jax.random.split(key, 12)
    ki = 0
    for cin, cout in sizes:
        w = jax.random.normal(keys[ki], (3, 3, cin, cout), jnp.float32) * 0.05
        b = jax.random.normal(keys[ki + 1], (cout,), jnp.float32) * 0.05
        gamma = 1.0 + 0.1 * jax.random.normal(keys[ki + 2], (cout,), jnp.float32)
        beta = 0.1 * jax.random.normal(keys[ki + 3], (cout,), jnp.float32)
        rmean = 0.1 * jax.random.normal(keys[ki + 4], (cout,), jnp.float32)
        rvar = 1.0 + 0.1 * jnp.abs(
            jax.random.normal(keys[ki + 5], (cout,), jnp.float32))
        ki += 6
        layers.append((w, b, gamma, beta, rmean, rvar))
    return {"layers": layers}


# --------------------------------- main ----------------------------------------

if __name__ == "__main__":
    key = jax.random.PRNGKey(0)
    kx, kparam = jax.random.split(key, 2)

    batch, in_size, out_size, spatial = 2, 4, 32, 16
    padding, batch_norm = True, True

    x = jax.random.normal(kx, (batch, in_size, spatial, spatial), jnp.float32)
    params = init_params(in_size, out_size, kparam)

    fwd = jax.jit(functools.partial(
        unet_conv_block, params=params, padding=padding, batch_norm=batch_norm))
    out = fwd(x)
    jax.block_until_ready(out)

    assert out.shape == (batch, out_size, spatial, spatial), out.shape
    assert out.dtype == jnp.float32

    ref = reference_forward(x, params, padding=padding, batch_norm=batch_norm)
    jax.block_until_ready(ref)
    # Only the MXU inputs see bf16 (default matmul precision); accumulation,
    # the in-VMEM intermediate and the epilogue all stay f32.
    assert bool(jnp.allclose(out, ref, rtol=2e-2, atol=2e-2)), (
        float(jnp.max(jnp.abs(out - ref))))

    print("KERNEL_OK")
</pallas_src>

<mosaic_0001>
module attributes {stable_mosaic.version = 11 : i64} {
  func.func @_fused_block_kernel(%arg0: i32, %arg1: memref<1x18x18x4xf32, #tpu.memory_space<vmem>>, %arg2: memref<9x4x32xf32, #tpu.memory_space<vmem>>, %arg3: memref<9x32x32xf32, #tpu.memory_space<vmem>>, %arg4: memref<3x32xf32, #tpu.memory_space<vmem>>, %arg5: memref<3x32xf32, #tpu.memory_space<vmem>>, %arg6: memref<1x16x16x32xf32, #tpu.memory_space<vmem>>, %arg7: memref<18x18x32xf32, #tpu.memory_space<vmem>>) attributes {dimension_semantics = [#tpu.dimension_semantics<parallel>], iteration_bounds = array<i64: 2>, scalar_prefetch = 0 : i64, scratch_operands = 1 : i64, tpu.core_type = #tpu.core_type<tc>, window_params = [{transform_indices = @transform_0, window_bounds = array<i64: 1, 18, 18, 4>}, {pipeline_mode = #tpu.pipeline_mode<synchronous>, transform_indices = @transform_1, window_bounds = array<i64: 9, 4, 32>}, {pipeline_mode = #tpu.pipeline_mode<synchronous>, transform_indices = @transform_2, window_bounds = array<i64: 9, 32, 32>}, {pipeline_mode = #tpu.pipeline_mode<synchronous>, transform_indices = @transform_3, window_bounds = array<i64: 3, 32>}, {pipeline_mode = #tpu.pipeline_mode<synchronous>, transform_indices = @transform_4, window_bounds = array<i64: 3, 32>}, {transform_indices = @transform_5, window_bounds = array<i64: 1, 16, 16, 32>}]} {
    %cst = arith.constant 0.000000e+00 : f32
    %0 = vector.broadcast %cst : f32 to vector<256x32xf32>
    %c0 = arith.constant 0 : index
    %c0_0 = arith.constant 0 : index
    %c0_1 = arith.constant 0 : index
    %c0_2 = arith.constant 0 : index
    %1 = vector.load %arg1[%c0, %c0_0, %c0_1, %c0_2] : memref<1x18x18x4xf32, #tpu.memory_space<vmem>>, vector<1x16x16x4xf32>
    %2 = vector.shape_cast %1 : vector<1x16x16x4xf32> to vector<16x16x4xf32>
    %3 = vector.shape_cast %2 : vector<16x16x4xf32> to vector<256x4xf32>
    %c0_3 = arith.constant 0 : index
    %c0_4 = arith.constant 0 : index
    %c0_5 = arith.constant 0 : index
    %4 = vector.load %arg2[%c0_3, %c0_4, %c0_5] : memref<9x4x32xf32, #tpu.memory_space<vmem>>, vector<1x4x32xf32>
    %5 = vector.shape_cast %4 : vector<1x4x32xf32> to vector<4x32xf32>
    %cst_6 = arith.constant dense<0.000000e+00> : vector<256x32xf32>
    %6 = tpu.matmul %3, %5, %cst_6 {dimension_numbers = #tpu.dot_dimension_numbers<[1], [0], [0], [1], [0, 0, 1, 1], [], []>} : vector<256x4xf32>, vector<4x32xf32>, vector<256x32xf32> -> vector<256x32xf32>
    %7 = arith.addf %0, %6 : vector<256x32xf32>
    %c0_7 = arith.constant 0 : index
    %c0_8 = arith.constant 0 : index
    %c1 = arith.constant 1 : index
    %c0_9 = arith.constant 0 : index
    %8 = vector.load %arg1[%c0_7, %c0_8, %c1, %c0_9] : memref<1x18x18x4xf32, #tpu.memory_space<vmem>>, vector<1x16x16x4xf32>
    %9 = vector.shape_cast %8 : vector<1x16x16x4xf32> to vector<16x16x4xf32>
    %10 = vector.shape_cast %9 : vector<16x16x4xf32> to vector<256x4xf32>
    %c1_10 = arith.constant 1 : index
    %c0_11 = arith.constant 0 : index
    %c0_12 = arith.constant 0 : index
    %11 = vector.load %arg2[%c1_10, %c0_11, %c0_12] : memref<9x4x32xf32, #tpu.memory_space<vmem>>, vector<1x4x32xf32>
    %12 = vector.shape_cast %11 : vector<1x4x32xf32> to vector<4x32xf32>
    %cst_13 = arith.constant dense<0.000000e+00> : vector<256x32xf32>
    %13 = tpu.matmul %10, %12, %cst_13 {dimension_numbers = #tpu.dot_dimension_numbers<[1], [0], [0], [1], [0, 0, 1, 1], [], []>} : vector<256x4xf32>, vector<4x32xf32>, vector<256x32xf32> -> vector<256x32xf32>
    %14 = arith.addf %7, %13 : vector<256x32xf32>
    %c0_14 = arith.constant 0 : index
    %c0_15 = arith.constant 0 : index
    %c2 = arith.constant 2 : index
    %c0_16 = arith.constant 0 : index
    %15 = vector.load %arg1[%c0_14, %c0_15, %c2, %c0_16] : memref<1x18x18x4xf32, #tpu.memory_space<vmem>>, vector<1x16x16x4xf32>
    %16 = vector.shape_cast %15 : vector<1x16x16x4xf32> to vector<16x16x4xf32>
    %17 = vector.shape_cast %16 : vector<16x16x4xf32> to vector<256x4xf32>
    %c2_17 = arith.constant 2 : index
    %c0_18 = arith.constant 0 : index
    %c0_19 = arith.constant 0 : index
    %18 = vector.load %arg2[%c2_17, %c0_18, %c0_19] : memref<9x4x32xf32, #tpu.memory_space<vmem>>, vector<1x4x32xf32>
    %19 = vector.shape_cast %18 : vector<1x4x32xf32> to vector<4x32xf32>
    %cst_20 = arith.constant dense<0.000000e+00> : vector<256x32xf32>
    %20 = tpu.matmul %17, %19, %cst_20 {dimension_numbers = #tpu.dot_dimension_numbers<[1], [0], [0], [1], [0, 0, 1, 1], [], []>} : vector<256x4xf32>, vector<4x32xf32>, vector<256x32xf32> -> vector<256x32xf32>
    %21 = arith.addf %14, %20 : vector<256x32xf32>
    %c0_21 = arith.constant 0 : index
    %c1_22 = arith.constant 1 : index
    %c0_23 = arith.constant 0 : index
    %c0_24 = arith.constant 0 : index
    %22 = vector.load %arg1[%c0_21, %c1_22, %c0_23, %c0_24] : memref<1x18x18x4xf32, #tpu.memory_space<vmem>>, vector<1x16x16x4xf32>
    %23 = vector.shape_cast %22 : vector<1x16x16x4xf32> to vector<16x16x4xf32>
    %24 = vector.shape_cast %23 : vector<16x16x4xf32> to vector<256x4xf32>
    %c3 = arith.constant 3 : index
    %c0_25 = arith.constant 0 : index
    %c0_26 = arith.constant 0 : index
    %25 = vector.load %arg2[%c3, %c0_25, %c0_26] : memref<9x4x32xf32, #tpu.memory_space<vmem>>, vector<1x4x32xf32>
    %26 = vector.shape_cast %25 : vector<1x4x32xf32> to vector<4x32xf32>
    %cst_27 = arith.constant dense<0.000000e+00> : vector<256x32xf32>
    %27 = tpu.matmul %24, %26, %cst_27 {dimension_numbers = #tpu.dot_dimension_numbers<[1], [0], [0], [1], [0, 0, 1, 1], [], []>} : vector<256x4xf32>, vector<4x32xf32>, vector<256x32xf32> -> vector<256x32xf32>
    %28 = arith.addf %21, %27 : vector<256x32xf32>
    %c0_28 = arith.constant 0 : index
    %c1_29 = arith.constant 1 : index
    %c1_30 = arith.constant 1 : index
    %c0_31 = arith.constant 0 : index
    %29 = vector.load %arg1[%c0_28, %c1_29, %c1_30, %c0_31] : memref<1x18x18x4xf32, #tpu.memory_space<vmem>>, vector<1x16x16x4xf32>
    %30 = vector.shape_cast %29 : vector<1x16x16x4xf32> to vector<16x16x4xf32>
    %31 = vector.shape_cast %30 : vector<16x16x4xf32> to vector<256x4xf32>
    %c4 = arith.constant 4 : index
    %c0_32 = arith.constant 0 : index
    %c0_33 = arith.constant 0 : index
    %32 = vector.load %arg2[%c4, %c0_32, %c0_33] : memref<9x4x32xf32, #tpu.memory_space<vmem>>, vector<1x4x32xf32>
    %33 = vector.shape_cast %32 : vector<1x4x32xf32> to vector<4x32xf32>
    %cst_34 = arith.constant dense<0.000000e+00> : vector<256x32xf32>
    %34 = tpu.matmul %31, %33, %cst_34 {dimension_numbers = #tpu.dot_dimension_numbers<[1], [0], [0], [1], [0, 0, 1, 1], [], []>} : vector<256x4xf32>, vector<4x32xf32>, vector<256x32xf32> -> vector<256x32xf32>
    %35 = arith.addf %28, %34 : vector<256x32xf32>
    %c0_35 = arith.constant 0 : index
    %c1_36 = arith.constant 1 : index
    %c2_37 = arith.constant 2 : index
    %c0_38 = arith.constant 0 : index
    %36 = vector.load %arg1[%c0_35, %c1_36, %c2_37, %c0_38] : memref<1x18x18x4xf32, #tpu.memory_space<vmem>>, vector<1x16x16x4xf32>
    %37 = vector.shape_cast %36 : vector<1x16x16x4xf32> to vector<16x16x4xf32>
    %38 = vector.shape_cast %37 : vector<16x16x4xf32> to vector<256x4xf32>
    %c5 = arith.constant 5 : index
    %c0_39 = arith.constant 0 : index
    %c0_40 = arith.constant 0 : index
    %39 = vector.load %arg2[%c5, %c0_39, %c0_40] : memref<9x4x32xf32, #tpu.memory_space<vmem>>, vector<1x4x32xf32>
    %40 = vector.shape_cast %39 : vector<1x4x32xf32> to vector<4x32xf32>
    %cst_41 = arith.constant dense<0.000000e+00> : vector<256x32xf32>
    %41 = tpu.matmul %38, %40, %cst_41 {dimension_numbers = #tpu.dot_dimension_numbers<[1], [0], [0], [1], [0, 0, 1, 1], [], []>} : vector<256x4xf32>, vector<4x32xf32>, vector<256x32xf32> -> vector<256x32xf32>
    %42 = arith.addf %35, %41 : vector<256x32xf32>
    %c0_42 = arith.constant 0 : index
    %c2_43 = arith.constant 2 : index
    %c0_44 = arith.constant 0 : index
    %c0_45 = arith.constant 0 : index
    %43 = vector.load %arg1[%c0_42, %c2_43, %c0_44, %c0_45] : memref<1x18x18x4xf32, #tpu.memory_space<vmem>>, vector<1x16x16x4xf32>
    %44 = vector.shape_cast %43 : vector<1x16x16x4xf32> to vector<16x16x4xf32>
    %45 = vector.shape_cast %44 : vector<16x16x4xf32> to vector<256x4xf32>
    %c6 = arith.constant 6 : index
    %c0_46 = arith.constant 0 : index
    %c0_47 = arith.constant 0 : index
    %46 = vector.load %arg2[%c6, %c0_46, %c0_47] : memref<9x4x32xf32, #tpu.memory_space<vmem>>, vector<1x4x32xf32>
    %47 = vector.shape_cast %46 : vector<1x4x32xf32> to vector<4x32xf32>
    %cst_48 = arith.constant dense<0.000000e+00> : vector<256x32xf32>
    %48 = tpu.matmul %45, %47, %cst_48 {dimension_numbers = #tpu.dot_dimension_numbers<[1], [0], [0], [1], [0, 0, 1, 1], [], []>} : vector<256x4xf32>, vector<4x32xf32>, vector<256x32xf32> -> vector<256x32xf32>
    %49 = arith.addf %42, %48 : vector<256x32xf32>
    %c0_49 = arith.constant 0 : index
    %c2_50 = arith.constant 2 : index
    %c1_51 = arith.constant 1 : index
    %c0_52 = arith.constant 0 : index
    %50 = vector.load %arg1[%c0_49, %c2_50, %c1_51, %c0_52] : memref<1x18x18x4xf32, #tpu.memory_space<vmem>>, vector<1x16x16x4xf32>
    %51 = vector.shape_cast %50 : vector<1x16x16x4xf32> to vector<16x16x4xf32>
    %52 = vector.shape_cast %51 : vector<16x16x4xf32> to vector<256x4xf32>
    %c7 = arith.constant 7 : index
    %c0_53 = arith.constant 0 : index
    %c0_54 = arith.constant 0 : index
    %53 = vector.load %arg2[%c7, %c0_53, %c0_54] : memref<9x4x32xf32, #tpu.memory_space<vmem>>, vector<1x4x32xf32>
    %54 = vector.shape_cast %53 : vector<1x4x32xf32> to vector<4x32xf32>
    %cst_55 = arith.constant dense<0.000000e+00> : vector<256x32xf32>
    %55 = tpu.matmul %52, %54, %cst_55 {dimension_numbers = #tpu.dot_dimension_numbers<[1], [0], [0], [1], [0, 0, 1, 1], [], []>} : vector<256x4xf32>, vector<4x32xf32>, vector<256x32xf32> -> vector<256x32xf32>
    %56 = arith.addf %49, %55 : vector<256x32xf32>
    %c0_56 = arith.constant 0 : index
    %c2_57 = arith.constant 2 : index
    %c2_58 = arith.constant 2 : index
    %c0_59 = arith.constant 0 : index
    %57 = vector.load %arg1[%c0_56, %c2_57, %c2_58, %c0_59] : memref<1x18x18x4xf32, #tpu.memory_space<vmem>>, vector<1x16x16x4xf32>
    %58 = vector.shape_cast %57 : vector<1x16x16x4xf32> to vector<16x16x4xf32>
    %59 = vector.shape_cast %58 : vector<16x16x4xf32> to vector<256x4xf32>
    %c8 = arith.constant 8 : index
    %c0_60 = arith.constant 0 : index
    %c0_61 = arith.constant 0 : index
    %60 = vector.load %arg2[%c8, %c0_60, %c0_61] : memref<9x4x32xf32, #tpu.memory_space<vmem>>, vector<1x4x32xf32>
    %61 = vector.shape_cast %60 : vector<1x4x32xf32> to vector<4x32xf32>
    %cst_62 = arith.constant dense<0.000000e+00> : vector<256x32xf32>
    %62 = tpu.matmul %59, %61, %cst_62 {dimension_numbers = #tpu.dot_dimension_numbers<[1], [0], [0], [1], [0, 0, 1, 1], [], []>} : vector<256x4xf32>, vector<4x32xf32>, vector<256x32xf32> -> vector<256x32xf32>
    %63 = arith.addf %56, %62 : vector<256x32xf32>
    %c0_63 = arith.constant 0 : index
    %c0_64 = arith.constant 0 : index
    %64 = vector.load %arg4[%c0_63, %c0_64] : memref<3x32xf32, #tpu.memory_space<vmem>>, vector<1x32xf32>
    %65 = vector.broadcast %64 : vector<1x32xf32> to vector<256x32xf32>
    %66 = arith.addf %63, %65 : vector<256x32xf32>
    %cst_65 = arith.constant 0.000000e+00 : f32
    %67 = vector.broadcast %cst_65 : f32 to vector<256x32xf32>
    %68 = arith.maximumf %66, %67 : vector<256x32xf32>
    %c1_66 = arith.constant 1 : index
    %c0_67 = arith.constant 0 : index
    %69 = vector.load %arg4[%c1_66, %c0_67] : memref<3x32xf32, #tpu.memory_space<vmem>>, vector<1x32xf32>
    %70 = vector.broadcast %69 : vector<1x32xf32> to vector<256x32xf32>
    %71 = arith.mulf %68, %70 : vector<256x32xf32>
    %c2_68 = arith.constant 2 : index
    %c0_69 = arith.constant 0 : index
    %72 = vector.load %arg4[%c2_68, %c0_69] : memref<3x32xf32, #tpu.memory_space<vmem>>, vector<1x32xf32>
    %73 = vector.broadcast %72 : vector<1x32xf32> to vector<256x32xf32>
    %74 = arith.addf %71, %73 : vector<256x32xf32>
    %cst_70 = arith.constant 0.000000e+00 : f32
    %75 = vector.broadcast %cst_70 : f32 to vector<18x18x32xf32>
    %c0_71 = arith.constant 0 : index
    %c0_72 = arith.constant 0 : index
    %c0_73 = arith.constant 0 : index
    %76 = vector.load %arg7[%c0_71, %c0_72, %c0_73] : memref<18x18x32xf32, #tpu.memory_space<vmem>>, vector<18x18x32xf32>
    tpu.vector_store %arg7[%c0_71, %c0_72, %c0_73], %75 {strides = array<i32>} : memref<18x18x32xf32, #tpu.memory_space<vmem>>, vector<18x18x32xf32>,
    %77 = vector.shape_cast %74 : vector<256x32xf32> to vector<16x16x32xf32>
    %c1_74 = arith.constant 1 : index
    %c1_75 = arith.constant 1 : index
    %c0_76 = arith.constant 0 : index
    %78 = vector.load %arg7[%c1_74, %c1_75, %c0_76] : memref<18x18x32xf32, #tpu.memory_space<vmem>>, vector<16x16x32xf32>
    tpu.vector_store %arg7[%c1_74, %c1_75, %c0_76], %77 {strides = array<i32>} : memref<18x18x32xf32, #tpu.memory_space<vmem>>, vector<16x16x32xf32>,
    %cst_77 = arith.constant 0.000000e+00 : f32
    %79 = vector.broadcast %cst_77 : f32 to vector<256x32xf32>
    %c0_78 = arith.constant 0 : index
    %c0_79 = arith.constant 0 : index
    %c0_80 = arith.constant 0 : index
    %80 = vector.load %arg7[%c0_78, %c0_79, %c0_80] : memref<18x18x32xf32, #tpu.memory_space<vmem>>, vector<16x16x32xf32>
    %81 = vector.shape_cast %80 : vector<16x16x32xf32> to vector<256x32xf32>
    %c0_81 = arith.constant 0 : index
    %c0_82 = arith.constant 0 : index
    %c0_83 = arith.constant 0 : index
    %82 = vector.load %arg3[%c0_81, %c0_82, %c0_83] : memref<9x32x32xf32, #tpu.memory_space<vmem>>, vector<1x32x32xf32>
    %83 = vector.shape_cast %82 : vector<1x32x32xf32> to vector<32x32xf32>
    %cst_84 = arith.constant dense<0.000000e+00> : vector<256x32xf32>
    %84 = tpu.matmul %81, %83, %cst_84 {dimension_numbers = #tpu.dot_dimension_numbers<[1], [0], [0], [1], [0, 0, 1, 1], [], []>} : vector<256x32xf32>, vector<32x32xf32>, vector<256x32xf32> -> vector<256x32xf32>
    %85 = arith.addf %79, %84 : vector<256x32xf32>
    %c0_85 = arith.constant 0 : index
    %c1_86 = arith.constant 1 : index
    %c0_87 = arith.constant 0 : index
    %86 = vector.load %arg7[%c0_85, %c1_86, %c0_87] : memref<18x18x32xf32, #tpu.memory_space<vmem>>, vector<16x16x32xf32>
    %87 = vector.shape_cast %86 : vector<16x16x32xf32> to vector<256x32xf32>
    %c1_88 = arith.constant 1 : index
    %c0_89 = arith.constant 0 : index
    %c0_90 = arith.constant 0 : index
    %88 = vector.load %arg3[%c1_88, %c0_89, %c0_90] : memref<9x32x32xf32, #tpu.memory_space<vmem>>, vector<1x32x32xf32>
    %89 = vector.shape_cast %88 : vector<1x32x32xf32> to vector<32x32xf32>
    %cst_91 = arith.constant dense<0.000000e+00> : vector<256x32xf32>
    %90 = tpu.matmul %87, %89, %cst_91 {dimension_numbers = #tpu.dot_dimension_numbers<[1], [0], [0], [1], [0, 0, 1, 1], [], []>} : vector<256x32xf32>, vector<32x32xf32>, vector<256x32xf32> -> vector<256x32xf32>
    %91 = arith.addf %85, %90 : vector<256x32xf32>
    %c0_92 = arith.constant 0 : index
    %c2_93 = arith.constant 2 : index
    %c0_94 = arith.constant 0 : index
    %92 = vector.load %arg7[%c0_92, %c2_93, %c0_94] : memref<18x18x32xf32, #tpu.memory_space<vmem>>, vector<16x16x32xf32>
    %93 = vector.shape_cast %92 : vector<16x16x32xf32> to vector<256x32xf32>
    %c2_95 = arith.constant 2 : index
    %c0_96 = arith.constant 0 : index
    %c0_97 = arith.constant 0 : index
    %94 = vector.load %arg3[%c2_95, %c0_96, %c0_97] : memref<9x32x32xf32, #tpu.memory_space<vmem>>, vector<1x32x32xf32>
    %95 = vector.shape_cast %94 : vector<1x32x32xf32> to vector<32x32xf32>
    %cst_98 = arith.constant dense<0.000000e+00> : vector<256x32xf32>
    %96 = tpu.matmul %93, %95, %cst_98 {dimension_numbers = #tpu.dot_dimension_numbers<[1], [0], [0], [1], [0, 0, 1, 1], [], []>} : vector<256x32xf32>, vector<32x32xf32>, vector<256x32xf32> -> vector<256x32xf32>
    %97 = arith.addf %91, %96 : vector<256x32xf32>
    %c1_99 = arith.constant 1 : index
    %c0_100 = arith.constant 0 : index
    %c0_101 = arith.constant 0 : index
    %98 = vector.load %arg7[%c1_99, %c0_100, %c0_101] : memref<18x18x32xf32, #tpu.memory_space<vmem>>, vector<16x16x32xf32>
    %99 = vector.shape_cast %98 : vector<16x16x32xf32> to vector<256x32xf32>
    %c3_102 = arith.constant 3 : index
    %c0_103 = arith.constant 0 : index
    %c0_104 = arith.constant 0 : index
    %100 = vector.load %arg3[%c3_102, %c0_103, %c0_104] : memref<9x32x32xf32, #tpu.memory_space<vmem>>, vector<1x32x32xf32>
    %101 = vector.shape_cast %100 : vector<1x32x32xf32> to vector<32x32xf32>
    %cst_105 = arith.constant dense<0.000000e+00> : vector<256x32xf32>
    %102 = tpu.matmul %99, %101, %cst_105 {dimension_numbers = #tpu.dot_dimension_numbers<[1], [0], [0], [1], [0, 0, 1, 1], [], []>} : vector<256x32xf32>, vector<32x32xf32>, vector<256x32xf32> -> vector<256x32xf32>
    %103 = arith.addf %97, %102 : vector<256x32xf32>
    %c1_106 = arith.constant 1 : index
    %c1_107 = arith.constant 1 : index
    %c0_108 = arith.constant 0 : index
    %104 = vector.load %arg7[%c1_106, %c1_107, %c0_108] : memref<18x18x32xf32, #tpu.memory_space<vmem>>, vector<16x16x32xf32>
    %105 = vector.shape_cast %104 : vector<16x16x32xf32> to vector<256x32xf32>
    %c4_109 = arith.constant 4 : index
    %c0_110 = arith.constant 0 : index
    %c0_111 = arith.constant 0 : index
    %106 = vector.load %arg3[%c4_109, %c0_110, %c0_111] : memref<9x32x32xf32, #tpu.memory_space<vmem>>, vector<1x32x32xf32>
    %107 = vector.shape_cast %106 : vector<1x32x32xf32> to vector<32x32xf32>
    %cst_112 = arith.constant dense<0.000000e+00> : vector<256x32xf32>
    %108 = tpu.matmul %105, %107, %cst_112 {dimension_numbers = #tpu.dot_dimension_numbers<[1], [0], [0], [1], [0, 0, 1, 1], [], []>} : vector<256x32xf32>, vector<32x32xf32>, vector<256x32xf32> -> vector<256x32xf32>
    %109 = arith.addf %103, %108 : vector<256x32xf32>
    %c1_113 = arith.constant 1 : index
    %c2_114 = arith.constant 2 : index
    %c0_115 = arith.constant 0 : index
    %110 = vector.load %arg7[%c1_113, %c2_114, %c0_115] : memref<18x18x32xf32, #tpu.memory_space<vmem>>, vector<16x16x32xf32>
    %111 = vector.shape_cast %110 : vector<16x16x32xf32> to vector<256x32xf32>
    %c5_116 = arith.constant 5 : index
    %c0_117 = arith.constant 0 : index
    %c0_118 = arith.constant 0 : index
    %112 = vector.load %arg3[%c5_116, %c0_117, %c0_118] : memref<9x32x32xf32, #tpu.memory_space<vmem>>, vector<1x32x32xf32>
    %113 = vector.shape_cast %112 : vector<1x32x32xf32> to vector<32x32xf32>
    %cst_119 = arith.constant dense<0.000000e+00> : vector<256x32xf32>
    %114 = tpu.matmul %111, %113, %cst_119 {dimension_numbers = #tpu.dot_dimension_numbers<[1], [0], [0], [1], [0, 0, 1, 1], [], []>} : vector<256x32xf32>, vector<32x32xf32>, vector<256x32xf32> -> vector<256x32xf32>
    %115 = arith.addf %109, %114 : vector<256x32xf32>
    %c2_120 = arith.constant 2 : index
    %c0_121 = arith.constant 0 : index
    %c0_122 = arith.constant 0 : index
    %116 = vector.load %arg7[%c2_120, %c0_121, %c0_122] : memref<18x18x32xf32, #tpu.memory_space<vmem>>, vector<16x16x32xf32>
    %117 = vector.shape_cast %116 : vector<16x16x32xf32> to vector<256x32xf32>
    %c6_123 = arith.constant 6 : index
    %c0_124 = arith.constant 0 : index
    %c0_125 = arith.constant 0 : index
    %118 = vector.load %arg3[%c6_123, %c0_124, %c0_125] : memref<9x32x32xf32, #tpu.memory_space<vmem>>, vector<1x32x32xf32>
    %119 = vector.shape_cast %118 : vector<1x32x32xf32> to vector<32x32xf32>
    %cst_126 = arith.constant dense<0.000000e+00> : vector<256x32xf32>
    %120 = tpu.matmul %117, %119, %cst_126 {dimension_numbers = #tpu.dot_dimension_numbers<[1], [0], [0], [1], [0, 0, 1, 1], [], []>} : vector<256x32xf32>, vector<32x32xf32>, vector<256x32xf32> -> vector<256x32xf32>
    %121 = arith.addf %115, %120 : vector<256x32xf32>
    %c2_127 = arith.constant 2 : index
    %c1_128 = arith.constant 1 : index
    %c0_129 = arith.constant 0 : index
    %122 = vector.load %arg7[%c2_127, %c1_128, %c0_129] : memref<18x18x32xf32, #tpu.memory_space<vmem>>, vector<16x16x32xf32>
    %123 = vector.shape_cast %122 : vector<16x16x32xf32> to vector<256x32xf32>
    %c7_130 = arith.constant 7 : index
    %c0_131 = arith.constant 0 : index
    %c0_132 = arith.constant 0 : index
    %124 = vector.load %arg3[%c7_130, %c0_131, %c0_132] : memref<9x32x32xf32, #tpu.memory_space<vmem>>, vector<1x32x32xf32>
    %125 = vector.shape_cast %124 : vector<1x32x32xf32> to vector<32x32xf32>
    %cst_133 = arith.constant dense<0.000000e+00> : vector<256x32xf32>
    %126 = tpu.matmul %123, %125, %cst_133 {dimension_numbers = #tpu.dot_dimension_numbers<[1], [0], [0], [1], [0, 0, 1, 1], [], []>} : vector<256x32xf32>, vector<32x32xf32>, vector<256x32xf32> -> vector<256x32xf32>
    %127 = arith.addf %121, %126 : vector<256x32xf32>
    %c2_134 = arith.constant 2 : index
    %c2_135 = arith.constant 2 : index
    %c0_136 = arith.constant 0 : index
    %128 = vector.load %arg7[%c2_134, %c2_135, %c0_136] : memref<18x18x32xf32, #tpu.memory_space<vmem>>, vector<16x16x32xf32>
    %129 = vector.shape_cast %128 : vector<16x16x32xf32> to vector<256x32xf32>
    %c8_137 = arith.constant 8 : index
    %c0_138 = arith.constant 0 : index
    %c0_139 = arith.constant 0 : index
    %130 = vector.load %arg3[%c8_137, %c0_138, %c0_139] : memref<9x32x32xf32, #tpu.memory_space<vmem>>, vector<1x32x32xf32>
    %131 = vector.shape_cast %130 : vector<1x32x32xf32> to vector<32x32xf32>
    %cst_140 = arith.constant dense<0.000000e+00> : vector<256x32xf32>
    %132 = tpu.matmul %129, %131, %cst_140 {dimension_numbers = #tpu.dot_dimension_numbers<[1], [0], [0], [1], [0, 0, 1, 1], [], []>} : vector<256x32xf32>, vector<32x32xf32>, vector<256x32xf32> -> vector<256x32xf32>
    %133 = arith.addf %127, %132 : vector<256x32xf32>
    %c0_141 = arith.constant 0 : index
    %c0_142 = arith.constant 0 : index
    %134 = vector.load %arg5[%c0_141, %c0_142] : memref<3x32xf32, #tpu.memory_space<vmem>>, vector<1x32xf32>
    %135 = vector.broadcast %134 : vector<1x32xf32> to vector<256x32xf32>
    %136 = arith.addf %133, %135 : vector<256x32xf32>
    %cst_143 = arith.constant 0.000000e+00 : f32
    %137 = vector.broadcast %cst_143 : f32 to vector<256x32xf32>
    %138 = arith.maximumf %136, %137 : vector<256x32xf32>
    %c1_144 = arith.constant 1 : index
    %c0_145 = arith.constant 0 : index
    %139 = vector.load %arg5[%c1_144, %c0_145] : memref<3x32xf32, #tpu.memory_space<vmem>>, vector<1x32xf32>
    %140 = vector.broadcast %139 : vector<1x32xf32> to vector<256x32xf32>
    %141 = arith.mulf %138, %140 : vector<256x32xf32>
    %c2_146 = arith.constant 2 : index
    %c0_147 = arith.constant 0 : index
    %142 = vector.load %arg5[%c2_146, %c0_147] : memref<3x32xf32, #tpu.memory_space<vmem>>, vector<1x32xf32>
    %143 = vector.broadcast %142 : vector<1x32xf32> to vector<256x32xf32>
    %144 = arith.addf %141, %143 : vector<256x32xf32>
    %145 = vector.shape_cast %144 : vector<256x32xf32> to vector<16x16x32xf32>
    %c0_148 = arith.constant 0 : index
    %c0_149 = arith.constant 0 : index
    %c0_150 = arith.constant 0 : index
    %c0_151 = arith.constant 0 : index
    %146 = vector.load %arg6[%c0_148, %c0_149, %c0_150, %c0_151] : memref<1x16x16x32xf32, #tpu.memory_space<vmem>>, vector<1x16x16x32xf32>
    %147 = vector.shape_cast %146 : vector<1x16x16x32xf32> to vector<16x16x32xf32>
    %148 = vector.shape_cast %145 : vector<16x16x32xf32> to vector<1x16x16x32xf32>
    tpu.vector_store %arg6[%c0_148, %c0_149, %c0_150, %c0_151], %148 {strides = array<i32>} : memref<1x16x16x32xf32, #tpu.memory_space<vmem>>, vector<1x16x16x32xf32>,
    return
  }
  func.func @transform_0(%arg0: i32) -> (i32, i32, i32, i32) {
    %c0_i32 = arith.constant 0 : i32
    %c0_i32_0 = arith.constant 0 : i32
    %c0_i32_1 = arith.constant 0 : i32
    %c0_i32_2 = arith.constant 0 : i32
    return %arg0, %c0_i32, %c0_i32_0, %c0_i32_1 : i32, i32, i32, i32
  }
  func.func @transform_1(%arg0: i32) -> (i32, i32, i32) {
    %c0_i32 = arith.constant 0 : i32
    %c0_i32_0 = arith.constant 0 : i32
    %c0_i32_1 = arith.constant 0 : i32
    %c0_i32_2 = arith.constant 0 : i32
    return %c0_i32, %c0_i32_0, %c0_i32_1 : i32, i32, i32
  }
  func.func @transform_2(%arg0: i32) -> (i32, i32, i32) {
    %c0_i32 = arith.constant 0 : i32
    %c0_i32_0 = arith.constant 0 : i32
    %c0_i32_1 = arith.constant 0 : i32
    %c0_i32_2 = arith.constant 0 : i32
    return %c0_i32, %c0_i32_0, %c0_i32_1 : i32, i32, i32
  }
  func.func @transform_3(%arg0: i32) -> (i32, i32) {
    %c0_i32 = arith.constant 0 : i32
    %c0_i32_0 = arith.constant 0 : i32
    %c0_i32_1 = arith.constant 0 : i32
    return %c0_i32, %c0_i32_0 : i32, i32
  }
  func.func @transform_4(%arg0: i32) -> (i32, i32) {
    %c0_i32 = arith.constant 0 : i32
    %c0_i32_0 = arith.constant 0 : i32
    %c0_i32_1 = arith.constant 0 : i32
    return %c0_i32, %c0_i32_0 : i32, i32
  }
  func.func @transform_5(%arg0: i32) -> (i32, i32, i32, i32) {
    %c0_i32 = arith.constant 0 : i32
    %c0_i32_0 = arith.constant 0 : i32
    %c0_i32_1 = arith.constant 0 : i32
    %c0_i32_2 = arith.constant 0 : i32
    return %arg0, %c0_i32, %c0_i32_0, %c0_i32_1 : i32, i32, i32, i32
  }
}

</mosaic_0001>

<llo_original>
// kernel: unet_conv_block.1
$region0: #{unet_conv_block.1}
  #allocation0 [shape = 'u32[]', space=smem, size = 0x4, offset = 0x4, fixed_abs, tag = 'smem constant byte address 0x4 - core index']
  #allocation1 [shape = 'u32[144,128]{1,0:T(1,128)}', space=vmem, size = 0x12000, scoped, tag = 'internal scratch']
  #allocation2 [shape = 'f32[18,18,32]{2,1,0:T(8,128)}', space=vmem, size = 0x36000, scoped, tag = 'scratch operand']
  %s0 = inlined_call_operand.vmem [shape: f32[2,18,18,4], index: 0, kind: input, shape index: {}]
  %s1 = inlined_call_operand.vmem [shape: f32[9,4,32], index: 1, kind: input, shape index: {}]
  %s2 = inlined_call_operand.vmem [shape: f32[9,32,32], index: 2, kind: input, shape index: {}]
  %s3 = inlined_call_operand.vmem [shape: f32[3,32], index: 3, kind: input, shape index: {}]
  %s4 = inlined_call_operand.vmem [shape: f32[3,32], index: 4, kind: input, shape index: {}]
  %s5 = inlined_call_operand.hbm [shape: f32[2,16,16,32], index: 5, kind: output, shape index: {}]
  %s6 = sld [smem:[#allocation0]]
  $region53: #{unet_conv_block.1} parent=0
    _
  %s8 = ssub.s32 1, %s6
  %s9 = scalar_select 0, %s8, %s6
  $region1: #{unet_conv_block.1} parent=0
    #allocation3 [shape = 'u8[262144]{0}', space=vmem, size = 0x40000, scoped, tag = 'output window, operand 0']
    #allocation4 [shape = 's32[2]{0}', space=sflag, size = 0x8, scoped, tag = 'scoped memory for unet_conv_block.1']
    %10 = vsyncpa [#allocation4], 0
    %s11 = scalar_lea.sflag [#allocation4], 1
    %12 = vsyncpa %s11, 0
    loop: start=0, step=1, limit=4
    $region2: #{unet_conv_block.1} parent=1 // loop_pre_header
      _
    $region3: #{unet_conv_block.1} parent=1 // loop_header
      %s14 = sphi 0, %s18
      %p15 = scmp.ge.s32.totalorder %s14, 4
      %s24 = sphi 0, %s26
      %s27 = sphi 0, %s24
      %s28 = sphi 0, %s27
      %s44 = sphi 0, %s28
      %s48 = sphi 0, %s48
      %s50 = sphi 0, %s48
      %s51 = sphi 0, %s50
      %s65 = sphi 0, %s51
      %s69 = sphi 0, %s69
      %s71 = sphi 0, %s69
      %s72 = sphi 0, %s71
      %s86 = sphi 0, %s72
      %s90 = sphi 0, %s90
      %s92 = sphi 0, %s90
      %s93 = sphi 0, %s92
      %s107 = sphi 0, %s93
      %s111 = sphi 0, %s111
      %s113 = sphi 0, %s111
      %s114 = sphi 0, %s113
      %s128 = sphi 0, %s114
      %s134 = sphi 0, %s136
      %s137 = sphi 0, %s134
      %s138 = sphi 0, %s137
      %s154 = sphi 0, %s138
    $region4: #{unet_conv_block.1} parent=1 // loop_header_branch
      %17 = sbr.rel (%p15) target = $region8
    $region5: #{unet_conv_block.1} parent=1 // loop_body
      %s19 = ssub.s32 %s14, 1
      %s20 = ssub.s32 %s14, 2
      %s21 = sadd.s32 %s14, 1
      %s22 = ssub.s32 %s14, %s21
      %p23 = scmp.eq.s32.totalorder %s22, 0
      %s25 = sadd.s32 %s24, 1
      %s26 = scalar_select %p23, %s24, %s25
      %p29 = pneg %p23
      %p30 = scmp.eq.s32.totalorder %s14, 1
      %p31 = por %p29, %p30
      %p32 = scmp.ne.s32.totalorder %s24, %s27
      %p33 = scmp.eq.s32.totalorder %s14, 0
      %p34 = por %p32, %p33
      %p35 = scmp.ne.s32.totalorder %s24, %s27
      %p36 = scmp.eq.s32.totalorder %s19, 1
      %p37 = por %p35, %p36
      %p38 = scmp.ne.s32.totalorder %s27, %s28
      %p39 = scmp.eq.s32.totalorder %s19, 0
      %p40 = por %p38, %p39
      %p41 = scmp.ne.s32.totalorder %s27, %s28
      %p42 = scmp.eq.s32.totalorder %s20, 1
      %p43 = por %p41, %p42
      %p45 = scmp.ne.s32.totalorder %s28, %s44
      %p46 = scmp.eq.s32.totalorder %s20, 0
      %p47 = por %p45, %p46
      %s49 = sadd.s32 %s48, 1
      %p52 = scmp.eq.s32.totalorder %s14, 1
      %p53 = scmp.ne.s32.totalorder %s48, %s50
      %p54 = scmp.eq.s32.totalorder %s14, 0
      %p55 = por %p53, %p54
      %p56 = scmp.ne.s32.totalorder %s48, %s50
      %p57 = scmp.eq.s32.totalorder %s19, 1
      %p58 = por %p56, %p57
      %p59 = scmp.ne.s32.totalorder %s50, %s51
      %p60 = scmp.eq.s32.totalorder %s19, 0
      %p61 = por %p59, %p60
      %p62 = scmp.ne.s32.totalorder %s50, %s51
      %p63 = scmp.eq.s32.totalorder %s20, 1
      %p64 = por %p62, %p63
      %p66 = scmp.ne.s32.totalorder %s51, %s65
      %p67 = scmp.eq.s32.totalorder %s20, 0
      %p68 = por %p66, %p67
      %s70 = sadd.s32 %s69, 1
      %p73 = scmp.eq.s32.totalorder %s14, 1
      %p74 = scmp.ne.s32.totalorder %s69, %s71
      %p75 = scmp.eq.s32.totalorder %s14, 0
      %p76 = por %p74, %p75
      %p77 = scmp.ne.s32.totalorder %s69, %s71
      %p78 = scmp.eq.s32.totalorder %s19, 1
      %p79 = por %p77, %p78
      %p80 = scmp.ne.s32.totalorder %s71, %s72
      %p81 = scmp.eq.s32.totalorder %s19, 0
      %p82 = por %p80, %p81
      %p83 = scmp.ne.s32.totalorder %s71, %s72
      %p84 = scmp.eq.s32.totalorder %s20, 1
      %p85 = por %p83, %p84
      %p87 = scmp.ne.s32.totalorder %s72, %s86
      %p88 = scmp.eq.s32.totalorder %s20, 0
      %p89 = por %p87, %p88
      %s91 = sadd.s32 %s90, 1
      %p94 = scmp.eq.s32.totalorder %s14, 1
      %p95 = scmp.ne.s32.totalorder %s90, %s92
      %p96 = scmp.eq.s32.totalorder %s14, 0
      %p97 = por %p95, %p96
      %p98 = scmp.ne.s32.totalorder %s90, %s92
      %p99 = scmp.eq.s32.totalorder %s19, 1
      %p100 = por %p98, %p99
      %p101 = scmp.ne.s32.totalorder %s92, %s93
      %p102 = scmp.eq.s32.totalorder %s19, 0
      %p103 = por %p101, %p102
      %p104 = scmp.ne.s32.totalorder %s92, %s93
      %p105 = scmp.eq.s32.totalorder %s20, 1
      %p106 = por %p104, %p105
      %p108 = scmp.ne.s32.totalorder %s93, %s107
      %p109 = scmp.eq.s32.totalorder %s20, 0
      %p110 = por %p108, %p109
      %s112 = sadd.s32 %s111, 1
      %p115 = scmp.eq.s32.totalorder %s14, 1
      %p116 = scmp.ne.s32.totalorder %s111, %s113
      %p117 = scmp.eq.s32.totalorder %s14, 0
      %p118 = por %p116, %p117
      %p119 = scmp.ne.s32.totalorder %s111, %s113
      %p120 = scmp.eq.s32.totalorder %s19, 1
      %p121 = por %p119, %p120
      %p122 = scmp.ne.s32.totalorder %s113, %s114
      %p123 = scmp.eq.s32.totalorder %s19, 0
      %p124 = por %p122, %p123
      %p125 = scmp.ne.s32.totalorder %s113, %s114
      %p126 = scmp.eq.s32.totalorder %s20, 1
      %p127 = por %p125, %p126
      %p129 = scmp.ne.s32.totalorder %s114, %s128
      %p130 = scmp.eq.s32.totalorder %s20, 0
      %p131 = por %p129, %p130
      %s132 = ssub.s32 %s14, %s21
      %p133 = scmp.eq.s32.totalorder %s132, 0
      %s135 = sadd.s32 %s134, 1
      %s136 = scalar_select %p133, %s134, %s135
      %p139 = pneg %p133
      %p140 = scmp.eq.s32.totalorder %s14, 1
      %p141 = por %p139, %p140
      %p142 = scmp.ne.s32.totalorder %s134, %s137
      %p143 = scmp.eq.s32.totalorder %s14, 0
      %p144 = por %p142, %p143
      %p145 = scmp.ne.s32.totalorder %s134, %s137
      %p146 = scmp.eq.s32.totalorder %s19, 1
      %p147 = por %p145, %p146
      %p148 = scmp.ne.s32.totalorder %s137, %s138
      %p149 = scmp.eq.s32.totalorder %s19, 0
      %p150 = por %p148, %p149
      %p151 = scmp.ne.s32.totalorder %s137, %s138
      %p152 = scmp.eq.s32.totalorder %s20, 1
      %p153 = por %p151, %p152
      %p155 = scmp.ne.s32.totalorder %s138, %s154
      %p156 = scmp.eq.s32.totalorder %s20, 0
      %p157 = por %p155, %p156
      %p158 = scmp.le.s32.totalorder 1, %s14
      %p159 = scmp.lt.s32.totalorder %s14, 3
      %p160 = pnand %p158, %p159
      %p161 = pneg %p160
      // Predicated region
      $region9: #{unet_conv_block.1} parent=5 // pred_check
        _
      $region10: #{unet_conv_block.1} parent=5 // pred_check_branch
        %163 = sbr.rel (%p160) target = $region12
      $region11: #{unet_conv_block.1} parent=5 // pred_region
        %s164 = ssub.s32 %s14, 1
        // Predicated region
        $region13: #{unet_conv_block.1} parent=11 // pred_check
          %p165 = pneg %p61
        $region14: #{unet_conv_block.1} parent=11 // pred_check_branch
          %167 = sbr.rel (%p165) target = $region16
        $region15: #{unet_conv_block.1} parent=11 // pred_region
          _
        $region16: #{unet_conv_block.1} parent=11 // pred_fallthru
          _
        // Predicated region
        $region17: #{unet_conv_block.1} parent=11 // pred_check
          %p168 = pneg %p82
        $region18: #{unet_conv_block.1} parent=11 // pred_check_branch
          %170 = sbr.rel (%p168) target = $region20
        $region19: #{unet_conv_block.1} parent=11 // pred_region
          _
        $region20: #{unet_conv_block.1} parent=11 // pred_fallthru
          _
        // Predicated region
        $region21: #{unet_conv_block.1} parent=11 // pred_check
          %p171 = pneg %p103
        $region22: #{unet_conv_block.1} parent=11 // pred_check_branch
          %173 = sbr.rel (%p171) target = $region24
        $region23: #{unet_conv_block.1} parent=11 // pred_region
          _
        $region24: #{unet_conv_block.1} parent=11 // pred_fallthru
          _
        // Predicated region
        $region25: #{unet_conv_block.1} parent=11 // pred_check
          %p174 = pneg %p124
        $region26: #{unet_conv_block.1} parent=11 // pred_check_branch
          %176 = sbr.rel (%p174) target = $region28
        $region27: #{unet_conv_block.1} parent=11 // pred_region
          _
        $region28: #{unet_conv_block.1} parent=11 // pred_fallthru
          _
      $region12: #{unet_conv_block.1} parent=5 // pred_fallthru
        _
      %p177 = scmp.lt.s32.totalorder %s14, 2
      // Predicated region
      $region29: #{unet_conv_block.1} parent=5 // pred_check
        %p178 = pneg %p177
      $region30: #{unet_conv_block.1} parent=5 // pred_check_branch
        %180 = sbr.rel (%p178) target = $region32
      $region31: #{unet_conv_block.1} parent=5 // pred_region
        // Predicated region
        $region33: #{unet_conv_block.1} parent=31 // pred_check
          %p181 = pneg %p34
        $region34: #{unet_conv_block.1} parent=31 // pred_check_branch
          %183 = sbr.rel (%p181) target = $region36
        $region35: #{unet_conv_block.1} parent=31 // pred_region
          %p184 = scmp.lt.s32.totalorder %s14, 1
          %s185 = scalar_select %p184, %s14, 1
          %s186 = smul.addr %s185, 54
          %s187 = smul.addr %s186, 8
          %s188 = scalar_lea.vmem %s0, %s187
        $region36: #{unet_conv_block.1} parent=31 // pred_fallthru
          _
      $region32: #{unet_conv_block.1} parent=5 // pred_fallthru
        _
      %p189 = scmp.le.s32.totalorder 1, %s14
      %p190 = scmp.lt.s32.totalorder %s14, 3
      %p191 = pnand %p189, %p190
      %p192 = pneg %p191
      // Predicated region
      $region37: #{unet_conv_block.1} parent=5 // pred_check
        _
      $region38: #{unet_conv_block.1} parent=5 // pred_check_branch
        %194 = sbr.rel (%p191) target = $region40
      $region39: #{unet_conv_block.1} parent=5 // pred_region
        %s195 = ssub.s32 %s14, 1
        %p196 = scmp.lt.s32.totalorder %s19, 1
        %s197 = scalar_select %p196, %s19, 1
        %s198 = smul.addr %s197, 54
        %s199 = smul.addr %s198, 8
        %s200 = scalar_lea.vmem %s0, %s199
        %p201 = pneg %p40
        %p202 = pneg %p37
        %p203 = pneg %p61
        %p204 = pneg %p58
        %p205 = pneg %p82
        %p206 = pneg %p79
        %p207 = pneg %p103
        %p208 = pneg %p100
        %p209 = pneg %p124
        %p210 = pneg %p121
        %p211 = pneg %p150
        %p212 = pneg %p147
        %s213 = sand.u32 %s137, 1
        %s214 = scalar_lea.sflag [#allocation4], %s213
        %s215 = sand.u32 %s137, 1
        %s216 = smul.addr %s215, 256
        %s217 = scalar_lea.vmem [#allocation3], %s216
        %p218 = scmp.lt.s32.totalorder %s19, 1
        %s219 = scalar_select %p218, %s19, 1
        %s220 = smul.addr %s219, 54
        %s221 = smul.addr %s220, 8
        %s222 = scalar_lea.vmem %s0, %s221
        %v223 = vld [vmem:[%s222] sm:$0xff]
        %v224 = vld [vmem:[%s222 + $0x8] sm:$0xff]
        %v225 = vld [vmem:[%s222 + $0x18] sm:$0xff]
        %v226 = vld [vmem:[%s222 + $0x20] sm:$0xff]
        %v227 = vld [vmem:[%s222 + $0x30] sm:$0xff]
        %v228 = vld [vmem:[%s222 + $0x38] sm:$0xff]
        %v229 = vld [vmem:[%s222 + $0x48] sm:$0xff]
        %v230 = vld [vmem:[%s222 + $0x50] sm:$0xff]
        %v231 = vld [vmem:[%s222 + $0x60] sm:$0xff]
        %v232 = vld [vmem:[%s222 + $0x68] sm:$0xff]
        %v233 = vld [vmem:[%s222 + $0x78] sm:$0xff]
        %v234 = vld [vmem:[%s222 + $0x80] sm:$0xff]
        %v235 = vld [vmem:[%s222 + $0x90] sm:$0xff]
        %v236 = vld [vmem:[%s222 + $0x98] sm:$0xff]
        %v237 = vld [vmem:[%s222 + $0xa8] sm:$0xff]
        %v238 = vld [vmem:[%s222 + $0xb0] sm:$0xff]
        %v239 = vld [vmem:[%s222 + $0xc0] sm:$0xff]
        %v240 = vld [vmem:[%s222 + $0xc8] sm:$0xff]
        %v241 = vld [vmem:[%s222 + $0xd8] sm:$0xff]
        %v242 = vld [vmem:[%s222 + $0xe0] sm:$0xff]
        %v243 = vld [vmem:[%s222 + $0xf0] sm:$0xff]
        %v244 = vld [vmem:[%s222 + $0xf8] sm:$0xff]
        %v245 = vld [vmem:[%s222 + $0x108] sm:$0xff]
        %v246 = vld [vmem:[%s222 + $0x110] sm:$0xff]
        %v247 = vld [vmem:[%s222 + $0x120] sm:$0xff]
        %v248 = vld [vmem:[%s222 + $0x128] sm:$0xff]
        %v249 = vld [vmem:[%s222 + $0x138] sm:$0xff]
        %v250 = vld [vmem:[%s222 + $0x140] sm:$0xff]
        %v251 = vld [vmem:[%s222 + $0x150] sm:$0xff]
        %v252 = vld [vmem:[%s222 + $0x158] sm:$0xff]
        %v253 = vld [vmem:[%s222 + $0x168] sm:$0xff]
        %v254 = vld [vmem:[%s222 + $0x170] sm:$0xff]
        %v255 = vld [vmem:[%s1] sm:$0xf]
        %v256 = vld [vmem:[%s222 + $0x1] sm:$0xff]
        %v257 = vld [vmem:[%s222 + $0x9] sm:$0xff]
        %v258 = vld [vmem:[%s222 + $0x19] sm:$0xff]
        %v259 = vld [vmem:[%s222 + $0x21] sm:$0xff]
        %v260 = vld [vmem:[%s222 + $0x31] sm:$0xff]
        %v261 = vld [vmem:[%s222 + $0x39] sm:$0xff]
        %v262 = vld [vmem:[%s222 + $0x49] sm:$0xff]
        %v263 = vld [vmem:[%s222 + $0x51] sm:$0xff]
        %v264 = vld [vmem:[%s222 + $0x61] sm:$0xff]
        %v265 = vld [vmem:[%s222 + $0x69] sm:$0xff]
        %v266 = vld [vmem:[%s222 + $0x79] sm:$0xff]
        %v267 = vld [vmem:[%s222 + $0x81] sm:$0xff]
        %v268 = vld [vmem:[%s222 + $0x91] sm:$0xff]
        %v269 = vld [vmem:[%s222 + $0x99] sm:$0xff]
        %v270 = vld [vmem:[%s222 + $0xa9] sm:$0xff]
        %v271 = vld [vmem:[%s222 + $0xb1] sm:$0xff]
        %v272 = vld [vmem:[%s222 + $0xc1] sm:$0xff]
        %v273 = vld [vmem:[%s222 + $0xc9] sm:$0xff]
        %v274 = vld [vmem:[%s222 + $0xd9] sm:$0xff]
        %v275 = vld [vmem:[%s222 + $0xe1] sm:$0xff]
        %v276 = vld [vmem:[%s222 + $0xf1] sm:$0xff]
        %v277 = vld [vmem:[%s222 + $0xf9] sm:$0xff]
        %v278 = vld [vmem:[%s222 + $0x109] sm:$0xff]
        %v279 = vld [vmem:[%s222 + $0x111] sm:$0xff]
        %v280 = vld [vmem:[%s222 + $0x121] sm:$0xff]
        %v281 = vld [vmem:[%s222 + $0x129] sm:$0xff]
        %v282 = vld [vmem:[%s222 + $0x139] sm:$0xff]
        %v283 = vld [vmem:[%s222 + $0x141] sm:$0xff]
        %v284 = vld [vmem:[%s222 + $0x151] sm:$0xff]
        %v285 = vld [vmem:[%s222 + $0x159] sm:$0xff]
        %v286 = vld [vmem:[%s222 + $0x169] sm:$0xff]
        %v287 = vld [vmem:[%s222 + $0x171] sm:$0xff]
        %s288 = scalar_lea.vmem %s1, 4
        %v289 = vld [vmem:[%s288] sm:$0xf]
        %vm290 = vcmask 31744
        %v292 = vsel %vm290, %v256, 0
        %v295 = vsel %vm290, %v257, 0
        %v298 = vsel %vm290, %v258, 0
        %v301 = vsel %vm290, %v259, 0
        %v304 = vsel %vm290, %v260, 0
        %v307 = vsel %vm290, %v261, 0
        %v310 = vsel %vm290, %v262, 0
        %v313 = vsel %vm290, %v263, 0
        %v316 = vsel %vm290, %v264, 0
        %v319 = vsel %vm290, %v265, 0
        %v322 = vsel %vm290, %v266, 0
        %v325 = vsel %vm290, %v267, 0
        %v328 = vsel %vm290, %v268, 0
        %v331 = vsel %vm290, %v269, 0
        %v334 = vsel %vm290, %v270, 0
        %v337 = vsel %vm290, %v271, 0
        %v340 = vsel %vm290, %v272, 0
        %v343 = vsel %vm290, %v273, 0
        %v346 = vsel %vm290, %v274, 0
        %v349 = vsel %vm290, %v275, 0
        %v352 = vsel %vm290, %v276, 0
        %v355 = vsel %vm290, %v277, 0
        %v358 = vsel %vm290, %v278, 0
        %v361 = vsel %vm290, %v279, 0
        %v364 = vsel %vm290, %v280, 0
        %v367 = vsel %vm290, %v281, 0
        %v370 = vsel %vm290, %v282, 0
        %v373 = vsel %vm290, %v283, 0
        %v376 = vsel %vm290, %v284, 0
        %v379 = vsel %vm290, %v285, 0
        %v382 = vsel %vm290, %v286, 0
        %v385 = vsel %vm290, %v287, 0
        %vm387 = vcmask 1043456
        %v389 = vsel %vm387, %v289, 0
        %391 = vmatprep.subr.mxu0 0.0
        %392 = vmatpush1.msra.mxu0 0.0
        %393 = vmatprep.subr.mxu0 0.0
        %394 = vmatpush1.msra.mxu0 0.0
        %395 = vmatprep.subr.mxu0 0.0
        %396 = vmatpush1.msra.mxu0 0.0
        %397 = vmatprep.subr.mxu0 0.0
        %398 = vmatpush1.msra.mxu0 0.0
        %399 = vmatprep.subr.mxu0 0.0
        %400 = vmatpush1.msra.mxu0 0.0
        %401 = vmatprep.subr.mxu0 0.0
        %402 = vmatpush1.msra.mxu0 0.0
        %403 = vmatprep.subr.mxu0 0.0
        %404 = vmatpush1.msra.mxu0 0.0
        %405 = vmatprep.subr.mxu0 0.0
        %406 = vmatpush1.msra.mxu0 0.0
        %407 = vmatprep.subr.mxu0 0.0
        %408 = vmatpush1.msra.mxu0 0.0
        %409 = vmatprep.subr.mxu0 0.0
        %410 = vmatpush1.msra.mxu0 0.0
        %411 = vmatprep.subr.mxu0 0.0
        %412 = vmatpush1.msra.mxu0 0.0
        %413 = vmatprep.subr.mxu0 0.0
        %414 = vmatpush1.msra.mxu0 0.0
        %415 = vmatprep.subr.mxu0 0.0
        %416 = vmatpush1.msra.mxu0 0.0
        %417 = vmatprep.subr.mxu0 0.0
        %418 = vmatpush1.msra.mxu0 0.0
        %419 = vmatprep.subr.mxu0 0.0
        %420 = vmatpush1.msra.mxu0 0.0
        %421 = vmatprep.subr.mxu0 0.0
        %422 = vmatpush1.msra.mxu0 %v389
        %423 = vmatprep.subr.mxu0 0.0
        %424 = vmatpush2.msra.mxu0 0.0
        %425 = vmatprep.subr.mxu0 0.0
        %426 = vmatpush2.msra.mxu0 0.0
        %427 = vmatprep.subr.mxu0 0.0
        %428 = vmatpush2.msra.mxu0 0.0
        %429 = vmatprep.subr.mxu0 0.0
        %430 = vmatpush2.msra.mxu0 0.0
        %431 = vmatprep.subr.mxu0 0.0
        %432 = vmatpush2.msra.mxu0 0.0
        %433 = vmatprep.subr.mxu0 0.0
        %434 = vmatpush2.msra.mxu0 0.0
        %435 = vmatprep.subr.mxu0 0.0
        %436 = vmatpush2.msra.mxu0 0.0
        %437 = vmatprep.subr.mxu0 0.0
        %438 = vmatpush2.msra.mxu0 0.0
        %439 = vmatprep.subr.mxu0 0.0
        %440 = vmatpush2.msra.mxu0 0.0
        %441 = vmatprep.subr.mxu0 0.0
        %442 = vmatpush2.msra.mxu0 0.0
        %443 = vmatprep.subr.mxu0 0.0
        %444 = vmatpush2.msra.mxu0 0.0
        %445 = vmatprep.subr.mxu0 0.0
        %446 = vmatpush2.msra.mxu0 0.0
        %447 = vmatprep.subr.mxu0 0.0
        %448 = vmatpush2.msra.mxu0 0.0
        %449 = vmatprep.subr.mxu0 0.0
        %450 = vmatpush2.msra.mxu0 0.0
        %451 = vmatprep.subr.mxu0 0.0
        %452 = vmatpush2.msra.mxu0 0.0
        %453 = vmatprep.subr.mxu0 0.0
        %454 = vmatpush2.msra.mxu0 0.0
        %455 = vmatprep.mubr.f32.mxu0 0.0
        %456 = vmatmul.mubr.f32.gmra.mxu0 %v292
        %v457 = vpop.f32.mrf.mxu0
        %v458 = vadd.f32 0.0, %v457
        %v459 = vpop.f32.mrf.mxu0
        %460 = vmatprep.mubr.f32.mxu0 0.0
        %461 = vmatmul.mubr.f32.gmra.mxu0 %v295
        %v462 = vpop.f32.mrf.mxu0
        %v463 = vadd.f32 0.0, %v462
        %v464 = vpop.f32.mrf.mxu0
        %465 = vmatprep.mubr.f32.mxu0 0.0
        %466 = vmatmul.mubr.f32.gmra.mxu0 %v298
        %v467 = vpop.f32.mrf.mxu0
        %v468 = vadd.f32 0.0, %v467
        %v469 = vpop.f32.mrf.mxu0
        %470 = vmatprep.mubr.f32.mxu0 0.0
        %471 = vmatmul.mubr.f32.gmra.mxu0 %v301
        %v472 = vpop.f32.mrf.mxu0
        %v473 = vadd.f32 0.0, %v472
        %v474 = vpop.f32.mrf.mxu0
        %475 = vmatprep.mubr.f32.mxu0 0.0
        %476 = vmatmul.mubr.f32.gmra.mxu0 %v304
        %v477 = vpop.f32.mrf.mxu0
        %v478 = vadd.f32 0.0, %v477
        %v479 = vpop.f32.mrf.mxu0
        %480 = vmatprep.mubr.f32.mxu0 0.0
        %481 = vmatmul.mubr.f32.gmra.mxu0 %v307
        %v482 = vpop.f32.mrf.mxu0
        %v483 = vadd.f32 0.0, %v482
        %v484 = vpop.f32.mrf.mxu0
        %485 = vmatprep.mubr.f32.mxu0 0.0
        %486 = vmatmul.mubr.f32.gmra.mxu0 %v310
        %v487 = vpop.f32.mrf.mxu0
        %v488 = vadd.f32 0.0, %v487
        %v489 = vpop.f32.mrf.mxu0
        %490 = vmatprep.mubr.f32.mxu0 0.0
        %491 = vmatmul.mubr.f32.gmra.mxu0 %v313
        %v492 = vpop.f32.mrf.mxu0
        %v493 = vadd.f32 0.0, %v492
        %v494 = vpop.f32.mrf.mxu0
        %495 = vmatprep.mubr.f32.mxu0 0.0
        %496 = vmatmul.mubr.f32.gmra.mxu0 %v316
        %v497 = vpop.f32.mrf.mxu0
        %v498 = vadd.f32 0.0, %v497
        %v499 = vpop.f32.mrf.mxu0
        %500 = vmatprep.mubr.f32.mxu0 0.0
        %501 = vmatmul.mubr.f32.gmra.mxu0 %v319
        %v502 = vpop.f32.mrf.mxu0
        %v503 = vadd.f32 0.0, %v502
        %v504 = vpop.f32.mrf.mxu0
        %505 = vmatprep.mubr.f32.mxu0 0.0
        %506 = vmatmul.mubr.f32.gmra.mxu0 %v322
        %v507 = vpop.f32.mrf.mxu0
        %v508 = vadd.f32 0.0, %v507
        %v509 = vpop.f32.mrf.mxu0
        %510 = vmatprep.mubr.f32.mxu0 0.0
        %511 = vmatmul.mubr.f32.gmra.mxu0 %v325
        %v512 = vpop.f32.mrf.mxu0
        %v513 = vadd.f32 0.0, %v512
        %v514 = vpop.f32.mrf.mxu0
        %515 = vmatprep.mubr.f32.mxu0 0.0
        %516 = vmatmul.mubr.f32.gmra.mxu0 %v328
        %v517 = vpop.f32.mrf.mxu0
        %v518 = vadd.f32 0.0, %v517
        %v519 = vpop.f32.mrf.mxu0
        %520 = vmatprep.mubr.f32.mxu0 0.0
        %521 = vmatmul.mubr.f32.gmra.mxu0 %v331
        %v522 = vpop.f32.mrf.mxu0
        %v523 = vadd.f32 0.0, %v522
        %v524 = vpop.f32.mrf.mxu0
        %525 = vmatprep.mubr.f32.mxu0 0.0
        %526 = vmatmul.mubr.f32.gmra.mxu0 %v334
        %v527 = vpop.f32.mrf.mxu0
        %v528 = vadd.f32 0.0, %v527
        %v529 = vpop.f32.mrf.mxu0
        %530 = vmatprep.mubr.f32.mxu0 0.0
        %531 = vmatmul.mubr.f32.gmra.mxu0 %v337
        %v532 = vpop.f32.mrf.mxu0
        %v533 = vadd.f32 0.0, %v532
        %v534 = vpop.f32.mrf.mxu0
        %535 = vmatprep.mubr.f32.mxu0 0.0
        %536 = vmatmul.mubr.f32.gmra.mxu0 %v340
        %v537 = vpop.f32.mrf.mxu0
        %v538 = vadd.f32 0.0, %v537
        %v539 = vpop.f32.mrf.mxu0
        %540 = vmatprep.mubr.f32.mxu0 0.0
        %541 = vmatmul.mubr.f32.gmra.mxu0 %v343
        %v542 = vpop.f32.mrf.mxu0
        %v543 = vadd.f32 0.0, %v542
        %v544 = vpop.f32.mrf.mxu0
        %545 = vmatprep.mubr.f32.mxu0 0.0
        %546 = vmatmul.mubr.f32.gmra.mxu0 %v346
        %v547 = vpop.f32.mrf.mxu0
        %v548 = vadd.f32 0.0, %v547
        %v549 = vpop.f32.mrf.mxu0
        %550 = vmatprep.mubr.f32.mxu0 0.0
        %551 = vmatmul.mubr.f32.gmra.mxu0 %v349
        %v552 = vpop.f32.mrf.mxu0
        %v553 = vadd.f32 0.0, %v552
        %v554 = vpop.f32.mrf.mxu0
        %555 = vmatprep.mubr.f32.mxu0 0.0
        %556 = vmatmul.mubr.f32.gmra.mxu0 %v352
        %v557 = vpop.f32.mrf.mxu0
        %v558 = vadd.f32 0.0, %v557
        %v559 = vpop.f32.mrf.mxu0
        %560 = vmatprep.mubr.f32.mxu0 0.0
        %561 = vmatmul.mubr.f32.gmra.mxu0 %v355
        %v562 = vpop.f32.mrf.mxu0
        %v563 = vadd.f32 0.0, %v562
        %v564 = vpop.f32.mrf.mxu0
        %565 = vmatprep.mubr.f32.mxu0 0.0
        %566 = vmatmul.mubr.f32.gmra.mxu0 %v358
        %v567 = vpop.f32.mrf.mxu0
        %v568 = vadd.f32 0.0, %v567
        %v569 = vpop.f32.mrf.mxu0
        %570 = vmatprep.mubr.f32.mxu0 0.0
        %571 = vmatmul.mubr.f32.gmra.mxu0 %v361
        %v572 = vpop.f32.mrf.mxu0
        %v573 = vadd.f32 0.0, %v572
        %v574 = vpop.f32.mrf.mxu0
        %575 = vmatprep.mubr.f32.mxu0 0.0
        %576 = vmatmul.mubr.f32.gmra.mxu0 %v364
        %v577 = vpop.f32.mrf.mxu0
        %v578 = vadd.f32 0.0, %v577
        %v579 = vpop.f32.mrf.mxu0
        %580 = vmatprep.mubr.f32.mxu0 0.0
        %581 = vmatmul.mubr.f32.gmra.mxu0 %v367
        %v582 = vpop.f32.mrf.mxu0
        %v583 = vadd.f32 0.0, %v582
        %v584 = vpop.f32.mrf.mxu0
        %585 = vmatprep.mubr.f32.mxu0 0.0
        %586 = vmatmul.mubr.f32.gmra.mxu0 %v370
        %v587 = vpop.f32.mrf.mxu0
        %v588 = vadd.f32 0.0, %v587
        %v589 = vpop.f32.mrf.mxu0
        %590 = vmatprep.mubr.f32.mxu0 0.0
        %591 = vmatmul.mubr.f32.gmra.mxu0 %v373
        %v592 = vpop.f32.mrf.mxu0
        %v593 = vadd.f32 0.0, %v592
        %v594 = vpop.f32.mrf.mxu0
        %595 = vmatprep.mubr.f32.mxu0 0.0
        %596 = vmatmul.mubr.f32.gmra.mxu0 %v376
        %v597 = vpop.f32.mrf.mxu0
        %v598 = vadd.f32 0.0, %v597
        %v599 = vpop.f32.mrf.mxu0
        %600 = vmatprep.mubr.f32.mxu0 0.0
        %601 = vmatmul.mubr.f32.gmra.mxu0 %v379
        %v602 = vpop.f32.mrf.mxu0
        %v603 = vadd.f32 0.0, %v602
        %v604 = vpop.f32.mrf.mxu0
        %605 = vmatprep.mubr.f32.mxu0 0.0
        %606 = vmatmul.mubr.f32.gmra.mxu0 %v382
        %v607 = vpop.f32.mrf.mxu0
        %v608 = vadd.f32 0.0, %v607
        %v609 = vpop.f32.mrf.mxu0
        %610 = vmatprep.mubr.f32.mxu0 0.0
        %611 = vmatmul.mubr.f32.gmra.mxu0 %v385
        %v612 = vpop.f32.mrf.mxu0
        %v613 = vadd.f32 0.0, %v612
        %v614 = vpop.f32.mrf.mxu0
        %615 = vdwg.mxu0
        %v617 = vsel %vm290, %v223, 0
        %v620 = vsel %vm290, %v224, 0
        %v623 = vsel %vm290, %v225, 0
        %v626 = vsel %vm290, %v226, 0
        %v629 = vsel %vm290, %v227, 0
        %v632 = vsel %vm290, %v228, 0
        %v635 = vsel %vm290, %v229, 0
        %v638 = vsel %vm290, %v230, 0
        %v641 = vsel %vm290, %v231, 0
        %v644 = vsel %vm290, %v232, 0
        %v647 = vsel %vm290, %v233, 0
        %v650 = vsel %vm290, %v234, 0
        %v653 = vsel %vm290, %v235, 0
        %v656 = vsel %vm290, %v236, 0
        %v659 = vsel %vm290, %v237, 0
        %v662 = vsel %vm290, %v238, 0
        %v665 = vsel %vm290, %v239, 0
        %v668 = vsel %vm290, %v240, 0
        %v671 = vsel %vm290, %v241, 0
        %v674 = vsel %vm290, %v242, 0
        %v677 = vsel %vm290, %v243, 0
        %v680 = vsel %vm290, %v244, 0
        %v683 = vsel %vm290, %v245, 0
        %v686 = vsel %vm290, %v246, 0
        %v689 = vsel %vm290, %v247, 0
        %v692 = vsel %vm290, %v248, 0
        %v695 = vsel %vm290, %v249, 0
        %v698 = vsel %vm290, %v250, 0
        %v701 = vsel %vm290, %v251, 0
        %v704 = vsel %vm290, %v252, 0
        %v707 = vsel %vm290, %v253, 0
        %v710 = vsel %vm290, %v254, 0
        %v713 = vsel %vm387, %v255, 0
        %715 = vmatprep.subr.mxu0 0.0
        %716 = vmatpush1.msra.mxu0 0.0
        %717 = vmatprep.subr.mxu0 0.0
        %718 = vmatpush1.msra.mxu0 0.0
        %719 = vmatprep.subr.mxu0 0.0
        %720 = vmatpush1.msra.mxu0 0.0
        %721 = vmatprep.subr.mxu0 0.0
        %722 = vmatpush1.msra.mxu0 0.0
        %723 = vmatprep.subr.mxu0 0.0
        %724 = vmatpush1.msra.mxu0 0.0
        %725 = vmatprep.subr.mxu0 0.0
        %726 = vmatpush1.msra.mxu0 0.0
        %727 = vmatprep.subr.mxu0 0.0
        %728 = vmatpush1.msra.mxu0 0.0
        %729 = vmatprep.subr.mxu0 0.0
        %730 = vmatpush1.msra.mxu0 0.0
        %731 = vmatprep.subr.mxu0 0.0
        %732 = vmatpush1.msra.mxu0 0.0
        %733 = vmatprep.subr.mxu0 0.0
        %734 = vmatpush1.msra.mxu0 0.0
        %735 = vmatprep.subr.mxu0 0.0
        %736 = vmatpush1.msra.mxu0 0.0
        %737 = vmatprep.subr.mxu0 0.0
        %738 = vmatpush1.msra.mxu0 0.0
        %739 = vmatprep.subr.mxu0 0.0
        %740 = vmatpush1.msra.mxu0 0.0
        %741 = vmatprep.subr.mxu0 0.0
        %742 = vmatpush1.msra.mxu0 0.0
        %743 = vmatprep.subr.mxu0 0.0
        %744 = vmatpush1.msra.mxu0 0.0
        %745 = vmatprep.subr.mxu0 0.0
        %746 = vmatpush1.msra.mxu0 %v713
        %747 = vmatprep.subr.mxu0 0.0
        %748 = vmatpush2.msra.mxu0 0.0
        %749 = vmatprep.subr.mxu0 0.0
        %750 = vmatpush2.msra.mxu0 0.0
        %751 = vmatprep.subr.mxu0 0.0
        %752 = vmatpush2.msra.mxu0 0.0
        %753 = vmatprep.subr.mxu0 0.0
        %754 = vmatpush2.msra.mxu0 0.0
        %755 = vmatprep.subr.mxu0 0.0
        %756 = vmatpush2.msra.mxu0 0.0
        %757 = vmatprep.subr.mxu0 0.0
        %758 = vmatpush2.msra.mxu0 0.0
        %759 = vmatprep.subr.mxu0 0.0
        %760 = vmatpush2.msra.mxu0 0.0
        %761 = vmatprep.subr.mxu0 0.0
        %762 = vmatpush2.msra.mxu0 0.0
        %763 = vmatprep.subr.mxu0 0.0
        %764 = vmatpush2.msra.mxu0 0.0
        %765 = vmatprep.subr.mxu0 0.0
        %766 = vmatpush2.msra.mxu0 0.0
        %767 = vmatprep.subr.mxu0 0.0
        %768 = vmatpush2.msra.mxu0 0.0
        %769 = vmatprep.subr.mxu0 0.0
        %770 = vmatpush2.msra.mxu0 0.0
        %771 = vmatprep.subr.mxu0 0.0
        %772 = vmatpush2.msra.mxu0 0.0
        %773 = vmatprep.subr.mxu0 0.0
        %774 = vmatpush2.msra.mxu0 0.0
        %775 = vmatprep.subr.mxu0 0.0
        %776 = vmatpush2.msra.mxu0 0.0
        %777 = vmatprep.subr.mxu0 0.0
        %778 = vmatpush2.msra.mxu0 0.0
        %779 = vmatprep.mubr.f32.mxu0 0.0
        %780 = vmatmul.mubr.f32.gmra.mxu0 %v617
        %v781 = vpop.f32.mrf.mxu0
        %v782 = vadd.f32 %v458, %v781
        %v783 = vpop.f32.mrf.mxu0
        %784 = vmatprep.mubr.f32.mxu0 0.0
        %785 = vmatmul.mubr.f32.gmra.mxu0 %v620
        %v786 = vpop.f32.mrf.mxu0
        %v787 = vadd.f32 %v463, %v786
        %v788 = vpop.f32.mrf.mxu0
        %789 = vmatprep.mubr.f32.mxu0 0.0
        %790 = vmatmul.mubr.f32.gmra.mxu0 %v623
        %v791 = vpop.f32.mrf.mxu0
        %v792 = vadd.f32 %v468, %v791
        %v793 = vpop.f32.mrf.mxu0
        %794 = vmatprep.mubr.f32.mxu0 0.0
        %795 = vmatmul.mubr.f32.gmra.mxu0 %v626
        %v796 = vpop.f32.mrf.mxu0
        %v797 = vadd.f32 %v473, %v796
        %v798 = vpop.f32.mrf.mxu0
        %799 = vmatprep.mubr.f32.mxu0 0.0
        %800 = vmatmul.mubr.f32.gmra.mxu0 %v629
        %v801 = vpop.f32.mrf.mxu0
        %v802 = vadd.f32 %v478, %v801
        %v803 = vpop.f32.mrf.mxu0
        %804 = vmatprep.mubr.f32.mxu0 0.0
        %805 = vmatmul.mubr.f32.gmra.mxu0 %v632
        %v806 = vpop.f32.mrf.mxu0
        %v807 = vadd.f32 %v483, %v806
        %v808 = vpop.f32.mrf.mxu0
        %809 = vmatprep.mubr.f32.mxu0 0.0
        %810 = vmatmul.mubr.f32.gmra.mxu0 %v635
        %v811 = vpop.f32.mrf.mxu0
        %v812 = vadd.f32 %v488, %v811
        %v813 = vpop.f32.mrf.mxu0
        %814 = vmatprep.mubr.f32.mxu0 0.0
        %815 = vmatmul.mubr.f32.gmra.mxu0 %v638
        %v816 = vpop.f32.mrf.mxu0
        %v817 = vadd.f32 %v493, %v816
        %v818 = vpop.f32.mrf.mxu0
        %819 = vmatprep.mubr.f32.mxu0 0.0
        %820 = vmatmul.mubr.f32.gmra.mxu0 %v641
        %v821 = vpop.f32.mrf.mxu0
        %v822 = vadd.f32 %v498, %v821
        %v823 = vpop.f32.mrf.mxu0
        %824 = vmatprep.mubr.f32.mxu0 0.0
        %825 = vmatmul.mubr.f32.gmra.mxu0 %v644
        %v826 = vpop.f32.mrf.mxu0
        %v827 = vadd.f32 %v503, %v826
        %v828 = vpop.f32.mrf.mxu0
        %829 = vmatprep.mubr.f32.mxu0 0.0
        %830 = vmatmul.mubr.f32.gmra.mxu0 %v647
        %v831 = vpop.f32.mrf.mxu0
        %v832 = vadd.f32 %v508, %v831
        %v833 = vpop.f32.mrf.mxu0
        %834 = vmatprep.mubr.f32.mxu0 0.0
        %835 = vmatmul.mubr.f32.gmra.mxu0 %v650
        %v836 = vpop.f32.mrf.mxu0
        %v837 = vadd.f32 %v513, %v836
        %v838 = vpop.f32.mrf.mxu0
        %839 = vmatprep.mubr.f32.mxu0 0.0
        %840 = vmatmul.mubr.f32.gmra.mxu0 %v653
        %v841 = vpop.f32.mrf.mxu0
        %v842 = vadd.f32 %v518, %v841
        %v843 = vpop.f32.mrf.mxu0
        %844 = vmatprep.mubr.f32.mxu0 0.0
        %845 = vmatmul.mubr.f32.gmra.mxu0 %v656
        %v846 = vpop.f32.mrf.mxu0
        %v847 = vadd.f32 %v523, %v846
        %v848 = vpop.f32.mrf.mxu0
        %849 = vmatprep.mubr.f32.mxu0 0.0
        %850 = vmatmul.mubr.f32.gmra.mxu0 %v659
        %v851 = vpop.f32.mrf.mxu0
        %v852 = vadd.f32 %v528, %v851
        %v853 = vpop.f32.mrf.mxu0
        %854 = vmatprep.mubr.f32.mxu0 0.0
        %855 = vmatmul.mubr.f32.gmra.mxu0 %v662
        %v856 = vpop.f32.mrf.mxu0
        %v857 = vadd.f32 %v533, %v856
        %v858 = vpop.f32.mrf.mxu0
        %859 = vmatprep.mubr.f32.mxu0 0.0
        %860 = vmatmul.mubr.f32.gmra.mxu0 %v665
        %v861 = vpop.f32.mrf.mxu0
        %v862 = vadd.f32 %v538, %v861
        %v863 = vpop.f32.mrf.mxu0
        %864 = vmatprep.mubr.f32.mxu0 0.0
        %865 = vmatmul.mubr.f32.gmra.mxu0 %v668
        %v866 = vpop.f32.mrf.mxu0
        %v867 = vadd.f32 %v543, %v866
        %v868 = vpop.f32.mrf.mxu0
        %869 = vmatprep.mubr.f32.mxu0 0.0
        %870 = vmatmul.mubr.f32.gmra.mxu0 %v671
        %v871 = vpop.f32.mrf.mxu0
        %v872 = vadd.f32 %v548, %v871
        %v873 = vpop.f32.mrf.mxu0
        %874 = vmatprep.mubr.f32.mxu0 0.0
        %875 = vmatmul.mubr.f32.gmra.mxu0 %v674
        %v876 = vpop.f32.mrf.mxu0
        %v877 = vadd.f32 %v553, %v876
        %v878 = vpop.f32.mrf.mxu0
        %879 = vmatprep.mubr.f32.mxu0 0.0
        %880 = vmatmul.mubr.f32.gmra.mxu0 %v677
        %v881 = vpop.f32.mrf.mxu0
        %v882 = vadd.f32 %v558, %v881
        %v883 = vpop.f32.mrf.mxu0
        %884 = vmatprep.mubr.f32.mxu0 0.0
        %885 = vmatmul.mubr.f32.gmra.mxu0 %v680
        %v886 = vpop.f32.mrf.mxu0
        %v887 = vadd.f32 %v563, %v886
        %v888 = vpop.f32.mrf.mxu0
        %889 = vmatprep.mubr.f32.mxu0 0.0
        %890 = vmatmul.mubr.f32.gmra.mxu0 %v683
        %v891 = vpop.f32.mrf.mxu0
        %v892 = vadd.f32 %v568, %v891
        %v893 = vpop.f32.mrf.mxu0
        %894 = vmatprep.mubr.f32.mxu0 0.0
        %895 = vmatmul.mubr.f32.gmra.mxu0 %v686
        %v896 = vpop.f32.mrf.mxu0
        %v897 = vadd.f32 %v573, %v896
        %v898 = vpop.f32.mrf.mxu0
        %899 = vmatprep.mubr.f32.mxu0 0.0
        %900 = vmatmul.mubr.f32.gmra.mxu0 %v689
        %v901 = vpop.f32.mrf.mxu0
        %v902 = vadd.f32 %v578, %v901
        %v903 = vpop.f32.mrf.mxu0
        %904 = vmatprep.mubr.f32.mxu0 0.0
        %905 = vmatmul.mubr.f32.gmra.mxu0 %v692
        %v906 = vpop.f32.mrf.mxu0
        %v907 = vadd.f32 %v583, %v906
        %v908 = vpop.f32.mrf.mxu0
        %909 = vmatprep.mubr.f32.mxu0 0.0
        %910 = vmatmul.mubr.f32.gmra.mxu0 %v695
        %v911 = vpop.f32.mrf.mxu0
        %v912 = vadd.f32 %v588, %v911
        %v913 = vpop.f32.mrf.mxu0
        %914 = vmatprep.mubr.f32.mxu0 0.0
        %915 = vmatmul.mubr.f32.gmra.mxu0 %v698
        %v916 = vpop.f32.mrf.mxu0
        %v917 = vadd.f32 %v593, %v916
        %v918 = vpop.f32.mrf.mxu0
        %919 = vmatprep.mubr.f32.mxu0 0.0
        %920 = vmatmul.mubr.f32.gmra.mxu0 %v701
        %v921 = vpop.f32.mrf.mxu0
        %v922 = vadd.f32 %v598, %v921
        %v923 = vpop.f32.mrf.mxu0
        %924 = vmatprep.mubr.f32.mxu0 0.0
        %925 = vmatmul.mubr.f32.gmra.mxu0 %v704
        %v926 = vpop.f32.mrf.mxu0
        %v927 = vadd.f32 %v603, %v926
        %v928 = vpop.f32.mrf.mxu0
        %929 = vmatprep.mubr.f32.mxu0 0.0
        %930 = vmatmul.mubr.f32.gmra.mxu0 %v707
        %v931 = vpop.f32.mrf.mxu0
        %v932 = vadd.f32 %v608, %v931
        %v933 = vpop.f32.mrf.mxu0
        %934 = vmatprep.mubr.f32.mxu0 0.0
        %935 = vmatmul.mubr.f32.gmra.mxu0 %v710
        %v936 = vpop.f32.mrf.mxu0
        %v937 = vadd.f32 %v613, %v936
        %v938 = vpop.f32.mrf.mxu0
        %939 = vdwg.mxu0
        %v940 = vld [vmem:[%s222 + $0x2] sm:$0xff]
        %v941 = vld [vmem:[%s222 + $0xa] sm:$0xff]
        %v942 = vld [vmem:[%s222 + $0x1a] sm:$0xff]
        %v943 = vld [vmem:[%s222 + $0x22] sm:$0xff]
        %v944 = vld [vmem:[%s222 + $0x32] sm:$0xff]
        %v945 = vld [vmem:[%s222 + $0x3a] sm:$0xff]
        %v946 = vld [vmem:[%s222 + $0x4a] sm:$0xff]
        %v947 = vld [vmem:[%s222 + $0x52] sm:$0xff]
        %v948 = vld [vmem:[%s222 + $0x62] sm:$0xff]
        %v949 = vld [vmem:[%s222 + $0x6a] sm:$0xff]
        %v950 = vld [vmem:[%s222 + $0x7a] sm:$0xff]
        %v951 = vld [vmem:[%s222 + $0x82] sm:$0xff]
        %v952 = vld [vmem:[%s222 + $0x92] sm:$0xff]
        %v953 = vld [vmem:[%s222 + $0x9a] sm:$0xff]
        %v954 = vld [vmem:[%s222 + $0xaa] sm:$0xff]
        %v955 = vld [vmem:[%s222 + $0xb2] sm:$0xff]
        %v956 = vld [vmem:[%s222 + $0xc2] sm:$0xff]
        %v957 = vld [vmem:[%s222 + $0xca] sm:$0xff]
        %v958 = vld [vmem:[%s222 + $0xda] sm:$0xff]
        %v959 = vld [vmem:[%s222 + $0xe2] sm:$0xff]
        %v960 = vld [vmem:[%s222 + $0xf2] sm:$0xff]
        %v961 = vld [vmem:[%s222 + $0xfa] sm:$0xff]
        %v962 = vld [vmem:[%s222 + $0x10a] sm:$0xff]
        %v963 = vld [vmem:[%s222 + $0x112] sm:$0xff]
        %v964 = vld [vmem:[%s222 + $0x122] sm:$0xff]
        %v965 = vld [vmem:[%s222 + $0x12a] sm:$0xff]
        %v966 = vld [vmem:[%s222 + $0x13a] sm:$0xff]
        %v967 = vld [vmem:[%s222 + $0x142] sm:$0xff]
        %v968 = vld [vmem:[%s222 + $0x152] sm:$0xff]
        %v969 = vld [vmem:[%s222 + $0x15a] sm:$0xff]
        %v970 = vld [vmem:[%s222 + $0x16a] sm:$0xff]
        %v971 = vld [vmem:[%s222 + $0x172] sm:$0xff]
        %s972 = scalar_lea.vmem %s1, 8
        %v973 = vld [vmem:[%s972] sm:$0xf]
        %v975 = vsel %vm290, %v940, 0
        %v978 = vsel %vm290, %v941, 0
        %v981 = vsel %vm290, %v942, 0
        %v984 = vsel %vm290, %v943, 0
        %v987 = vsel %vm290, %v944, 0
        %v990 = vsel %vm290, %v945, 0
        %v993 = vsel %vm290, %v946, 0
        %v996 = vsel %vm290, %v947, 0
        %v999 = vsel %vm290, %v948, 0
        %v1002 = vsel %vm290, %v949, 0
        %v1005 = vsel %vm290, %v950, 0
        %v1008 = vsel %vm290, %v951, 0
        %v1011 = vsel %vm290, %v952, 0
        %v1014 = vsel %vm290, %v953, 0
        %v1017 = vsel %vm290, %v954, 0
        %v1020 = vsel %vm290, %v955, 0
        %v1023 = vsel %vm290, %v956, 0
        %v1026 = vsel %vm290, %v957, 0
        %v1029 = vsel %vm290, %v958, 0
        %v1032 = vsel %vm290, %v959, 0
        %v1035 = vsel %vm290, %v960, 0
        %v1038 = vsel %vm290, %v961, 0
        %v1041 = vsel %vm290, %v962, 0
        %v1044 = vsel %vm290, %v963, 0
        %v1047 = vsel %vm290, %v964, 0
        %v1050 = vsel %vm290, %v965, 0
        %v1053 = vsel %vm290, %v966, 0
        %v1056 = vsel %vm290, %v967, 0
        %v1059 = vsel %vm290, %v968, 0
        %v1062 = vsel %vm290, %v969, 0
        %v1065 = vsel %vm290, %v970, 0
        %v1068 = vsel %vm290, %v971, 0
        %v1071 = vsel %vm387, %v973, 0
        %1073 = vmatprep.subr.mxu0 0.0
        %1074 = vmatpush1.msra.mxu0 0.0
        %1075 = vmatprep.subr.mxu0 0.0
        %1076 = vmatpush1.msra.mxu0 0.0
        %1077 = vmatprep.subr.mxu0 0.0
        %1078 = vmatpush1.msra.mxu0 0.0
        %1079 = vmatprep.subr.mxu0 0.0
        %1080 = vmatpush1.msra.mxu0 0.0
        %1081 = vmatprep.subr.mxu0 0.0
        %1082 = vmatpush1.msra.mxu0 0.0
        %1083 = vmatprep.subr.mxu0 0.0
        %1084 = vmatpush1.msra.mxu0 0.0
        %1085 = vmatprep.subr.mxu0 0.0
        %1086 = vmatpush1.msra.mxu0 0.0
        %1087 = vmatprep.subr.mxu0 0.0
        %1088 = vmatpush1.msra.mxu0 0.0
        %1089 = vmatprep.subr.mxu0 0.0
        %1090 = vmatpush1.msra.mxu0 0.0
        %1091 = vmatprep.subr.mxu0 0.0
        %1092 = vmatpush1.msra.mxu0 0.0
        %1093 = vmatprep.subr.mxu0 0.0
        %1094 = vmatpush1.msra.mxu0 0.0
        %1095 = vmatprep.subr.mxu0 0.0
        %1096 = vmatpush1.msra.mxu0 0.0
        %1097 = vmatprep.subr.mxu0 0.0
        %1098 = vmatpush1.msra.mxu0 0.0
        %1099 = vmatprep.subr.mxu0 0.0
        %1100 = vmatpush1.msra.mxu0 0.0
        %1101 = vmatprep.subr.mxu0 0.0
        %1102 = vmatpush1.msra.mxu0 0.0
        %1103 = vmatprep.subr.mxu0 0.0
        %1104 = vmatpush1.msra.mxu0 %v1071
        %1105 = vmatprep.subr.mxu0 0.0
        %1106 = vmatpush2.msra.mxu0 0.0
        %1107 = vmatprep.subr.mxu0 0.0
        %1108 = vmatpush2.msra.mxu0 0.0
        %1109 = vmatprep.subr.mxu0 0.0
        %1110 = vmatpush2.msra.mxu0 0.0
        %1111 = vmatprep.subr.mxu0 0.0
        %1112 = vmatpush2.msra.mxu0 0.0
        %1113 = vmatprep.subr.mxu0 0.0
        %1114 = vmatpush2.msra.mxu0 0.0
        %1115 = vmatprep.subr.mxu0 0.0
        %1116 = vmatpush2.msra.mxu0 0.0
        %1117 = vmatprep.subr.mxu0 0.0
        %1118 = vmatpush2.msra.mxu0 0.0
        %1119 = vmatprep.subr.mxu0 0.0
        %1120 = vmatpush2.msra.mxu0 0.0
        %1121 = vmatprep.subr.mxu0 0.0
        %1122 = vmatpush2.msra.mxu0 0.0
        %1123 = vmatprep.subr.mxu0 0.0
        %1124 = vmatpush2.msra.mxu0 0.0
        %1125 = vmatprep.subr.mxu0 0.0
        %1126 = vmatpush2.msra.mxu0 0.0
        %1127 = vmatprep.subr.mxu0 0.0
        %1128 = vmatpush2.msra.mxu0 0.0
        %1129 = vmatprep.subr.mxu0 0.0
        %1130 = vmatpush2.msra.mxu0 0.0
        %1131 = vmatprep.subr.mxu0 0.0
        %1132 = vmatpush2.msra.mxu0 0.0
        %1133 = vmatprep.subr.mxu0 0.0
        %1134 = vmatpush2.msra.mxu0 0.0
        %1135 = vmatprep.subr.mxu0 0.0
        %1136 = vmatpush2.msra.mxu0 0.0
        %1137 = vmatprep.mubr.f32.mxu0 0.0
        %1138 = vmatmul.mubr.f32.gmra.mxu0 %v975
        %v1139 = vpop.f32.mrf.mxu0
        %v1140 = vadd.f32 0.0, %v1139
        %v1141 = vpop.f32.mrf.mxu0
        %1142 = vmatprep.mubr.f32.mxu0 0.0
        %1143 = vmatmul.mubr.f32.gmra.mxu0 %v978
        %v1144 = vpop.f32.mrf.mxu0
        %v1145 = vadd.f32 0.0, %v1144
        %v1146 = vpop.f32.mrf.mxu0
        %1147 = vmatprep.mubr.f32.mxu0 0.0
        %1148 = vmatmul.mubr.f32.gmra.mxu0 %v981
        %v1149 = vpop.f32.mrf.mxu0
        %v1150 = vadd.f32 0.0, %v1149
        %v1151 = vpop.f32.mrf.mxu0
        %1152 = vmatprep.mubr.f32.mxu0 0.0
        %1153 = vmatmul.mubr.f32.gmra.mxu0 %v984
        %v1154 = vpop.f32.mrf.mxu0
        %v1155 = vadd.f32 0.0, %v1154
        %v1156 = vpop.f32.mrf.mxu0
        %1157 = vmatprep.mubr.f32.mxu0 0.0
        %1158 = vmatmul.mubr.f32.gmra.mxu0 %v987
        %v1159 = vpop.f32.mrf.mxu0
        %v1160 = vadd.f32 0.0, %v1159
        %v1161 = vpop.f32.mrf.mxu0
        %1162 = vmatprep.mubr.f32.mxu0 0.0
        %1163 = vmatmul.mubr.f32.gmra.mxu0 %v990
        %v1164 = vpop.f32.mrf.mxu0
        %v1165 = vadd.f32 0.0, %v1164
        %v1166 = vpop.f32.mrf.mxu0
        %1167 = vmatprep.mubr.f32.mxu0 0.0
        %1168 = vmatmul.mubr.f32.gmra.mxu0 %v993
        %v1169 = vpop.f32.mrf.mxu0
        %v1170 = vadd.f32 0.0, %v1169
        %v1171 = vpop.f32.mrf.mxu0
        %1172 = vmatprep.mubr.f32.mxu0 0.0
        %1173 = vmatmul.mubr.f32.gmra.mxu0 %v996
        %v1174 = vpop.f32.mrf.mxu0
        %v1175 = vadd.f32 0.0, %v1174
        %v1176 = vpop.f32.mrf.mxu0
        %1177 = vmatprep.mubr.f32.mxu0 0.0
        %1178 = vmatmul.mubr.f32.gmra.mxu0 %v999
        %v1179 = vpop.f32.mrf.mxu0
        %v1180 = vadd.f32 0.0, %v1179
        %v1181 = vpop.f32.mrf.mxu0
        %1182 = vmatprep.mubr.f32.mxu0 0.0
        %1183 = vmatmul.mubr.f32.gmra.mxu0 %v1002
        %v1184 = vpop.f32.mrf.mxu0
        %v1185 = vadd.f32 0.0, %v1184
        %v1186 = vpop.f32.mrf.mxu0
        %1187 = vmatprep.mubr.f32.mxu0 0.0
        %1188 = vmatmul.mubr.f32.gmra.mxu0 %v1005
        %v1189 = vpop.f32.mrf.mxu0
        %v1190 = vadd.f32 0.0, %v1189
        %v1191 = vpop.f32.mrf.mxu0
        %1192 = vmatprep.mubr.f32.mxu0 0.0
        %1193 = vmatmul.mubr.f32.gmra.mxu0 %v1008
        %v1194 = vpop.f32.mrf.mxu0
        %v1195 = vadd.f32 0.0, %v1194
        %v1196 = vpop.f32.mrf.mxu0
        %1197 = vmatprep.mubr.f32.mxu0 0.0
        %1198 = vmatmul.mubr.f32.gmra.mxu0 %v1011
        %v1199 = vpop.f32.mrf.mxu0
        %v1200 = vadd.f32 0.0, %v1199
        %v1201 = vpop.f32.mrf.mxu0
        %1202 = vmatprep.mubr.f32.mxu0 0.0
        %1203 = vmatmul.mubr.f32.gmra.mxu0 %v1014
        %v1204 = vpop.f32.mrf.mxu0
        %v1205 = vadd.f32 0.0, %v1204
        %v1206 = vpop.f32.mrf.mxu0
        %1207 = vmatprep.mubr.f32.mxu0 0.0
        %1208 = vmatmul.mubr.f32.gmra.mxu0 %v1017
        %v1209 = vpop.f32.mrf.mxu0
        %v1210 = vadd.f32 0.0, %v1209
        %v1211 = vpop.f32.mrf.mxu0
        %1212 = vmatprep.mubr.f32.mxu0 0.0
        %1213 = vmatmul.mubr.f32.gmra.mxu0 %v1020
        %v1214 = vpop.f32.mrf.mxu0
        %v1215 = vadd.f32 0.0, %v1214
        %v1216 = vpop.f32.mrf.mxu0
        %1217 = vmatprep.mubr.f32.mxu0 0.0
        %1218 = vmatmul.mubr.f32.gmra.mxu0 %v1023
        %v1219 = vpop.f32.mrf.mxu0
        %v1220 = vadd.f32 0.0, %v1219
        %v1221 = vpop.f32.mrf.mxu0
        %1222 = vmatprep.mubr.f32.mxu0 0.0
        %1223 = vmatmul.mubr.f32.gmra.mxu0 %v1026
        %v1224 = vpop.f32.mrf.mxu0
        %v1225 = vadd.f32 0.0, %v1224
        %v1226 = vpop.f32.mrf.mxu0
        %1227 = vmatprep.mubr.f32.mxu0 0.0
        %1228 = vmatmul.mubr.f32.gmra.mxu0 %v1029
        %v1229 = vpop.f32.mrf.mxu0
        %v1230 = vadd.f32 0.0, %v1229
        %v1231 = vpop.f32.mrf.mxu0
        %1232 = vmatprep.mubr.f32.mxu0 0.0
        %1233 = vmatmul.mubr.f32.gmra.mxu0 %v1032
        %v1234 = vpop.f32.mrf.mxu0
        %v1235 = vadd.f32 0.0, %v1234
        %v1236 = vpop.f32.mrf.mxu0
        %1237 = vmatprep.mubr.f32.mxu0 0.0
        %1238 = vmatmul.mubr.f32.gmra.mxu0 %v1035
        %v1239 = vpop.f32.mrf.mxu0
        %v1240 = vadd.f32 0.0, %v1239
        %v1241 = vpop.f32.mrf.mxu0
        %1242 = vmatprep.mubr.f32.mxu0 0.0
        %1243 = vmatmul.mubr.f32.gmra.mxu0 %v1038
        %v1244 = vpop.f32.mrf.mxu0
        %v1245 = vadd.f32 0.0, %v1244
        %v1246 = vpop.f32.mrf.mxu0
        %1247 = vmatprep.mubr.f32.mxu0 0.0
        %1248 = vmatmul.mubr.f32.gmra.mxu0 %v1041
        %v1249 = vpop.f32.mrf.mxu0
        %v1250 = vadd.f32 0.0, %v1249
        %v1251 = vpop.f32.mrf.mxu0
        %1252 = vmatprep.mubr.f32.mxu0 0.0
        %1253 = vmatmul.mubr.f32.gmra.mxu0 %v1044
        %v1254 = vpop.f32.mrf.mxu0
        %v1255 = vadd.f32 0.0, %v1254
        %v1256 = vpop.f32.mrf.mxu0
        %1257 = vmatprep.mubr.f32.mxu0 0.0
        %1258 = vmatmul.mubr.f32.gmra.mxu0 %v1047
        %v1259 = vpop.f32.mrf.mxu0
        %v1260 = vadd.f32 0.0, %v1259
        %v1261 = vpop.f32.mrf.mxu0
        %1262 = vmatprep.mubr.f32.mxu0 0.0
        %1263 = vmatmul.mubr.f32.gmra.mxu0 %v1050
        %v1264 = vpop.f32.mrf.mxu0
        %v1265 = vadd.f32 0.0, %v1264
        %v1266 = vpop.f32.mrf.mxu0
        %1267 = vmatprep.mubr.f32.mxu0 0.0
        %1268 = vmatmul.mubr.f32.gmra.mxu0 %v1053
        %v1269 = vpop.f32.mrf.mxu0
        %v1270 = vadd.f32 0.0, %v1269
        %v1271 = vpop.f32.mrf.mxu0
        %1272 = vmatprep.mubr.f32.mxu0 0.0
        %1273 = vmatmul.mubr.f32.gmra.mxu0 %v1056
        %v1274 = vpop.f32.mrf.mxu0
        %v1275 = vadd.f32 0.0, %v1274
        %v1276 = vpop.f32.mrf.mxu0
        %1277 = vmatprep.mubr.f32.mxu0 0.0
        %1278 = vmatmul.mubr.f32.gmra.mxu0 %v1059
        %v1279 = vpop.f32.mrf.mxu0
        %v1280 = vadd.f32 0.0, %v1279
        %v1281 = vpop.f32.mrf.mxu0
        %1282 = vmatprep.mubr.f32.mxu0 0.0
        %1283 = vmatmul.mubr.f32.gmra.mxu0 %v1062
        %v1284 = vpop.f32.mrf.mxu0
        %v1285 = vadd.f32 0.0, %v1284
        %v1286 = vpop.f32.mrf.mxu0
        %1287 = vmatprep.mubr.f32.mxu0 0.0
        %1288 = vmatmul.mubr.f32.gmra.mxu0 %v1065
        %v1289 = vpop.f32.mrf.mxu0
        %v1290 = vadd.f32 0.0, %v1289
        %v1291 = vpop.f32.mrf.mxu0
        %1292 = vmatprep.mubr.f32.mxu0 0.0
        %1293 = vmatmul.mubr.f32.gmra.mxu0 %v1068
        %v1294 = vpop.f32.mrf.mxu0
        %v1295 = vadd.f32 0.0, %v1294
        %v1296 = vpop.f32.mrf.mxu0
        %1297 = vdwg.mxu0
        %v1298 = vadd.f32 %v782, %v1140
        %v1299 = vadd.f32 %v787, %v1145
        %v1300 = vadd.f32 %v792, %v1150
        %v1301 = vadd.f32 %v797, %v1155
        %v1302 = vadd.f32 %v802, %v1160
        %v1303 = vadd.f32 %v807, %v1165
        %v1304 = vadd.f32 %v812, %v1170
        %v1305 = vadd.f32 %v817, %v1175
        %v1306 = vadd.f32 %v822, %v1180
        %v1307 = vadd.f32 %v827, %v1185
        %v1308 = vadd.f32 %v832, %v1190
        %v1309 = vadd.f32 %v837, %v1195
        %v1310 = vadd.f32 %v842, %v1200
        %v1311 = vadd.f32 %v847, %v1205
        %v1312 = vadd.f32 %v852, %v1210
        %v1313 = vadd.f32 %v857, %v1215
        %v1314 = vadd.f32 %v862, %v1220
        %v1315 = vadd.f32 %v867, %v1225
        %v1316 = vadd.f32 %v872, %v1230
        %v1317 = vadd.f32 %v877, %v1235
        %v1318 = vadd.f32 %v882, %v1240
        %v1319 = vadd.f32 %v887, %v1245
        %v1320 = vadd.f32 %v892, %v1250
        %v1321 = vadd.f32 %v897, %v1255
        %v1322 = vadd.f32 %v902, %v1260
        %v1323 = vadd.f32 %v907, %v1265
        %v1324 = vadd.f32 %v912, %v1270
        %v1325 = vadd.f32 %v917, %v1275
        %v1326 = vadd.f32 %v922, %v1280
        %v1327 = vadd.f32 %v927, %v1285
        %v1328 = vadd.f32 %v932, %v1290
        %v1329 = vadd.f32 %v937, %v1295
        %s1330 = scalar_lea.vmem %s222, 24
        %v1331 = vld [vmem:[%s1330] sm:$0xff]
        %v1332 = vld [vmem:[%s1330 + $0x8] sm:$0xff]
        %v1333 = vld [vmem:[%s1330 + $0x18] sm:$0xff]
        %v1334 = vld [vmem:[%s1330 + $0x20] sm:$0xff]
        %v1335 = vld [vmem:[%s1330 + $0x30] sm:$0xff]
        %v1336 = vld [vmem:[%s1330 + $0x38] sm:$0xff]
        %v1337 = vld [vmem:[%s1330 + $0x48] sm:$0xff]
        %v1338 = vld [vmem:[%s1330 + $0x50] sm:$0xff]
        %v1339 = vld [vmem:[%s1330 + $0x60] sm:$0xff]
        %v1340 = vld [vmem:[%s1330 + $0x68] sm:$0xff]
        %v1341 = vld [vmem:[%s1330 + $0x78] sm:$0xff]
        %v1342 = vld [vmem:[%s1330 + $0x80] sm:$0xff]
        %v1343 = vld [vmem:[%s1330 + $0x90] sm:$0xff]
        %v1344 = vld [vmem:[%s1330 + $0x98] sm:$0xff]
        %v1345 = vld [vmem:[%s1330 + $0xa8] sm:$0xff]
        %v1346 = vld [vmem:[%s1330 + $0xb0] sm:$0xff]
        %v1347 = vld [vmem:[%s1330 + $0xc0] sm:$0xff]
        %v1348 = vld [vmem:[%s1330 + $0xc8] sm:$0xff]
        %v1349 = vld [vmem:[%s1330 + $0xd8] sm:$0xff]
        %v1350 = vld [vmem:[%s1330 + $0xe0] sm:$0xff]
        %v1351 = vld [vmem:[%s1330 + $0xf0] sm:$0xff]
        %v1352 = vld [vmem:[%s1330 + $0xf8] sm:$0xff]
        %v1353 = vld [vmem:[%s1330 + $0x108] sm:$0xff]
        %v1354 = vld [vmem:[%s1330 + $0x110] sm:$0xff]
        %v1355 = vld [vmem:[%s1330 + $0x120] sm:$0xff]
        %v1356 = vld [vmem:[%s1330 + $0x128] sm:$0xff]
        %v1357 = vld [vmem:[%s1330 + $0x138] sm:$0xff]
        %v1358 = vld [vmem:[%s1330 + $0x140] sm:$0xff]
        %v1359 = vld [vmem:[%s1330 + $0x150] sm:$0xff]
        %v1360 = vld [vmem:[%s1330 + $0x158] sm:$0xff]
        %v1361 = vld [vmem:[%s1330 + $0x168] sm:$0xff]
        %v1362 = vld [vmem:[%s1330 + $0x170] sm:$0xff]
        %s1363 = scalar_lea.vmem %s1, 12
        %v1364 = vld [vmem:[%s1363] sm:$0xf]
        %v1366 = vsel %vm290, %v1331, 0
        %v1369 = vsel %vm290, %v1332, 0
        %v1372 = vsel %vm290, %v1333, 0
        %v1375 = vsel %vm290, %v1334, 0
        %v1378 = vsel %vm290, %v1335, 0
        %v1381 = vsel %vm290, %v1336, 0
        %v1384 = vsel %vm290, %v1337, 0
        %v1387 = vsel %vm290, %v1338, 0
        %v1390 = vsel %vm290, %v1339, 0
        %v1393 = vsel %vm290, %v1340, 0
        %v1396 = vsel %vm290, %v1341, 0
        %v1399 = vsel %vm290, %v1342, 0
        %v1402 = vsel %vm290, %v1343, 0
        %v1405 = vsel %vm290, %v1344, 0
        %v1408 = vsel %vm290, %v1345, 0
        %v1411 = vsel %vm290, %v1346, 0
        %v1414 = vsel %vm290, %v1347, 0
        %v1417 = vsel %vm290, %v1348, 0
        %v1420 = vsel %vm290, %v1349, 0
        %v1423 = vsel %vm290, %v1350, 0
        %v1426 = vsel %vm290, %v1351, 0
        %v1429 = vsel %vm290, %v1352, 0
        %v1432 = vsel %vm290, %v1353, 0
        %v1435 = vsel %vm290, %v1354, 0
        %v1438 = vsel %vm290, %v1355, 0
        %v1441 = vsel %vm290, %v1356, 0
        %v1444 = vsel %vm290, %v1357, 0
        %v1447 = vsel %vm290, %v1358, 0
        %v1450 = vsel %vm290, %v1359, 0
        %v1453 = vsel %vm290, %v1360, 0
        %v1456 = vsel %vm290, %v1361, 0
        %v1459 = vsel %vm290, %v1362, 0
        %v1462 = vsel %vm387, %v1364, 0
        %1464 = vmatprep.subr.mxu0 0.0
        %1465 = vmatpush1.msra.mxu0 0.0
        %1466 = vmatprep.subr.mxu0 0.0
        %1467 = vmatpush1.msra.mxu0 0.0
        %1468 = vmatprep.subr.mxu0 0.0
        %1469 = vmatpush1.msra.mxu0 0.0
        %1470 = vmatprep.subr.mxu0 0.0
        %1471 = vmatpush1.msra.mxu0 0.0
        %1472 = vmatprep.subr.mxu0 0.0
        %1473 = vmatpush1.msra.mxu0 0.0
        %1474 = vmatprep.subr.mxu0 0.0
        %1475 = vmatpush1.msra.mxu0 0.0
        %1476 = vmatprep.subr.mxu0 0.0
        %1477 = vmatpush1.msra.mxu0 0.0
        %1478 = vmatprep.subr.mxu0 0.0
        %1479 = vmatpush1.msra.mxu0 0.0
        %1480 = vmatprep.subr.mxu0 0.0
        %1481 = vmatpush1.msra.mxu0 0.0
        %1482 = vmatprep.subr.mxu0 0.0
        %1483 = vmatpush1.msra.mxu0 0.0
        %1484 = vmatprep.subr.mxu0 0.0
        %1485 = vmatpush1.msra.mxu0 0.0
        %1486 = vmatprep.subr.mxu0 0.0
        %1487 = vmatpush1.msra.mxu0 0.0
        %1488 = vmatprep.subr.mxu0 0.0
        %1489 = vmatpush1.msra.mxu0 0.0
        %1490 = vmatprep.subr.mxu0 0.0
        %1491 = vmatpush1.msra.mxu0 0.0
        %1492 = vmatprep.subr.mxu0 0.0
        %1493 = vmatpush1.msra.mxu0 0.0
        %1494 = vmatprep.subr.mxu0 0.0
        %1495 = vmatpush1.msra.mxu0 %v1462
        %1496 = vmatprep.subr.mxu0 0.0
        %1497 = vmatpush2.msra.mxu0 0.0
        %1498 = vmatprep.subr.mxu0 0.0
        %1499 = vmatpush2.msra.mxu0 0.0
        %1500 = vmatprep.subr.mxu0 0.0
        %1501 = vmatpush2.msra.mxu0 0.0
        %1502 = vmatprep.subr.mxu0 0.0
        %1503 = vmatpush2.msra.mxu0 0.0
        %1504 = vmatprep.subr.mxu0 0.0
        %1505 = vmatpush2.msra.mxu0 0.0
        %1506 = vmatprep.subr.mxu0 0.0
        %1507 = vmatpush2.msra.mxu0 0.0
        %1508 = vmatprep.subr.mxu0 0.0
        %1509 = vmatpush2.msra.mxu0 0.0
        %1510 = vmatprep.subr.mxu0 0.0
        %1511 = vmatpush2.msra.mxu0 0.0
        %1512 = vmatprep.subr.mxu0 0.0
        %1513 = vmatpush2.msra.mxu0 0.0
        %1514 = vmatprep.subr.mxu0 0.0
        %1515 = vmatpush2.msra.mxu0 0.0
        %1516 = vmatprep.subr.mxu0 0.0
        %1517 = vmatpush2.msra.mxu0 0.0
        %1518 = vmatprep.subr.mxu0 0.0
        %1519 = vmatpush2.msra.mxu0 0.0
        %1520 = vmatprep.subr.mxu0 0.0
        %1521 = vmatpush2.msra.mxu0 0.0
        %1522 = vmatprep.subr.mxu0 0.0
        %1523 = vmatpush2.msra.mxu0 0.0
        %1524 = vmatprep.subr.mxu0 0.0
        %1525 = vmatpush2.msra.mxu0 0.0
        %1526 = vmatprep.subr.mxu0 0.0
        %1527 = vmatpush2.msra.mxu0 0.0
        %1528 = vmatprep.mubr.f32.mxu0 0.0
        %1529 = vmatmul.mubr.f32.gmra.mxu0 %v1366
        %v1530 = vpop.f32.mrf.mxu0
        %v1531 = vadd.f32 0.0, %v1530
        %v1532 = vpop.f32.mrf.mxu0
        %1533 = vmatprep.mubr.f32.mxu0 0.0
        %1534 = vmatmul.mubr.f32.gmra.mxu0 %v1369
        %v1535 = vpop.f32.mrf.mxu0
        %v1536 = vadd.f32 0.0, %v1535
        %v1537 = vpop.f32.mrf.mxu0
        %1538 = vmatprep.mubr.f32.mxu0 0.0
        %1539 = vmatmul.mubr.f32.gmra.mxu0 %v1372
        %v1540 = vpop.f32.mrf.mxu0
        %v1541 = vadd.f32 0.0, %v1540
        %v1542 = vpop.f32.mrf.mxu0
        %1543 = vmatprep.mubr.f32.mxu0 0.0
        %1544 = vmatmul.mubr.f32.gmra.mxu0 %v1375
        %v1545 = vpop.f32.mrf.mxu0
        %v1546 = vadd.f32 0.0, %v1545
        %v1547 = vpop.f32.mrf.mxu0
        %1548 = vmatprep.mubr.f32.mxu0 0.0
        %1549 = vmatmul.mubr.f32.gmra.mxu0 %v1378
        %v1550 = vpop.f32.mrf.mxu0
        %v1551 = vadd.f32 0.0, %v1550
        %v1552 = vpop.f32.mrf.mxu0
        %1553 = vmatprep.mubr.f32.mxu0 0.0
        %1554 = vmatmul.mubr.f32.gmra.mxu0 %v1381
        %v1555 = vpop.f32.mrf.mxu0
        %v1556 = vadd.f32 0.0, %v1555
        %v1557 = vpop.f32.mrf.mxu0
        %1558 = vmatprep.mubr.f32.mxu0 0.0
        %1559 = vmatmul.mubr.f32.gmra.mxu0 %v1384
        %v1560 = vpop.f32.mrf.mxu0
        %v1561 = vadd.f32 0.0, %v1560
        %v1562 = vpop.f32.mrf.mxu0
        %1563 = vmatprep.mubr.f32.mxu0 0.0
        %1564 = vmatmul.mubr.f32.gmra.mxu0 %v1387
        %v1565 = vpop.f32.mrf.mxu0
        %v1566 = vadd.f32 0.0, %v1565
        %v1567 = vpop.f32.mrf.mxu0
        %1568 = vmatprep.mubr.f32.mxu0 0.0
        %1569 = vmatmul.mubr.f32.gmra.mxu0 %v1390
        %v1570 = vpop.f32.mrf.mxu0
        %v1571 = vadd.f32 0.0, %v1570
        %v1572 = vpop.f32.mrf.mxu0
        %1573 = vmatprep.mubr.f32.mxu0 0.0
        %1574 = vmatmul.mubr.f32.gmra.mxu0 %v1393
        %v1575 = vpop.f32.mrf.mxu0
        %v1576 = vadd.f32 0.0, %v1575
        %v1577 = vpop.f32.mrf.mxu0
        %1578 = vmatprep.mubr.f32.mxu0 0.0
        %1579 = vmatmul.mubr.f32.gmra.mxu0 %v1396
        %v1580 = vpop.f32.mrf.mxu0
        %v1581 = vadd.f32 0.0, %v1580
        %v1582 = vpop.f32.mrf.mxu0
        %1583 = vmatprep.mubr.f32.mxu0 0.0
        %1584 = vmatmul.mubr.f32.gmra.mxu0 %v1399
        %v1585 = vpop.f32.mrf.mxu0
        %v1586 = vadd.f32 0.0, %v1585
        %v1587 = vpop.f32.mrf.mxu0
        %1588 = vmatprep.mubr.f32.mxu0 0.0
        %1589 = vmatmul.mubr.f32.gmra.mxu0 %v1402
        %v1590 = vpop.f32.mrf.mxu0
        %v1591 = vadd.f32 0.0, %v1590
        %v1592 = vpop.f32.mrf.mxu0
        %1593 = vmatprep.mubr.f32.mxu0 0.0
        %1594 = vmatmul.mubr.f32.gmra.mxu0 %v1405
        %v1595 = vpop.f32.mrf.mxu0
        %v1596 = vadd.f32 0.0, %v1595
        %v1597 = vpop.f32.mrf.mxu0
        %1598 = vmatprep.mubr.f32.mxu0 0.0
        %1599 = vmatmul.mubr.f32.gmra.mxu0 %v1408
        %v1600 = vpop.f32.mrf.mxu0
        %v1601 = vadd.f32 0.0, %v1600
        %v1602 = vpop.f32.mrf.mxu0
        %1603 = vmatprep.mubr.f32.mxu0 0.0
        %1604 = vmatmul.mubr.f32.gmra.mxu0 %v1411
        %v1605 = vpop.f32.mrf.mxu0
        %v1606 = vadd.f32 0.0, %v1605
        %v1607 = vpop.f32.mrf.mxu0
        %1608 = vmatprep.mubr.f32.mxu0 0.0
        %1609 = vmatmul.mubr.f32.gmra.mxu0 %v1414
        %v1610 = vpop.f32.mrf.mxu0
        %v1611 = vadd.f32 0.0, %v1610
        %v1612 = vpop.f32.mrf.mxu0
        %1613 = vmatprep.mubr.f32.mxu0 0.0
        %1614 = vmatmul.mubr.f32.gmra.mxu0 %v1417
        %v1615 = vpop.f32.mrf.mxu0
        %v1616 = vadd.f32 0.0, %v1615
        %v1617 = vpop.f32.mrf.mxu0
        %1618 = vmatprep.mubr.f32.mxu0 0.0
        %1619 = vmatmul.mubr.f32.gmra.mxu0 %v1420
        %v1620 = vpop.f32.mrf.mxu0
        %v1621 = vadd.f32 0.0, %v1620
        %v1622 = vpop.f32.mrf.mxu0
        %1623 = vmatprep.mubr.f32.mxu0 0.0
        %1624 = vmatmul.mubr.f32.gmra.mxu0 %v1423
        %v1625 = vpop.f32.mrf.mxu0
        %v1626 = vadd.f32 0.0, %v1625
        %v1627 = vpop.f32.mrf.mxu0
        %1628 = vmatprep.mubr.f32.mxu0 0.0
        %1629 = vmatmul.mubr.f32.gmra.mxu0 %v1426
        %v1630 = vpop.f32.mrf.mxu0
        %v1631 = vadd.f32 0.0, %v1630
        %v1632 = vpop.f32.mrf.mxu0
        %1633 = vmatprep.mubr.f32.mxu0 0.0
        %1634 = vmatmul.mubr.f32.gmra.mxu0 %v1429
        %v1635 = vpop.f32.mrf.mxu0
        %v1636 = vadd.f32 0.0, %v1635
        %v1637 = vpop.f32.mrf.mxu0
        %1638 = vmatprep.mubr.f32.mxu0 0.0
        %1639 = vmatmul.mubr.f32.gmra.mxu0 %v1432
        %v1640 = vpop.f32.mrf.mxu0
        %v1641 = vadd.f32 0.0, %v1640
        %v1642 = vpop.f32.mrf.mxu0
        %1643 = vmatprep.mubr.f32.mxu0 0.0
        %1644 = vmatmul.mubr.f32.gmra.mxu0 %v1435
        %v1645 = vpop.f32.mrf.mxu0
        %v1646 = vadd.f32 0.0, %v1645
        %v1647 = vpop.f32.mrf.mxu0
        %1648 = vmatprep.mubr.f32.mxu0 0.0
        %1649 = vmatmul.mubr.f32.gmra.mxu0 %v1438
        %v1650 = vpop.f32.mrf.mxu0
        %v1651 = vadd.f32 0.0, %v1650
        %v1652 = vpop.f32.mrf.mxu0
        %1653 = vmatprep.mubr.f32.mxu0 0.0
        %1654 = vmatmul.mubr.f32.gmra.mxu0 %v1441
        %v1655 = vpop.f32.mrf.mxu0
        %v1656 = vadd.f32 0.0, %v1655
        %v1657 = vpop.f32.mrf.mxu0
        %1658 = vmatprep.mubr.f32.mxu0 0.0
        %1659 = vmatmul.mubr.f32.gmra.mxu0 %v1444
        %v1660 = vpop.f32.mrf.mxu0
        %v1661 = vadd.f32 0.0, %v1660
        %v1662 = vpop.f32.mrf.mxu0
        %1663 = vmatprep.mubr.f32.mxu0 0.0
        %1664 = vmatmul.mubr.f32.gmra.mxu0 %v1447
        %v1665 = vpop.f32.mrf.mxu0
        %v1666 = vadd.f32 0.0, %v1665
        %v1667 = vpop.f32.mrf.mxu0
        %1668 = vmatprep.mubr.f32.mxu0 0.0
        %1669 = vmatmul.mubr.f32.gmra.mxu0 %v1450
        %v1670 = vpop.f32.mrf.mxu0
        %v1671 = vadd.f32 0.0, %v1670
        %v1672 = vpop.f32.mrf.mxu0
        %1673 = vmatprep.mubr.f32.mxu0 0.0
        %1674 = vmatmul.mubr.f32.gmra.mxu0 %v1453
        %v1675 = vpop.f32.mrf.mxu0
        %v1676 = vadd.f32 0.0, %v1675
        %v1677 = vpop.f32.mrf.mxu0
        %1678 = vmatprep.mubr.f32.mxu0 0.0
        %1679 = vmatmul.mubr.f32.gmra.mxu0 %v1456
        %v1680 = vpop.f32.mrf.mxu0
        %v1681 = vadd.f32 0.0, %v1680
        %v1682 = vpop.f32.mrf.mxu0
        %1683 = vmatprep.mubr.f32.mxu0 0.0
        %1684 = vmatmul.mubr.f32.gmra.mxu0 %v1459
        %v1685 = vpop.f32.mrf.mxu0
        %v1686 = vadd.f32 0.0, %v1685
        %v1687 = vpop.f32.mrf.mxu0
        %1688 = vdwg.mxu0
        %v1689 = vadd.f32 %v1298, %v1531
        %v1690 = vadd.f32 %v1299, %v1536
        %v1691 = vadd.f32 %v1300, %v1541
        %v1692 = vadd.f32 %v1301, %v1546
        %v1693 = vadd.f32 %v1302, %v1551
        %v1694 = vadd.f32 %v1303, %v1556
        %v1695 = vadd.f32 %v1304, %v1561
        %v1696 = vadd.f32 %v1305, %v1566
        %v1697 = vadd.f32 %v1306, %v1571
        %v1698 = vadd.f32 %v1307, %v1576
        %v1699 = vadd.f32 %v1308, %v1581
        %v1700 = vadd.f32 %v1309, %v1586
        %v1701 = vadd.f32 %v1310, %v1591
        %v1702 = vadd.f32 %v1311, %v1596
        %v1703 = vadd.f32 %v1312, %v1601
        %v1704 = vadd.f32 %v1313, %v1606
        %v1705 = vadd.f32 %v1314, %v1611
        %v1706 = vadd.f32 %v1315, %v1616
        %v1707 = vadd.f32 %v1316, %v1621
        %v1708 = vadd.f32 %v1317, %v1626
        %v1709 = vadd.f32 %v1318, %v1631
        %v1710 = vadd.f32 %v1319, %v1636
        %v1711 = vadd.f32 %v1320, %v1641
        %v1712 = vadd.f32 %v1321, %v1646
        %v1713 = vadd.f32 %v1322, %v1651
        %v1714 = vadd.f32 %v1323, %v1656
        %v1715 = vadd.f32 %v1324, %v1661
        %v1716 = vadd.f32 %v1325, %v1666
        %v1717 = vadd.f32 %v1326, %v1671
        %v1718 = vadd.f32 %v1327, %v1676
        %v1719 = vadd.f32 %v1328, %v1681
        %v1720 = vadd.f32 %v1329, %v1686
        %v1721 = vld [vmem:[%s1330 + $0x1] sm:$0xff]
        %v1722 = vld [vmem:[%s1330 + $0x9] sm:$0xff]
        %v1723 = vld [vmem:[%s1330 + $0x19] sm:$0xff]
        %v1724 = vld [vmem:[%s1330 + $0x21] sm:$0xff]
        %v1725 = vld [vmem:[%s1330 + $0x31] sm:$0xff]
        %v1726 = vld [vmem:[%s1330 + $0x39] sm:$0xff]
        %v1727 = vld [vmem:[%s1330 + $0x49] sm:$0xff]
        %v1728 = vld [vmem:[%s1330 + $0x51] sm:$0xff]
        %v1729 = vld [vmem:[%s1330 + $0x61] sm:$0xff]
        %v1730 = vld [vmem:[%s1330 + $0x69] sm:$0xff]
        %v1731 = vld [vmem:[%s1330 + $0x79] sm:$0xff]
        %v1732 = vld [vmem:[%s1330 + $0x81] sm:$0xff]
        %v1733 = vld [vmem:[%s1330 + $0x91] sm:$0xff]
        %v1734 = vld [vmem:[%s1330 + $0x99] sm:$0xff]
        %v1735 = vld [vmem:[%s1330 + $0xa9] sm:$0xff]
        %v1736 = vld [vmem:[%s1330 + $0xb1] sm:$0xff]
        %v1737 = vld [vmem:[%s1330 + $0xc1] sm:$0xff]
        %v1738 = vld [vmem:[%s1330 + $0xc9] sm:$0xff]
        %v1739 = vld [vmem:[%s1330 + $0xd9] sm:$0xff]
        %v1740 = vld [vmem:[%s1330 + $0xe1] sm:$0xff]
        %v1741 = vld [vmem:[%s1330 + $0xf1] sm:$0xff]
        %v1742 = vld [vmem:[%s1330 + $0xf9] sm:$0xff]
        %v1743 = vld [vmem:[%s1330 + $0x109] sm:$0xff]
        %v1744 = vld [vmem:[%s1330 + $0x111] sm:$0xff]
        %v1745 = vld [vmem:[%s1330 + $0x121] sm:$0xff]
        %v1746 = vld [vmem:[%s1330 + $0x129] sm:$0xff]
        %v1747 = vld [vmem:[%s1330 + $0x139] sm:$0xff]
        %v1748 = vld [vmem:[%s1330 + $0x141] sm:$0xff]
        %v1749 = vld [vmem:[%s1330 + $0x151] sm:$0xff]
        %v1750 = vld [vmem:[%s1330 + $0x159] sm:$0xff]
        %v1751 = vld [vmem:[%s1330 + $0x169] sm:$0xff]
        %v1752 = vld [vmem:[%s1330 + $0x171] sm:$0xff]
        %s1753 = scalar_lea.vmem %s1, 16
        %v1754 = vld [vmem:[%s1753] sm:$0xf]
        %v1756 = vsel %vm290, %v1721, 0
        %v1759 = vsel %vm290, %v1722, 0
        %v1762 = vsel %vm290, %v1723, 0
        %v1765 = vsel %vm290, %v1724, 0
        %v1768 = vsel %vm290, %v1725, 0
        %v1771 = vsel %vm290, %v1726, 0
        %v1774 = vsel %vm290, %v1727, 0
        %v1777 = vsel %vm290, %v1728, 0
        %v1780 = vsel %vm290, %v1729, 0
        %v1783 = vsel %vm290, %v1730, 0
        %v1786 = vsel %vm290, %v1731, 0
        %v1789 = vsel %vm290, %v1732, 0
        %v1792 = vsel %vm290, %v1733, 0
        %v1795 = vsel %vm290, %v1734, 0
        %v1798 = vsel %vm290, %v1735, 0
        %v1801 = vsel %vm290, %v1736, 0
        %v1804 = vsel %vm290, %v1737, 0
        %v1807 = vsel %vm290, %v1738, 0
        %v1810 = vsel %vm290, %v1739, 0
        %v1813 = vsel %vm290, %v1740, 0
        %v1816 = vsel %vm290, %v1741, 0
        %v1819 = vsel %vm290, %v1742, 0
        %v1822 = vsel %vm290, %v1743, 0
        %v1825 = vsel %vm290, %v1744, 0
        %v1828 = vsel %vm290, %v1745, 0
        %v1831 = vsel %vm290, %v1746, 0
        %v1834 = vsel %vm290, %v1747, 0
        %v1837 = vsel %vm290, %v1748, 0
        %v1840 = vsel %vm290, %v1749, 0
        %v1843 = vsel %vm290, %v1750, 0
        %v1846 = vsel %vm290, %v1751, 0
        %v1849 = vsel %vm290, %v1752, 0
        %v1852 = vsel %vm387, %v1754, 0
        %1854 = vmatprep.subr.mxu0 0.0
        %1855 = vmatpush1.msra.mxu0 0.0
        %1856 = vmatprep.subr.mxu0 0.0
        %1857 = vmatpush1.msra.mxu0 0.0
        %1858 = vmatprep.subr.mxu0 0.0
        %1859 = vmatpush1.msra.mxu0 0.0
        %1860 = vmatprep.subr.mxu0 0.0
        %1861 = vmatpush1.msra.mxu0 0.0
        %1862 = vmatprep.subr.mxu0 0.0
        %1863 = vmatpush1.msra.mxu0 0.0
        %1864 = vmatprep.subr.mxu0 0.0
        %1865 = vmatpush1.msra.mxu0 0.0
        %1866 = vmatprep.subr.mxu0 0.0
        %1867 = vmatpush1.msra.mxu0 0.0
        %1868 = vmatprep.subr.mxu0 0.0
        %1869 = vmatpush1.msra.mxu0 0.0
        %1870 = vmatprep.subr.mxu0 0.0
        %1871 = vmatpush1.msra.mxu0 0.0
        %1872 = vmatprep.subr.mxu0 0.0
        %1873 = vmatpush1.msra.mxu0 0.0
        %1874 = vmatprep.subr.mxu0 0.0
        %1875 = vmatpush1.msra.mxu0 0.0
        %1876 = vmatprep.subr.mxu0 0.0
        %1877 = vmatpush1.msra.mxu0 0.0
        %1878 = vmatprep.subr.mxu0 0.0
        %1879 = vmatpush1.msra.mxu0 0.0
        %1880 = vmatprep.subr.mxu0 0.0
        %1881 = vmatpush1.msra.mxu0 0.0
        %1882 = vmatprep.subr.mxu0 0.0
        %1883 = vmatpush1.msra.mxu0 0.0
        %1884 = vmatprep.subr.mxu0 0.0
        %1885 = vmatpush1.msra.mxu0 %v1852
        %1886 = vmatprep.subr.mxu0 0.0
        %1887 = vmatpush2.msra.mxu0 0.0
        %1888 = vmatprep.subr.mxu0 0.0
        %1889 = vmatpush2.msra.mxu0 0.0
        %1890 = vmatprep.subr.mxu0 0.0
        %1891 = vmatpush2.msra.mxu0 0.0
        %1892 = vmatprep.subr.mxu0 0.0
        %1893 = vmatpush2.msra.mxu0 0.0
        %1894 = vmatprep.subr.mxu0 0.0
        %1895 = vmatpush2.msra.mxu0 0.0
        %1896 = vmatprep.subr.mxu0 0.0
        %1897 = vmatpush2.msra.mxu0 0.0
        %1898 = vmatprep.subr.mxu0 0.0
        %1899 = vmatpush2.msra.mxu0 0.0
        %1900 = vmatprep.subr.mxu0 0.0
        %1901 = vmatpush2.msra.mxu0 0.0
        %1902 = vmatprep.subr.mxu0 0.0
        %1903 = vmatpush2.msra.mxu0 0.0
        %1904 = vmatprep.subr.mxu0 0.0
        %1905 = vmatpush2.msra.mxu0 0.0
        %1906 = vmatprep.subr.mxu0 0.0
        %1907 = vmatpush2.msra.mxu0 0.0
        %1908 = vmatprep.subr.mxu0 0.0
        %1909 = vmatpush2.msra.mxu0 0.0
        %1910 = vmatprep.subr.mxu0 0.0
        %1911 = vmatpush2.msra.mxu0 0.0
        %1912 = vmatprep.subr.mxu0 0.0
        %1913 = vmatpush2.msra.mxu0 0.0
        %1914 = vmatprep.subr.mxu0 0.0
        %1915 = vmatpush2.msra.mxu0 0.0
        %1916 = vmatprep.subr.mxu0 0.0
        %1917 = vmatpush2.msra.mxu0 0.0
        %1918 = vmatprep.mubr.f32.mxu0 0.0
        %1919 = vmatmul.mubr.f32.gmra.mxu0 %v1756
        %v1920 = vpop.f32.mrf.mxu0
        %v1921 = vadd.f32 0.0, %v1920
        %v1922 = vpop.f32.mrf.mxu0
        %1923 = vmatprep.mubr.f32.mxu0 0.0
        %1924 = vmatmul.mubr.f32.gmra.mxu0 %v1759
        %v1925 = vpop.f32.mrf.mxu0
        %v1926 = vadd.f32 0.0, %v1925
        %v1927 = vpop.f32.mrf.mxu0
        %1928 = vmatprep.mubr.f32.mxu0 0.0
        %1929 = vmatmul.mubr.f32.gmra.mxu0 %v1762
        %v1930 = vpop.f32.mrf.mxu0
        %v1931 = vadd.f32 0.0, %v1930
        %v1932 = vpop.f32.mrf.mxu0
        %1933 = vmatprep.mubr.f32.mxu0 0.0
        %1934 = vmatmul.mubr.f32.gmra.mxu0 %v1765
        %v1935 = vpop.f32.mrf.mxu0
        %v1936 = vadd.f32 0.0, %v1935
        %v1937 = vpop.f32.mrf.mxu0
        %1938 = vmatprep.mubr.f32.mxu0 0.0
        %1939 = vmatmul.mubr.f32.gmra.mxu0 %v1768
        %v1940 = vpop.f32.mrf.mxu0
        %v1941 = vadd.f32 0.0, %v1940
        %v1942 = vpop.f32.mrf.mxu0
        %1943 = vmatprep.mubr.f32.mxu0 0.0
        %1944 = vmatmul.mubr.f32.gmra.mxu0 %v1771
        %v1945 = vpop.f32.mrf.mxu0
        %v1946 = vadd.f32 0.0, %v1945
        %v1947 = vpop.f32.mrf.mxu0
        %1948 = vmatprep.mubr.f32.mxu0 0.0
        %1949 = vmatmul.mubr.f32.gmra.mxu0 %v1774
        %v1950 = vpop.f32.mrf.mxu0
        %v1951 = vadd.f32 0.0, %v1950
        %v1952 = vpop.f32.mrf.mxu0
        %1953 = vmatprep.mubr.f32.mxu0 0.0
        %1954 = vmatmul.mubr.f32.gmra.mxu0 %v1777
        %v1955 = vpop.f32.mrf.mxu0
        %v1956 = vadd.f32 0.0, %v1955
        %v1957 = vpop.f32.mrf.mxu0
        %1958 = vmatprep.mubr.f32.mxu0 0.0
        %1959 = vmatmul.mubr.f32.gmra.mxu0 %v1780
        %v1960 = vpop.f32.mrf.mxu0
        %v1961 = vadd.f32 0.0, %v1960
        %v1962 = vpop.f32.mrf.mxu0
        %1963 = vmatprep.mubr.f32.mxu0 0.0
        %1964 = vmatmul.mubr.f32.gmra.mxu0 %v1783
        %v1965 = vpop.f32.mrf.mxu0
        %v1966 = vadd.f32 0.0, %v1965
        %v1967 = vpop.f32.mrf.mxu0
        %1968 = vmatprep.mubr.f32.mxu0 0.0
        %1969 = vmatmul.mubr.f32.gmra.mxu0 %v1786
        %v1970 = vpop.f32.mrf.mxu0
        %v1971 = vadd.f32 0.0, %v1970
        %v1972 = vpop.f32.mrf.mxu0
        %1973 = vmatprep.mubr.f32.mxu0 0.0
        %1974 = vmatmul.mubr.f32.gmra.mxu0 %v1789
        %v1975 = vpop.f32.mrf.mxu0
        %v1976 = vadd.f32 0.0, %v1975
        %v1977 = vpop.f32.mrf.mxu0
        %1978 = vmatprep.mubr.f32.mxu0 0.0
        %1979 = vmatmul.mubr.f32.gmra.mxu0 %v1792
        %v1980 = vpop.f32.mrf.mxu0
        %v1981 = vadd.f32 0.0, %v1980
        %v1982 = vpop.f32.mrf.mxu0
        %1983 = vmatprep.mubr.f32.mxu0 0.0
        %1984 = vmatmul.mubr.f32.gmra.mxu0 %v1795
        %v1985 = vpop.f32.mrf.mxu0
        %v1986 = vadd.f32 0.0, %v1985
        %v1987 = vpop.f32.mrf.mxu0
        %1988 = vmatprep.mubr.f32.mxu0 0.0
        %1989 = vmatmul.mubr.f32.gmra.mxu0 %v1798
        %v1990 = vpop.f32.mrf.mxu0
        %v1991 = vadd.f32 0.0, %v1990
        %v1992 = vpop.f32.mrf.mxu0
        %1993 = vmatprep.mubr.f32.mxu0 0.0
        %1994 = vmatmul.mubr.f32.gmra.mxu0 %v1801
        %v1995 = vpop.f32.mrf.mxu0
        %v1996 = vadd.f32 0.0, %v1995
        %v1997 = vpop.f32.mrf.mxu0
        %1998 = vmatprep.mubr.f32.mxu0 0.0
        %1999 = vmatmul.mubr.f32.gmra.mxu0 %v1804
        %v2000 = vpop.f32.mrf.mxu0
        %v2001 = vadd.f32 0.0, %v2000
        %v2002 = vpop.f32.mrf.mxu0
        %2003 = vmatprep.mubr.f32.mxu0 0.0
        %2004 = vmatmul.mubr.f32.gmra.mxu0 %v1807
        %v2005 = vpop.f32.mrf.mxu0
        %v2006 = vadd.f32 0.0, %v2005
        %v2007 = vpop.f32.mrf.mxu0
        %2008 = vmatprep.mubr.f32.mxu0 0.0
        %2009 = vmatmul.mubr.f32.gmra.mxu0 %v1810
        %v2010 = vpop.f32.mrf.mxu0
        %v2011 = vadd.f32 0.0, %v2010
        %v2012 = vpop.f32.mrf.mxu0
        %2013 = vmatprep.mubr.f32.mxu0 0.0
        %2014 = vmatmul.mubr.f32.gmra.mxu0 %v1813
        %v2015 = vpop.f32.mrf.mxu0
        %v2016 = vadd.f32 0.0, %v2015
        %v2017 = vpop.f32.mrf.mxu0
        %2018 = vmatprep.mubr.f32.mxu0 0.0
        %2019 = vmatmul.mubr.f32.gmra.mxu0 %v1816
        %v2020 = vpop.f32.mrf.mxu0
        %v2021 = vadd.f32 0.0, %v2020
        %v2022 = vpop.f32.mrf.mxu0
        %2023 = vmatprep.mubr.f32.mxu0 0.0
        %2024 = vmatmul.mubr.f32.gmra.mxu0 %v1819
        %v2025 = vpop.f32.mrf.mxu0
        %v2026 = vadd.f32 0.0, %v2025
        %v2027 = vpop.f32.mrf.mxu0
        %2028 = vmatprep.mubr.f32.mxu0 0.0
        %2029 = vmatmul.mubr.f32.gmra.mxu0 %v1822
        %v2030 = vpop.f32.mrf.mxu0
        %v2031 = vadd.f32 0.0, %v2030
        %v2032 = vpop.f32.mrf.mxu0
        %2033 = vmatprep.mubr.f32.mxu0 0.0
        %2034 = vmatmul.mubr.f32.gmra.mxu0 %v1825
        %v2035 = vpop.f32.mrf.mxu0
        %v2036 = vadd.f32 0.0, %v2035
        %v2037 = vpop.f32.mrf.mxu0
        %2038 = vmatprep.mubr.f32.mxu0 0.0
        %2039 = vmatmul.mubr.f32.gmra.mxu0 %v1828
        %v2040 = vpop.f32.mrf.mxu0
        %v2041 = vadd.f32 0.0, %v2040
        %v2042 = vpop.f32.mrf.mxu0
        %2043 = vmatprep.mubr.f32.mxu0 0.0
        %2044 = vmatmul.mubr.f32.gmra.mxu0 %v1831
        %v2045 = vpop.f32.mrf.mxu0
        %v2046 = vadd.f32 0.0, %v2045
        %v2047 = vpop.f32.mrf.mxu0
        %2048 = vmatprep.mubr.f32.mxu0 0.0
        %2049 = vmatmul.mubr.f32.gmra.mxu0 %v1834
        %v2050 = vpop.f32.mrf.mxu0
        %v2051 = vadd.f32 0.0, %v2050
        %v2052 = vpop.f32.mrf.mxu0
        %2053 = vmatprep.mubr.f32.mxu0 0.0
        %2054 = vmatmul.mubr.f32.gmra.mxu0 %v1837
        %v2055 = vpop.f32.mrf.mxu0
        %v2056 = vadd.f32 0.0, %v2055
        %v2057 = vpop.f32.mrf.mxu0
        %2058 = vmatprep.mubr.f32.mxu0 0.0
        %2059 = vmatmul.mubr.f32.gmra.mxu0 %v1840
        %v2060 = vpop.f32.mrf.mxu0
        %v2061 = vadd.f32 0.0, %v2060
        %v2062 = vpop.f32.mrf.mxu0
        %2063 = vmatprep.mubr.f32.mxu0 0.0
        %2064 = vmatmul.mubr.f32.gmra.mxu0 %v1843
        %v2065 = vpop.f32.mrf.mxu0
        %v2066 = vadd.f32 0.0, %v2065
        %v2067 = vpop.f32.mrf.mxu0
        %2068 = vmatprep.mubr.f32.mxu0 0.0
        %2069 = vmatmul.mubr.f32.gmra.mxu0 %v1846
        %v2070 = vpop.f32.mrf.mxu0
        %v2071 = vadd.f32 0.0, %v2070
        %v2072 = vpop.f32.mrf.mxu0
        %2073 = vmatprep.mubr.f32.mxu0 0.0
        %2074 = vmatmul.mubr.f32.gmra.mxu0 %v1849
        %v2075 = vpop.f32.mrf.mxu0
        %v2076 = vadd.f32 0.0, %v2075
        %v2077 = vpop.f32.mrf.mxu0
        %2078 = vdwg.mxu0
        %v2079 = vadd.f32 %v1689, %v1921
        %v2080 = vadd.f32 %v1690, %v1926
        %v2081 = vadd.f32 %v1691, %v1931
        %v2082 = vadd.f32 %v1692, %v1936
        %v2083 = vadd.f32 %v1693, %v1941
        %v2084 = vadd.f32 %v1694, %v1946
        %v2085 = vadd.f32 %v1695, %v1951
        %v2086 = vadd.f32 %v1696, %v1956
        %v2087 = vadd.f32 %v1697, %v1961
        %v2088 = vadd.f32 %v1698, %v1966
        %v2089 = vadd.f32 %v1699, %v1971
        %v2090 = vadd.f32 %v1700, %v1976
        %v2091 = vadd.f32 %v1701, %v1981
        %v2092 = vadd.f32 %v1702, %v1986
        %v2093 = vadd.f32 %v1703, %v1991
        %v2094 = vadd.f32 %v1704, %v1996
        %v2095 = vadd.f32 %v1705, %v2001
        %v2096 = vadd.f32 %v1706, %v2006
        %v2097 = vadd.f32 %v1707, %v2011
        %v2098 = vadd.f32 %v1708, %v2016
        %v2099 = vadd.f32 %v1709, %v2021
        %v2100 = vadd.f32 %v1710, %v2026
        %v2101 = vadd.f32 %v1711, %v2031
        %v2102 = vadd.f32 %v1712, %v2036
        %v2103 = vadd.f32 %v1713, %v2041
        %v2104 = vadd.f32 %v1714, %v2046
        %v2105 = vadd.f32 %v1715, %v2051
        %v2106 = vadd.f32 %v1716, %v2056
        %v2107 = vadd.f32 %v1717, %v2061
        %v2108 = vadd.f32 %v1718, %v2066
        %v2109 = vadd.f32 %v1719, %v2071
        %v2110 = vadd.f32 %v1720, %v2076
        %v2111 = vld [vmem:[%s1330 + $0x2] sm:$0xff]
        %v2112 = vld [vmem:[%s1330 + $0xa] sm:$0xff]
        %v2113 = vld [vmem:[%s1330 + $0x1a] sm:$0xff]
        %v2114 = vld [vmem:[%s1330 + $0x22] sm:$0xff]
        %v2115 = vld [vmem:[%s1330 + $0x32] sm:$0xff]
        %v2116 = vld [vmem:[%s1330 + $0x3a] sm:$0xff]
        %v2117 = vld [vmem:[%s1330 + $0x4a] sm:$0xff]
        %v2118 = vld [vmem:[%s1330 + $0x52] sm:$0xff]
        %v2119 = vld [vmem:[%s1330 + $0x62] sm:$0xff]
        %v2120 = vld [vmem:[%s1330 + $0x6a] sm:$0xff]
        %v2121 = vld [vmem:[%s1330 + $0x7a] sm:$0xff]
        %v2122 = vld [vmem:[%s1330 + $0x82] sm:$0xff]
        %v2123 = vld [vmem:[%s1330 + $0x92] sm:$0xff]
        %v2124 = vld [vmem:[%s1330 + $0x9a] sm:$0xff]
        %v2125 = vld [vmem:[%s1330 + $0xaa] sm:$0xff]
        %v2126 = vld [vmem:[%s1330 + $0xb2] sm:$0xff]
        %v2127 = vld [vmem:[%s1330 + $0xc2] sm:$0xff]
        %v2128 = vld [vmem:[%s1330 + $0xca] sm:$0xff]
        %v2129 = vld [vmem:[%s1330 + $0xda] sm:$0xff]
        %v2130 = vld [vmem:[%s1330 + $0xe2] sm:$0xff]
        %v2131 = vld [vmem:[%s1330 + $0xf2] sm:$0xff]
        %v2132 = vld [vmem:[%s1330 + $0xfa] sm:$0xff]
        %v2133 = vld [vmem:[%s1330 + $0x10a] sm:$0xff]
        %v2134 = vld [vmem:[%s1330 + $0x112] sm:$0xff]
        %v2135 = vld [vmem:[%s1330 + $0x122] sm:$0xff]
        %v2136 = vld [vmem:[%s1330 + $0x12a] sm:$0xff]
        %v2137 = vld [vmem:[%s1330 + $0x13a] sm:$0xff]
        %v2138 = vld [vmem:[%s1330 + $0x142] sm:$0xff]
        %v2139 = vld [vmem:[%s1330 + $0x152] sm:$0xff]
        %v2140 = vld [vmem:[%s1330 + $0x15a] sm:$0xff]
        %v2141 = vld [vmem:[%s1330 + $0x16a] sm:$0xff]
        %v2142 = vld [vmem:[%s1330 + $0x172] sm:$0xff]
        %s2143 = scalar_lea.vmem %s1, 20
        %v2144 = vld [vmem:[%s2143] sm:$0xf]
        %v2146 = vsel %vm290, %v2111, 0
        %v2149 = vsel %vm290, %v2112, 0
        %v2152 = vsel %vm290, %v2113, 0
        %v2155 = vsel %vm290, %v2114, 0
        %v2158 = vsel %vm290, %v2115, 0
        %v2161 = vsel %vm290, %v2116, 0
        %v2164 = vsel %vm290, %v2117, 0
        %v2167 = vsel %vm290, %v2118, 0
        %v2170 = vsel %vm290, %v2119, 0
        %v2173 = vsel %vm290, %v2120, 0
        %v2176 = vsel %vm290, %v2121, 0
        %v2179 = vsel %vm290, %v2122, 0
        %v2182 = vsel %vm290, %v2123, 0
        %v2185 = vsel %vm290, %v2124, 0
        %v2188 = vsel %vm290, %v2125, 0
        %v2191 = vsel %vm290, %v2126, 0
        %v2194 = vsel %vm290, %v2127, 0
        %v2197 = vsel %vm290, %v2128, 0
        %v2200 = vsel %vm290, %v2129, 0
        %v2203 = vsel %vm290, %v2130, 0
        %v2206 = vsel %vm290, %v2131, 0
        %v2209 = vsel %vm290, %v2132, 0
        %v2212 = vsel %vm290, %v2133, 0
        %v2215 = vsel %vm290, %v2134, 0
        %v2218 = vsel %vm290, %v2135, 0
        %v2221 = vsel %vm290, %v2136, 0
        %v2224 = vsel %vm290, %v2137, 0
        %v2227 = vsel %vm290, %v2138, 0
        %v2230 = vsel %vm290, %v2139, 0
        %v2233 = vsel %vm290, %v2140, 0
        %v2236 = vsel %vm290, %v2141, 0
        %v2239 = vsel %vm290, %v2142, 0
        %v2242 = vsel %vm387, %v2144, 0
        %2244 = vmatprep.subr.mxu0 0.0
        %2245 = vmatpush1.msra.mxu0 0.0
        %2246 = vmatprep.subr.mxu0 0.0
        %2247 = vmatpush1.msra.mxu0 0.0
        %2248 = vmatprep.subr.mxu0 0.0
        %2249 = vmatpush1.msra.mxu0 0.0
        %2250 = vmatprep.subr.mxu0 0.0
        %2251 = vmatpush1.msra.mxu0 0.0
        %2252 = vmatprep.subr.mxu0 0.0
        %2253 = vmatpush1.msra.mxu0 0.0
        %2254 = vmatprep.subr.mxu0 0.0
        %2255 = vmatpush1.msra.mxu0 0.0
        %2256 = vmatprep.subr.mxu0 0.0
        %2257 = vmatpush1.msra.mxu0 0.0
        %2258 = vmatprep.subr.mxu0 0.0
        %2259 = vmatpush1.msra.mxu0 0.0
        %2260 = vmatprep.subr.mxu0 0.0
        %2261 = vmatpush1.msra.mxu0 0.0
        %2262 = vmatprep.subr.mxu0 0.0
        %2263 = vmatpush1.msra.mxu0 0.0
        %2264 = vmatprep.subr.mxu0 0.0
        %2265 = vmatpush1.msra.mxu0 0.0
        %2266 = vmatprep.subr.mxu0 0.0
        %2267 = vmatpush1.msra.mxu0 0.0
        %2268 = vmatprep.subr.mxu0 0.0
        %2269 = vmatpush1.msra.mxu0 0.0
        %2270 = vmatprep.subr.mxu0 0.0
        %2271 = vmatpush1.msra.mxu0 0.0
        %2272 = vmatprep.subr.mxu0 0.0
        %2273 = vmatpush1.msra.mxu0 0.0
        %2274 = vmatprep.subr.mxu0 0.0
        %2275 = vmatpush1.msra.mxu0 %v2242
        %2276 = vmatprep.subr.mxu0 0.0
        %2277 = vmatpush2.msra.mxu0 0.0
        %2278 = vmatprep.subr.mxu0 0.0
        %2279 = vmatpush2.msra.mxu0 0.0
        %2280 = vmatprep.subr.mxu0 0.0
        %2281 = vmatpush2.msra.mxu0 0.0
        %2282 = vmatprep.subr.mxu0 0.0
        %2283 = vmatpush2.msra.mxu0 0.0
        %2284 = vmatprep.subr.mxu0 0.0
        %2285 = vmatpush2.msra.mxu0 0.0
        %2286 = vmatprep.subr.mxu0 0.0
        %2287 = vmatpush2.msra.mxu0 0.0
        %2288 = vmatprep.subr.mxu0 0.0
        %2289 = vmatpush2.msra.mxu0 0.0
        %2290 = vmatprep.subr.mxu0 0.0
        %2291 = vmatpush2.msra.mxu0 0.0
        %2292 = vmatprep.subr.mxu0 0.0
        %2293 = vmatpush2.msra.mxu0 0.0
        %2294 = vmatprep.subr.mxu0 0.0
        %2295 = vmatpush2.msra.mxu0 0.0
        %2296 = vmatprep.subr.mxu0 0.0
        %2297 = vmatpush2.msra.mxu0 0.0
        %2298 = vmatprep.subr.mxu0 0.0
        %2299 = vmatpush2.msra.mxu0 0.0
        %2300 = vmatprep.subr.mxu0 0.0
        %2301 = vmatpush2.msra.mxu0 0.0
        %2302 = vmatprep.subr.mxu0 0.0
        %2303 = vmatpush2.msra.mxu0 0.0
        %2304 = vmatprep.subr.mxu0 0.0
        %2305 = vmatpush2.msra.mxu0 0.0
        %2306 = vmatprep.subr.mxu0 0.0
        %2307 = vmatpush2.msra.mxu0 0.0
        %2308 = vmatprep.mubr.f32.mxu0 0.0
        %2309 = vmatmul.mubr.f32.gmra.mxu0 %v2146
        %v2310 = vpop.f32.mrf.mxu0
        %v2311 = vadd.f32 0.0, %v2310
        %v2312 = vpop.f32.mrf.mxu0
        %2313 = vmatprep.mubr.f32.mxu0 0.0
        %2314 = vmatmul.mubr.f32.gmra.mxu0 %v2149
        %v2315 = vpop.f32.mrf.mxu0
        %v2316 = vadd.f32 0.0, %v2315
        %v2317 = vpop.f32.mrf.mxu0
        %2318 = vmatprep.mubr.f32.mxu0 0.0
        %2319 = vmatmul.mubr.f32.gmra.mxu0 %v2152
        %v2320 = vpop.f32.mrf.mxu0
        %v2321 = vadd.f32 0.0, %v2320
        %v2322 = vpop.f32.mrf.mxu0
        %2323 = vmatprep.mubr.f32.mxu0 0.0
        %2324 = vmatmul.mubr.f32.gmra.mxu0 %v2155
        %v2325 = vpop.f32.mrf.mxu0
        %v2326 = vadd.f32 0.0, %v2325
        %v2327 = vpop.f32.mrf.mxu0
        %2328 = vmatprep.mubr.f32.mxu0 0.0
        %2329 = vmatmul.mubr.f32.gmra.mxu0 %v2158
        %v2330 = vpop.f32.mrf.mxu0
        %v2331 = vadd.f32 0.0, %v2330
        %v2332 = vpop.f32.mrf.mxu0
        %2333 = vmatprep.mubr.f32.mxu0 0.0
        %2334 = vmatmul.mubr.f32.gmra.mxu0 %v2161
        %v2335 = vpop.f32.mrf.mxu0
        %v2336 = vadd.f32 0.0, %v2335
        %v2337 = vpop.f32.mrf.mxu0
        %2338 = vmatprep.mubr.f32.mxu0 0.0
        %2339 = vmatmul.mubr.f32.gmra.mxu0 %v2164
        %v2340 = vpop.f32.mrf.mxu0
        %v2341 = vadd.f32 0.0, %v2340
        %v2342 = vpop.f32.mrf.mxu0
        %2343 = vmatprep.mubr.f32.mxu0 0.0
        %2344 = vmatmul.mubr.f32.gmra.mxu0 %v2167
        %v2345 = vpop.f32.mrf.mxu0
        %v2346 = vadd.f32 0.0, %v2345
        %v2347 = vpop.f32.mrf.mxu0
        %2348 = vmatprep.mubr.f32.mxu0 0.0
        %2349 = vmatmul.mubr.f32.gmra.mxu0 %v2170
        %v2350 = vpop.f32.mrf.mxu0
        %v2351 = vadd.f32 0.0, %v2350
        %v2352 = vpop.f32.mrf.mxu0
        %2353 = vmatprep.mubr.f32.mxu0 0.0
        %2354 = vmatmul.mubr.f32.gmra.mxu0 %v2173
        %v2355 = vpop.f32.mrf.mxu0
        %v2356 = vadd.f32 0.0, %v2355
        %v2357 = vpop.f32.mrf.mxu0
        %2358 = vmatprep.mubr.f32.mxu0 0.0
        %2359 = vmatmul.mubr.f32.gmra.mxu0 %v2176
        %v2360 = vpop.f32.mrf.mxu0
        %v2361 = vadd.f32 0.0, %v2360
        %v2362 = vpop.f32.mrf.mxu0
        %2363 = vmatprep.mubr.f32.mxu0 0.0
        %2364 = vmatmul.mubr.f32.gmra.mxu0 %v2179
        %v2365 = vpop.f32.mrf.mxu0
        %v2366 = vadd.f32 0.0, %v2365
        %v2367 = vpop.f32.mrf.mxu0
        %2368 = vmatprep.mubr.f32.mxu0 0.0
        %2369 = vmatmul.mubr.f32.gmra.mxu0 %v2182
        %v2370 = vpop.f32.mrf.mxu0
        %v2371 = vadd.f32 0.0, %v2370
        %v2372 = vpop.f32.mrf.mxu0
        %2373 = vmatprep.mubr.f32.mxu0 0.0
        %2374 = vmatmul.mubr.f32.gmra.mxu0 %v2185
        %v2375 = vpop.f32.mrf.mxu0
        %v2376 = vadd.f32 0.0, %v2375
        %v2377 = vpop.f32.mrf.mxu0
        %2378 = vmatprep.mubr.f32.mxu0 0.0
        %2379 = vmatmul.mubr.f32.gmra.mxu0 %v2188
        %v2380 = vpop.f32.mrf.mxu0
        %v2381 = vadd.f32 0.0, %v2380
        %v2382 = vpop.f32.mrf.mxu0
        %2383 = vmatprep.mubr.f32.mxu0 0.0
        %2384 = vmatmul.mubr.f32.gmra.mxu0 %v2191
        %v2385 = vpop.f32.mrf.mxu0
        %v2386 = vadd.f32 0.0, %v2385
        %v2387 = vpop.f32.mrf.mxu0
        %2388 = vmatprep.mubr.f32.mxu0 0.0
        %2389 = vmatmul.mubr.f32.gmra.mxu0 %v2194
        %v2390 = vpop.f32.mrf.mxu0
        %v2391 = vadd.f32 0.0, %v2390
        %v2392 = vpop.f32.mrf.mxu0
        %2393 = vmatprep.mubr.f32.mxu0 0.0
        %2394 = vmatmul.mubr.f32.gmra.mxu0 %v2197
        %v2395 = vpop.f32.mrf.mxu0
        %v2396 = vadd.f32 0.0, %v2395
        %v2397 = vpop.f32.mrf.mxu0
        %2398 = vmatprep.mubr.f32.mxu0 0.0
        %2399 = vmatmul.mubr.f32.gmra.mxu0 %v2200
        %v2400 = vpop.f32.mrf.mxu0
        %v2401 = vadd.f32 0.0, %v2400
        %v2402 = vpop.f32.mrf.mxu0
        %2403 = vmatprep.mubr.f32.mxu0 0.0
        %2404 = vmatmul.mubr.f32.gmra.mxu0 %v2203
        %v2405 = vpop.f32.mrf.mxu0
        %v2406 = vadd.f32 0.0, %v2405
        %v2407 = vpop.f32.mrf.mxu0
        %2408 = vmatprep.mubr.f32.mxu0 0.0
        %2409 = vmatmul.mubr.f32.gmra.mxu0 %v2206
        %v2410 = vpop.f32.mrf.mxu0
        %v2411 = vadd.f32 0.0, %v2410
        %v2412 = vpop.f32.mrf.mxu0
        %2413 = vmatprep.mubr.f32.mxu0 0.0
        %2414 = vmatmul.mubr.f32.gmra.mxu0 %v2209
        %v2415 = vpop.f32.mrf.mxu0
        %v2416 = vadd.f32 0.0, %v2415
        %v2417 = vpop.f32.mrf.mxu0
        %2418 = vmatprep.mubr.f32.mxu0 0.0
        %2419 = vmatmul.mubr.f32.gmra.mxu0 %v2212
        %v2420 = vpop.f32.mrf.mxu0
        %v2421 = vadd.f32 0.0, %v2420
        %v2422 = vpop.f32.mrf.mxu0
        %2423 = vmatprep.mubr.f32.mxu0 0.0
        %2424 = vmatmul.mubr.f32.gmra.mxu0 %v2215
        %v2425 = vpop.f32.mrf.mxu0
        %v2426 = vadd.f32 0.0, %v2425
        %v2427 = vpop.f32.mrf.mxu0
        %2428 = vmatprep.mubr.f32.mxu0 0.0
        %2429 = vmatmul.mubr.f32.gmra.mxu0 %v2218
        %v2430 = vpop.f32.mrf.mxu0
        %v2431 = vadd.f32 0.0, %v2430
        %v2432 = vpop.f32.mrf.mxu0
        %2433 = vmatprep.mubr.f32.mxu0 0.0
        %2434 = vmatmul.mubr.f32.gmra.mxu0 %v2221
        %v2435 = vpop.f32.mrf.mxu0
        %v2436 = vadd.f32 0.0, %v2435
        %v2437 = vpop.f32.mrf.mxu0
        %2438 = vmatprep.mubr.f32.mxu0 0.0
        %2439 = vmatmul.mubr.f32.gmra.mxu0 %v2224
        %v2440 = vpop.f32.mrf.mxu0
        %v2441 = vadd.f32 0.0, %v2440
        %v2442 = vpop.f32.mrf.mxu0
        %2443 = vmatprep.mubr.f32.mxu0 0.0
        %2444 = vmatmul.mubr.f32.gmra.mxu0 %v2227
        %v2445 = vpop.f32.mrf.mxu0
        %v2446 = vadd.f32 0.0, %v2445
        %v2447 = vpop.f32.mrf.mxu0
        %2448 = vmatprep.mubr.f32.mxu0 0.0
        %2449 = vmatmul.mubr.f32.gmra.mxu0 %v2230
        %v2450 = vpop.f32.mrf.mxu0
        %v2451 = vadd.f32 0.0, %v2450
        %v2452 = vpop.f32.mrf.mxu0
        %2453 = vmatprep.mubr.f32.mxu0 0.0
        %2454 = vmatmul.mubr.f32.gmra.mxu0 %v2233
        %v2455 = vpop.f32.mrf.mxu0
        %v2456 = vadd.f32 0.0, %v2455
        %v2457 = vpop.f32.mrf.mxu0
        %2458 = vmatprep.mubr.f32.mxu0 0.0
        %2459 = vmatmul.mubr.f32.gmra.mxu0 %v2236
        %v2460 = vpop.f32.mrf.mxu0
        %v2461 = vadd.f32 0.0, %v2460
        %v2462 = vpop.f32.mrf.mxu0
        %2463 = vmatprep.mubr.f32.mxu0 0.0
        %2464 = vmatmul.mubr.f32.gmra.mxu0 %v2239
        %v2465 = vpop.f32.mrf.mxu0
        %v2466 = vadd.f32 0.0, %v2465
        %v2467 = vpop.f32.mrf.mxu0
        %2468 = vdwg.mxu0
        %v2469 = vadd.f32 %v2079, %v2311
        %v2470 = vadd.f32 %v2080, %v2316
        %v2471 = vadd.f32 %v2081, %v2321
        %v2472 = vadd.f32 %v2082, %v2326
        %v2473 = vadd.f32 %v2083, %v2331
        %v2474 = vadd.f32 %v2084, %v2336
        %v2475 = vadd.f32 %v2085, %v2341
        %v2476 = vadd.f32 %v2086, %v2346
        %v2477 = vadd.f32 %v2087, %v2351
        %v2478 = vadd.f32 %v2088, %v2356
        %v2479 = vadd.f32 %v2089, %v2361
        %v2480 = vadd.f32 %v2090, %v2366
        %v2481 = vadd.f32 %v2091, %v2371
        %v2482 = vadd.f32 %v2092, %v2376
        %v2483 = vadd.f32 %v2093, %v2381
        %v2484 = vadd.f32 %v2094, %v2386
        %v2485 = vadd.f32 %v2095, %v2391
        %v2486 = vadd.f32 %v2096, %v2396
        %v2487 = vadd.f32 %v2097, %v2401
        %v2488 = vadd.f32 %v2098, %v2406
        %v2489 = vadd.f32 %v2099, %v2411
        %v2490 = vadd.f32 %v2100, %v2416
        %v2491 = vadd.f32 %v2101, %v2421
        %v2492 = vadd.f32 %v2102, %v2426
        %v2493 = vadd.f32 %v2103, %v2431
        %v2494 = vadd.f32 %v2104, %v2436
        %v2495 = vadd.f32 %v2105, %v2441
        %v2496 = vadd.f32 %v2106, %v2446
        %v2497 = vadd.f32 %v2107, %v2451
        %v2498 = vadd.f32 %v2108, %v2456
        %v2499 = vadd.f32 %v2109, %v2461
        %v2500 = vadd.f32 %v2110, %v2466
        %s2501 = scalar_lea.vmem %s222, 48
        %v2502 = vld [vmem:[%s2501] sm:$0xff]
        %v2503 = vld [vmem:[%s2501 + $0x8] sm:$0xff]
        %v2504 = vld [vmem:[%s2501 + $0x18] sm:$0xff]
        %v2505 = vld [vmem:[%s2501 + $0x20] sm:$0xff]
        %v2506 = vld [vmem:[%s2501 + $0x30] sm:$0xff]
        %v2507 = vld [vmem:[%s2501 + $0x38] sm:$0xff]
        %v2508 = vld [vmem:[%s2501 + $0x48] sm:$0xff]
        %v2509 = vld [vmem:[%s2501 + $0x50] sm:$0xff]
        %v2510 = vld [vmem:[%s2501 + $0x60] sm:$0xff]
        %v2511 = vld [vmem:[%s2501 + $0x68] sm:$0xff]
        %v2512 = vld [vmem:[%s2501 + $0x78] sm:$0xff]
        %v2513 = vld [vmem:[%s2501 + $0x80] sm:$0xff]
        %v2514 = vld [vmem:[%s2501 + $0x90] sm:$0xff]
        %v2515 = vld [vmem:[%s2501 + $0x98] sm:$0xff]
        %v2516 = vld [vmem:[%s2501 + $0xa8] sm:$0xff]
        %v2517 = vld [vmem:[%s2501 + $0xb0] sm:$0xff]
        %v2518 = vld [vmem:[%s2501 + $0xc0] sm:$0xff]
        %v2519 = vld [vmem:[%s2501 + $0xc8] sm:$0xff]
        %v2520 = vld [vmem:[%s2501 + $0xd8] sm:$0xff]
        %v2521 = vld [vmem:[%s2501 + $0xe0] sm:$0xff]
        %v2522 = vld [vmem:[%s2501 + $0xf0] sm:$0xff]
        %v2523 = vld [vmem:[%s2501 + $0xf8] sm:$0xff]
        %v2524 = vld [vmem:[%s2501 + $0x108] sm:$0xff]
        %v2525 = vld [vmem:[%s2501 + $0x110] sm:$0xff]
        %v2526 = vld [vmem:[%s2501 + $0x120] sm:$0xff]
        %v2527 = vld [vmem:[%s2501 + $0x128] sm:$0xff]
        %v2528 = vld [vmem:[%s2501 + $0x138] sm:$0xff]
        %v2529 = vld [vmem:[%s2501 + $0x140] sm:$0xff]
        %v2530 = vld [vmem:[%s2501 + $0x150] sm:$0xff]
        %v2531 = vld [vmem:[%s2501 + $0x158] sm:$0xff]
        %v2532 = vld [vmem:[%s2501 + $0x168] sm:$0xff]
        %v2533 = vld [vmem:[%s2501 + $0x170] sm:$0xff]
        %s2534 = scalar_lea.vmem %s1, 24
        %v2535 = vld [vmem:[%s2534] sm:$0xf]
        %v2537 = vsel %vm290, %v2502, 0
        %v2540 = vsel %vm290, %v2503, 0
        %v2543 = vsel %vm290, %v2504, 0
        %v2546 = vsel %vm290, %v2505, 0
        %v2549 = vsel %vm290, %v2506, 0
        %v2552 = vsel %vm290, %v2507, 0
        %v2555 = vsel %vm290, %v2508, 0
        %v2558 = vsel %vm290, %v2509, 0
        %v2561 = vsel %vm290, %v2510, 0
        %v2564 = vsel %vm290, %v2511, 0
        %v2567 = vsel %vm290, %v2512, 0
        %v2570 = vsel %vm290, %v2513, 0
        %v2573 = vsel %vm290, %v2514, 0
        %v2576 = vsel %vm290, %v2515, 0
        %v2579 = vsel %vm290, %v2516, 0
        %v2582 = vsel %vm290, %v2517, 0
        %v2585 = vsel %vm290, %v2518, 0
        %v2588 = vsel %vm290, %v2519, 0
        %v2591 = vsel %vm290, %v2520, 0
        %v2594 = vsel %vm290, %v2521, 0
        %v2597 = vsel %vm290, %v2522, 0
        %v2600 = vsel %vm290, %v2523, 0
        %v2603 = vsel %vm290, %v2524, 0
        %v2606 = vsel %vm290, %v2525, 0
        %v2609 = vsel %vm290, %v2526, 0
        %v2612 = vsel %vm290, %v2527, 0
        %v2615 = vsel %vm290, %v2528, 0
        %v2618 = vsel %vm290, %v2529, 0
        %v2621 = vsel %vm290, %v2530, 0
        %v2624 = vsel %vm290, %v2531, 0
        %v2627 = vsel %vm290, %v2532, 0
        %v2630 = vsel %vm290, %v2533, 0
        %v2633 = vsel %vm387, %v2535, 0
        %2635 = vmatprep.subr.mxu0 0.0
        %2636 = vmatpush1.msra.mxu0 0.0
        %2637 = vmatprep.subr.mxu0 0.0
        %2638 = vmatpush1.msra.mxu0 0.0
        %2639 = vmatprep.subr.mxu0 0.0
        %2640 = vmatpush1.msra.mxu0 0.0
        %2641 = vmatprep.subr.mxu0 0.0
        %2642 = vmatpush1.msra.mxu0 0.0
        %2643 = vmatprep.subr.mxu0 0.0
        %2644 = vmatpush1.msra.mxu0 0.0
        %2645 = vmatprep.subr.mxu0 0.0
        %2646 = vmatpush1.msra.mxu0 0.0
        %2647 = vmatprep.subr.mxu0 0.0
        %2648 = vmatpush1.msra.mxu0 0.0
        %2649 = vmatprep.subr.mxu0 0.0
        %2650 = vmatpush1.msra.mxu0 0.0
        %2651 = vmatprep.subr.mxu0 0.0
        %2652 = vmatpush1.msra.mxu0 0.0
        %2653 = vmatprep.subr.mxu0 0.0
        %2654 = vmatpush1.msra.mxu0 0.0
        %2655 = vmatprep.subr.mxu0 0.0
        %2656 = vmatpush1.msra.mxu0 0.0
        %2657 = vmatprep.subr.mxu0 0.0
        %2658 = vmatpush1.msra.mxu0 0.0
        %2659 = vmatprep.subr.mxu0 0.0
        %2660 = vmatpush1.msra.mxu0 0.0
        %2661 = vmatprep.subr.mxu0 0.0
        %2662 = vmatpush1.msra.mxu0 0.0
        %2663 = vmatprep.subr.mxu0 0.0
        %2664 = vmatpush1.msra.mxu0 0.0
        %2665 = vmatprep.subr.mxu0 0.0
        %2666 = vmatpush1.msra.mxu0 %v2633
        %2667 = vmatprep.subr.mxu0 0.0
        %2668 = vmatpush2.msra.mxu0 0.0
        %2669 = vmatprep.subr.mxu0 0.0
        %2670 = vmatpush2.msra.mxu0 0.0
        %2671 = vmatprep.subr.mxu0 0.0
        %2672 = vmatpush2.msra.mxu0 0.0
        %2673 = vmatprep.subr.mxu0 0.0
        %2674 = vmatpush2.msra.mxu0 0.0
        %2675 = vmatprep.subr.mxu0 0.0
        %2676 = vmatpush2.msra.mxu0 0.0
        %2677 = vmatprep.subr.mxu0 0.0
        %2678 = vmatpush2.msra.mxu0 0.0
        %2679 = vmatprep.subr.mxu0 0.0
        %2680 = vmatpush2.msra.mxu0 0.0
        %2681 = vmatprep.subr.mxu0 0.0
        %2682 = vmatpush2.msra.mxu0 0.0
        %2683 = vmatprep.subr.mxu0 0.0
        %2684 = vmatpush2.msra.mxu0 0.0
        %2685 = vmatprep.subr.mxu0 0.0
        %2686 = vmatpush2.msra.mxu0 0.0
        %2687 = vmatprep.subr.mxu0 0.0
        %2688 = vmatpush2.msra.mxu0 0.0
        %2689 = vmatprep.subr.mxu0 0.0
        %2690 = vmatpush2.msra.mxu0 0.0
        %2691 = vmatprep.subr.mxu0 0.0
        %2692 = vmatpush2.msra.mxu0 0.0
        %2693 = vmatprep.subr.mxu0 0.0
        %2694 = vmatpush2.msra.mxu0 0.0
        %2695 = vmatprep.subr.mxu0 0.0
        %2696 = vmatpush2.msra.mxu0 0.0
        %2697 = vmatprep.subr.mxu0 0.0
        %2698 = vmatpush2.msra.mxu0 0.0
        %2699 = vmatprep.mubr.f32.mxu0 0.0
        %2700 = vmatmul.mubr.f32.gmra.mxu0 %v2537
        %v2701 = vpop.f32.mrf.mxu0
        %v2702 = vadd.f32 0.0, %v2701
        %v2703 = vpop.f32.mrf.mxu0
        %2704 = vmatprep.mubr.f32.mxu0 0.0
        %2705 = vmatmul.mubr.f32.gmra.mxu0 %v2540
        %v2706 = vpop.f32.mrf.mxu0
        %v2707 = vadd.f32 0.0, %v2706
        %v2708 = vpop.f32.mrf.mxu0
        %2709 = vmatprep.mubr.f32.mxu0 0.0
        %2710 = vmatmul.mubr.f32.gmra.mxu0 %v2543
        %v2711 = vpop.f32.mrf.mxu0
        %v2712 = vadd.f32 0.0, %v2711
        %v2713 = vpop.f32.mrf.mxu0
        %2714 = vmatprep.mubr.f32.mxu0 0.0
        %2715 = vmatmul.mubr.f32.gmra.mxu0 %v2546
        %v2716 = vpop.f32.mrf.mxu0
        %v2717 = vadd.f32 0.0, %v2716
        %v2718 = vpop.f32.mrf.mxu0
        %2719 = vmatprep.mubr.f32.mxu0 0.0
        %2720 = vmatmul.mubr.f32.gmra.mxu0 %v2549
        %v2721 = vpop.f32.mrf.mxu0
        %v2722 = vadd.f32 0.0, %v2721
        %v2723 = vpop.f32.mrf.mxu0
        %2724 = vmatprep.mubr.f32.mxu0 0.0
        %2725 = vmatmul.mubr.f32.gmra.mxu0 %v2552
        %v2726 = vpop.f32.mrf.mxu0
        %v2727 = vadd.f32 0.0, %v2726
        %v2728 = vpop.f32.mrf.mxu0
        %2729 = vmatprep.mubr.f32.mxu0 0.0
        %2730 = vmatmul.mubr.f32.gmra.mxu0 %v2555
        %v2731 = vpop.f32.mrf.mxu0
        %v2732 = vadd.f32 0.0, %v2731
        %v2733 = vpop.f32.mrf.mxu0
        %2734 = vmatprep.mubr.f32.mxu0 0.0
        %2735 = vmatmul.mubr.f32.gmra.mxu0 %v2558
        %v2736 = vpop.f32.mrf.mxu0
        %v2737 = vadd.f32 0.0, %v2736
        %v2738 = vpop.f32.mrf.mxu0
        %2739 = vmatprep.mubr.f32.mxu0 0.0
        %2740 = vmatmul.mubr.f32.gmra.mxu0 %v2561
        %v2741 = vpop.f32.mrf.mxu0
        %v2742 = vadd.f32 0.0, %v2741
        %v2743 = vpop.f32.mrf.mxu0
        %2744 = vmatprep.mubr.f32.mxu0 0.0
        %2745 = vmatmul.mubr.f32.gmra.mxu0 %v2564
        %v2746 = vpop.f32.mrf.mxu0
        %v2747 = vadd.f32 0.0, %v2746
        %v2748 = vpop.f32.mrf.mxu0
        %2749 = vmatprep.mubr.f32.mxu0 0.0
        %2750 = vmatmul.mubr.f32.gmra.mxu0 %v2567
        %v2751 = vpop.f32.mrf.mxu0
        %v2752 = vadd.f32 0.0, %v2751
        %v2753 = vpop.f32.mrf.mxu0
        %2754 = vmatprep.mubr.f32.mxu0 0.0
        %2755 = vmatmul.mubr.f32.gmra.mxu0 %v2570
        %v2756 = vpop.f32.mrf.mxu0
        %v2757 = vadd.f32 0.0, %v2756
        %v2758 = vpop.f32.mrf.mxu0
        %2759 = vmatprep.mubr.f32.mxu0 0.0
        %2760 = vmatmul.mubr.f32.gmra.mxu0 %v2573
        %v2761 = vpop.f32.mrf.mxu0
        %v2762 = vadd.f32 0.0, %v2761
        %v2763 = vpop.f32.mrf.mxu0
        %2764 = vmatprep.mubr.f32.mxu0 0.0
        %2765 = vmatmul.mubr.f32.gmra.mxu0 %v2576
        %v2766 = vpop.f32.mrf.mxu0
        %v2767 = vadd.f32 0.0, %v2766
        %v2768 = vpop.f32.mrf.mxu0
        %2769 = vmatprep.mubr.f32.mxu0 0.0
        %2770 = vmatmul.mubr.f32.gmra.mxu0 %v2579
        %v2771 = vpop.f32.mrf.mxu0
        %v2772 = vadd.f32 0.0, %v2771
        %v2773 = vpop.f32.mrf.mxu0
        %2774 = vmatprep.mubr.f32.mxu0 0.0
        %2775 = vmatmul.mubr.f32.gmra.mxu0 %v2582
        %v2776 = vpop.f32.mrf.mxu0
        %v2777 = vadd.f32 0.0, %v2776
        %v2778 = vpop.f32.mrf.mxu0
        %2779 = vmatprep.mubr.f32.mxu0 0.0
        %2780 = vmatmul.mubr.f32.gmra.mxu0 %v2585
        %v2781 = vpop.f32.mrf.mxu0
        %v2782 = vadd.f32 0.0, %v2781
        %v2783 = vpop.f32.mrf.mxu0
        %2784 = vmatprep.mubr.f32.mxu0 0.0
        %2785 = vmatmul.mubr.f32.gmra.mxu0 %v2588
        %v2786 = vpop.f32.mrf.mxu0
        %v2787 = vadd.f32 0.0, %v2786
        %v2788 = vpop.f32.mrf.mxu0
        %2789 = vmatprep.mubr.f32.mxu0 0.0
        %2790 = vmatmul.mubr.f32.gmra.mxu0 %v2591
        %v2791 = vpop.f32.mrf.mxu0
        %v2792 = vadd.f32 0.0, %v2791
        %v2793 = vpop.f32.mrf.mxu0
        %2794 = vmatprep.mubr.f32.mxu0 0.0
        %2795 = vmatmul.mubr.f32.gmra.mxu0 %v2594
        %v2796 = vpop.f32.mrf.mxu0
        %v2797 = vadd.f32 0.0, %v2796
        %v2798 = vpop.f32.mrf.mxu0
        %2799 = vmatprep.mubr.f32.mxu0 0.0
        %2800 = vmatmul.mubr.f32.gmra.mxu0 %v2597
        %v2801 = vpop.f32.mrf.mxu0
        %v2802 = vadd.f32 0.0, %v2801
        %v2803 = vpop.f32.mrf.mxu0
        %2804 = vmatprep.mubr.f32.mxu0 0.0
        %2805 = vmatmul.mubr.f32.gmra.mxu0 %v2600
        %v2806 = vpop.f32.mrf.mxu0
        %v2807 = vadd.f32 0.0, %v2806
        %v2808 = vpop.f32.mrf.mxu0
        %2809 = vmatprep.mubr.f32.mxu0 0.0
        %2810 = vmatmul.mubr.f32.gmra.mxu0 %v2603
        %v2811 = vpop.f32.mrf.mxu0
        %v2812 = vadd.f32 0.0, %v2811
        %v2813 = vpop.f32.mrf.mxu0
        %2814 = vmatprep.mubr.f32.mxu0 0.0
        %2815 = vmatmul.mubr.f32.gmra.mxu0 %v2606
        %v2816 = vpop.f32.mrf.mxu0
        %v2817 = vadd.f32 0.0, %v2816
        %v2818 = vpop.f32.mrf.mxu0
        %2819 = vmatprep.mubr.f32.mxu0 0.0
        %2820 = vmatmul.mubr.f32.gmra.mxu0 %v2609
        %v2821 = vpop.f32.mrf.mxu0
        %v2822 = vadd.f32 0.0, %v2821
        %v2823 = vpop.f32.mrf.mxu0
        %2824 = vmatprep.mubr.f32.mxu0 0.0
        %2825 = vmatmul.mubr.f32.gmra.mxu0 %v2612
        %v2826 = vpop.f32.mrf.mxu0
        %v2827 = vadd.f32 0.0, %v2826
        %v2828 = vpop.f32.mrf.mxu0
        %2829 = vmatprep.mubr.f32.mxu0 0.0
        %2830 = vmatmul.mubr.f32.gmra.mxu0 %v2615
        %v2831 = vpop.f32.mrf.mxu0
        %v2832 = vadd.f32 0.0, %v2831
        %v2833 = vpop.f32.mrf.mxu0
        %2834 = vmatprep.mubr.f32.mxu0 0.0
        %2835 = vmatmul.mubr.f32.gmra.mxu0 %v2618
        %v2836 = vpop.f32.mrf.mxu0
        %v2837 = vadd.f32 0.0, %v2836
        %v2838 = vpop.f32.mrf.mxu0
        %2839 = vmatprep.mubr.f32.mxu0 0.0
        %2840 = vmatmul.mubr.f32.gmra.mxu0 %v2621
        %v2841 = vpop.f32.mrf.mxu0
        %v2842 = vadd.f32 0.0, %v2841
        %v2843 = vpop.f32.mrf.mxu0
        %2844 = vmatprep.mubr.f32.mxu0 0.0
        %2845 = vmatmul.mubr.f32.gmra.mxu0 %v2624
        %v2846 = vpop.f32.mrf.mxu0
        %v2847 = vadd.f32 0.0, %v2846
        %v2848 = vpop.f32.mrf.mxu0
        %2849 = vmatprep.mubr.f32.mxu0 0.0
        %2850 = vmatmul.mubr.f32.gmra.mxu0 %v2627
        %v2851 = vpop.f32.mrf.mxu0
        %v2852 = vadd.f32 0.0, %v2851
        %v2853 = vpop.f32.mrf.mxu0
        %2854 = vmatprep.mubr.f32.mxu0 0.0
        %2855 = vmatmul.mubr.f32.gmra.mxu0 %v2630
        %v2856 = vpop.f32.mrf.mxu0
        %v2857 = vadd.f32 0.0, %v2856
        %v2858 = vpop.f32.mrf.mxu0
        %2859 = vdwg.mxu0
        %v2860 = vadd.f32 %v2469, %v2702
        %v2861 = vadd.f32 %v2470, %v2707
        %v2862 = vadd.f32 %v2471, %v2712
        %v2863 = vadd.f32 %v2472, %v2717
        %v2864 = vadd.f32 %v2473, %v2722
        %v2865 = vadd.f32 %v2474, %v2727
        %v2866 = vadd.f32 %v2475, %v2732
        %v2867 = vadd.f32 %v2476, %v2737
        %v2868 = vadd.f32 %v2477, %v2742
        %v2869 = vadd.f32 %v2478, %v2747
        %v2870 = vadd.f32 %v2479, %v2752
        %v2871 = vadd.f32 %v2480, %v2757
        %v2872 = vadd.f32 %v2481, %v2762
        %v2873 = vadd.f32 %v2482, %v2767
        %v2874 = vadd.f32 %v2483, %v2772
        %v2875 = vadd.f32 %v2484, %v2777
        %v2876 = vadd.f32 %v2485, %v2782
        %v2877 = vadd.f32 %v2486, %v2787
        %v2878 = vadd.f32 %v2487, %v2792
        %v2879 = vadd.f32 %v2488, %v2797
        %v2880 = vadd.f32 %v2489, %v2802
        %v2881 = vadd.f32 %v2490, %v2807
        %v2882 = vadd.f32 %v2491, %v2812
        %v2883 = vadd.f32 %v2492, %v2817
        %v2884 = vadd.f32 %v2493, %v2822
        %v2885 = vadd.f32 %v2494, %v2827
        %v2886 = vadd.f32 %v2495, %v2832
        %v2887 = vadd.f32 %v2496, %v2837
        %v2888 = vadd.f32 %v2497, %v2842
        %v2889 = vadd.f32 %v2498, %v2847
        %v2890 = vadd.f32 %v2499, %v2852
        %v2891 = vadd.f32 %v2500, %v2857
        %v2892 = vld [vmem:[%s2501 + $0x1] sm:$0xff]
        %v2893 = vld [vmem:[%s2501 + $0x9] sm:$0xff]
        %v2894 = vld [vmem:[%s2501 + $0x19] sm:$0xff]
        %v2895 = vld [vmem:[%s2501 + $0x21] sm:$0xff]
        %v2896 = vld [vmem:[%s2501 + $0x31] sm:$0xff]
        %v2897 = vld [vmem:[%s2501 + $0x39] sm:$0xff]
        %v2898 = vld [vmem:[%s2501 + $0x49] sm:$0xff]
        %v2899 = vld [vmem:[%s2501 + $0x51] sm:$0xff]
        %v2900 = vld [vmem:[%s2501 + $0x61] sm:$0xff]
        %v2901 = vld [vmem:[%s2501 + $0x69] sm:$0xff]
        %v2902 = vld [vmem:[%s2501 + $0x79] sm:$0xff]
        %v2903 = vld [vmem:[%s2501 + $0x81] sm:$0xff]
        %v2904 = vld [vmem:[%s2501 + $0x91] sm:$0xff]
        %v2905 = vld [vmem:[%s2501 + $0x99] sm:$0xff]
        %v2906 = vld [vmem:[%s2501 + $0xa9] sm:$0xff]
        %v2907 = vld [vmem:[%s2501 + $0xb1] sm:$0xff]
        %v2908 = vld [vmem:[%s2501 + $0xc1] sm:$0xff]
        %v2909 = vld [vmem:[%s2501 + $0xc9] sm:$0xff]
        %v2910 = vld [vmem:[%s2501 + $0xd9] sm:$0xff]
        %v2911 = vld [vmem:[%s2501 + $0xe1] sm:$0xff]
        %v2912 = vld [vmem:[%s2501 + $0xf1] sm:$0xff]
        %v2913 = vld [vmem:[%s2501 + $0xf9] sm:$0xff]
        %v2914 = vld [vmem:[%s2501 + $0x109] sm:$0xff]
        %v2915 = vld [vmem:[%s2501 + $0x111] sm:$0xff]
        %v2916 = vld [vmem:[%s2501 + $0x121] sm:$0xff]
        %v2917 = vld [vmem:[%s2501 + $0x129] sm:$0xff]
        %v2918 = vld [vmem:[%s2501 + $0x139] sm:$0xff]
        %v2919 = vld [vmem:[%s2501 + $0x141] sm:$0xff]
        %v2920 = vld [vmem:[%s2501 + $0x151] sm:$0xff]
        %v2921 = vld [vmem:[%s2501 + $0x159] sm:$0xff]
        %v2922 = vld [vmem:[%s2501 + $0x169] sm:$0xff]
        %v2923 = vld [vmem:[%s2501 + $0x171] sm:$0xff]
        %s2924 = scalar_lea.vmem %s1, 28
        %v2925 = vld [vmem:[%s2924] sm:$0xf]
        %v2927 = vsel %vm290, %v2892, 0
        %v2930 = vsel %vm290, %v2893, 0
        %v2933 = vsel %vm290, %v2894, 0
        %v2936 = vsel %vm290, %v2895, 0
        %v2939 = vsel %vm290, %v2896, 0
        %v2942 = vsel %vm290, %v2897, 0
        %v2945 = vsel %vm290, %v2898, 0
        %v2948 = vsel %vm290, %v2899, 0
        %v2951 = vsel %vm290, %v2900, 0
        %v2954 = vsel %vm290, %v2901, 0
        %v2957 = vsel %vm290, %v2902, 0
        %v2960 = vsel %vm290, %v2903, 0
        %v2963 = vsel %vm290, %v2904, 0
        %v2966 = vsel %vm290, %v2905, 0
        %v2969 = vsel %vm290, %v2906, 0
        %v2972 = vsel %vm290, %v2907, 0
        %v2975 = vsel %vm290, %v2908, 0
        %v2978 = vsel %vm290, %v2909, 0
        %v2981 = vsel %vm290, %v2910, 0
        %v2984 = vsel %vm290, %v2911, 0
        %v2987 = vsel %vm290, %v2912, 0
        %v2990 = vsel %vm290, %v2913, 0
        %v2993 = vsel %vm290, %v2914, 0
        %v2996 = vsel %vm290, %v2915, 0
        %v2999 = vsel %vm290, %v2916, 0
        %v3002 = vsel %vm290, %v2917, 0
        %v3005 = vsel %vm290, %v2918, 0
        %v3008 = vsel %vm290, %v2919, 0
        %v3011 = vsel %vm290, %v2920, 0
        %v3014 = vsel %vm290, %v2921, 0
        %v3017 = vsel %vm290, %v2922, 0
        %v3020 = vsel %vm290, %v2923, 0
        %v3023 = vsel %vm387, %v2925, 0
        %3025 = vmatprep.subr.mxu0 0.0
        %3026 = vmatpush1.msra.mxu0 0.0
        %3027 = vmatprep.subr.mxu0 0.0
        %3028 = vmatpush1.msra.mxu0 0.0
        %3029 = vmatprep.subr.mxu0 0.0
        %3030 = vmatpush1.msra.mxu0 0.0
        %3031 = vmatprep.subr.mxu0 0.0
        %3032 = vmatpush1.msra.mxu0 0.0
        %3033 = vmatprep.subr.mxu0 0.0
        %3034 = vmatpush1.msra.mxu0 0.0
        %3035 = vmatprep.subr.mxu0 0.0
        %3036 = vmatpush1.msra.mxu0 0.0
        %3037 = vmatprep.subr.mxu0 0.0
        %3038 = vmatpush1.msra.mxu0 0.0
        %3039 = vmatprep.subr.mxu0 0.0
        %3040 = vmatpush1.msra.mxu0 0.0
        %3041 = vmatprep.subr.mxu0 0.0
        %3042 = vmatpush1.msra.mxu0 0.0
        %3043 = vmatprep.subr.mxu0 0.0
        %3044 = vmatpush1.msra.mxu0 0.0
        %3045 = vmatprep.subr.mxu0 0.0
        %3046 = vmatpush1.msra.mxu0 0.0
        %3047 = vmatprep.subr.mxu0 0.0
        %3048 = vmatpush1.msra.mxu0 0.0
        %3049 = vmatprep.subr.mxu0 0.0
        %3050 = vmatpush1.msra.mxu0 0.0
        %3051 = vmatprep.subr.mxu0 0.0
        %3052 = vmatpush1.msra.mxu0 0.0
        %3053 = vmatprep.subr.mxu0 0.0
        %3054 = vmatpush1.msra.mxu0 0.0
        %3055 = vmatprep.subr.mxu0 0.0
        %3056 = vmatpush1.msra.mxu0 %v3023
        %3057 = vmatprep.subr.mxu0 0.0
        %3058 = vmatpush2.msra.mxu0 0.0
        %3059 = vmatprep.subr.mxu0 0.0
        %3060 = vmatpush2.msra.mxu0 0.0
        %3061 = vmatprep.subr.mxu0 0.0
        %3062 = vmatpush2.msra.mxu0 0.0
        %3063 = vmatprep.subr.mxu0 0.0
        %3064 = vmatpush2.msra.mxu0 0.0
        %3065 = vmatprep.subr.mxu0 0.0
        %3066 = vmatpush2.msra.mxu0 0.0
        %3067 = vmatprep.subr.mxu0 0.0
        %3068 = vmatpush2.msra.mxu0 0.0
        %3069 = vmatprep.subr.mxu0 0.0
        %3070 = vmatpush2.msra.mxu0 0.0
        %3071 = vmatprep.subr.mxu0 0.0
        %3072 = vmatpush2.msra.mxu0 0.0
        %3073 = vmatprep.subr.mxu0 0.0
        %3074 = vmatpush2.msra.mxu0 0.0
        %3075 = vmatprep.subr.mxu0 0.0
        %3076 = vmatpush2.msra.mxu0 0.0
        %3077 = vmatprep.subr.mxu0 0.0
        %3078 = vmatpush2.msra.mxu0 0.0
        %3079 = vmatprep.subr.mxu0 0.0
        %3080 = vmatpush2.msra.mxu0 0.0
        %3081 = vmatprep.subr.mxu0 0.0
        %3082 = vmatpush2.msra.mxu0 0.0
        %3083 = vmatprep.subr.mxu0 0.0
        %3084 = vmatpush2.msra.mxu0 0.0
        %3085 = vmatprep.subr.mxu0 0.0
        %3086 = vmatpush2.msra.mxu0 0.0
        %3087 = vmatprep.subr.mxu0 0.0
        %3088 = vmatpush2.msra.mxu0 0.0
        %3089 = vmatprep.mubr.f32.mxu0 0.0
        %3090 = vmatmul.mubr.f32.gmra.mxu0 %v2927
        %v3091 = vpop.f32.mrf.mxu0
        %v3092 = vadd.f32 0.0, %v3091
        %v3093 = vpop.f32.mrf.mxu0
        %3094 = vmatprep.mubr.f32.mxu0 0.0
        %3095 = vmatmul.mubr.f32.gmra.mxu0 %v2930
        %v3096 = vpop.f32.mrf.mxu0
        %v3097 = vadd.f32 0.0, %v3096
        %v3098 = vpop.f32.mrf.mxu0
        %3099 = vmatprep.mubr.f32.mxu0 0.0
        %3100 = vmatmul.mubr.f32.gmra.mxu0 %v2933
        %v3101 = vpop.f32.mrf.mxu0
        %v3102 = vadd.f32 0.0, %v3101
        %v3103 = vpop.f32.mrf.mxu0
        %3104 = vmatprep.mubr.f32.mxu0 0.0
        %3105 = vmatmul.mubr.f32.gmra.mxu0 %v2936
        %v3106 = vpop.f32.mrf.mxu0
        %v3107 = vadd.f32 0.0, %v3106
        %v3108 = vpop.f32.mrf.mxu0
        %3109 = vmatprep.mubr.f32.mxu0 0.0
        %3110 = vmatmul.mubr.f32.gmra.mxu0 %v2939
        %v3111 = vpop.f32.mrf.mxu0
        %v3112 = vadd.f32 0.0, %v3111
        %v3113 = vpop.f32.mrf.mxu0
        %3114 = vmatprep.mubr.f32.mxu0 0.0
        %3115 = vmatmul.mubr.f32.gmra.mxu0 %v2942
        %v3116 = vpop.f32.mrf.mxu0
        %v3117 = vadd.f32 0.0, %v3116
        %v3118 = vpop.f32.mrf.mxu0
        %3119 = vmatprep.mubr.f32.mxu0 0.0
        %3120 = vmatmul.mubr.f32.gmra.mxu0 %v2945
        %v3121 = vpop.f32.mrf.mxu0
        %v3122 = vadd.f32 0.0, %v3121
        %v3123 = vpop.f32.mrf.mxu0
        %3124 = vmatprep.mubr.f32.mxu0 0.0
        %3125 = vmatmul.mubr.f32.gmra.mxu0 %v2948
        %v3126 = vpop.f32.mrf.mxu0
        %v3127 = vadd.f32 0.0, %v3126
        %v3128 = vpop.f32.mrf.mxu0
        %3129 = vmatprep.mubr.f32.mxu0 0.0
        %3130 = vmatmul.mubr.f32.gmra.mxu0 %v2951
        %v3131 = vpop.f32.mrf.mxu0
        %v3132 = vadd.f32 0.0, %v3131
        %v3133 = vpop.f32.mrf.mxu0
        %3134 = vmatprep.mubr.f32.mxu0 0.0
        %3135 = vmatmul.mubr.f32.gmra.mxu0 %v2954
        %v3136 = vpop.f32.mrf.mxu0
        %v3137 = vadd.f32 0.0, %v3136
        %v3138 = vpop.f32.mrf.mxu0
        %3139 = vmatprep.mubr.f32.mxu0 0.0
        %3140 = vmatmul.mubr.f32.gmra.mxu0 %v2957
        %v3141 = vpop.f32.mrf.mxu0
        %v3142 = vadd.f32 0.0, %v3141
        %v3143 = vpop.f32.mrf.mxu0
        %3144 = vmatprep.mubr.f32.mxu0 0.0
        %3145 = vmatmul.mubr.f32.gmra.mxu0 %v2960
        %v3146 = vpop.f32.mrf.mxu0
        %v3147 = vadd.f32 0.0, %v3146
        %v3148 = vpop.f32.mrf.mxu0
        %3149 = vmatprep.mubr.f32.mxu0 0.0
        %3150 = vmatmul.mubr.f32.gmra.mxu0 %v2963
        %v3151 = vpop.f32.mrf.mxu0
        %v3152 = vadd.f32 0.0, %v3151
        %v3153 = vpop.f32.mrf.mxu0
        %3154 = vmatprep.mubr.f32.mxu0 0.0
        %3155 = vmatmul.mubr.f32.gmra.mxu0 %v2966
        %v3156 = vpop.f32.mrf.mxu0
        %v3157 = vadd.f32 0.0, %v3156
        %v3158 = vpop.f32.mrf.mxu0
        %3159 = vmatprep.mubr.f32.mxu0 0.0
        %3160 = vmatmul.mubr.f32.gmra.mxu0 %v2969
        %v3161 = vpop.f32.mrf.mxu0
        %v3162 = vadd.f32 0.0, %v3161
        %v3163 = vpop.f32.mrf.mxu0
        %3164 = vmatprep.mubr.f32.mxu0 0.0
        %3165 = vmatmul.mubr.f32.gmra.mxu0 %v2972
        %v3166 = vpop.f32.mrf.mxu0
        %v3167 = vadd.f32 0.0, %v3166
        %v3168 = vpop.f32.mrf.mxu0
        %3169 = vmatprep.mubr.f32.mxu0 0.0
        %3170 = vmatmul.mubr.f32.gmra.mxu0 %v2975
        %v3171 = vpop.f32.mrf.mxu0
        %v3172 = vadd.f32 0.0, %v3171
        %v3173 = vpop.f32.mrf.mxu0
        %3174 = vmatprep.mubr.f32.mxu0 0.0
        %3175 = vmatmul.mubr.f32.gmra.mxu0 %v2978
        %v3176 = vpop.f32.mrf.mxu0
        %v3177 = vadd.f32 0.0, %v3176
        %v3178 = vpop.f32.mrf.mxu0
        %3179 = vmatprep.mubr.f32.mxu0 0.0
        %3180 = vmatmul.mubr.f32.gmra.mxu0 %v2981
        %v3181 = vpop.f32.mrf.mxu0
        %v3182 = vadd.f32 0.0, %v3181
        %v3183 = vpop.f32.mrf.mxu0
        %3184 = vmatprep.mubr.f32.mxu0 0.0
        %3185 = vmatmul.mubr.f32.gmra.mxu0 %v2984
        %v3186 = vpop.f32.mrf.mxu0
        %v3187 = vadd.f32 0.0, %v3186
        %v3188 = vpop.f32.mrf.mxu0
        %3189 = vmatprep.mubr.f32.mxu0 0.0
        %3190 = vmatmul.mubr.f32.gmra.mxu0 %v2987
        %v3191 = vpop.f32.mrf.mxu0
        %v3192 = vadd.f32 0.0, %v3191
        %v3193 = vpop.f32.mrf.mxu0
        %3194 = vmatprep.mubr.f32.mxu0 0.0
        %3195 = vmatmul.mubr.f32.gmra.mxu0 %v2990
        %v3196 = vpop.f32.mrf.mxu0
        %v3197 = vadd.f32 0.0, %v3196
        %v3198 = vpop.f32.mrf.mxu0
        %3199 = vmatprep.mubr.f32.mxu0 0.0
        %3200 = vmatmul.mubr.f32.gmra.mxu0 %v2993
        %v3201 = vpop.f32.mrf.mxu0
        %v3202 = vadd.f32 0.0, %v3201
        %v3203 = vpop.f32.mrf.mxu0
        %3204 = vmatprep.mubr.f32.mxu0 0.0
        %3205 = vmatmul.mubr.f32.gmra.mxu0 %v2996
        %v3206 = vpop.f32.mrf.mxu0
        %v3207 = vadd.f32 0.0, %v3206
        %v3208 = vpop.f32.mrf.mxu0
        %3209 = vmatprep.mubr.f32.mxu0 0.0
        %3210 = vmatmul.mubr.f32.gmra.mxu0 %v2999
        %v3211 = vpop.f32.mrf.mxu0
        %v3212 = vadd.f32 0.0, %v3211
        %v3213 = vpop.f32.mrf.mxu0
        %3214 = vmatprep.mubr.f32.mxu0 0.0
        %3215 = vmatmul.mubr.f32.gmra.mxu0 %v3002
        %v3216 = vpop.f32.mrf.mxu0
        %v3217 = vadd.f32 0.0, %v3216
        %v3218 = vpop.f32.mrf.mxu0
        %3219 = vmatprep.mubr.f32.mxu0 0.0
        %3220 = vmatmul.mubr.f32.gmra.mxu0 %v3005
        %v3221 = vpop.f32.mrf.mxu0
        %v3222 = vadd.f32 0.0, %v3221
        %v3223 = vpop.f32.mrf.mxu0
        %3224 = vmatprep.mubr.f32.mxu0 0.0
        %3225 = vmatmul.mubr.f32.gmra.mxu0 %v3008
        %v3226 = vpop.f32.mrf.mxu0
        %v3227 = vadd.f32 0.0, %v3226
        %v3228 = vpop.f32.mrf.mxu0
        %3229 = vmatprep.mubr.f32.mxu0 0.0
        %3230 = vmatmul.mubr.f32.gmra.mxu0 %v3011
        %v3231 = vpop.f32.mrf.mxu0
        %v3232 = vadd.f32 0.0, %v3231
        %v3233 = vpop.f32.mrf.mxu0
        %3234 = vmatprep.mubr.f32.mxu0 0.0
        %3235 = vmatmul.mubr.f32.gmra.mxu0 %v3014
        %v3236 = vpop.f32.mrf.mxu0
        %v3237 = vadd.f32 0.0, %v3236
        %v3238 = vpop.f32.mrf.mxu0
        %3239 = vmatprep.mubr.f32.mxu0 0.0
        %3240 = vmatmul.mubr.f32.gmra.mxu0 %v3017
        %v3241 = vpop.f32.mrf.mxu0
        %v3242 = vadd.f32 0.0, %v3241
        %v3243 = vpop.f32.mrf.mxu0
        %3244 = vmatprep.mubr.f32.mxu0 0.0
        %3245 = vmatmul.mubr.f32.gmra.mxu0 %v3020
        %v3246 = vpop.f32.mrf.mxu0
        %v3247 = vadd.f32 0.0, %v3246
        %v3248 = vpop.f32.mrf.mxu0
        %3249 = vdwg.mxu0
        %v3250 = vadd.f32 %v2860, %v3092
        %v3251 = vadd.f32 %v2861, %v3097
        %v3252 = vadd.f32 %v2862, %v3102
        %v3253 = vadd.f32 %v2863, %v3107
        %v3254 = vadd.f32 %v2864, %v3112
        %v3255 = vadd.f32 %v2865, %v3117
        %v3256 = vadd.f32 %v2866, %v3122
        %v3257 = vadd.f32 %v2867, %v3127
        %v3258 = vadd.f32 %v2868, %v3132
        %v3259 = vadd.f32 %v2869, %v3137
        %v3260 = vadd.f32 %v2870, %v3142
        %v3261 = vadd.f32 %v2871, %v3147
        %v3262 = vadd.f32 %v2872, %v3152
        %v3263 = vadd.f32 %v2873, %v3157
        %v3264 = vadd.f32 %v2874, %v3162
        %v3265 = vadd.f32 %v2875, %v3167
        %v3266 = vadd.f32 %v2876, %v3172
        %v3267 = vadd.f32 %v2877, %v3177
        %v3268 = vadd.f32 %v2878, %v3182
        %v3269 = vadd.f32 %v2879, %v3187
        %v3270 = vadd.f32 %v2880, %v3192
        %v3271 = vadd.f32 %v2881, %v3197
        %v3272 = vadd.f32 %v2882, %v3202
        %v3273 = vadd.f32 %v2883, %v3207
        %v3274 = vadd.f32 %v2884, %v3212
        %v3275 = vadd.f32 %v2885, %v3217
        %v3276 = vadd.f32 %v2886, %v3222
        %v3277 = vadd.f32 %v2887, %v3227
        %v3278 = vadd.f32 %v2888, %v3232
        %v3279 = vadd.f32 %v2889, %v3237
        %v3280 = vadd.f32 %v2890, %v3242
        %v3281 = vadd.f32 %v2891, %v3247
        %v3282 = vld [vmem:[%s2501 + $0x2] sm:$0xff]
        %v3283 = vld [vmem:[%s2501 + $0xa] sm:$0xff]
        %v3284 = vld [vmem:[%s2501 + $0x1a] sm:$0xff]
        %v3285 = vld [vmem:[%s2501 + $0x22] sm:$0xff]
        %v3286 = vld [vmem:[%s2501 + $0x32] sm:$0xff]
        %v3287 = vld [vmem:[%s2501 + $0x3a] sm:$0xff]
        %v3288 = vld [vmem:[%s2501 + $0x4a] sm:$0xff]
        %v3289 = vld [vmem:[%s2501 + $0x52] sm:$0xff]
        %v3290 = vld [vmem:[%s2501 + $0x62] sm:$0xff]
        %v3291 = vld [vmem:[%s2501 + $0x6a] sm:$0xff]
        %v3292 = vld [vmem:[%s2501 + $0x7a] sm:$0xff]
        %v3293 = vld [vmem:[%s2501 + $0x82] sm:$0xff]
        %v3294 = vld [vmem:[%s2501 + $0x92] sm:$0xff]
        %v3295 = vld [vmem:[%s2501 + $0x9a] sm:$0xff]
        %v3296 = vld [vmem:[%s2501 + $0xaa] sm:$0xff]
        %v3297 = vld [vmem:[%s2501 + $0xb2] sm:$0xff]
        %v3298 = vld [vmem:[%s2501 + $0xc2] sm:$0xff]
        %v3299 = vld [vmem:[%s2501 + $0xca] sm:$0xff]
        %v3300 = vld [vmem:[%s2501 + $0xda] sm:$0xff]
        %v3301 = vld [vmem:[%s2501 + $0xe2] sm:$0xff]
        %v3302 = vld [vmem:[%s2501 + $0xf2] sm:$0xff]
        %v3303 = vld [vmem:[%s2501 + $0xfa] sm:$0xff]
        %v3304 = vld [vmem:[%s2501 + $0x10a] sm:$0xff]
        %v3305 = vld [vmem:[%s2501 + $0x112] sm:$0xff]
        %v3306 = vld [vmem:[%s2501 + $0x122] sm:$0xff]
        %v3307 = vld [vmem:[%s2501 + $0x12a] sm:$0xff]
        %v3308 = vld [vmem:[%s2501 + $0x13a] sm:$0xff]
        %v3309 = vld [vmem:[%s2501 + $0x142] sm:$0xff]
        %v3310 = vld [vmem:[%s2501 + $0x152] sm:$0xff]
        %v3311 = vld [vmem:[%s2501 + $0x15a] sm:$0xff]
        %v3312 = vld [vmem:[%s2501 + $0x16a] sm:$0xff]
        %v3313 = vld [vmem:[%s2501 + $0x172] sm:$0xff]
        %s3314 = scalar_lea.vmem %s1, 32
        %v3315 = vld [vmem:[%s3314] sm:$0xf]
        %v3317 = vsel %vm290, %v3282, 0
        %v3320 = vsel %vm290, %v3283, 0
        %v3323 = vsel %vm290, %v3284, 0
        %v3326 = vsel %vm290, %v3285, 0
        %v3329 = vsel %vm290, %v3286, 0
        %v3332 = vsel %vm290, %v3287, 0
        %v3335 = vsel %vm290, %v3288, 0
        %v3338 = vsel %vm290, %v3289, 0
        %v3341 = vsel %vm290, %v3290, 0
        %v3344 = vsel %vm290, %v3291, 0
        %v3347 = vsel %vm290, %v3292, 0
        %v3350 = vsel %vm290, %v3293, 0
        %v3353 = vsel %vm290, %v3294, 0
        %v3356 = vsel %vm290, %v3295, 0
        %v3359 = vsel %vm290, %v3296, 0
        %v3362 = vsel %vm290, %v3297, 0
        %v3365 = vsel %vm290, %v3298, 0
        %v3368 = vsel %vm290, %v3299, 0
        %v3371 = vsel %vm290, %v3300, 0
        %v3374 = vsel %vm290, %v3301, 0
        %v3377 = vsel %vm290, %v3302, 0
        %v3380 = vsel %vm290, %v3303, 0
        %v3383 = vsel %vm290, %v3304, 0
        %v3386 = vsel %vm290, %v3305, 0
        %v3389 = vsel %vm290, %v3306, 0
        %v3392 = vsel %vm290, %v3307, 0
        %v3395 = vsel %vm290, %v3308, 0
        %v3398 = vsel %vm290, %v3309, 0
        %v3401 = vsel %vm290, %v3310, 0
        %v3404 = vsel %vm290, %v3311, 0
        %v3407 = vsel %vm290, %v3312, 0
        %v3410 = vsel %vm290, %v3313, 0
        %v3413 = vsel %vm387, %v3315, 0
        %3415 = vmatprep.subr.mxu0 0.0
        %3416 = vmatpush1.msra.mxu0 0.0
        %3417 = vmatprep.subr.mxu0 0.0
        %3418 = vmatpush1.msra.mxu0 0.0
        %3419 = vmatprep.subr.mxu0 0.0
        %3420 = vmatpush1.msra.mxu0 0.0
        %3421 = vmatprep.subr.mxu0 0.0
        %3422 = vmatpush1.msra.mxu0 0.0
        %3423 = vmatprep.subr.mxu0 0.0
        %3424 = vmatpush1.msra.mxu0 0.0
        %3425 = vmatprep.subr.mxu0 0.0
        %3426 = vmatpush1.msra.mxu0 0.0
        %3427 = vmatprep.subr.mxu0 0.0
        %3428 = vmatpush1.msra.mxu0 0.0
        %3429 = vmatprep.subr.mxu0 0.0
        %3430 = vmatpush1.msra.mxu0 0.0
        %3431 = vmatprep.subr.mxu0 0.0
        %3432 = vmatpush1.msra.mxu0 0.0
        %3433 = vmatprep.subr.mxu0 0.0
        %3434 = vmatpush1.msra.mxu0 0.0
        %3435 = vmatprep.subr.mxu0 0.0
        %3436 = vmatpush1.msra.mxu0 0.0
        %3437 = vmatprep.subr.mxu0 0.0
        %3438 = vmatpush1.msra.mxu0 0.0
        %3439 = vmatprep.subr.mxu0 0.0
        %3440 = vmatpush1.msra.mxu0 0.0
        %3441 = vmatprep.subr.mxu0 0.0
        %3442 = vmatpush1.msra.mxu0 0.0
        %3443 = vmatprep.subr.mxu0 0.0
        %3444 = vmatpush1.msra.mxu0 0.0
        %3445 = vmatprep.subr.mxu0 0.0
        %3446 = vmatpush1.msra.mxu0 %v3413
        %3447 = vmatprep.subr.mxu0 0.0
        %3448 = vmatpush2.msra.mxu0 0.0
        %3449 = vmatprep.subr.mxu0 0.0
        %3450 = vmatpush2.msra.mxu0 0.0
        %3451 = vmatprep.subr.mxu0 0.0
        %3452 = vmatpush2.msra.mxu0 0.0
        %3453 = vmatprep.subr.mxu0 0.0
        %3454 = vmatpush2.msra.mxu0 0.0
        %3455 = vmatprep.subr.mxu0 0.0
        %3456 = vmatpush2.msra.mxu0 0.0
        %3457 = vmatprep.subr.mxu0 0.0
        %3458 = vmatpush2.msra.mxu0 0.0
        %3459 = vmatprep.subr.mxu0 0.0
        %3460 = vmatpush2.msra.mxu0 0.0
        %3461 = vmatprep.subr.mxu0 0.0
        %3462 = vmatpush2.msra.mxu0 0.0
        %3463 = vmatprep.subr.mxu0 0.0
        %3464 = vmatpush2.msra.mxu0 0.0
        %3465 = vmatprep.subr.mxu0 0.0
        %3466 = vmatpush2.msra.mxu0 0.0
        %3467 = vmatprep.subr.mxu0 0.0
        %3468 = vmatpush2.msra.mxu0 0.0
        %3469 = vmatprep.subr.mxu0 0.0
        %3470 = vmatpush2.msra.mxu0 0.0
        %3471 = vmatprep.subr.mxu0 0.0
        %3472 = vmatpush2.msra.mxu0 0.0
        %3473 = vmatprep.subr.mxu0 0.0
        %3474 = vmatpush2.msra.mxu0 0.0
        %3475 = vmatprep.subr.mxu0 0.0
        %3476 = vmatpush2.msra.mxu0 0.0
        %3477 = vmatprep.subr.mxu0 0.0
        %3478 = vmatpush2.msra.mxu0 0.0
        %3479 = vmatprep.mubr.f32.mxu0 0.0
        %3480 = vmatmul.mubr.f32.gmra.mxu0 %v3317
        %v3481 = vpop.f32.mrf.mxu0
        %v3482 = vadd.f32 0.0, %v3481
        %v3483 = vpop.f32.mrf.mxu0
        %3484 = vmatprep.mubr.f32.mxu0 0.0
        %3485 = vmatmul.mubr.f32.gmra.mxu0 %v3320
        %v3486 = vpop.f32.mrf.mxu0
        %v3487 = vadd.f32 0.0, %v3486
        %v3488 = vpop.f32.mrf.mxu0
        %3489 = vmatprep.mubr.f32.mxu0 0.0
        %3490 = vmatmul.mubr.f32.gmra.mxu0 %v3323
        %v3491 = vpop.f32.mrf.mxu0
        %v3492 = vadd.f32 0.0, %v3491
        %v3493 = vpop.f32.mrf.mxu0
        %3494 = vmatprep.mubr.f32.mxu0 0.0
        %3495 = vmatmul.mubr.f32.gmra.mxu0 %v3326
        %v3496 = vpop.f32.mrf.mxu0
        %v3497 = vadd.f32 0.0, %v3496
        %v3498 = vpop.f32.mrf.mxu0
        %3499 = vmatprep.mubr.f32.mxu0 0.0
        %3500 = vmatmul.mubr.f32.gmra.mxu0 %v3329
        %v3501 = vpop.f32.mrf.mxu0
        %v3502 = vadd.f32 0.0, %v3501
        %v3503 = vpop.f32.mrf.mxu0
        %3504 = vmatprep.mubr.f32.mxu0 0.0
        %3505 = vmatmul.mubr.f32.gmra.mxu0 %v3332
        %v3506 = vpop.f32.mrf.mxu0
        %v3507 = vadd.f32 0.0, %v3506
        %v3508 = vpop.f32.mrf.mxu0
        %3509 = vmatprep.mubr.f32.mxu0 0.0
        %3510 = vmatmul.mubr.f32.gmra.mxu0 %v3335
        %v3511 = vpop.f32.mrf.mxu0
        %v3512 = vadd.f32 0.0, %v3511
        %v3513 = vpop.f32.mrf.mxu0
        %3514 = vmatprep.mubr.f32.mxu0 0.0
        %3515 = vmatmul.mubr.f32.gmra.mxu0 %v3338
        %v3516 = vpop.f32.mrf.mxu0
        %v3517 = vadd.f32 0.0, %v3516
        %v3518 = vpop.f32.mrf.mxu0
        %3519 = vmatprep.mubr.f32.mxu0 0.0
        %3520 = vmatmul.mubr.f32.gmra.mxu0 %v3341
        %v3521 = vpop.f32.mrf.mxu0
        %v3522 = vadd.f32 0.0, %v3521
        %v3523 = vpop.f32.mrf.mxu0
        %3524 = vmatprep.mubr.f32.mxu0 0.0
        %3525 = vmatmul.mubr.f32.gmra.mxu0 %v3344
        %v3526 = vpop.f32.mrf.mxu0
        %v3527 = vadd.f32 0.0, %v3526
        %v3528 = vpop.f32.mrf.mxu0
        %3529 = vmatprep.mubr.f32.mxu0 0.0
        %3530 = vmatmul.mubr.f32.gmra.mxu0 %v3347
        %v3531 = vpop.f32.mrf.mxu0
        %v3532 = vadd.f32 0.0, %v3531
        %v3533 = vpop.f32.mrf.mxu0
        %3534 = vmatprep.mubr.f32.mxu0 0.0
        %3535 = vmatmul.mubr.f32.gmra.mxu0 %v3350
        %v3536 = vpop.f32.mrf.mxu0
        %v3537 = vadd.f32 0.0, %v3536
        %v3538 = vpop.f32.mrf.mxu0
        %3539 = vmatprep.mubr.f32.mxu0 0.0
        %3540 = vmatmul.mubr.f32.gmra.mxu0 %v3353
        %v3541 = vpop.f32.mrf.mxu0
        %v3542 = vadd.f32 0.0, %v3541
        %v3543 = vpop.f32.mrf.mxu0
        %3544 = vmatprep.mubr.f32.mxu0 0.0
        %3545 = vmatmul.mubr.f32.gmra.mxu0 %v3356
        %v3546 = vpop.f32.mrf.mxu0
        %v3547 = vadd.f32 0.0, %v3546
        %v3548 = vpop.f32.mrf.mxu0
        %3549 = vmatprep.mubr.f32.mxu0 0.0
        %3550 = vmatmul.mubr.f32.gmra.mxu0 %v3359
        %v3551 = vpop.f32.mrf.mxu0
        %v3552 = vadd.f32 0.0, %v3551
        %v3553 = vpop.f32.mrf.mxu0
        %3554 = vmatprep.mubr.f32.mxu0 0.0
        %3555 = vmatmul.mubr.f32.gmra.mxu0 %v3362
        %v3556 = vpop.f32.mrf.mxu0
        %v3557 = vadd.f32 0.0, %v3556
        %v3558 = vpop.f32.mrf.mxu0
        %3559 = vmatprep.mubr.f32.mxu0 0.0
        %3560 = vmatmul.mubr.f32.gmra.mxu0 %v3365
        %v3561 = vpop.f32.mrf.mxu0
        %v3562 = vadd.f32 0.0, %v3561
        %v3563 = vpop.f32.mrf.mxu0
        %3564 = vmatprep.mubr.f32.mxu0 0.0
        %3565 = vmatmul.mubr.f32.gmra.mxu0 %v3368
        %v3566 = vpop.f32.mrf.mxu0
        %v3567 = vadd.f32 0.0, %v3566
        %v3568 = vpop.f32.mrf.mxu0
        %3569 = vmatprep.mubr.f32.mxu0 0.0
        %3570 = vmatmul.mubr.f32.gmra.mxu0 %v3371
        %v3571 = vpop.f32.mrf.mxu0
        %v3572 = vadd.f32 0.0, %v3571
        %v3573 = vpop.f32.mrf.mxu0
        %3574 = vmatprep.mubr.f32.mxu0 0.0
        %3575 = vmatmul.mubr.f32.gmra.mxu0 %v3374
        %v3576 = vpop.f32.mrf.mxu0
        %v3577 = vadd.f32 0.0, %v3576
        %v3578 = vpop.f32.mrf.mxu0
        %3579 = vmatprep.mubr.f32.mxu0 0.0
        %3580 = vmatmul.mubr.f32.gmra.mxu0 %v3377
        %v3581 = vpop.f32.mrf.mxu0
        %v3582 = vadd.f32 0.0, %v3581
        %v3583 = vpop.f32.mrf.mxu0
        %3584 = vmatprep.mubr.f32.mxu0 0.0
        %3585 = vmatmul.mubr.f32.gmra.mxu0 %v3380
        %v3586 = vpop.f32.mrf.mxu0
        %v3587 = vadd.f32 0.0, %v3586
        %v3588 = vpop.f32.mrf.mxu0
        %3589 = vmatprep.mubr.f32.mxu0 0.0
        %3590 = vmatmul.mubr.f32.gmra.mxu0 %v3383
        %v3591 = vpop.f32.mrf.mxu0
        %v3592 = vadd.f32 0.0, %v3591
        %v3593 = vpop.f32.mrf.mxu0
        %3594 = vmatprep.mubr.f32.mxu0 0.0
        %3595 = vmatmul.mubr.f32.gmra.mxu0 %v3386
        %v3596 = vpop.f32.mrf.mxu0
        %v3597 = vadd.f32 0.0, %v3596
        %v3598 = vpop.f32.mrf.mxu0
        %3599 = vmatprep.mubr.f32.mxu0 0.0
        %3600 = vmatmul.mubr.f32.gmra.mxu0 %v3389
        %v3601 = vpop.f32.mrf.mxu0
        %v3602 = vadd.f32 0.0, %v3601
        %v3603 = vpop.f32.mrf.mxu0
        %3604 = vmatprep.mubr.f32.mxu0 0.0
        %3605 = vmatmul.mubr.f32.gmra.mxu0 %v3392
        %v3606 = vpop.f32.mrf.mxu0
        %v3607 = vadd.f32 0.0, %v3606
        %v3608 = vpop.f32.mrf.mxu0
        %3609 = vmatprep.mubr.f32.mxu0 0.0
        %3610 = vmatmul.mubr.f32.gmra.mxu0 %v3395
        %v3611 = vpop.f32.mrf.mxu0
        %v3612 = vadd.f32 0.0, %v3611
        %v3613 = vpop.f32.mrf.mxu0
        %3614 = vmatprep.mubr.f32.mxu0 0.0
        %3615 = vmatmul.mubr.f32.gmra.mxu0 %v3398
        %v3616 = vpop.f32.mrf.mxu0
        %v3617 = vadd.f32 0.0, %v3616
        %v3618 = vpop.f32.mrf.mxu0
        %3619 = vmatprep.mubr.f32.mxu0 0.0
        %3620 = vmatmul.mubr.f32.gmra.mxu0 %v3401
        %v3621 = vpop.f32.mrf.mxu0
        %v3622 = vadd.f32 0.0, %v3621
        %v3623 = vpop.f32.mrf.mxu0
        %3624 = vmatprep.mubr.f32.mxu0 0.0
        %3625 = vmatmul.mubr.f32.gmra.mxu0 %v3404
        %v3626 = vpop.f32.mrf.mxu0
        %v3627 = vadd.f32 0.0, %v3626
        %v3628 = vpop.f32.mrf.mxu0
        %3629 = vmatprep.mubr.f32.mxu0 0.0
        %3630 = vmatmul.mubr.f32.gmra.mxu0 %v3407
        %v3631 = vpop.f32.mrf.mxu0
        %v3632 = vadd.f32 0.0, %v3631
        %v3633 = vpop.f32.mrf.mxu0
        %3634 = vmatprep.mubr.f32.mxu0 0.0
        %3635 = vmatmul.mubr.f32.gmra.mxu0 %v3410
        %v3636 = vpop.f32.mrf.mxu0
        %v3637 = vadd.f32 0.0, %v3636
        %v3638 = vpop.f32.mrf.mxu0
        %3639 = vdwg.mxu0
        %v3640 = vadd.f32 %v3250, %v3482
        %v3641 = vadd.f32 %v3251, %v3487
        %v3642 = vadd.f32 %v3252, %v3492
        %v3643 = vadd.f32 %v3253, %v3497
        %v3644 = vadd.f32 %v3254, %v3502
        %v3645 = vadd.f32 %v3255, %v3507
        %v3646 = vadd.f32 %v3256, %v3512
        %v3647 = vadd.f32 %v3257, %v3517
        %v3648 = vadd.f32 %v3258, %v3522
        %v3649 = vadd.f32 %v3259, %v3527
        %v3650 = vadd.f32 %v3260, %v3532
        %v3651 = vadd.f32 %v3261, %v3537
        %v3652 = vadd.f32 %v3262, %v3542
        %v3653 = vadd.f32 %v3263, %v3547
        %v3654 = vadd.f32 %v3264, %v3552
        %v3655 = vadd.f32 %v3265, %v3557
        %v3656 = vadd.f32 %v3266, %v3562
        %v3657 = vadd.f32 %v3267, %v3567
        %v3658 = vadd.f32 %v3268, %v3572
        %v3659 = vadd.f32 %v3269, %v3577
        %v3660 = vadd.f32 %v3270, %v3582
        %v3661 = vadd.f32 %v3271, %v3587
        %v3662 = vadd.f32 %v3272, %v3592
        %v3663 = vadd.f32 %v3273, %v3597
        %v3664 = vadd.f32 %v3274, %v3602
        %v3665 = vadd.f32 %v3275, %v3607
        %v3666 = vadd.f32 %v3276, %v3612
        %v3667 = vadd.f32 %v3277, %v3617
        %v3668 = vadd.f32 %v3278, %v3622
        %v3669 = vadd.f32 %v3279, %v3627
        %v3670 = vadd.f32 %v3280, %v3632
        %v3671 = vadd.f32 %v3281, %v3637
        %v3672 = vld [vmem:[%s3] sm:$0x1]
        %v3673 = vlaneseq
        %v3674 = vshrl.u32 %v3673, 7
        %v3675 = vsub.s32 0, %v3674
        %v3676 = vrot.slane %v3672, %v3675
        %v3677 = vadd.f32 %v3640, %v3676
        %v3678 = vadd.f32 %v3641, %v3676
        %v3679 = vadd.f32 %v3642, %v3676
        %v3680 = vadd.f32 %v3643, %v3676
        %v3681 = vadd.f32 %v3644, %v3676
        %v3682 = vadd.f32 %v3645, %v3676
        %v3683 = vadd.f32 %v3646, %v3676
        %v3684 = vadd.f32 %v3647, %v3676
        %v3685 = vadd.f32 %v3648, %v3676
        %v3686 = vadd.f32 %v3649, %v3676
        %v3687 = vadd.f32 %v3650, %v3676
        %v3688 = vadd.f32 %v3651, %v3676
        %v3689 = vadd.f32 %v3652, %v3676
        %v3690 = vadd.f32 %v3653, %v3676
        %v3691 = vadd.f32 %v3654, %v3676
        %v3692 = vadd.f32 %v3655, %v3676
        %v3693 = vadd.f32 %v3656, %v3676
        %v3694 = vadd.f32 %v3657, %v3676
        %v3695 = vadd.f32 %v3658, %v3676
        %v3696 = vadd.f32 %v3659, %v3676
        %v3697 = vadd.f32 %v3660, %v3676
        %v3698 = vadd.f32 %v3661, %v3676
        %v3699 = vadd.f32 %v3662, %v3676
        %v3700 = vadd.f32 %v3663, %v3676
        %v3701 = vadd.f32 %v3664, %v3676
        %v3702 = vadd.f32 %v3665, %v3676
        %v3703 = vadd.f32 %v3666, %v3676
        %v3704 = vadd.f32 %v3667, %v3676
        %v3705 = vadd.f32 %v3668, %v3676
        %v3706 = vadd.f32 %v3669, %v3676
        %v3707 = vadd.f32 %v3670, %v3676
        %v3708 = vadd.f32 %v3671, %v3676
        %v3709 = vmax.f32 %v3677, 0.0
        %v3710 = vmax.f32 %v3678, 0.0
        %v3711 = vmax.f32 %v3679, 0.0
        %v3712 = vmax.f32 %v3680, 0.0
        %v3713 = vmax.f32 %v3681, 0.0
        %v3714 = vmax.f32 %v3682, 0.0
        %v3715 = vmax.f32 %v3683, 0.0
        %v3716 = vmax.f32 %v3684, 0.0
        %v3717 = vmax.f32 %v3685, 0.0
        %v3718 = vmax.f32 %v3686, 0.0
        %v3719 = vmax.f32 %v3687, 0.0
        %v3720 = vmax.f32 %v3688, 0.0
        %v3721 = vmax.f32 %v3689, 0.0
        %v3722 = vmax.f32 %v3690, 0.0
        %v3723 = vmax.f32 %v3691, 0.0
        %v3724 = vmax.f32 %v3692, 0.0
        %v3725 = vmax.f32 %v3693, 0.0
        %v3726 = vmax.f32 %v3694, 0.0
        %v3727 = vmax.f32 %v3695, 0.0
        %v3728 = vmax.f32 %v3696, 0.0
        %v3729 = vmax.f32 %v3697, 0.0
        %v3730 = vmax.f32 %v3698, 0.0
        %v3731 = vmax.f32 %v3699, 0.0
        %v3732 = vmax.f32 %v3700, 0.0
        %v3733 = vmax.f32 %v3701, 0.0
        %v3734 = vmax.f32 %v3702, 0.0
        %v3735 = vmax.f32 %v3703, 0.0
        %v3736 = vmax.f32 %v3704, 0.0
        %v3737 = vmax.f32 %v3705, 0.0
        %v3738 = vmax.f32 %v3706, 0.0
        %v3739 = vmax.f32 %v3707, 0.0
        %v3740 = vmax.f32 %v3708, 0.0
        %v3741 = vld [vmem:[%s3 + $0x1] sm:$0x1]
        %v3742 = vlaneseq
        %v3743 = vshrl.u32 %v3742, 7
        %v3744 = vsub.s32 0, %v3743
        %v3745 = vrot.slane %v3741, %v3744
        %v3746 = vmul.f32 %v3709, %v3745
        %v3747 = vmul.f32 %v3710, %v3745
        %v3748 = vmul.f32 %v3711, %v3745
        %v3749 = vmul.f32 %v3712, %v3745
        %v3750 = vmul.f32 %v3713, %v3745
        %v3751 = vmul.f32 %v3714, %v3745
        %v3752 = vmul.f32 %v3715, %v3745
        %v3753 = vmul.f32 %v3716, %v3745
        %v3754 = vmul.f32 %v3717, %v3745
        %v3755 = vmul.f32 %v3718, %v3745
        %v3756 = vmul.f32 %v3719, %v3745
        %v3757 = vmul.f32 %v3720, %v3745
        %v3758 = vmul.f32 %v3721, %v3745
        %v3759 = vmul.f32 %v3722, %v3745
        %v3760 = vmul.f32 %v3723, %v3745
        %v3761 = vmul.f32 %v3724, %v3745
        %v3762 = vmul.f32 %v3725, %v3745
        %v3763 = vmul.f32 %v3726, %v3745
        %v3764 = vmul.f32 %v3727, %v3745
        %v3765 = vmul.f32 %v3728, %v3745
        %v3766 = vmul.f32 %v3729, %v3745
        %v3767 = vmul.f32 %v3730, %v3745
        %v3768 = vmul.f32 %v3731, %v3745
        %v3769 = vmul.f32 %v3732, %v3745
        %v3770 = vmul.f32 %v3733, %v3745
        %v3771 = vmul.f32 %v3734, %v3745
        %v3772 = vmul.f32 %v3735, %v3745
        %v3773 = vmul.f32 %v3736, %v3745
        %v3774 = vmul.f32 %v3737, %v3745
        %v3775 = vmul.f32 %v3738, %v3745
        %v3776 = vmul.f32 %v3739, %v3745
        %v3777 = vmul.f32 %v3740, %v3745
        %v3778 = vld [vmem:[%s3 + $0x2] sm:$0x1]
        %v3779 = vlaneseq
        %v3780 = vshrl.u32 %v3779, 7
        %v3781 = vsub.s32 0, %v3780
        %v3782 = vrot.slane %v3778, %v3781
        %v3783 = vadd.f32 %v3746, %v3782
        %v3784 = vadd.f32 %v3747, %v3782
        %v3785 = vadd.f32 %v3748, %v3782
        %v3786 = vadd.f32 %v3749, %v3782
        %v3787 = vadd.f32 %v3750, %v3782
        %v3788 = vadd.f32 %v3751, %v3782
        %v3789 = vadd.f32 %v3752, %v3782
        %v3790 = vadd.f32 %v3753, %v3782
        %v3791 = vadd.f32 %v3754, %v3782
        %v3792 = vadd.f32 %v3755, %v3782
        %v3793 = vadd.f32 %v3756, %v3782
        %v3794 = vadd.f32 %v3757, %v3782
        %v3795 = vadd.f32 %v3758, %v3782
        %v3796 = vadd.f32 %v3759, %v3782
        %v3797 = vadd.f32 %v3760, %v3782
        %v3798 = vadd.f32 %v3761, %v3782
        %v3799 = vadd.f32 %v3762, %v3782
        %v3800 = vadd.f32 %v3763, %v3782
        %v3801 = vadd.f32 %v3764, %v3782
        %v3802 = vadd.f32 %v3765, %v3782
        %v3803 = vadd.f32 %v3766, %v3782
        %v3804 = vadd.f32 %v3767, %v3782
        %v3805 = vadd.f32 %v3768, %v3782
        %v3806 = vadd.f32 %v3769, %v3782
        %v3807 = vadd.f32 %v3770, %v3782
        %v3808 = vadd.f32 %v3771, %v3782
        %v3809 = vadd.f32 %v3772, %v3782
        %v3810 = vadd.f32 %v3773, %v3782
        %v3811 = vadd.f32 %v3774, %v3782
        %v3812 = vadd.f32 %v3775, %v3782
        %v3813 = vadd.f32 %v3776, %v3782
        %v3814 = vadd.f32 %v3777, %v3782
        %vm3815 = vcmask 261120
        %3816 = vst.msk [vmem:[#allocation2] sm:$0xff] %vm3815, 0.0
        %3817 = vst.msk [vmem:[#allocation2 + $0x8] sm:$0xff] %vm3815, 0.0
        %vm3818 = vcmask 254976
        %3819 = vst.msk [vmem:[#allocation2 + $0x10] sm:$0x3] %vm3818, 0.0
        %3820 = vst.msk [vmem:[#allocation2 + $0x18] sm:$0xff] %vm3815, 0.0
        %3821 = vst.msk [vmem:[#allocation2 + $0x20] sm:$0xff] %vm3815, 0.0
        %3822 = vst.msk [vmem:[#allocation2 + $0x28] sm:$0x3] %vm3818, 0.0
        %3823 = vst.msk [vmem:[#allocation2 + $0x30] sm:$0xff] %vm3815, 0.0
        %3824 = vst.msk [vmem:[#allocation2 + $0x38] sm:$0xff] %vm3815, 0.0
        %3825 = vst.msk [vmem:[#allocation2 + $0x40] sm:$0x3] %vm3818, 0.0
        %3826 = vst.msk [vmem:[#allocation2 + $0x48] sm:$0xff] %vm3815, 0.0
        %3827 = vst.msk [vmem:[#allocation2 + $0x50] sm:$0xff] %vm3815, 0.0
        %3828 = vst.msk [vmem:[#allocation2 + $0x58] sm:$0x3] %vm3818, 0.0
        %3829 = vst.msk [vmem:[#allocation2 + $0x60] sm:$0xff] %vm3815, 0.0
        %3830 = vst.msk [vmem:[#allocation2 + $0x68] sm:$0xff] %vm3815, 0.0
        %3831 = vst.msk [vmem:[#allocation2 + $0x70] sm:$0x3] %vm3818, 0.0
        %3832 = vst.msk [vmem:[#allocation2 + $0x78] sm:$0xff] %vm3815, 0.0
        %3833 = vst.msk [vmem:[#allocation2 + $0x80] sm:$0xff] %vm3815, 0.0
        %3834 = vst.msk [vmem:[#allocation2 + $0x88] sm:$0x3] %vm3818, 0.0
        %3835 = vst.msk [vmem:[#allocation2 + $0x90] sm:$0xff] %vm3815, 0.0
        %3836 = vst.msk [vmem:[#allocation2 + $0x98] sm:$0xff] %vm3815, 0.0
        %3837 = vst.msk [vmem:[#allocation2 + $0xa0] sm:$0x3] %vm3818, 0.0
        %3838 = vst.msk [vmem:[#allocation2 + $0xa8] sm:$0xff] %vm3815, 0.0
        %3839 = vst.msk [vmem:[#allocation2 + $0xb0] sm:$0xff] %vm3815, 0.0
        %3840 = vst.msk [vmem:[#allocation2 + $0xb8] sm:$0x3] %vm3818, 0.0
        %3841 = vst.msk [vmem:[#allocation2 + $0xc0] sm:$0xff] %vm3815, 0.0
        %3842 = vst.msk [vmem:[#allocation2 + $0xc8] sm:$0xff] %vm3815, 0.0
        %3843 = vst.msk [vmem:[#allocation2 + $0xd0] sm:$0x3] %vm3818, 0.0
        %3844 = vst.msk [vmem:[#allocation2 + $0xd8] sm:$0xff] %vm3815, 0.0
        %3845 = vst.msk [vmem:[#allocation2 + $0xe0] sm:$0xff] %vm3815, 0.0
        %3846 = vst.msk [vmem:[#allocation2 + $0xe8] sm:$0x3] %vm3818, 0.0
        %3847 = vst.msk [vmem:[#allocation2 + $0xf0] sm:$0xff] %vm3815, 0.0
        %3848 = vst.msk [vmem:[#allocation2 + $0xf8] sm:$0xff] %vm3815, 0.0
        %3849 = vst.msk [vmem:[#allocation2 + $0x100] sm:$0x3] %vm3818, 0.0
        %3850 = vst.msk [vmem:[#allocation2 + $0x108] sm:$0xff] %vm3815, 0.0
        %3851 = vst.msk [vmem:[#allocation2 + $0x110] sm:$0xff] %vm3815, 0.0
        %3852 = vst.msk [vmem:[#allocation2 + $0x118] sm:$0x3] %vm3818, 0.0
        %3853 = vst.msk [vmem:[#allocation2 + $0x120] sm:$0xff] %vm3815, 0.0
        %3854 = vst.msk [vmem:[#allocation2 + $0x128] sm:$0xff] %vm3815, 0.0
        %3855 = vst.msk [vmem:[#allocation2 + $0x130] sm:$0x3] %vm3818, 0.0
        %3856 = vst.msk [vmem:[#allocation2 + $0x138] sm:$0xff] %vm3815, 0.0
        %3857 = vst.msk [vmem:[#allocation2 + $0x140] sm:$0xff] %vm3815, 0.0
        %3858 = vst.msk [vmem:[#allocation2 + $0x148] sm:$0x3] %vm3818, 0.0
        %3859 = vst.msk [vmem:[#allocation2 + $0x150] sm:$0xff] %vm3815, 0.0
        %3860 = vst.msk [vmem:[#allocation2 + $0x158] sm:$0xff] %vm3815, 0.0
        %3861 = vst.msk [vmem:[#allocation2 + $0x160] sm:$0x3] %vm3818, 0.0
        %3862 = vst.msk [vmem:[#allocation2 + $0x168] sm:$0xff] %vm3815, 0.0
        %3863 = vst.msk [vmem:[#allocation2 + $0x170] sm:$0xff] %vm3815, 0.0
        %3864 = vst.msk [vmem:[#allocation2 + $0x178] sm:$0x3] %vm3818, 0.0
        %3865 = vst.msk [vmem:[#allocation2 + $0x180] sm:$0xff] %vm3815, 0.0
        %3866 = vst.msk [vmem:[#allocation2 + $0x188] sm:$0xff] %vm3815, 0.0
        %3867 = vst.msk [vmem:[#allocation2 + $0x190] sm:$0x3] %vm3818, 0.0
        %3868 = vst.msk [vmem:[#allocation2 + $0x198] sm:$0xff] %vm3815, 0.0
        %3869 = vst.msk [vmem:[#allocation2 + $0x1a0] sm:$0xff] %vm3815, 0.0
        %3870 = vst.msk [vmem:[#allocation2 + $0x1a8] sm:$0x3] %vm3818, 0.0
        %s3871 = scalar_lea.vmem [#allocation2], 24
        %3872 = vst.msk [vmem:[%s3871 + $0x1] sm:$0xff] %vm3815, %v3783
        %3873 = vst.msk [vmem:[%s3871 + $0x9] sm:$0xff] %vm3815, %v3784
        %3874 = vst.msk [vmem:[%s3871 + $0x19] sm:$0xff] %vm3815, %v3785
        %3875 = vst.msk [vmem:[%s3871 + $0x21] sm:$0xff] %vm3815, %v3786
        %3876 = vst.msk [vmem:[%s3871 + $0x31] sm:$0xff] %vm3815, %v3787
        %3877 = vst.msk [vmem:[%s3871 + $0x39] sm:$0xff] %vm3815, %v3788
        %3878 = vst.msk [vmem:[%s3871 + $0x49] sm:$0xff] %vm3815, %v3789
        %3879 = vst.msk [vmem:[%s3871 + $0x51] sm:$0xff] %vm3815, %v3790
        %3880 = vst.msk [vmem:[%s3871 + $0x61] sm:$0xff] %vm3815, %v3791
        %3881 = vst.msk [vmem:[%s3871 + $0x69] sm:$0xff] %vm3815, %v3792
        %3882 = vst.msk [vmem:[%s3871 + $0x79] sm:$0xff] %vm3815, %v3793
        %3883 = vst.msk [vmem:[%s3871 + $0x81] sm:$0xff] %vm3815, %v3794
        %3884 = vst.msk [vmem:[%s3871 + $0x91] sm:$0xff] %vm3815, %v3795
        %3885 = vst.msk [vmem:[%s3871 + $0x99] sm:$0xff] %vm3815, %v3796
        %3886 = vst.msk [vmem:[%s3871 + $0xa9] sm:$0xff] %vm3815, %v3797
        %3887 = vst.msk [vmem:[%s3871 + $0xb1] sm:$0xff] %vm3815, %v3798
        %3888 = vst.msk [vmem:[%s3871 + $0xc1] sm:$0xff] %vm3815, %v3799
        %3889 = vst.msk [vmem:[%s3871 + $0xc9] sm:$0xff] %vm3815, %v3800
        %3890 = vst.msk [vmem:[%s3871 + $0xd9] sm:$0xff] %vm3815, %v3801
        %3891 = vst.msk [vmem:[%s3871 + $0xe1] sm:$0xff] %vm3815, %v3802
        %3892 = vst.msk [vmem:[%s3871 + $0xf1] sm:$0xff] %vm3815, %v3803
        %3893 = vst.msk [vmem:[%s3871 + $0xf9] sm:$0xff] %vm3815, %v3804
        %3894 = vst.msk [vmem:[%s3871 + $0x109] sm:$0xff] %vm3815, %v3805
        %3895 = vst.msk [vmem:[%s3871 + $0x111] sm:$0xff] %vm3815, %v3806
        %3896 = vst.msk [vmem:[%s3871 + $0x121] sm:$0xff] %vm3815, %v3807
        %3897 = vst.msk [vmem:[%s3871 + $0x129] sm:$0xff] %vm3815, %v3808
        %3898 = vst.msk [vmem:[%s3871 + $0x139] sm:$0xff] %vm3815, %v3809
        %3899 = vst.msk [vmem:[%s3871 + $0x141] sm:$0xff] %vm3815, %v3810
        %3900 = vst.msk [vmem:[%s3871 + $0x151] sm:$0xff] %vm3815, %v3811
        %3901 = vst.msk [vmem:[%s3871 + $0x159] sm:$0xff] %vm3815, %v3812
        %3902 = vst.msk [vmem:[%s3871 + $0x169] sm:$0xff] %vm3815, %v3813
        %3903 = vst.msk [vmem:[%s3871 + $0x171] sm:$0xff] %vm3815, %v3814
        %v3904 = vld [vmem:[#allocation2] sm:$0xff]
        %v3905 = vld [vmem:[#allocation2 + $0x8] sm:$0xff]
        %v3906 = vld [vmem:[#allocation2 + $0x18] sm:$0xff]
        %v3907 = vld [vmem:[#allocation2 + $0x20] sm:$0xff]
        %v3908 = vld [vmem:[#allocation2 + $0x30] sm:$0xff]
        %v3909 = vld [vmem:[#allocation2 + $0x38] sm:$0xff]
        %v3910 = vld [vmem:[#allocation2 + $0x48] sm:$0xff]
        %v3911 = vld [vmem:[#allocation2 + $0x50] sm:$0xff]
        %v3912 = vld [vmem:[#allocation2 + $0x60] sm:$0xff]
        %v3913 = vld [vmem:[#allocation2 + $0x68] sm:$0xff]
        %v3914 = vld [vmem:[#allocation2 + $0x78] sm:$0xff]
        %v3915 = vld [vmem:[#allocation2 + $0x80] sm:$0xff]
        %v3916 = vld [vmem:[#allocation2 + $0x90] sm:$0xff]
        %v3917 = vld [vmem:[#allocation2 + $0x98] sm:$0xff]
        %v3918 = vld [vmem:[#allocation2 + $0xa8] sm:$0xff]
        %v3919 = vld [vmem:[#allocation2 + $0xb0] sm:$0xff]
        %v3920 = vld [vmem:[#allocation2 + $0xc0] sm:$0xff]
        %v3921 = vld [vmem:[#allocation2 + $0xc8] sm:$0xff]
        %v3922 = vld [vmem:[#allocation2 + $0xd8] sm:$0xff]
        %v3923 = vld [vmem:[#allocation2 + $0xe0] sm:$0xff]
        %v3924 = vld [vmem:[#allocation2 + $0xf0] sm:$0xff]
        %v3925 = vld [vmem:[#allocation2 + $0xf8] sm:$0xff]
        %v3926 = vld [vmem:[#allocation2 + $0x108] sm:$0xff]
        %v3927 = vld [vmem:[#allocation2 + $0x110] sm:$0xff]
        %v3928 = vld [vmem:[#allocation2 + $0x120] sm:$0xff]
        %v3929 = vld [vmem:[#allocation2 + $0x128] sm:$0xff]
        %v3930 = vld [vmem:[#allocation2 + $0x138] sm:$0xff]
        %v3931 = vld [vmem:[#allocation2 + $0x140] sm:$0xff]
        %v3932 = vld [vmem:[#allocation2 + $0x150] sm:$0xff]
        %v3933 = vld [vmem:[#allocation2 + $0x158] sm:$0xff]
        %v3934 = vld [vmem:[#allocation2 + $0x168] sm:$0xff]
        %v3935 = vld [vmem:[#allocation2 + $0x170] sm:$0xff]
        %v3936 = vld [vmem:[%s2] sm:$0xff]
        %v3937 = vld [vmem:[%s2 + $0x8] sm:$0xff]
        %v3938 = vld [vmem:[%s2 + $0x10] sm:$0xff]
        %v3939 = vld [vmem:[%s2 + $0x18] sm:$0xff]
        %v3940 = vld [vmem:[#allocation2 + $0x1] sm:$0xff]
        %v3941 = vld [vmem:[#allocation2 + $0x9] sm:$0xff]
        %v3942 = vld [vmem:[#allocation2 + $0x19] sm:$0xff]
        %v3943 = vld [vmem:[#allocation2 + $0x21] sm:$0xff]
        %v3944 = vld [vmem:[#allocation2 + $0x31] sm:$0xff]
        %v3945 = vld [vmem:[#allocation2 + $0x39] sm:$0xff]
        %v3946 = vld [vmem:[#allocation2 + $0x49] sm:$0xff]
        %v3947 = vld [vmem:[#allocation2 + $0x51] sm:$0xff]
        %v3948 = vld [vmem:[#allocation2 + $0x61] sm:$0xff]
        %v3949 = vld [vmem:[#allocation2 + $0x69] sm:$0xff]
        %v3950 = vld [vmem:[#allocation2 + $0x79] sm:$0xff]
        %v3951 = vld [vmem:[#allocation2 + $0x81] sm:$0xff]
        %v3952 = vld [vmem:[#allocation2 + $0x91] sm:$0xff]
        %v3953 = vld [vmem:[#allocation2 + $0x99] sm:$0xff]
        %v3954 = vld [vmem:[#allocation2 + $0xa9] sm:$0xff]
        %v3955 = vld [vmem:[#allocation2 + $0xb1] sm:$0xff]
        %v3956 = vld [vmem:[#allocation2 + $0xc1] sm:$0xff]
        %v3957 = vld [vmem:[#allocation2 + $0xc9] sm:$0xff]
        %v3958 = vld [vmem:[#allocation2 + $0xd9] sm:$0xff]
        %v3959 = vld [vmem:[#allocation2 + $0xe1] sm:$0xff]
        %v3960 = vld [vmem:[#allocation2 + $0xf1] sm:$0xff]
        %v3961 = vld [vmem:[#allocation2 + $0xf9] sm:$0xff]
        %v3962 = vld [vmem:[#allocation2 + $0x109] sm:$0xff]
        %v3963 = vld [vmem:[#allocation2 + $0x111] sm:$0xff]
        %v3964 = vld [vmem:[#allocation2 + $0x121] sm:$0xff]
        %v3965 = vld [vmem:[#allocation2 + $0x129] sm:$0xff]
        %v3966 = vld [vmem:[#allocation2 + $0x139] sm:$0xff]
        %v3967 = vld [vmem:[#allocation2 + $0x141] sm:$0xff]
        %v3968 = vld [vmem:[#allocation2 + $0x151] sm:$0xff]
        %v3969 = vld [vmem:[#allocation2 + $0x159] sm:$0xff]
        %v3970 = vld [vmem:[#allocation2 + $0x169] sm:$0xff]
        %v3971 = vld [vmem:[#allocation2 + $0x171] sm:$0xff]
        %s3972 = scalar_lea.vmem %s2, 32
        %v3973 = vld [vmem:[%s3972] sm:$0xff]
        %v3974 = vld [vmem:[%s3972 + $0x8] sm:$0xff]
        %v3975 = vld [vmem:[%s3972 + $0x10] sm:$0xff]
        %v3976 = vld [vmem:[%s3972 + $0x18] sm:$0xff]
        %v3978 = vsel %vm3815, %v3940, 0
        %v3981 = vsel %vm3815, %v3941, 0
        %v3984 = vsel %vm3815, %v3942, 0
        %v3987 = vsel %vm3815, %v3943, 0
        %v3990 = vsel %vm3815, %v3944, 0
        %v3993 = vsel %vm3815, %v3945, 0
        %v3996 = vsel %vm3815, %v3946, 0
        %v3999 = vsel %vm3815, %v3947, 0
        %v4002 = vsel %vm3815, %v3948, 0
        %v4005 = vsel %vm3815, %v3949, 0
        %v4008 = vsel %vm3815, %v3950, 0
        %v4011 = vsel %vm3815, %v3951, 0
        %v4014 = vsel %vm3815, %v3952, 0
        %v4017 = vsel %vm3815, %v3953, 0
        %v4020 = vsel %vm3815, %v3954, 0
        %v4023 = vsel %vm3815, %v3955, 0
        %v4026 = vsel %vm3815, %v3956, 0
        %v4029 = vsel %vm3815, %v3957, 0
        %v4032 = vsel %vm3815, %v3958, 0
        %v4035 = vsel %vm3815, %v3959, 0
        %v4038 = vsel %vm3815, %v3960, 0
        %v4041 = vsel %vm3815, %v3961, 0
        %v4044 = vsel %vm3815, %v3962, 0
        %v4047 = vsel %vm3815, %v3963, 0
        %v4050 = vsel %vm3815, %v3964, 0
        %v4053 = vsel %vm3815, %v3965, 0
        %v4056 = vsel %vm3815, %v3966, 0
        %v4059 = vsel %vm3815, %v3967, 0
        %v4062 = vsel %vm3815, %v3968, 0
        %v4065 = vsel %vm3815, %v3969, 0
        %v4068 = vsel %vm3815, %v3970, 0
        %v4071 = vsel %vm3815, %v3971, 0
        %4073 = vmatprep.subr.mxu0 0.0
        %4074 = vmatpush1.msra.mxu0 0.0
        %4075 = vmatprep.subr.mxu0 0.0
        %4076 = vmatpush1.msra.mxu0 0.0
        %4077 = vmatprep.subr.mxu0 0.0
        %4078 = vmatpush1.msra.mxu0 0.0
        %4079 = vmatprep.subr.mxu0 0.0
        %4080 = vmatpush1.msra.mxu0 0.0
        %4081 = vmatprep.subr.mxu0 0.0
        %4082 = vmatpush1.msra.mxu0 0.0
        %4083 = vmatprep.subr.mxu0 0.0
        %4084 = vmatpush1.msra.mxu0 0.0
        %4085 = vmatprep.subr.mxu0 0.0
        %4086 = vmatpush1.msra.mxu0 0.0
        %4087 = vmatprep.subr.mxu0 0.0
        %4088 = vmatpush1.msra.mxu0 0.0
        %4089 = vmatprep.subr.mxu0 0.0
        %4090 = vmatpush1.msra.mxu0 0.0
        %4091 = vmatprep.subr.mxu0 0.0
        %4092 = vmatpush1.msra.mxu0 0.0
        %4093 = vmatprep.subr.mxu0 0.0
        %4094 = vmatpush1.msra.mxu0 0.0
        %4095 = vmatprep.subr.mxu0 0.0
        %4096 = vmatpush1.msra.mxu0 0.0
        %4097 = vmatprep.subr.mxu0 0.0
        %4098 = vmatpush1.msra.mxu0 %v3976
        %4099 = vmatprep.subr.mxu0 0.0
        %4100 = vmatpush1.msra.mxu0 %v3975
        %4101 = vmatprep.subr.mxu0 0.0
        %4102 = vmatpush1.msra.mxu0 %v3974
        %4103 = vmatprep.subr.mxu0 0.0
        %4104 = vmatpush1.msra.mxu0 %v3973
        %4105 = vmatprep.subr.mxu0 0.0
        %4106 = vmatpush2.msra.mxu0 0.0
        %4107 = vmatprep.subr.mxu0 0.0
        %4108 = vmatpush2.msra.mxu0 0.0
        %4109 = vmatprep.subr.mxu0 0.0
        %4110 = vmatpush2.msra.mxu0 0.0
        %4111 = vmatprep.subr.mxu0 0.0
        %4112 = vmatpush2.msra.mxu0 0.0
        %4113 = vmatprep.subr.mxu0 0.0
        %4114 = vmatpush2.msra.mxu0 0.0
        %4115 = vmatprep.subr.mxu0 0.0
        %4116 = vmatpush2.msra.mxu0 0.0
        %4117 = vmatprep.subr.mxu0 0.0
        %4118 = vmatpush2.msra.mxu0 0.0
        %4119 = vmatprep.subr.mxu0 0.0
        %4120 = vmatpush2.msra.mxu0 0.0
        %4121 = vmatprep.subr.mxu0 0.0
        %4122 = vmatpush2.msra.mxu0 0.0
        %4123 = vmatprep.subr.mxu0 0.0
        %4124 = vmatpush2.msra.mxu0 0.0
        %4125 = vmatprep.subr.mxu0 0.0
        %4126 = vmatpush2.msra.mxu0 0.0
        %4127 = vmatprep.subr.mxu0 0.0
        %4128 = vmatpush2.msra.mxu0 0.0
        %4129 = vmatprep.subr.mxu0 0.0
        %4130 = vmatpush2.msra.mxu0 0.0
        %4131 = vmatprep.subr.mxu0 0.0
        %4132 = vmatpush2.msra.mxu0 0.0
        %4133 = vmatprep.subr.mxu0 0.0
        %4134 = vmatpush2.msra.mxu0 0.0
        %4135 = vmatprep.subr.mxu0 0.0
        %4136 = vmatpush2.msra.mxu0 0.0
        %4137 = vmatprep.mubr.f32.mxu0 0.0
        %4138 = vmatmul.mubr.f32.gmra.mxu0 %v3978
        %v4139 = vpop.f32.mrf.mxu0
        %v4140 = vadd.f32 0.0, %v4139
        %v4141 = vpop.f32.mrf.mxu0
        %4142 = vmatprep.mubr.f32.mxu0 0.0
        %4143 = vmatmul.mubr.f32.gmra.mxu0 %v3981
        %v4144 = vpop.f32.mrf.mxu0
        %v4145 = vadd.f32 0.0, %v4144
        %v4146 = vpop.f32.mrf.mxu0
        %4147 = vmatprep.mubr.f32.mxu0 0.0
        %4148 = vmatmul.mubr.f32.gmra.mxu0 %v3984
        %v4149 = vpop.f32.mrf.mxu0
        %v4150 = vadd.f32 0.0, %v4149
        %v4151 = vpop.f32.mrf.mxu0
        %4152 = vmatprep.mubr.f32.mxu0 0.0
        %4153 = vmatmul.mubr.f32.gmra.mxu0 %v3987
        %v4154 = vpop.f32.mrf.mxu0
        %v4155 = vadd.f32 0.0, %v4154
        %v4156 = vpop.f32.mrf.mxu0
        %4157 = vmatprep.mubr.f32.mxu0 0.0
        %4158 = vmatmul.mubr.f32.gmra.mxu0 %v3990
        %v4159 = vpop.f32.mrf.mxu0
        %v4160 = vadd.f32 0.0, %v4159
        %v4161 = vpop.f32.mrf.mxu0
        %4162 = vmatprep.mubr.f32.mxu0 0.0
        %4163 = vmatmul.mubr.f32.gmra.mxu0 %v3993
        %v4164 = vpop.f32.mrf.mxu0
        %v4165 = vadd.f32 0.0, %v4164
        %v4166 = vpop.f32.mrf.mxu0
        %4167 = vmatprep.mubr.f32.mxu0 0.0
        %4168 = vmatmul.mubr.f32.gmra.mxu0 %v3996
        %v4169 = vpop.f32.mrf.mxu0
        %v4170 = vadd.f32 0.0, %v4169
        %v4171 = vpop.f32.mrf.mxu0
        %4172 = vmatprep.mubr.f32.mxu0 0.0
        %4173 = vmatmul.mubr.f32.gmra.mxu0 %v3999
        %v4174 = vpop.f32.mrf.mxu0
        %v4175 = vadd.f32 0.0, %v4174
        %v4176 = vpop.f32.mrf.mxu0
        %4177 = vmatprep.mubr.f32.mxu0 0.0
        %4178 = vmatmul.mubr.f32.gmra.mxu0 %v4002
        %v4179 = vpop.f32.mrf.mxu0
        %v4180 = vadd.f32 0.0, %v4179
        %v4181 = vpop.f32.mrf.mxu0
        %4182 = vmatprep.mubr.f32.mxu0 0.0
        %4183 = vmatmul.mubr.f32.gmra.mxu0 %v4005
        %v4184 = vpop.f32.mrf.mxu0
        %v4185 = vadd.f32 0.0, %v4184
        %v4186 = vpop.f32.mrf.mxu0
        %4187 = vmatprep.mubr.f32.mxu0 0.0
        %4188 = vmatmul.mubr.f32.gmra.mxu0 %v4008
        %v4189 = vpop.f32.mrf.mxu0
        %v4190 = vadd.f32 0.0, %v4189
        %v4191 = vpop.f32.mrf.mxu0
        %4192 = vmatprep.mubr.f32.mxu0 0.0
        %4193 = vmatmul.mubr.f32.gmra.mxu0 %v4011
        %v4194 = vpop.f32.mrf.mxu0
        %v4195 = vadd.f32 0.0, %v4194
        %v4196 = vpop.f32.mrf.mxu0
        %4197 = vmatprep.mubr.f32.mxu0 0.0
        %4198 = vmatmul.mubr.f32.gmra.mxu0 %v4014
        %v4199 = vpop.f32.mrf.mxu0
        %v4200 = vadd.f32 0.0, %v4199
        %v4201 = vpop.f32.mrf.mxu0
        %4202 = vmatprep.mubr.f32.mxu0 0.0
        %4203 = vmatmul.mubr.f32.gmra.mxu0 %v4017
        %v4204 = vpop.f32.mrf.mxu0
        %v4205 = vadd.f32 0.0, %v4204
        %v4206 = vpop.f32.mrf.mxu0
        %4207 = vmatprep.mubr.f32.mxu0 0.0
        %4208 = vmatmul.mubr.f32.gmra.mxu0 %v4020
        %v4209 = vpop.f32.mrf.mxu0
        %v4210 = vadd.f32 0.0, %v4209
        %v4211 = vpop.f32.mrf.mxu0
        %4212 = vmatprep.mubr.f32.mxu0 0.0
        %4213 = vmatmul.mubr.f32.gmra.mxu0 %v4023
        %v4214 = vpop.f32.mrf.mxu0
        %v4215 = vadd.f32 0.0, %v4214
        %v4216 = vpop.f32.mrf.mxu0
        %4217 = vmatprep.mubr.f32.mxu0 0.0
        %4218 = vmatmul.mubr.f32.gmra.mxu0 %v4026
        %v4219 = vpop.f32.mrf.mxu0
        %v4220 = vadd.f32 0.0, %v4219
        %v4221 = vpop.f32.mrf.mxu0
        %4222 = vmatprep.mubr.f32.mxu0 0.0
        %4223 = vmatmul.mubr.f32.gmra.mxu0 %v4029
        %v4224 = vpop.f32.mrf.mxu0
        %v4225 = vadd.f32 0.0, %v4224
        %v4226 = vpop.f32.mrf.mxu0
        %4227 = vmatprep.mubr.f32.mxu0 0.0
        %4228 = vmatmul.mubr.f32.gmra.mxu0 %v4032
        %v4229 = vpop.f32.mrf.mxu0
        %v4230 = vadd.f32 0.0, %v4229
        %v4231 = vpop.f32.mrf.mxu0
        %4232 = vmatprep.mubr.f32.mxu0 0.0
        %4233 = vmatmul.mubr.f32.gmra.mxu0 %v4035
        %v4234 = vpop.f32.mrf.mxu0
        %v4235 = vadd.f32 0.0, %v4234
        %v4236 = vpop.f32.mrf.mxu0
        %4237 = vmatprep.mubr.f32.mxu0 0.0
        %4238 = vmatmul.mubr.f32.gmra.mxu0 %v4038
        %v4239 = vpop.f32.mrf.mxu0
        %v4240 = vadd.f32 0.0, %v4239
        %v4241 = vpop.f32.mrf.mxu0
        %4242 = vmatprep.mubr.f32.mxu0 0.0
        %4243 = vmatmul.mubr.f32.gmra.mxu0 %v4041
        %v4244 = vpop.f32.mrf.mxu0
        %v4245 = vadd.f32 0.0, %v4244
        %v4246 = vpop.f32.mrf.mxu0
        %4247 = vmatprep.mubr.f32.mxu0 0.0
        %4248 = vmatmul.mubr.f32.gmra.mxu0 %v4044
        %v4249 = vpop.f32.mrf.mxu0
        %v4250 = vadd.f32 0.0, %v4249
        %v4251 = vpop.f32.mrf.mxu0
        %4252 = vmatprep.mubr.f32.mxu0 0.0
        %4253 = vmatmul.mubr.f32.gmra.mxu0 %v4047
        %v4254 = vpop.f32.mrf.mxu0
        %v4255 = vadd.f32 0.0, %v4254
        %v4256 = vpop.f32.mrf.mxu0
        %4257 = vmatprep.mubr.f32.mxu0 0.0
        %4258 = vmatmul.mubr.f32.gmra.mxu0 %v4050
        %v4259 = vpop.f32.mrf.mxu0
        %v4260 = vadd.f32 0.0, %v4259
        %v4261 = vpop.f32.mrf.mxu0
        %4262 = vmatprep.mubr.f32.mxu0 0.0
        %4263 = vmatmul.mubr.f32.gmra.mxu0 %v4053
        %v4264 = vpop.f32.mrf.mxu0
        %v4265 = vadd.f32 0.0, %v4264
        %v4266 = vpop.f32.mrf.mxu0
        %4267 = vmatprep.mubr.f32.mxu0 0.0
        %4268 = vmatmul.mubr.f32.gmra.mxu0 %v4056
        %v4269 = vpop.f32.mrf.mxu0
        %v4270 = vadd.f32 0.0, %v4269
        %v4271 = vpop.f32.mrf.mxu0
        %4272 = vmatprep.mubr.f32.mxu0 0.0
        %4273 = vmatmul.mubr.f32.gmra.mxu0 %v4059
        %v4274 = vpop.f32.mrf.mxu0
        %v4275 = vadd.f32 0.0, %v4274
        %v4276 = vpop.f32.mrf.mxu0
        %4277 = vmatprep.mubr.f32.mxu0 0.0
        %4278 = vmatmul.mubr.f32.gmra.mxu0 %v4062
        %v4279 = vpop.f32.mrf.mxu0
        %v4280 = vadd.f32 0.0, %v4279
        %v4281 = vpop.f32.mrf.mxu0
        %4282 = vmatprep.mubr.f32.mxu0 0.0
        %4283 = vmatmul.mubr.f32.gmra.mxu0 %v4065
        %v4284 = vpop.f32.mrf.mxu0
        %v4285 = vadd.f32 0.0, %v4284
        %v4286 = vpop.f32.mrf.mxu0
        %4287 = vmatprep.mubr.f32.mxu0 0.0
        %4288 = vmatmul.mubr.f32.gmra.mxu0 %v4068
        %v4289 = vpop.f32.mrf.mxu0
        %v4290 = vadd.f32 0.0, %v4289
        %v4291 = vpop.f32.mrf.mxu0
        %4292 = vmatprep.mubr.f32.mxu0 0.0
        %4293 = vmatmul.mubr.f32.gmra.mxu0 %v4071
        %v4294 = vpop.f32.mrf.mxu0
        %v4295 = vadd.f32 0.0, %v4294
        %v4296 = vpop.f32.mrf.mxu0
        %4297 = vdwg.mxu0
        %v4299 = vsel %vm3815, %v3904, 0
        %v4302 = vsel %vm3815, %v3905, 0
        %v4305 = vsel %vm3815, %v3906, 0
        %v4308 = vsel %vm3815, %v3907, 0
        %v4311 = vsel %vm3815, %v3908, 0
        %v4314 = vsel %vm3815, %v3909, 0
        %v4317 = vsel %vm3815, %v3910, 0
        %v4320 = vsel %vm3815, %v3911, 0
        %v4323 = vsel %vm3815, %v3912, 0
        %v4326 = vsel %vm3815, %v3913, 0
        %v4329 = vsel %vm3815, %v3914, 0
        %v4332 = vsel %vm3815, %v3915, 0
        %v4335 = vsel %vm3815, %v3916, 0
        %v4338 = vsel %vm3815, %v3917, 0
        %v4341 = vsel %vm3815, %v3918, 0
        %v4344 = vsel %vm3815, %v3919, 0
        %v4347 = vsel %vm3815, %v3920, 0
        %v4350 = vsel %vm3815, %v3921, 0
        %v4353 = vsel %vm3815, %v3922, 0
        %v4356 = vsel %vm3815, %v3923, 0
        %v4359 = vsel %vm3815, %v3924, 0
        %v4362 = vsel %vm3815, %v3925, 0
        %v4365 = vsel %vm3815, %v3926, 0
        %v4368 = vsel %vm3815, %v3927, 0
        %v4371 = vsel %vm3815, %v3928, 0
        %v4374 = vsel %vm3815, %v3929, 0
        %v4377 = vsel %vm3815, %v3930, 0
        %v4380 = vsel %vm3815, %v3931, 0
        %v4383 = vsel %vm3815, %v3932, 0
        %v4386 = vsel %vm3815, %v3933, 0
        %v4389 = vsel %vm3815, %v3934, 0
        %v4392 = vsel %vm3815, %v3935, 0
        %4394 = vmatprep.subr.mxu0 0.0
        %4395 = vmatpush1.msra.mxu0 0.0
        %4396 = vmatprep.subr.mxu0 0.0
        %4397 = vmatpush1.msra.mxu0 0.0
        %4398 = vmatprep.subr.mxu0 0.0
        %4399 = vmatpush1.msra.mxu0 0.0
        %4400 = vmatprep.subr.mxu0 0.0
        %4401 = vmatpush1.msra.mxu0 0.0
        %4402 = vmatprep.subr.mxu0 0.0
        %4403 = vmatpush1.msra.mxu0 0.0
        %4404 = vmatprep.subr.mxu0 0.0
        %4405 = vmatpush1.msra.mxu0 0.0
        %4406 = vmatprep.subr.mxu0 0.0
        %4407 = vmatpush1.msra.mxu0 0.0
        %4408 = vmatprep.subr.mxu0 0.0
        %4409 = vmatpush1.msra.mxu0 0.0
        %4410 = vmatprep.subr.mxu0 0.0
        %4411 = vmatpush1.msra.mxu0 0.0
        %4412 = vmatprep.subr.mxu0 0.0
        %4413 = vmatpush1.msra.mxu0 0.0
        %4414 = vmatprep.subr.mxu0 0.0
        %4415 = vmatpush1.msra.mxu0 0.0
        %4416 = vmatprep.subr.mxu0 0.0
        %4417 = vmatpush1.msra.mxu0 0.0
        %4418 = vmatprep.subr.mxu0 0.0
        %4419 = vmatpush1.msra.mxu0 %v3939
        %4420 = vmatprep.subr.mxu0 0.0
        %4421 = vmatpush1.msra.mxu0 %v3938
        %4422 = vmatprep.subr.mxu0 0.0
        %4423 = vmatpush1.msra.mxu0 %v3937
        %4424 = vmatprep.subr.mxu0 0.0
        %4425 = vmatpush1.msra.mxu0 %v3936
        %4426 = vmatprep.subr.mxu0 0.0
        %4427 = vmatpush2.msra.mxu0 0.0
        %4428 = vmatprep.subr.mxu0 0.0
        %4429 = vmatpush2.msra.mxu0 0.0
        %4430 = vmatprep.subr.mxu0 0.0
        %4431 = vmatpush2.msra.mxu0 0.0
        %4432 = vmatprep.subr.mxu0 0.0
        %4433 = vmatpush2.msra.mxu0 0.0
        %4434 = vmatprep.subr.mxu0 0.0
        %4435 = vmatpush2.msra.mxu0 0.0
        %4436 = vmatprep.subr.mxu0 0.0
        %4437 = vmatpush2.msra.mxu0 0.0
        %4438 = vmatprep.subr.mxu0 0.0
        %4439 = vmatpush2.msra.mxu0 0.0
        %4440 = vmatprep.subr.mxu0 0.0
        %4441 = vmatpush2.msra.mxu0 0.0
        %4442 = vmatprep.subr.mxu0 0.0
        %4443 = vmatpush2.msra.mxu0 0.0
        %4444 = vmatprep.subr.mxu0 0.0
        %4445 = vmatpush2.msra.mxu0 0.0
        %4446 = vmatprep.subr.mxu0 0.0
        %4447 = vmatpush2.msra.mxu0 0.0
        %4448 = vmatprep.subr.mxu0 0.0
        %4449 = vmatpush2.msra.mxu0 0.0
        %4450 = vmatprep.subr.mxu0 0.0
        %4451 = vmatpush2.msra.mxu0 0.0
        %4452 = vmatprep.subr.mxu0 0.0
        %4453 = vmatpush2.msra.mxu0 0.0
        %4454 = vmatprep.subr.mxu0 0.0
        %4455 = vmatpush2.msra.mxu0 0.0
        %4456 = vmatprep.subr.mxu0 0.0
        %4457 = vmatpush2.msra.mxu0 0.0
        %4458 = vmatprep.mubr.f32.mxu0 0.0
        %4459 = vmatmul.mubr.f32.gmra.mxu0 %v4299
        %v4460 = vpop.f32.mrf.mxu0
        %v4461 = vadd.f32 %v4140, %v4460
        %v4462 = vpop.f32.mrf.mxu0
        %4463 = vmatprep.mubr.f32.mxu0 0.0
        %4464 = vmatmul.mubr.f32.gmra.mxu0 %v4302
        %v4465 = vpop.f32.mrf.mxu0
        %v4466 = vadd.f32 %v4145, %v4465
        %v4467 = vpop.f32.mrf.mxu0
        %4468 = vmatprep.mubr.f32.mxu0 0.0
        %4469 = vmatmul.mubr.f32.gmra.mxu0 %v4305
        %v4470 = vpop.f32.mrf.mxu0
        %v4471 = vadd.f32 %v4150, %v4470
        %v4472 = vpop.f32.mrf.mxu0
        %4473 = vmatprep.mubr.f32.mxu0 0.0
        %4474 = vmatmul.mubr.f32.gmra.mxu0 %v4308
        %v4475 = vpop.f32.mrf.mxu0
        %v4476 = vadd.f32 %v4155, %v4475
        %v4477 = vpop.f32.mrf.mxu0
        %4478 = vmatprep.mubr.f32.mxu0 0.0
        %4479 = vmatmul.mubr.f32.gmra.mxu0 %v4311
        %v4480 = vpop.f32.mrf.mxu0
        %v4481 = vadd.f32 %v4160, %v4480
        %v4482 = vpop.f32.mrf.mxu0
        %4483 = vmatprep.mubr.f32.mxu0 0.0
        %4484 = vmatmul.mubr.f32.gmra.mxu0 %v4314
        %v4485 = vpop.f32.mrf.mxu0
        %v4486 = vadd.f32 %v4165, %v4485
        %v4487 = vpop.f32.mrf.mxu0
        %4488 = vmatprep.mubr.f32.mxu0 0.0
        %4489 = vmatmul.mubr.f32.gmra.mxu0 %v4317
        %v4490 = vpop.f32.mrf.mxu0
        %v4491 = vadd.f32 %v4170, %v4490
        %v4492 = vpop.f32.mrf.mxu0
        %4493 = vmatprep.mubr.f32.mxu0 0.0
        %4494 = vmatmul.mubr.f32.gmra.mxu0 %v4320
        %v4495 = vpop.f32.mrf.mxu0
        %v4496 = vadd.f32 %v4175, %v4495
        %v4497 = vpop.f32.mrf.mxu0
        %4498 = vmatprep.mubr.f32.mxu0 0.0
        %4499 = vmatmul.mubr.f32.gmra.mxu0 %v4323
        %v4500 = vpop.f32.mrf.mxu0
        %v4501 = vadd.f32 %v4180, %v4500
        %v4502 = vpop.f32.mrf.mxu0
        %4503 = vmatprep.mubr.f32.mxu0 0.0
        %4504 = vmatmul.mubr.f32.gmra.mxu0 %v4326
        %v4505 = vpop.f32.mrf.mxu0
        %v4506 = vadd.f32 %v4185, %v4505
        %v4507 = vpop.f32.mrf.mxu0
        %4508 = vmatprep.mubr.f32.mxu0 0.0
        %4509 = vmatmul.mubr.f32.gmra.mxu0 %v4329
        %v4510 = vpop.f32.mrf.mxu0
        %v4511 = vadd.f32 %v4190, %v4510
        %v4512 = vpop.f32.mrf.mxu0
        %4513 = vmatprep.mubr.f32.mxu0 0.0
        %4514 = vmatmul.mubr.f32.gmra.mxu0 %v4332
        %v4515 = vpop.f32.mrf.mxu0
        %v4516 = vadd.f32 %v4195, %v4515
        %v4517 = vpop.f32.mrf.mxu0
        %4518 = vmatprep.mubr.f32.mxu0 0.0
        %4519 = vmatmul.mubr.f32.gmra.mxu0 %v4335
        %v4520 = vpop.f32.mrf.mxu0
        %v4521 = vadd.f32 %v4200, %v4520
        %v4522 = vpop.f32.mrf.mxu0
        %4523 = vmatprep.mubr.f32.mxu0 0.0
        %4524 = vmatmul.mubr.f32.gmra.mxu0 %v4338
        %v4525 = vpop.f32.mrf.mxu0
        %v4526 = vadd.f32 %v4205, %v4525
        %v4527 = vpop.f32.mrf.mxu0
        %4528 = vmatprep.mubr.f32.mxu0 0.0
        %4529 = vmatmul.mubr.f32.gmra.mxu0 %v4341
        %v4530 = vpop.f32.mrf.mxu0
        %v4531 = vadd.f32 %v4210, %v4530
        %v4532 = vpop.f32.mrf.mxu0
        %4533 = vmatprep.mubr.f32.mxu0 0.0
        %4534 = vmatmul.mubr.f32.gmra.mxu0 %v4344
        %v4535 = vpop.f32.mrf.mxu0
        %v4536 = vadd.f32 %v4215, %v4535
        %v4537 = vpop.f32.mrf.mxu0
        %4538 = vmatprep.mubr.f32.mxu0 0.0
        %4539 = vmatmul.mubr.f32.gmra.mxu0 %v4347
        %v4540 = vpop.f32.mrf.mxu0
        %v4541 = vadd.f32 %v4220, %v4540
        %v4542 = vpop.f32.mrf.mxu0
        %4543 = vmatprep.mubr.f32.mxu0 0.0
        %4544 = vmatmul.mubr.f32.gmra.mxu0 %v4350
        %v4545 = vpop.f32.mrf.mxu0
        %v4546 = vadd.f32 %v4225, %v4545
        %v4547 = vpop.f32.mrf.mxu0
        %4548 = vmatprep.mubr.f32.mxu0 0.0
        %4549 = vmatmul.mubr.f32.gmra.mxu0 %v4353
        %v4550 = vpop.f32.mrf.mxu0
        %v4551 = vadd.f32 %v4230, %v4550
        %v4552 = vpop.f32.mrf.mxu0
        %4553 = vmatprep.mubr.f32.mxu0 0.0
        %4554 = vmatmul.mubr.f32.gmra.mxu0 %v4356
        %v4555 = vpop.f32.mrf.mxu0
        %v4556 = vadd.f32 %v4235, %v4555
        %v4557 = vpop.f32.mrf.mxu0
        %4558 = vmatprep.mubr.f32.mxu0 0.0
        %4559 = vmatmul.mubr.f32.gmra.mxu0 %v4359
        %v4560 = vpop.f32.mrf.mxu0
        %v4561 = vadd.f32 %v4240, %v4560
        %v4562 = vpop.f32.mrf.mxu0
        %4563 = vmatprep.mubr.f32.mxu0 0.0
        %4564 = vmatmul.mubr.f32.gmra.mxu0 %v4362
        %v4565 = vpop.f32.mrf.mxu0
        %v4566 = vadd.f32 %v4245, %v4565
        %v4567 = vpop.f32.mrf.mxu0
        %4568 = vmatprep.mubr.f32.mxu0 0.0
        %4569 = vmatmul.mubr.f32.gmra.mxu0 %v4365
        %v4570 = vpop.f32.mrf.mxu0
        %v4571 = vadd.f32 %v4250, %v4570
        %v4572 = vpop.f32.mrf.mxu0
        %4573 = vmatprep.mubr.f32.mxu0 0.0
        %4574 = vmatmul.mubr.f32.gmra.mxu0 %v4368
        %v4575 = vpop.f32.mrf.mxu0
        %v4576 = vadd.f32 %v4255, %v4575
        %v4577 = vpop.f32.mrf.mxu0
        %4578 = vmatprep.mubr.f32.mxu0 0.0
        %4579 = vmatmul.mubr.f32.gmra.mxu0 %v4371
        %v4580 = vpop.f32.mrf.mxu0
        %v4581 = vadd.f32 %v4260, %v4580
        %v4582 = vpop.f32.mrf.mxu0
        %4583 = vmatprep.mubr.f32.mxu0 0.0
        %4584 = vmatmul.mubr.f32.gmra.mxu0 %v4374
        %v4585 = vpop.f32.mrf.mxu0
        %v4586 = vadd.f32 %v4265, %v4585
        %v4587 = vpop.f32.mrf.mxu0
        %4588 = vmatprep.mubr.f32.mxu0 0.0
        %4589 = vmatmul.mubr.f32.gmra.mxu0 %v4377
        %v4590 = vpop.f32.mrf.mxu0
        %v4591 = vadd.f32 %v4270, %v4590
        %v4592 = vpop.f32.mrf.mxu0
        %4593 = vmatprep.mubr.f32.mxu0 0.0
        %4594 = vmatmul.mubr.f32.gmra.mxu0 %v4380
        %v4595 = vpop.f32.mrf.mxu0
        %v4596 = vadd.f32 %v4275, %v4595
        %v4597 = vpop.f32.mrf.mxu0
        %4598 = vmatprep.mubr.f32.mxu0 0.0
        %4599 = vmatmul.mubr.f32.gmra.mxu0 %v4383
        %v4600 = vpop.f32.mrf.mxu0
        %v4601 = vadd.f32 %v4280, %v4600
        %v4602 = vpop.f32.mrf.mxu0
        %4603 = vmatprep.mubr.f32.mxu0 0.0
        %4604 = vmatmul.mubr.f32.gmra.mxu0 %v4386
        %v4605 = vpop.f32.mrf.mxu0
        %v4606 = vadd.f32 %v4285, %v4605
        %v4607 = vpop.f32.mrf.mxu0
        %4608 = vmatprep.mubr.f32.mxu0 0.0
        %4609 = vmatmul.mubr.f32.gmra.mxu0 %v4389
        %v4610 = vpop.f32.mrf.mxu0
        %v4611 = vadd.f32 %v4290, %v4610
        %v4612 = vpop.f32.mrf.mxu0
        %4613 = vmatprep.mubr.f32.mxu0 0.0
        %4614 = vmatmul.mubr.f32.gmra.mxu0 %v4392
        %v4615 = vpop.f32.mrf.mxu0
        %v4616 = vadd.f32 %v4295, %v4615
        %v4617 = vpop.f32.mrf.mxu0
        %4618 = vdwg.mxu0
        %v4619 = vld [vmem:[#allocation2 + $0x2] sm:$0xff]
        %v4620 = vld [vmem:[#allocation2 + $0xa] sm:$0xff]
        %v4621 = vld [vmem:[#allocation2 + $0x1a] sm:$0xff]
        %v4622 = vld [vmem:[#allocation2 + $0x22] sm:$0xff]
        %v4623 = vld [vmem:[#allocation2 + $0x32] sm:$0xff]
        %v4624 = vld [vmem:[#allocation2 + $0x3a] sm:$0xff]
        %v4625 = vld [vmem:[#allocation2 + $0x4a] sm:$0xff]
        %v4626 = vld [vmem:[#allocation2 + $0x52] sm:$0xff]
        %v4627 = vld [vmem:[#allocation2 + $0x62] sm:$0xff]
        %v4628 = vld [vmem:[#allocation2 + $0x6a] sm:$0xff]
        %v4629 = vld [vmem:[#allocation2 + $0x7a] sm:$0xff]
        %v4630 = vld [vmem:[#allocation2 + $0x82] sm:$0xff]
        %v4631 = vld [vmem:[#allocation2 + $0x92] sm:$0xff]
        %v4632 = vld [vmem:[#allocation2 + $0x9a] sm:$0xff]
        %v4633 = vld [vmem:[#allocation2 + $0xaa] sm:$0xff]
        %v4634 = vld [vmem:[#allocation2 + $0xb2] sm:$0xff]
        %v4635 = vld [vmem:[#allocation2 + $0xc2] sm:$0xff]
        %v4636 = vld [vmem:[#allocation2 + $0xca] sm:$0xff]
        %v4637 = vld [vmem:[#allocation2 + $0xda] sm:$0xff]
        %v4638 = vld [vmem:[#allocation2 + $0xe2] sm:$0xff]
        %v4639 = vld [vmem:[#allocation2 + $0xf2] sm:$0xff]
        %v4640 = vld [vmem:[#allocation2 + $0xfa] sm:$0xff]
        %v4641 = vld [vmem:[#allocation2 + $0x10a] sm:$0xff]
        %v4642 = vld [vmem:[#allocation2 + $0x112] sm:$0xff]
        %v4643 = vld [vmem:[#allocation2 + $0x122] sm:$0xff]
        %v4644 = vld [vmem:[#allocation2 + $0x12a] sm:$0xff]
        %v4645 = vld [vmem:[#allocation2 + $0x13a] sm:$0xff]
        %v4646 = vld [vmem:[#allocation2 + $0x142] sm:$0xff]
        %v4647 = vld [vmem:[#allocation2 + $0x152] sm:$0xff]
        %v4648 = vld [vmem:[#allocation2 + $0x15a] sm:$0xff]
        %v4649 = vld [vmem:[#allocation2 + $0x16a] sm:$0xff]
        %v4650 = vld [vmem:[#allocation2 + $0x172] sm:$0xff]
        %s4651 = scalar_lea.vmem %s2, 64
        %v4652 = vld [vmem:[%s4651] sm:$0xff]
        %v4653 = vld [vmem:[%s4651 + $0x8] sm:$0xff]
        %v4654 = vld [vmem:[%s4651 + $0x10] sm:$0xff]
        %v4655 = vld [vmem:[%s4651 + $0x18] sm:$0xff]
        %v4657 = vsel %vm3815, %v4619, 0
        %v4660 = vsel %vm3815, %v4620, 0
        %v4663 = vsel %vm3815, %v4621, 0
        %v4666 = vsel %vm3815, %v4622, 0
        %v4669 = vsel %vm3815, %v4623, 0
        %v4672 = vsel %vm3815, %v4624, 0
        %v4675 = vsel %vm3815, %v4625, 0
        %v4678 = vsel %vm3815, %v4626, 0
        %v4681 = vsel %vm3815, %v4627, 0
        %v4684 = vsel %vm3815, %v4628, 0
        %v4687 = vsel %vm3815, %v4629, 0
        %v4690 = vsel %vm3815, %v4630, 0
        %v4693 = vsel %vm3815, %v4631, 0
        %v4696 = vsel %vm3815, %v4632, 0
        %v4699 = vsel %vm3815, %v4633, 0
        %v4702 = vsel %vm3815, %v4634, 0
        %v4705 = vsel %vm3815, %v4635, 0
        %v4708 = vsel %vm3815, %v4636, 0
        %v4711 = vsel %vm3815, %v4637, 0
        %v4714 = vsel %vm3815, %v4638, 0
        %v4717 = vsel %vm3815, %v4639, 0
        %v4720 = vsel %vm3815, %v4640, 0
        %v4723 = vsel %vm3815, %v4641, 0
        %v4726 = vsel %vm3815, %v4642, 0
        %v4729 = vsel %vm3815, %v4643, 0
        %v4732 = vsel %vm3815, %v4644, 0
        %v4735 = vsel %vm3815, %v4645, 0
        %v4738 = vsel %vm3815, %v4646, 0
        %v4741 = vsel %vm3815, %v4647, 0
        %v4744 = vsel %vm3815, %v4648, 0
        %v4747 = vsel %vm3815, %v4649, 0
        %v4750 = vsel %vm3815, %v4650, 0
        %4752 = vmatprep.subr.mxu0 0.0
        %4753 = vmatpush1.msra.mxu0 0.0
        %4754 = vmatprep.subr.mxu0 0.0
        %4755 = vmatpush1.msra.mxu0 0.0
        %4756 = vmatprep.subr.mxu0 0.0
        %4757 = vmatpush1.msra.mxu0 0.0
        %4758 = vmatprep.subr.mxu0 0.0
        %4759 = vmatpush1.msra.mxu0 0.0
        %4760 = vmatprep.subr.mxu0 0.0
        %4761 = vmatpush1.msra.mxu0 0.0
        %4762 = vmatprep.subr.mxu0 0.0
        %4763 = vmatpush1.msra.mxu0 0.0
        %4764 = vmatprep.subr.mxu0 0.0
        %4765 = vmatpush1.msra.mxu0 0.0
        %4766 = vmatprep.subr.mxu0 0.0
        %4767 = vmatpush1.msra.mxu0 0.0
        %4768 = vmatprep.subr.mxu0 0.0
        %4769 = vmatpush1.msra.mxu0 0.0
        %4770 = vmatprep.subr.mxu0 0.0
        %4771 = vmatpush1.msra.mxu0 0.0
        %4772 = vmatprep.subr.mxu0 0.0
        %4773 = vmatpush1.msra.mxu0 0.0
        %4774 = vmatprep.subr.mxu0 0.0
        %4775 = vmatpush1.msra.mxu0 0.0
        %4776 = vmatprep.subr.mxu0 0.0
        %4777 = vmatpush1.msra.mxu0 %v4655
        %4778 = vmatprep.subr.mxu0 0.0
        %4779 = vmatpush1.msra.mxu0 %v4654
        %4780 = vmatprep.subr.mxu0 0.0
        %4781 = vmatpush1.msra.mxu0 %v4653
        %4782 = vmatprep.subr.mxu0 0.0
        %4783 = vmatpush1.msra.mxu0 %v4652
        %4784 = vmatprep.subr.mxu0 0.0
        %4785 = vmatpush2.msra.mxu0 0.0
        %4786 = vmatprep.subr.mxu0 0.0
        %4787 = vmatpush2.msra.mxu0 0.0
        %4788 = vmatprep.subr.mxu0 0.0
        %4789 = vmatpush2.msra.mxu0 0.0
        %4790 = vmatprep.subr.mxu0 0.0
        %4791 = vmatpush2.msra.mxu0 0.0
        %4792 = vmatprep.subr.mxu0 0.0
        %4793 = vmatpush2.msra.mxu0 0.0
        %4794 = vmatprep.subr.mxu0 0.0
        %4795 = vmatpush2.msra.mxu0 0.0
        %4796 = vmatprep.subr.mxu0 0.0
        %4797 = vmatpush2.msra.mxu0 0.0
        %4798 = vmatprep.subr.mxu0 0.0
        %4799 = vmatpush2.msra.mxu0 0.0
        %4800 = vmatprep.subr.mxu0 0.0
        %4801 = vmatpush2.msra.mxu0 0.0
        %4802 = vmatprep.subr.mxu0 0.0
        %4803 = vmatpush2.msra.mxu0 0.0
        %4804 = vmatprep.subr.mxu0 0.0
        %4805 = vmatpush2.msra.mxu0 0.0
        %4806 = vmatprep.subr.mxu0 0.0
        %4807 = vmatpush2.msra.mxu0 0.0
        %4808 = vmatprep.subr.mxu0 0.0
        %4809 = vmatpush2.msra.mxu0 0.0
        %4810 = vmatprep.subr.mxu0 0.0
        %4811 = vmatpush2.msra.mxu0 0.0
        %4812 = vmatprep.subr.mxu0 0.0
        %4813 = vmatpush2.msra.mxu0 0.0
        %4814 = vmatprep.subr.mxu0 0.0
        %4815 = vmatpush2.msra.mxu0 0.0
        %4816 = vmatprep.mubr.f32.mxu0 0.0
        %4817 = vmatmul.mubr.f32.gmra.mxu0 %v4657
        %v4818 = vpop.f32.mrf.mxu0
        %v4819 = vadd.f32 0.0, %v4818
        %v4820 = vpop.f32.mrf.mxu0
        %4821 = vmatprep.mubr.f32.mxu0 0.0
        %4822 = vmatmul.mubr.f32.gmra.mxu0 %v4660
        %v4823 = vpop.f32.mrf.mxu0
        %v4824 = vadd.f32 0.0, %v4823
        %v4825 = vpop.f32.mrf.mxu0
        %4826 = vmatprep.mubr.f32.mxu0 0.0
        %4827 = vmatmul.mubr.f32.gmra.mxu0 %v4663
        %v4828 = vpop.f32.mrf.mxu0
        %v4829 = vadd.f32 0.0, %v4828
        %v4830 = vpop.f32.mrf.mxu0
        %4831 = vmatprep.mubr.f32.mxu0 0.0
        %4832 = vmatmul.mubr.f32.gmra.mxu0 %v4666
        %v4833 = vpop.f32.mrf.mxu0
        %v4834 = vadd.f32 0.0, %v4833
        %v4835 = vpop.f32.mrf.mxu0
        %4836 = vmatprep.mubr.f32.mxu0 0.0
        %4837 = vmatmul.mubr.f32.gmra.mxu0 %v4669
        %v4838 = vpop.f32.mrf.mxu0
        %v4839 = vadd.f32 0.0, %v4838
        %v4840 = vpop.f32.mrf.mxu0
        %4841 = vmatprep.mubr.f32.mxu0 0.0
        %4842 = vmatmul.mubr.f32.gmra.mxu0 %v4672
        %v4843 = vpop.f32.mrf.mxu0
        %v4844 = vadd.f32 0.0, %v4843
        %v4845 = vpop.f32.mrf.mxu0
        %4846 = vmatprep.mubr.f32.mxu0 0.0
        %4847 = vmatmul.mubr.f32.gmra.mxu0 %v4675
        %v4848 = vpop.f32.mrf.mxu0
        %v4849 = vadd.f32 0.0, %v4848
        %v4850 = vpop.f32.mrf.mxu0
        %4851 = vmatprep.mubr.f32.mxu0 0.0
        %4852 = vmatmul.mubr.f32.gmra.mxu0 %v4678
        %v4853 = vpop.f32.mrf.mxu0
        %v4854 = vadd.f32 0.0, %v4853
        %v4855 = vpop.f32.mrf.mxu0
        %4856 = vmatprep.mubr.f32.mxu0 0.0
        %4857 = vmatmul.mubr.f32.gmra.mxu0 %v4681
        %v4858 = vpop.f32.mrf.mxu0
        %v4859 = vadd.f32 0.0, %v4858
        %v4860 = vpop.f32.mrf.mxu0
        %4861 = vmatprep.mubr.f32.mxu0 0.0
        %4862 = vmatmul.mubr.f32.gmra.mxu0 %v4684
        %v4863 = vpop.f32.mrf.mxu0
        %v4864 = vadd.f32 0.0, %v4863
        %v4865 = vpop.f32.mrf.mxu0
        %4866 = vmatprep.mubr.f32.mxu0 0.0
        %4867 = vmatmul.mubr.f32.gmra.mxu0 %v4687
        %v4868 = vpop.f32.mrf.mxu0
        %v4869 = vadd.f32 0.0, %v4868
        %v4870 = vpop.f32.mrf.mxu0
        %4871 = vmatprep.mubr.f32.mxu0 0.0
        %4872 = vmatmul.mubr.f32.gmra.mxu0 %v4690
        %v4873 = vpop.f32.mrf.mxu0
        %v4874 = vadd.f32 0.0, %v4873
        %v4875 = vpop.f32.mrf.mxu0
        %4876 = vmatprep.mubr.f32.mxu0 0.0
        %4877 = vmatmul.mubr.f32.gmra.mxu0 %v4693
        %v4878 = vpop.f32.mrf.mxu0
        %v4879 = vadd.f32 0.0, %v4878
        %v4880 = vpop.f32.mrf.mxu0
        %4881 = vmatprep.mubr.f32.mxu0 0.0
        %4882 = vmatmul.mubr.f32.gmra.mxu0 %v4696
        %v4883 = vpop.f32.mrf.mxu0
        %v4884 = vadd.f32 0.0, %v4883
        %v4885 = vpop.f32.mrf.mxu0
        %4886 = vmatprep.mubr.f32.mxu0 0.0
        %4887 = vmatmul.mubr.f32.gmra.mxu0 %v4699
        %v4888 = vpop.f32.mrf.mxu0
        %v4889 = vadd.f32 0.0, %v4888
        %v4890 = vpop.f32.mrf.mxu0
        %4891 = vmatprep.mubr.f32.mxu0 0.0
        %4892 = vmatmul.mubr.f32.gmra.mxu0 %v4702
        %v4893 = vpop.f32.mrf.mxu0
        %v4894 = vadd.f32 0.0, %v4893
        %v4895 = vpop.f32.mrf.mxu0
        %4896 = vmatprep.mubr.f32.mxu0 0.0
        %4897 = vmatmul.mubr.f32.gmra.mxu0 %v4705
        %v4898 = vpop.f32.mrf.mxu0
        %v4899 = vadd.f32 0.0, %v4898
        %v4900 = vpop.f32.mrf.mxu0
        %4901 = vmatprep.mubr.f32.mxu0 0.0
        %4902 = vmatmul.mubr.f32.gmra.mxu0 %v4708
        %v4903 = vpop.f32.mrf.mxu0
        %v4904 = vadd.f32 0.0, %v4903
        %v4905 = vpop.f32.mrf.mxu0
        %4906 = vmatprep.mubr.f32.mxu0 0.0
        %4907 = vmatmul.mubr.f32.gmra.mxu0 %v4711
        %v4908 = vpop.f32.mrf.mxu0
        %v4909 = vadd.f32 0.0, %v4908
        %v4910 = vpop.f32.mrf.mxu0
        %4911 = vmatprep.mubr.f32.mxu0 0.0
        %4912 = vmatmul.mubr.f32.gmra.mxu0 %v4714
        %v4913 = vpop.f32.mrf.mxu0
        %v4914 = vadd.f32 0.0, %v4913
        %v4915 = vpop.f32.mrf.mxu0
        %4916 = vmatprep.mubr.f32.mxu0 0.0
        %4917 = vmatmul.mubr.f32.gmra.mxu0 %v4717
        %v4918 = vpop.f32.mrf.mxu0
        %v4919 = vadd.f32 0.0, %v4918
        %v4920 = vpop.f32.mrf.mxu0
        %4921 = vmatprep.mubr.f32.mxu0 0.0
        %4922 = vmatmul.mubr.f32.gmra.mxu0 %v4720
        %v4923 = vpop.f32.mrf.mxu0
        %v4924 = vadd.f32 0.0, %v4923
        %v4925 = vpop.f32.mrf.mxu0
        %4926 = vmatprep.mubr.f32.mxu0 0.0
        %4927 = vmatmul.mubr.f32.gmra.mxu0 %v4723
        %v4928 = vpop.f32.mrf.mxu0
        %v4929 = vadd.f32 0.0, %v4928
        %v4930 = vpop.f32.mrf.mxu0
        %4931 = vmatprep.mubr.f32.mxu0 0.0
        %4932 = vmatmul.mubr.f32.gmra.mxu0 %v4726
        %v4933 = vpop.f32.mrf.mxu0
        %v4934 = vadd.f32 0.0, %v4933
        %v4935 = vpop.f32.mrf.mxu0
        %4936 = vmatprep.mubr.f32.mxu0 0.0
        %4937 = vmatmul.mubr.f32.gmra.mxu0 %v4729
        %v4938 = vpop.f32.mrf.mxu0
        %v4939 = vadd.f32 0.0, %v4938
        %v4940 = vpop.f32.mrf.mxu0
        %4941 = vmatprep.mubr.f32.mxu0 0.0
        %4942 = vmatmul.mubr.f32.gmra.mxu0 %v4732
        %v4943 = vpop.f32.mrf.mxu0
        %v4944 = vadd.f32 0.0, %v4943
        %v4945 = vpop.f32.mrf.mxu0
        %4946 = vmatprep.mubr.f32.mxu0 0.0
        %4947 = vmatmul.mubr.f32.gmra.mxu0 %v4735
        %v4948 = vpop.f32.mrf.mxu0
        %v4949 = vadd.f32 0.0, %v4948
        %v4950 = vpop.f32.mrf.mxu0
        %4951 = vmatprep.mubr.f32.mxu0 0.0
        %4952 = vmatmul.mubr.f32.gmra.mxu0 %v4738
        %v4953 = vpop.f32.mrf.mxu0
        %v4954 = vadd.f32 0.0, %v4953
        %v4955 = vpop.f32.mrf.mxu0
        %4956 = vmatprep.mubr.f32.mxu0 0.0
        %4957 = vmatmul.mubr.f32.gmra.mxu0 %v4741
        %v4958 = vpop.f32.mrf.mxu0
        %v4959 = vadd.f32 0.0, %v4958
        %v4960 = vpop.f32.mrf.mxu0
        %4961 = vmatprep.mubr.f32.mxu0 0.0
        %4962 = vmatmul.mubr.f32.gmra.mxu0 %v4744
        %v4963 = vpop.f32.mrf.mxu0
        %v4964 = vadd.f32 0.0, %v4963
        %v4965 = vpop.f32.mrf.mxu0
        %4966 = vmatprep.mubr.f32.mxu0 0.0
        %4967 = vmatmul.mubr.f32.gmra.mxu0 %v4747
        %v4968 = vpop.f32.mrf.mxu0
        %v4969 = vadd.f32 0.0, %v4968
        %v4970 = vpop.f32.mrf.mxu0
        %4971 = vmatprep.mubr.f32.mxu0 0.0
        %4972 = vmatmul.mubr.f32.gmra.mxu0 %v4750
        %v4973 = vpop.f32.mrf.mxu0
        %v4974 = vadd.f32 0.0, %v4973
        %v4975 = vpop.f32.mrf.mxu0
        %4976 = vdwg.mxu0
        %v4977 = vadd.f32 %v4461, %v4819
        %v4978 = vadd.f32 %v4466, %v4824
        %v4979 = vadd.f32 %v4471, %v4829
        %v4980 = vadd.f32 %v4476, %v4834
        %v4981 = vadd.f32 %v4481, %v4839
        %v4982 = vadd.f32 %v4486, %v4844
        %v4983 = vadd.f32 %v4491, %v4849
        %v4984 = vadd.f32 %v4496, %v4854
        %v4985 = vadd.f32 %v4501, %v4859
        %v4986 = vadd.f32 %v4506, %v4864
        %v4987 = vadd.f32 %v4511, %v4869
        %v4988 = vadd.f32 %v4516, %v4874
        %v4989 = vadd.f32 %v4521, %v4879
        %v4990 = vadd.f32 %v4526, %v4884
        %v4991 = vadd.f32 %v4531, %v4889
        %v4992 = vadd.f32 %v4536, %v4894
        %v4993 = vadd.f32 %v4541, %v4899
        %v4994 = vadd.f32 %v4546, %v4904
        %v4995 = vadd.f32 %v4551, %v4909
        %v4996 = vadd.f32 %v4556, %v4914
        %v4997 = vadd.f32 %v4561, %v4919
        %v4998 = vadd.f32 %v4566, %v4924
        %v4999 = vadd.f32 %v4571, %v4929
        %v5000 = vadd.f32 %v4576, %v4934
        %v5001 = vadd.f32 %v4581, %v4939
        %v5002 = vadd.f32 %v4586, %v4944
        %v5003 = vadd.f32 %v4591, %v4949
        %v5004 = vadd.f32 %v4596, %v4954
        %v5005 = vadd.f32 %v4601, %v4959
        %v5006 = vadd.f32 %v4606, %v4964
        %v5007 = vadd.f32 %v4611, %v4969
        %v5008 = vadd.f32 %v4616, %v4974
        %v5009 = vld [vmem:[%s3871] sm:$0xff]
        %v5010 = vld [vmem:[%s3871 + $0x8] sm:$0xff]
        %v5011 = vld [vmem:[%s3871 + $0x18] sm:$0xff]
        %v5012 = vld [vmem:[%s3871 + $0x20] sm:$0xff]
        %v5013 = vld [vmem:[%s3871 + $0x30] sm:$0xff]
        %v5014 = vld [vmem:[%s3871 + $0x38] sm:$0xff]
        %v5015 = vld [vmem:[%s3871 + $0x48] sm:$0xff]
        %v5016 = vld [vmem:[%s3871 + $0x50] sm:$0xff]
        %v5017 = vld [vmem:[%s3871 + $0x60] sm:$0xff]
        %v5018 = vld [vmem:[%s3871 + $0x68] sm:$0xff]
        %v5019 = vld [vmem:[%s3871 + $0x78] sm:$0xff]
        %v5020 = vld [vmem:[%s3871 + $0x80] sm:$0xff]
        %v5021 = vld [vmem:[%s3871 + $0x90] sm:$0xff]
        %v5022 = vld [vmem:[%s3871 + $0x98] sm:$0xff]
        %v5023 = vld [vmem:[%s3871 + $0xa8] sm:$0xff]
        %v5024 = vld [vmem:[%s3871 + $0xb0] sm:$0xff]
        %v5025 = vld [vmem:[%s3871 + $0xc0] sm:$0xff]
        %v5026 = vld [vmem:[%s3871 + $0xc8] sm:$0xff]
        %v5027 = vld [vmem:[%s3871 + $0xd8] sm:$0xff]
        %v5028 = vld [vmem:[%s3871 + $0xe0] sm:$0xff]
        %v5029 = vld [vmem:[%s3871 + $0xf0] sm:$0xff]
        %v5030 = vld [vmem:[%s3871 + $0xf8] sm:$0xff]
        %v5031 = vld [vmem:[%s3871 + $0x108] sm:$0xff]
        %v5032 = vld [vmem:[%s3871 + $0x110] sm:$0xff]
        %v5033 = vld [vmem:[%s3871 + $0x120] sm:$0xff]
        %v5034 = vld [vmem:[%s3871 + $0x128] sm:$0xff]
        %v5035 = vld [vmem:[%s3871 + $0x138] sm:$0xff]
        %v5036 = vld [vmem:[%s3871 + $0x140] sm:$0xff]
        %v5037 = vld [vmem:[%s3871 + $0x150] sm:$0xff]
        %v5038 = vld [vmem:[%s3871 + $0x158] sm:$0xff]
        %v5039 = vld [vmem:[%s3871 + $0x168] sm:$0xff]
        %v5040 = vld [vmem:[%s3871 + $0x170] sm:$0xff]
        %s5041 = scalar_lea.vmem %s2, 96
        %v5042 = vld [vmem:[%s5041] sm:$0xff]
        %v5043 = vld [vmem:[%s5041 + $0x8] sm:$0xff]
        %v5044 = vld [vmem:[%s5041 + $0x10] sm:$0xff]
        %v5045 = vld [vmem:[%s5041 + $0x18] sm:$0xff]
        %v5047 = vsel %vm3815, %v5009, 0
        %v5050 = vsel %vm3815, %v5010, 0
        %v5053 = vsel %vm3815, %v5011, 0
        %v5056 = vsel %vm3815, %v5012, 0
        %v5059 = vsel %vm3815, %v5013, 0
        %v5062 = vsel %vm3815, %v5014, 0
        %v5065 = vsel %vm3815, %v5015, 0
        %v5068 = vsel %vm3815, %v5016, 0
        %v5071 = vsel %vm3815, %v5017, 0
        %v5074 = vsel %vm3815, %v5018, 0
        %v5077 = vsel %vm3815, %v5019, 0
        %v5080 = vsel %vm3815, %v5020, 0
        %v5083 = vsel %vm3815, %v5021, 0
        %v5086 = vsel %vm3815, %v5022, 0
        %v5089 = vsel %vm3815, %v5023, 0
        %v5092 = vsel %vm3815, %v5024, 0
        %v5095 = vsel %vm3815, %v5025, 0
        %v5098 = vsel %vm3815, %v5026, 0
        %v5101 = vsel %vm3815, %v5027, 0
        %v5104 = vsel %vm3815, %v5028, 0
        %v5107 = vsel %vm3815, %v5029, 0
        %v5110 = vsel %vm3815, %v5030, 0
        %v5113 = vsel %vm3815, %v5031, 0
        %v5116 = vsel %vm3815, %v5032, 0
        %v5119 = vsel %vm3815, %v5033, 0
        %v5122 = vsel %vm3815, %v5034, 0
        %v5125 = vsel %vm3815, %v5035, 0
        %v5128 = vsel %vm3815, %v5036, 0
        %v5131 = vsel %vm3815, %v5037, 0
        %v5134 = vsel %vm3815, %v5038, 0
        %v5137 = vsel %vm3815, %v5039, 0
        %v5140 = vsel %vm3815, %v5040, 0
        %5142 = vmatprep.subr.mxu0 0.0
        %5143 = vmatpush1.msra.mxu0 0.0
        %5144 = vmatprep.subr.mxu0 0.0
        %5145 = vmatpush1.msra.mxu0 0.0
        %5146 = vmatprep.subr.mxu0 0.0
        %5147 = vmatpush1.msra.mxu0 0.0
        %5148 = vmatprep.subr.mxu0 0.0
        %5149 = vmatpush1.msra.mxu0 0.0
        %5150 = vmatprep.subr.mxu0 0.0
        %5151 = vmatpush1.msra.mxu0 0.0
        %5152 = vmatprep.subr.mxu0 0.0
        %5153 = vmatpush1.msra.mxu0 0.0
        %5154 = vmatprep.subr.mxu0 0.0
        %5155 = vmatpush1.msra.mxu0 0.0
        %5156 = vmatprep.subr.mxu0 0.0
        %5157 = vmatpush1.msra.mxu0 0.0
        %5158 = vmatprep.subr.mxu0 0.0
        %5159 = vmatpush1.msra.mxu0 0.0
        %5160 = vmatprep.subr.mxu0 0.0
        %5161 = vmatpush1.msra.mxu0 0.0
        %5162 = vmatprep.subr.mxu0 0.0
        %5163 = vmatpush1.msra.mxu0 0.0
        %5164 = vmatprep.subr.mxu0 0.0
        %5165 = vmatpush1.msra.mxu0 0.0
        %5166 = vmatprep.subr.mxu0 0.0
        %5167 = vmatpush1.msra.mxu0 %v5045
        %5168 = vmatprep.subr.mxu0 0.0
        %5169 = vmatpush1.msra.mxu0 %v5044
        %5170 = vmatprep.subr.mxu0 0.0
        %5171 = vmatpush1.msra.mxu0 %v5043
        %5172 = vmatprep.subr.mxu0 0.0
        %5173 = vmatpush1.msra.mxu0 %v5042
        %5174 = vmatprep.subr.mxu0 0.0
        %5175 = vmatpush2.msra.mxu0 0.0
        %5176 = vmatprep.subr.mxu0 0.0
        %5177 = vmatpush2.msra.mxu0 0.0
        %5178 = vmatprep.subr.mxu0 0.0
        %5179 = vmatpush2.msra.mxu0 0.0
        %5180 = vmatprep.subr.mxu0 0.0
        %5181 = vmatpush2.msra.mxu0 0.0
        %5182 = vmatprep.subr.mxu0 0.0
        %5183 = vmatpush2.msra.mxu0 0.0
        %5184 = vmatprep.subr.mxu0 0.0
        %5185 = vmatpush2.msra.mxu0 0.0
        %5186 = vmatprep.subr.mxu0 0.0
        %5187 = vmatpush2.msra.mxu0 0.0
        %5188 = vmatprep.subr.mxu0 0.0
        %5189 = vmatpush2.msra.mxu0 0.0
        %5190 = vmatprep.subr.mxu0 0.0
        %5191 = vmatpush2.msra.mxu0 0.0
        %5192 = vmatprep.subr.mxu0 0.0
        %5193 = vmatpush2.msra.mxu0 0.0
        %5194 = vmatprep.subr.mxu0 0.0
        %5195 = vmatpush2.msra.mxu0 0.0
        %5196 = vmatprep.subr.mxu0 0.0
        %5197 = vmatpush2.msra.mxu0 0.0
        %5198 = vmatprep.subr.mxu0 0.0
        %5199 = vmatpush2.msra.mxu0 0.0
        %5200 = vmatprep.subr.mxu0 0.0
        %5201 = vmatpush2.msra.mxu0 0.0
        %5202 = vmatprep.subr.mxu0 0.0
        %5203 = vmatpush2.msra.mxu0 0.0
        %5204 = vmatprep.subr.mxu0 0.0
        %5205 = vmatpush2.msra.mxu0 0.0
        %5206 = vmatprep.mubr.f32.mxu0 0.0
        %5207 = vmatmul.mubr.f32.gmra.mxu0 %v5047
        %v5208 = vpop.f32.mrf.mxu0
        %v5209 = vadd.f32 0.0, %v5208
        %v5210 = vpop.f32.mrf.mxu0
        %5211 = vmatprep.mubr.f32.mxu0 0.0
        %5212 = vmatmul.mubr.f32.gmra.mxu0 %v5050
        %v5213 = vpop.f32.mrf.mxu0
        %v5214 = vadd.f32 0.0, %v5213
        %v5215 = vpop.f32.mrf.mxu0
        %5216 = vmatprep.mubr.f32.mxu0 0.0
        %5217 = vmatmul.mubr.f32.gmra.mxu0 %v5053
        %v5218 = vpop.f32.mrf.mxu0
        %v5219 = vadd.f32 0.0, %v5218
        %v5220 = vpop.f32.mrf.mxu0
        %5221 = vmatprep.mubr.f32.mxu0 0.0
        %5222 = vmatmul.mubr.f32.gmra.mxu0 %v5056
        %v5223 = vpop.f32.mrf.mxu0
        %v5224 = vadd.f32 0.0, %v5223
        %v5225 = vpop.f32.mrf.mxu0
        %5226 = vmatprep.mubr.f32.mxu0 0.0
        %5227 = vmatmul.mubr.f32.gmra.mxu0 %v5059
        %v5228 = vpop.f32.mrf.mxu0
        %v5229 = vadd.f32 0.0, %v5228
        %v5230 = vpop.f32.mrf.mxu0
        %5231 = vmatprep.mubr.f32.mxu0 0.0
        %5232 = vmatmul.mubr.f32.gmra.mxu0 %v5062
        %v5233 = vpop.f32.mrf.mxu0
        %v5234 = vadd.f32 0.0, %v5233
        %v5235 = vpop.f32.mrf.mxu0
        %5236 = vmatprep.mubr.f32.mxu0 0.0
        %5237 = vmatmul.mubr.f32.gmra.mxu0 %v5065
        %v5238 = vpop.f32.mrf.mxu0
        %v5239 = vadd.f32 0.0, %v5238
        %v5240 = vpop.f32.mrf.mxu0
        %5241 = vmatprep.mubr.f32.mxu0 0.0
        %5242 = vmatmul.mubr.f32.gmra.mxu0 %v5068
        %v5243 = vpop.f32.mrf.mxu0
        %v5244 = vadd.f32 0.0, %v5243
        %v5245 = vpop.f32.mrf.mxu0
        %5246 = vmatprep.mubr.f32.mxu0 0.0
        %5247 = vmatmul.mubr.f32.gmra.mxu0 %v5071
        %v5248 = vpop.f32.mrf.mxu0
        %v5249 = vadd.f32 0.0, %v5248
        %v5250 = vpop.f32.mrf.mxu0
        %5251 = vmatprep.mubr.f32.mxu0 0.0
        %5252 = vmatmul.mubr.f32.gmra.mxu0 %v5074
        %v5253 = vpop.f32.mrf.mxu0
        %v5254 = vadd.f32 0.0, %v5253
        %v5255 = vpop.f32.mrf.mxu0
        %5256 = vmatprep.mubr.f32.mxu0 0.0
        %5257 = vmatmul.mubr.f32.gmra.mxu0 %v5077
        %v5258 = vpop.f32.mrf.mxu0
        %v5259 = vadd.f32 0.0, %v5258
        %v5260 = vpop.f32.mrf.mxu0
        %5261 = vmatprep.mubr.f32.mxu0 0.0
        %5262 = vmatmul.mubr.f32.gmra.mxu0 %v5080
        %v5263 = vpop.f32.mrf.mxu0
        %v5264 = vadd.f32 0.0, %v5263
        %v5265 = vpop.f32.mrf.mxu0
        %5266 = vmatprep.mubr.f32.mxu0 0.0
        %5267 = vmatmul.mubr.f32.gmra.mxu0 %v5083
        %v5268 = vpop.f32.mrf.mxu0
        %v5269 = vadd.f32 0.0, %v5268
        %v5270 = vpop.f32.mrf.mxu0
        %5271 = vmatprep.mubr.f32.mxu0 0.0
        %5272 = vmatmul.mubr.f32.gmra.mxu0 %v5086
        %v5273 = vpop.f32.mrf.mxu0
        %v5274 = vadd.f32 0.0, %v5273
        %v5275 = vpop.f32.mrf.mxu0
        %5276 = vmatprep.mubr.f32.mxu0 0.0
        %5277 = vmatmul.mubr.f32.gmra.mxu0 %v5089
        %v5278 = vpop.f32.mrf.mxu0
        %v5279 = vadd.f32 0.0, %v5278
        %v5280 = vpop.f32.mrf.mxu0
        %5281 = vmatprep.mubr.f32.mxu0 0.0
        %5282 = vmatmul.mubr.f32.gmra.mxu0 %v5092
        %v5283 = vpop.f32.mrf.mxu0
        %v5284 = vadd.f32 0.0, %v5283
        %v5285 = vpop.f32.mrf.mxu0
        %5286 = vmatprep.mubr.f32.mxu0 0.0
        %5287 = vmatmul.mubr.f32.gmra.mxu0 %v5095
        %v5288 = vpop.f32.mrf.mxu0
        %v5289 = vadd.f32 0.0, %v5288
        %v5290 = vpop.f32.mrf.mxu0
        %5291 = vmatprep.mubr.f32.mxu0 0.0
        %5292 = vmatmul.mubr.f32.gmra.mxu0 %v5098
        %v5293 = vpop.f32.mrf.mxu0
        %v5294 = vadd.f32 0.0, %v5293
        %v5295 = vpop.f32.mrf.mxu0
        %5296 = vmatprep.mubr.f32.mxu0 0.0
        %5297 = vmatmul.mubr.f32.gmra.mxu0 %v5101
        %v5298 = vpop.f32.mrf.mxu0
        %v5299 = vadd.f32 0.0, %v5298
        %v5300 = vpop.f32.mrf.mxu0
        %5301 = vmatprep.mubr.f32.mxu0 0.0
        %5302 = vmatmul.mubr.f32.gmra.mxu0 %v5104
        %v5303 = vpop.f32.mrf.mxu0
        %v5304 = vadd.f32 0.0, %v5303
        %v5305 = vpop.f32.mrf.mxu0
        %5306 = vmatprep.mubr.f32.mxu0 0.0
        %5307 = vmatmul.mubr.f32.gmra.mxu0 %v5107
        %v5308 = vpop.f32.mrf.mxu0
        %v5309 = vadd.f32 0.0, %v5308
        %v5310 = vpop.f32.mrf.mxu0
        %5311 = vmatprep.mubr.f32.mxu0 0.0
        %5312 = vmatmul.mubr.f32.gmra.mxu0 %v5110
        %v5313 = vpop.f32.mrf.mxu0
        %v5314 = vadd.f32 0.0, %v5313
        %v5315 = vpop.f32.mrf.mxu0
        %5316 = vmatprep.mubr.f32.mxu0 0.0
        %5317 = vmatmul.mubr.f32.gmra.mxu0 %v5113
        %v5318 = vpop.f32.mrf.mxu0
        %v5319 = vadd.f32 0.0, %v5318
        %v5320 = vpop.f32.mrf.mxu0
        %5321 = vmatprep.mubr.f32.mxu0 0.0
        %5322 = vmatmul.mubr.f32.gmra.mxu0 %v5116
        %v5323 = vpop.f32.mrf.mxu0
        %v5324 = vadd.f32 0.0, %v5323
        %v5325 = vpop.f32.mrf.mxu0
        %5326 = vmatprep.mubr.f32.mxu0 0.0
        %5327 = vmatmul.mubr.f32.gmra.mxu0 %v5119
        %v5328 = vpop.f32.mrf.mxu0
        %v5329 = vadd.f32 0.0, %v5328
        %v5330 = vpop.f32.mrf.mxu0
        %5331 = vmatprep.mubr.f32.mxu0 0.0
        %5332 = vmatmul.mubr.f32.gmra.mxu0 %v5122
        %v5333 = vpop.f32.mrf.mxu0
        %v5334 = vadd.f32 0.0, %v5333
        %v5335 = vpop.f32.mrf.mxu0
        %5336 = vmatprep.mubr.f32.mxu0 0.0
        %5337 = vmatmul.mubr.f32.gmra.mxu0 %v5125
        %v5338 = vpop.f32.mrf.mxu0
        %v5339 = vadd.f32 0.0, %v5338
        %v5340 = vpop.f32.mrf.mxu0
        %5341 = vmatprep.mubr.f32.mxu0 0.0
        %5342 = vmatmul.mubr.f32.gmra.mxu0 %v5128
        %v5343 = vpop.f32.mrf.mxu0
        %v5344 = vadd.f32 0.0, %v5343
        %v5345 = vpop.f32.mrf.mxu0
        %5346 = vmatprep.mubr.f32.mxu0 0.0
        %5347 = vmatmul.mubr.f32.gmra.mxu0 %v5131
        %v5348 = vpop.f32.mrf.mxu0
        %v5349 = vadd.f32 0.0, %v5348
        %v5350 = vpop.f32.mrf.mxu0
        %5351 = vmatprep.mubr.f32.mxu0 0.0
        %5352 = vmatmul.mubr.f32.gmra.mxu0 %v5134
        %v5353 = vpop.f32.mrf.mxu0
        %v5354 = vadd.f32 0.0, %v5353
        %v5355 = vpop.f32.mrf.mxu0
        %5356 = vmatprep.mubr.f32.mxu0 0.0
        %5357 = vmatmul.mubr.f32.gmra.mxu0 %v5137
        %v5358 = vpop.f32.mrf.mxu0
        %v5359 = vadd.f32 0.0, %v5358
        %v5360 = vpop.f32.mrf.mxu0
        %5361 = vmatprep.mubr.f32.mxu0 0.0
        %5362 = vmatmul.mubr.f32.gmra.mxu0 %v5140
        %v5363 = vpop.f32.mrf.mxu0
        %v5364 = vadd.f32 0.0, %v5363
        %v5365 = vpop.f32.mrf.mxu0
        %5366 = vdwg.mxu0
        %v5367 = vadd.f32 %v4977, %v5209
        %v5368 = vadd.f32 %v4978, %v5214
        %v5369 = vadd.f32 %v4979, %v5219
        %v5370 = vadd.f32 %v4980, %v5224
        %v5371 = vadd.f32 %v4981, %v5229
        %v5372 = vadd.f32 %v4982, %v5234
        %v5373 = vadd.f32 %v4983, %v5239
        %v5374 = vadd.f32 %v4984, %v5244
        %v5375 = vadd.f32 %v4985, %v5249
        %v5376 = vadd.f32 %v4986, %v5254
        %v5377 = vadd.f32 %v4987, %v5259
        %v5378 = vadd.f32 %v4988, %v5264
        %v5379 = vadd.f32 %v4989, %v5269
        %v5380 = vadd.f32 %v4990, %v5274
        %v5381 = vadd.f32 %v4991, %v5279
        %v5382 = vadd.f32 %v4992, %v5284
        %v5383 = vadd.f32 %v4993, %v5289
        %v5384 = vadd.f32 %v4994, %v5294
        %v5385 = vadd.f32 %v4995, %v5299
        %v5386 = vadd.f32 %v4996, %v5304
        %v5387 = vadd.f32 %v4997, %v5309
        %v5388 = vadd.f32 %v4998, %v5314
        %v5389 = vadd.f32 %v4999, %v5319
        %v5390 = vadd.f32 %v5000, %v5324
        %v5391 = vadd.f32 %v5001, %v5329
        %v5392 = vadd.f32 %v5002, %v5334
        %v5393 = vadd.f32 %v5003, %v5339
        %v5394 = vadd.f32 %v5004, %v5344
        %v5395 = vadd.f32 %v5005, %v5349
        %v5396 = vadd.f32 %v5006, %v5354
        %v5397 = vadd.f32 %v5007, %v5359
        %v5398 = vadd.f32 %v5008, %v5364
        %v5399 = vld [vmem:[%s3871 + $0x1] sm:$0xff]
        %v5400 = vld [vmem:[%s3871 + $0x9] sm:$0xff]
        %v5401 = vld [vmem:[%s3871 + $0x19] sm:$0xff]
        %v5402 = vld [vmem:[%s3871 + $0x21] sm:$0xff]
        %v5403 = vld [vmem:[%s3871 + $0x31] sm:$0xff]
        %v5404 = vld [vmem:[%s3871 + $0x39] sm:$0xff]
        %v5405 = vld [vmem:[%s3871 + $0x49] sm:$0xff]
        %v5406 = vld [vmem:[%s3871 + $0x51] sm:$0xff]
        %v5407 = vld [vmem:[%s3871 + $0x61] sm:$0xff]
        %v5408 = vld [vmem:[%s3871 + $0x69] sm:$0xff]
        %v5409 = vld [vmem:[%s3871 + $0x79] sm:$0xff]
        %v5410 = vld [vmem:[%s3871 + $0x81] sm:$0xff]
        %v5411 = vld [vmem:[%s3871 + $0x91] sm:$0xff]
        %v5412 = vld [vmem:[%s3871 + $0x99] sm:$0xff]
        %v5413 = vld [vmem:[%s3871 + $0xa9] sm:$0xff]
        %v5414 = vld [vmem:[%s3871 + $0xb1] sm:$0xff]
        %v5415 = vld [vmem:[%s3871 + $0xc1] sm:$0xff]
        %v5416 = vld [vmem:[%s3871 + $0xc9] sm:$0xff]
        %v5417 = vld [vmem:[%s3871 + $0xd9] sm:$0xff]
        %v5418 = vld [vmem:[%s3871 + $0xe1] sm:$0xff]
        %v5419 = vld [vmem:[%s3871 + $0xf1] sm:$0xff]
        %v5420 = vld [vmem:[%s3871 + $0xf9] sm:$0xff]
        %v5421 = vld [vmem:[%s3871 + $0x109] sm:$0xff]
        %v5422 = vld [vmem:[%s3871 + $0x111] sm:$0xff]
        %v5423 = vld [vmem:[%s3871 + $0x121] sm:$0xff]
        %v5424 = vld [vmem:[%s3871 + $0x129] sm:$0xff]
        %v5425 = vld [vmem:[%s3871 + $0x139] sm:$0xff]
        %v5426 = vld [vmem:[%s3871 + $0x141] sm:$0xff]
        %v5427 = vld [vmem:[%s3871 + $0x151] sm:$0xff]
        %v5428 = vld [vmem:[%s3871 + $0x159] sm:$0xff]
        %v5429 = vld [vmem:[%s3871 + $0x169] sm:$0xff]
        %v5430 = vld [vmem:[%s3871 + $0x171] sm:$0xff]
        %s5431 = scalar_lea.vmem %s2, 128
        %v5432 = vld [vmem:[%s5431] sm:$0xff]
        %v5433 = vld [vmem:[%s5431 + $0x8] sm:$0xff]
        %v5434 = vld [vmem:[%s5431 + $0x10] sm:$0xff]
        %v5435 = vld [vmem:[%s5431 + $0x18] sm:$0xff]
        %v5437 = vsel %vm3815, %v5399, 0
        %v5440 = vsel %vm3815, %v5400, 0
        %v5443 = vsel %vm3815, %v5401, 0
        %v5446 = vsel %vm3815, %v5402, 0
        %v5449 = vsel %vm3815, %v5403, 0
        %v5452 = vsel %vm3815, %v5404, 0
        %v5455 = vsel %vm3815, %v5405, 0
        %v5458 = vsel %vm3815, %v5406, 0
        %v5461 = vsel %vm3815, %v5407, 0
        %v5464 = vsel %vm3815, %v5408, 0
        %v5467 = vsel %vm3815, %v5409, 0
        %v5470 = vsel %vm3815, %v5410, 0
        %v5473 = vsel %vm3815, %v5411, 0
        %v5476 = vsel %vm3815, %v5412, 0
        %v5479 = vsel %vm3815, %v5413, 0
        %v5482 = vsel %vm3815, %v5414, 0
        %v5485 = vsel %vm3815, %v5415, 0
        %v5488 = vsel %vm3815, %v5416, 0
        %v5491 = vsel %vm3815, %v5417, 0
        %v5494 = vsel %vm3815, %v5418, 0
        %v5497 = vsel %vm3815, %v5419, 0
        %v5500 = vsel %vm3815, %v5420, 0
        %v5503 = vsel %vm3815, %v5421, 0
        %v5506 = vsel %vm3815, %v5422, 0
        %v5509 = vsel %vm3815, %v5423, 0
        %v5512 = vsel %vm3815, %v5424, 0
        %v5515 = vsel %vm3815, %v5425, 0
        %v5518 = vsel %vm3815, %v5426, 0
        %v5521 = vsel %vm3815, %v5427, 0
        %v5524 = vsel %vm3815, %v5428, 0
        %v5527 = vsel %vm3815, %v5429, 0
        %v5530 = vsel %vm3815, %v5430, 0
        %5532 = vmatprep.subr.mxu0 0.0
        %5533 = vmatpush1.msra.mxu0 0.0
        %5534 = vmatprep.subr.mxu0 0.0
        %5535 = vmatpush1.msra.mxu0 0.0
        %5536 = vmatprep.subr.mxu0 0.0
        %5537 = vmatpush1.msra.mxu0 0.0
        %5538 = vmatprep.subr.mxu0 0.0
        %5539 = vmatpush1.msra.mxu0 0.0
        %5540 = vmatprep.subr.mxu0 0.0
        %5541 = vmatpush1.msra.mxu0 0.0
        %5542 = vmatprep.subr.mxu0 0.0
        %5543 = vmatpush1.msra.mxu0 0.0
        %5544 = vmatprep.subr.mxu0 0.0
        %5545 = vmatpush1.msra.mxu0 0.0
        %5546 = vmatprep.subr.mxu0 0.0
        %5547 = vmatpush1.msra.mxu0 0.0
        %5548 = vmatprep.subr.mxu0 0.0
        %5549 = vmatpush1.msra.mxu0 0.0
        %5550 = vmatprep.subr.mxu0 0.0
        %5551 = vmatpush1.msra.mxu0 0.0
        %5552 = vmatprep.subr.mxu0 0.0
        %5553 = vmatpush1.msra.mxu0 0.0
        %5554 = vmatprep.subr.mxu0 0.0
        %5555 = vmatpush1.msra.mxu0 0.0
        %5556 = vmatprep.subr.mxu0 0.0
        %5557 = vmatpush1.msra.mxu0 %v5435
        %5558 = vmatprep.subr.mxu0 0.0
        %5559 = vmatpush1.msra.mxu0 %v5434
        %5560 = vmatprep.subr.mxu0 0.0
        %5561 = vmatpush1.msra.mxu0 %v5433
        %5562 = vmatprep.subr.mxu0 0.0
        %5563 = vmatpush1.msra.mxu0 %v5432
        %5564 = vmatprep.subr.mxu0 0.0
        %5565 = vmatpush2.msra.mxu0 0.0
        %5566 = vmatprep.subr.mxu0 0.0
        %5567 = vmatpush2.msra.mxu0 0.0
        %5568 = vmatprep.subr.mxu0 0.0
        %5569 = vmatpush2.msra.mxu0 0.0
        %5570 = vmatprep.subr.mxu0 0.0
        %5571 = vmatpush2.msra.mxu0 0.0
        %5572 = vmatprep.subr.mxu0 0.0
        %5573 = vmatpush2.msra.mxu0 0.0
        %5574 = vmatprep.subr.mxu0 0.0
        %5575 = vmatpush2.msra.mxu0 0.0
        %5576 = vmatprep.subr.mxu0 0.0
        %5577 = vmatpush2.msra.mxu0 0.0
        %5578 = vmatprep.subr.mxu0 0.0
        %5579 = vmatpush2.msra.mxu0 0.0
        %5580 = vmatprep.subr.mxu0 0.0
        %5581 = vmatpush2.msra.mxu0 0.0
        %5582 = vmatprep.subr.mxu0 0.0
        %5583 = vmatpush2.msra.mxu0 0.0
        %5584 = vmatprep.subr.mxu0 0.0
        %5585 = vmatpush2.msra.mxu0 0.0
        %5586 = vmatprep.subr.mxu0 0.0
        %5587 = vmatpush2.msra.mxu0 0.0
        %5588 = vmatprep.subr.mxu0 0.0
        %5589 = vmatpush2.msra.mxu0 0.0
        %5590 = vmatprep.subr.mxu0 0.0
        %5591 = vmatpush2.msra.mxu0 0.0
        %5592 = vmatprep.subr.mxu0 0.0
        %5593 = vmatpush2.msra.mxu0 0.0
        %5594 = vmatprep.subr.mxu0 0.0
        %5595 = vmatpush2.msra.mxu0 0.0
        %5596 = vmatprep.mubr.f32.mxu0 0.0
        %5597 = vmatmul.mubr.f32.gmra.mxu0 %v5437
        %v5598 = vpop.f32.mrf.mxu0
        %v5599 = vadd.f32 0.0, %v5598
        %v5600 = vpop.f32.mrf.mxu0
        %5601 = vmatprep.mubr.f32.mxu0 0.0
        %5602 = vmatmul.mubr.f32.gmra.mxu0 %v5440
        %v5603 = vpop.f32.mrf.mxu0
        %v5604 = vadd.f32 0.0, %v5603
        %v5605 = vpop.f32.mrf.mxu0
        %5606 = vmatprep.mubr.f32.mxu0 0.0
        %5607 = vmatmul.mubr.f32.gmra.mxu0 %v5443
        %v5608 = vpop.f32.mrf.mxu0
        %v5609 = vadd.f32 0.0, %v5608
        %v5610 = vpop.f32.mrf.mxu0
        %5611 = vmatprep.mubr.f32.mxu0 0.0
        %5612 = vmatmul.mubr.f32.gmra.mxu0 %v5446
        %v5613 = vpop.f32.mrf.mxu0
        %v5614 = vadd.f32 0.0, %v5613
        %v5615 = vpop.f32.mrf.mxu0
        %5616 = vmatprep.mubr.f32.mxu0 0.0
        %5617 = vmatmul.mubr.f32.gmra.mxu0 %v5449
        %v5618 = vpop.f32.mrf.mxu0
        %v5619 = vadd.f32 0.0, %v5618
        %v5620 = vpop.f32.mrf.mxu0
        %5621 = vmatprep.mubr.f32.mxu0 0.0
        %5622 = vmatmul.mubr.f32.gmra.mxu0 %v5452
        %v5623 = vpop.f32.mrf.mxu0
        %v5624 = vadd.f32 0.0, %v5623
        %v5625 = vpop.f32.mrf.mxu0
        %5626 = vmatprep.mubr.f32.mxu0 0.0
        %5627 = vmatmul.mubr.f32.gmra.mxu0 %v5455
        %v5628 = vpop.f32.mrf.mxu0
        %v5629 = vadd.f32 0.0, %v5628
        %v5630 = vpop.f32.mrf.mxu0
        %5631 = vmatprep.mubr.f32.mxu0 0.0
        %5632 = vmatmul.mubr.f32.gmra.mxu0 %v5458
        %v5633 = vpop.f32.mrf.mxu0
        %v5634 = vadd.f32 0.0, %v5633
        %v5635 = vpop.f32.mrf.mxu0
        %5636 = vmatprep.mubr.f32.mxu0 0.0
        %5637 = vmatmul.mubr.f32.gmra.mxu0 %v5461
        %v5638 = vpop.f32.mrf.mxu0
        %v5639 = vadd.f32 0.0, %v5638
        %v5640 = vpop.f32.mrf.mxu0
        %5641 = vmatprep.mubr.f32.mxu0 0.0
        %5642 = vmatmul.mubr.f32.gmra.mxu0 %v5464
        %v5643 = vpop.f32.mrf.mxu0
        %v5644 = vadd.f32 0.0, %v5643
        %v5645 = vpop.f32.mrf.mxu0
        %5646 = vmatprep.mubr.f32.mxu0 0.0
        %5647 = vmatmul.mubr.f32.gmra.mxu0 %v5467
        %v5648 = vpop.f32.mrf.mxu0
        %v5649 = vadd.f32 0.0, %v5648
        %v5650 = vpop.f32.mrf.mxu0
        %5651 = vmatprep.mubr.f32.mxu0 0.0
        %5652 = vmatmul.mubr.f32.gmra.mxu0 %v5470
        %v5653 = vpop.f32.mrf.mxu0
        %v5654 = vadd.f32 0.0, %v5653
        %v5655 = vpop.f32.mrf.mxu0
        %5656 = vmatprep.mubr.f32.mxu0 0.0
        %5657 = vmatmul.mubr.f32.gmra.mxu0 %v5473
        %v5658 = vpop.f32.mrf.mxu0
        %v5659 = vadd.f32 0.0, %v5658
        %v5660 = vpop.f32.mrf.mxu0
        %5661 = vmatprep.mubr.f32.mxu0 0.0
        %5662 = vmatmul.mubr.f32.gmra.mxu0 %v5476
        %v5663 = vpop.f32.mrf.mxu0
        %v5664 = vadd.f32 0.0, %v5663
        %v5665 = vpop.f32.mrf.mxu0
        %5666 = vmatprep.mubr.f32.mxu0 0.0
        %5667 = vmatmul.mubr.f32.gmra.mxu0 %v5479
        %v5668 = vpop.f32.mrf.mxu0
        %v5669 = vadd.f32 0.0, %v5668
        %v5670 = vpop.f32.mrf.mxu0
        %5671 = vmatprep.mubr.f32.mxu0 0.0
        %5672 = vmatmul.mubr.f32.gmra.mxu0 %v5482
        %v5673 = vpop.f32.mrf.mxu0
        %v5674 = vadd.f32 0.0, %v5673
        %v5675 = vpop.f32.mrf.mxu0
        %5676 = vmatprep.mubr.f32.mxu0 0.0
        %5677 = vmatmul.mubr.f32.gmra.mxu0 %v5485
        %v5678 = vpop.f32.mrf.mxu0
        %v5679 = vadd.f32 0.0, %v5678
        %v5680 = vpop.f32.mrf.mxu0
        %5681 = vmatprep.mubr.f32.mxu0 0.0
        %5682 = vmatmul.mubr.f32.gmra.mxu0 %v5488
        %v5683 = vpop.f32.mrf.mxu0
        %v5684 = vadd.f32 0.0, %v5683
        %v5685 = vpop.f32.mrf.mxu0
        %5686 = vmatprep.mubr.f32.mxu0 0.0
        %5687 = vmatmul.mubr.f32.gmra.mxu0 %v5491
        %v5688 = vpop.f32.mrf.mxu0
        %v5689 = vadd.f32 0.0, %v5688
        %v5690 = vpop.f32.mrf.mxu0
        %5691 = vmatprep.mubr.f32.mxu0 0.0
        %5692 = vmatmul.mubr.f32.gmra.mxu0 %v5494
        %v5693 = vpop.f32.mrf.mxu0
        %v5694 = vadd.f32 0.0, %v5693
        %v5695 = vpop.f32.mrf.mxu0
        %5696 = vmatprep.mubr.f32.mxu0 0.0
        %5697 = vmatmul.mubr.f32.gmra.mxu0 %v5497
        %v5698 = vpop.f32.mrf.mxu0
        %v5699 = vadd.f32 0.0, %v5698
        %v5700 = vpop.f32.mrf.mxu0
        %5701 = vmatprep.mubr.f32.mxu0 0.0
        %5702 = vmatmul.mubr.f32.gmra.mxu0 %v5500
        %v5703 = vpop.f32.mrf.mxu0
        %v5704 = vadd.f32 0.0, %v5703
        %v5705 = vpop.f32.mrf.mxu0
        %5706 = vmatprep.mubr.f32.mxu0 0.0
        %5707 = vmatmul.mubr.f32.gmra.mxu0 %v5503
        %v5708 = vpop.f32.mrf.mxu0
        %v5709 = vadd.f32 0.0, %v5708
        %v5710 = vpop.f32.mrf.mxu0
        %5711 = vmatprep.mubr.f32.mxu0 0.0
        %5712 = vmatmul.mubr.f32.gmra.mxu0 %v5506
        %v5713 = vpop.f32.mrf.mxu0
        %v5714 = vadd.f32 0.0, %v5713
        %v5715 = vpop.f32.mrf.mxu0
        %5716 = vmatprep.mubr.f32.mxu0 0.0
        %5717 = vmatmul.mubr.f32.gmra.mxu0 %v5509
        %v5718 = vpop.f32.mrf.mxu0
        %v5719 = vadd.f32 0.0, %v5718
        %v5720 = vpop.f32.mrf.mxu0
        %5721 = vmatprep.mubr.f32.mxu0 0.0
        %5722 = vmatmul.mubr.f32.gmra.mxu0 %v5512
        %v5723 = vpop.f32.mrf.mxu0
        %v5724 = vadd.f32 0.0, %v5723
        %v5725 = vpop.f32.mrf.mxu0
        %5726 = vmatprep.mubr.f32.mxu0 0.0
        %5727 = vmatmul.mubr.f32.gmra.mxu0 %v5515
        %v5728 = vpop.f32.mrf.mxu0
        %v5729 = vadd.f32 0.0, %v5728
        %v5730 = vpop.f32.mrf.mxu0
        %5731 = vmatprep.mubr.f32.mxu0 0.0
        %5732 = vmatmul.mubr.f32.gmra.mxu0 %v5518
        %v5733 = vpop.f32.mrf.mxu0
        %v5734 = vadd.f32 0.0, %v5733
        %v5735 = vpop.f32.mrf.mxu0
        %5736 = vmatprep.mubr.f32.mxu0 0.0
        %5737 = vmatmul.mubr.f32.gmra.mxu0 %v5521
        %v5738 = vpop.f32.mrf.mxu0
        %v5739 = vadd.f32 0.0, %v5738
        %v5740 = vpop.f32.mrf.mxu0
        %5741 = vmatprep.mubr.f32.mxu0 0.0
        %5742 = vmatmul.mubr.f32.gmra.mxu0 %v5524
        %v5743 = vpop.f32.mrf.mxu0
        %v5744 = vadd.f32 0.0, %v5743
        %v5745 = vpop.f32.mrf.mxu0
        %5746 = vmatprep.mubr.f32.mxu0 0.0
        %5747 = vmatmul.mubr.f32.gmra.mxu0 %v5527
        %v5748 = vpop.f32.mrf.mxu0
        %v5749 = vadd.f32 0.0, %v5748
        %v5750 = vpop.f32.mrf.mxu0
        %5751 = vmatprep.mubr.f32.mxu0 0.0
        %5752 = vmatmul.mubr.f32.gmra.mxu0 %v5530
        %v5753 = vpop.f32.mrf.mxu0
        %v5754 = vadd.f32 0.0, %v5753
        %v5755 = vpop.f32.mrf.mxu0
        %5756 = vdwg.mxu0
        %v5757 = vadd.f32 %v5367, %v5599
        %v5758 = vadd.f32 %v5368, %v5604
        %v5759 = vadd.f32 %v5369, %v5609
        %v5760 = vadd.f32 %v5370, %v5614
        %v5761 = vadd.f32 %v5371, %v5619
        %v5762 = vadd.f32 %v5372, %v5624
        %v5763 = vadd.f32 %v5373, %v5629
        %v5764 = vadd.f32 %v5374, %v5634
        %v5765 = vadd.f32 %v5375, %v5639
        %v5766 = vadd.f32 %v5376, %v5644
        %v5767 = vadd.f32 %v5377, %v5649
        %v5768 = vadd.f32 %v5378, %v5654
        %v5769 = vadd.f32 %v5379, %v5659
        %v5770 = vadd.f32 %v5380, %v5664
        %v5771 = vadd.f32 %v5381, %v5669
        %v5772 = vadd.f32 %v5382, %v5674
        %v5773 = vadd.f32 %v5383, %v5679
        %v5774 = vadd.f32 %v5384, %v5684
        %v5775 = vadd.f32 %v5385, %v5689
        %v5776 = vadd.f32 %v5386, %v5694
        %v5777 = vadd.f32 %v5387, %v5699
        %v5778 = vadd.f32 %v5388, %v5704
        %v5779 = vadd.f32 %v5389, %v5709
        %v5780 = vadd.f32 %v5390, %v5714
        %v5781 = vadd.f32 %v5391, %v5719
        %v5782 = vadd.f32 %v5392, %v5724
        %v5783 = vadd.f32 %v5393, %v5729
        %v5784 = vadd.f32 %v5394, %v5734
        %v5785 = vadd.f32 %v5395, %v5739
        %v5786 = vadd.f32 %v5396, %v5744
        %v5787 = vadd.f32 %v5397, %v5749
        %v5788 = vadd.f32 %v5398, %v5754
        %v5789 = vld [vmem:[%s3871 + $0x2] sm:$0xff]
        %v5790 = vld [vmem:[%s3871 + $0xa] sm:$0xff]
        %v5791 = vld [vmem:[%s3871 + $0x1a] sm:$0xff]
        %v5792 = vld [vmem:[%s3871 + $0x22] sm:$0xff]
        %v5793 = vld [vmem:[%s3871 + $0x32] sm:$0xff]
        %v5794 = vld [vmem:[%s3871 + $0x3a] sm:$0xff]
        %v5795 = vld [vmem:[%s3871 + $0x4a] sm:$0xff]
        %v5796 = vld [vmem:[%s3871 + $0x52] sm:$0xff]
        %v5797 = vld [vmem:[%s3871 + $0x62] sm:$0xff]
        %v5798 = vld [vmem:[%s3871 + $0x6a] sm:$0xff]
        %v5799 = vld [vmem:[%s3871 + $0x7a] sm:$0xff]
        %v5800 = vld [vmem:[%s3871 + $0x82] sm:$0xff]
        %v5801 = vld [vmem:[%s3871 + $0x92] sm:$0xff]
        %v5802 = vld [vmem:[%s3871 + $0x9a] sm:$0xff]
        %v5803 = vld [vmem:[%s3871 + $0xaa] sm:$0xff]
        %v5804 = vld [vmem:[%s3871 + $0xb2] sm:$0xff]
        %v5805 = vld [vmem:[%s3871 + $0xc2] sm:$0xff]
        %v5806 = vld [vmem:[%s3871 + $0xca] sm:$0xff]
        %v5807 = vld [vmem:[%s3871 + $0xda] sm:$0xff]
        %v5808 = vld [vmem:[%s3871 + $0xe2] sm:$0xff]
        %v5809 = vld [vmem:[%s3871 + $0xf2] sm:$0xff]
        %v5810 = vld [vmem:[%s3871 + $0xfa] sm:$0xff]
        %v5811 = vld [vmem:[%s3871 + $0x10a] sm:$0xff]
        %v5812 = vld [vmem:[%s3871 + $0x112] sm:$0xff]
        %v5813 = vld [vmem:[%s3871 + $0x122] sm:$0xff]
        %v5814 = vld [vmem:[%s3871 + $0x12a] sm:$0xff]
        %v5815 = vld [vmem:[%s3871 + $0x13a] sm:$0xff]
        %v5816 = vld [vmem:[%s3871 + $0x142] sm:$0xff]
        %v5817 = vld [vmem:[%s3871 + $0x152] sm:$0xff]
        %v5818 = vld [vmem:[%s3871 + $0x15a] sm:$0xff]
        %v5819 = vld [vmem:[%s3871 + $0x16a] sm:$0xff]
        %v5820 = vld [vmem:[%s3871 + $0x172] sm:$0xff]
        %s5821 = scalar_lea.vmem %s2, 160
        %v5822 = vld [vmem:[%s5821] sm:$0xff]
        %v5823 = vld [vmem:[%s5821 + $0x8] sm:$0xff]
        %v5824 = vld [vmem:[%s5821 + $0x10] sm:$0xff]
        %v5825 = vld [vmem:[%s5821 + $0x18] sm:$0xff]
        %v5827 = vsel %vm3815, %v5789, 0
        %v5830 = vsel %vm3815, %v5790, 0
        %v5833 = vsel %vm3815, %v5791, 0
        %v5836 = vsel %vm3815, %v5792, 0
        %v5839 = vsel %vm3815, %v5793, 0
        %v5842 = vsel %vm3815, %v5794, 0
        %v5845 = vsel %vm3815, %v5795, 0
        %v5848 = vsel %vm3815, %v5796, 0
        %v5851 = vsel %vm3815, %v5797, 0
        %v5854 = vsel %vm3815, %v5798, 0
        %v5857 = vsel %vm3815, %v5799, 0
        %v5860 = vsel %vm3815, %v5800, 0
        %v5863 = vsel %vm3815, %v5801, 0
        %v5866 = vsel %vm3815, %v5802, 0
        %v5869 = vsel %vm3815, %v5803, 0
        %v5872 = vsel %vm3815, %v5804, 0
        %v5875 = vsel %vm3815, %v5805, 0
        %v5878 = vsel %vm3815, %v5806, 0
        %v5881 = vsel %vm3815, %v5807, 0
        %v5884 = vsel %vm3815, %v5808, 0
        %v5887 = vsel %vm3815, %v5809, 0
        %v5890 = vsel %vm3815, %v5810, 0
        %v5893 = vsel %vm3815, %v5811, 0
        %v5896 = vsel %vm3815, %v5812, 0
        %v5899 = vsel %vm3815, %v5813, 0
        %v5902 = vsel %vm3815, %v5814, 0
        %v5905 = vsel %vm3815, %v5815, 0
        %v5908 = vsel %vm3815, %v5816, 0
        %v5911 = vsel %vm3815, %v5817, 0
        %v5914 = vsel %vm3815, %v5818, 0
        %v5917 = vsel %vm3815, %v5819, 0
        %v5920 = vsel %vm3815, %v5820, 0
        %5922 = vmatprep.subr.mxu0 0.0
        %5923 = vmatpush1.msra.mxu0 0.0
        %5924 = vmatprep.subr.mxu0 0.0
        %5925 = vmatpush1.msra.mxu0 0.0
        %5926 = vmatprep.subr.mxu0 0.0
        %5927 = vmatpush1.msra.mxu0 0.0
        %5928 = vmatprep.subr.mxu0 0.0
        %5929 = vmatpush1.msra.mxu0 0.0
        %5930 = vmatprep.subr.mxu0 0.0
        %5931 = vmatpush1.msra.mxu0 0.0
        %5932 = vmatprep.subr.mxu0 0.0
        %5933 = vmatpush1.msra.mxu0 0.0
        %5934 = vmatprep.subr.mxu0 0.0
        %5935 = vmatpush1.msra.mxu0 0.0
        %5936 = vmatprep.subr.mxu0 0.0
        %5937 = vmatpush1.msra.mxu0 0.0
        %5938 = vmatprep.subr.mxu0 0.0
        %5939 = vmatpush1.msra.mxu0 0.0
        %5940 = vmatprep.subr.mxu0 0.0
        %5941 = vmatpush1.msra.mxu0 0.0
        %5942 = vmatprep.subr.mxu0 0.0
        %5943 = vmatpush1.msra.mxu0 0.0
        %5944 = vmatprep.subr.mxu0 0.0
        %5945 = vmatpush1.msra.mxu0 0.0
        %5946 = vmatprep.subr.mxu0 0.0
        %5947 = vmatpush1.msra.mxu0 %v5825
        %5948 = vmatprep.subr.mxu0 0.0
        %5949 = vmatpush1.msra.mxu0 %v5824
        %5950 = vmatprep.subr.mxu0 0.0
        %5951 = vmatpush1.msra.mxu0 %v5823
        %5952 = vmatprep.subr.mxu0 0.0
        %5953 = vmatpush1.msra.mxu0 %v5822
        %5954 = vmatprep.subr.mxu0 0.0
        %5955 = vmatpush2.msra.mxu0 0.0
        %5956 = vmatprep.subr.mxu0 0.0
        %5957 = vmatpush2.msra.mxu0 0.0
        %5958 = vmatprep.subr.mxu0 0.0
        %5959 = vmatpush2.msra.mxu0 0.0
        %5960 = vmatprep.subr.mxu0 0.0
        %5961 = vmatpush2.msra.mxu0 0.0
        %5962 = vmatprep.subr.mxu0 0.0
        %5963 = vmatpush2.msra.mxu0 0.0
        %5964 = vmatprep.subr.mxu0 0.0
        %5965 = vmatpush2.msra.mxu0 0.0
        %5966 = vmatprep.subr.mxu0 0.0
        %5967 = vmatpush2.msra.mxu0 0.0
        %5968 = vmatprep.subr.mxu0 0.0
        %5969 = vmatpush2.msra.mxu0 0.0
        %5970 = vmatprep.subr.mxu0 0.0
        %5971 = vmatpush2.msra.mxu0 0.0
        %5972 = vmatprep.subr.mxu0 0.0
        %5973 = vmatpush2.msra.mxu0 0.0
        %5974 = vmatprep.subr.mxu0 0.0
        %5975 = vmatpush2.msra.mxu0 0.0
        %5976 = vmatprep.subr.mxu0 0.0
        %5977 = vmatpush2.msra.mxu0 0.0
        %5978 = vmatprep.subr.mxu0 0.0
        %5979 = vmatpush2.msra.mxu0 0.0
        %5980 = vmatprep.subr.mxu0 0.0
        %5981 = vmatpush2.msra.mxu0 0.0
        %5982 = vmatprep.subr.mxu0 0.0
        %5983 = vmatpush2.msra.mxu0 0.0
        %5984 = vmatprep.subr.mxu0 0.0
        %5985 = vmatpush2.msra.mxu0 0.0
        %5986 = vmatprep.mubr.f32.mxu0 0.0
        %5987 = vmatmul.mubr.f32.gmra.mxu0 %v5827
        %v5988 = vpop.f32.mrf.mxu0
        %v5989 = vadd.f32 0.0, %v5988
        %v5990 = vpop.f32.mrf.mxu0
        %5991 = vmatprep.mubr.f32.mxu0 0.0
        %5992 = vmatmul.mubr.f32.gmra.mxu0 %v5830
        %v5993 = vpop.f32.mrf.mxu0
        %v5994 = vadd.f32 0.0, %v5993
        %v5995 = vpop.f32.mrf.mxu0
        %5996 = vmatprep.mubr.f32.mxu0 0.0
        %5997 = vmatmul.mubr.f32.gmra.mxu0 %v5833
        %v5998 = vpop.f32.mrf.mxu0
        %v5999 = vadd.f32 0.0, %v5998
        %v6000 = vpop.f32.mrf.mxu0
        %6001 = vmatprep.mubr.f32.mxu0 0.0
        %6002 = vmatmul.mubr.f32.gmra.mxu0 %v5836
        %v6003 = vpop.f32.mrf.mxu0
        %v6004 = vadd.f32 0.0, %v6003
        %v6005 = vpop.f32.mrf.mxu0
        %6006 = vmatprep.mubr.f32.mxu0 0.0
        %6007 = vmatmul.mubr.f32.gmra.mxu0 %v5839
        %v6008 = vpop.f32.mrf.mxu0
        %v6009 = vadd.f32 0.0, %v6008
        %v6010 = vpop.f32.mrf.mxu0
        %6011 = vmatprep.mubr.f32.mxu0 0.0
        %6012 = vmatmul.mubr.f32.gmra.mxu0 %v5842
        %v6013 = vpop.f32.mrf.mxu0
        %v6014 = vadd.f32 0.0, %v6013
        %v6015 = vpop.f32.mrf.mxu0
        %6016 = vmatprep.mubr.f32.mxu0 0.0
        %6017 = vmatmul.mubr.f32.gmra.mxu0 %v5845
        %v6018 = vpop.f32.mrf.mxu0
        %v6019 = vadd.f32 0.0, %v6018
        %v6020 = vpop.f32.mrf.mxu0
        %6021 = vmatprep.mubr.f32.mxu0 0.0
        %6022 = vmatmul.mubr.f32.gmra.mxu0 %v5848
        %v6023 = vpop.f32.mrf.mxu0
        %v6024 = vadd.f32 0.0, %v6023
        %v6025 = vpop.f32.mrf.mxu0
        %6026 = vmatprep.mubr.f32.mxu0 0.0
        %6027 = vmatmul.mubr.f32.gmra.mxu0 %v5851
        %v6028 = vpop.f32.mrf.mxu0
        %v6029 = vadd.f32 0.0, %v6028
        %v6030 = vpop.f32.mrf.mxu0
        %6031 = vmatprep.mubr.f32.mxu0 0.0
        %6032 = vmatmul.mubr.f32.gmra.mxu0 %v5854
        %v6033 = vpop.f32.mrf.mxu0
        %v6034 = vadd.f32 0.0, %v6033
        %v6035 = vpop.f32.mrf.mxu0
        %6036 = vmatprep.mubr.f32.mxu0 0.0
        %6037 = vmatmul.mubr.f32.gmra.mxu0 %v5857
        %v6038 = vpop.f32.mrf.mxu0
        %v6039 = vadd.f32 0.0, %v6038
        %v6040 = vpop.f32.mrf.mxu0
        %6041 = vmatprep.mubr.f32.mxu0 0.0
        %6042 = vmatmul.mubr.f32.gmra.mxu0 %v5860
        %v6043 = vpop.f32.mrf.mxu0
        %v6044 = vadd.f32 0.0, %v6043
        %v6045 = vpop.f32.mrf.mxu0
        %6046 = vmatprep.mubr.f32.mxu0 0.0
        %6047 = vmatmul.mubr.f32.gmra.mxu0 %v5863
        %v6048 = vpop.f32.mrf.mxu0
        %v6049 = vadd.f32 0.0, %v6048
        %v6050 = vpop.f32.mrf.mxu0
        %6051 = vmatprep.mubr.f32.mxu0 0.0
        %6052 = vmatmul.mubr.f32.gmra.mxu0 %v5866
        %v6053 = vpop.f32.mrf.mxu0
        %v6054 = vadd.f32 0.0, %v6053
        %v6055 = vpop.f32.mrf.mxu0
        %6056 = vmatprep.mubr.f32.mxu0 0.0
        %6057 = vmatmul.mubr.f32.gmra.mxu0 %v5869
        %v6058 = vpop.f32.mrf.mxu0
        %v6059 = vadd.f32 0.0, %v6058
        %v6060 = vpop.f32.mrf.mxu0
        %6061 = vmatprep.mubr.f32.mxu0 0.0
        %6062 = vmatmul.mubr.f32.gmra.mxu0 %v5872
        %v6063 = vpop.f32.mrf.mxu0
        %v6064 = vadd.f32 0.0, %v6063
        %v6065 = vpop.f32.mrf.mxu0
        %6066 = vmatprep.mubr.f32.mxu0 0.0
        %6067 = vmatmul.mubr.f32.gmra.mxu0 %v5875
        %v6068 = vpop.f32.mrf.mxu0
        %v6069 = vadd.f32 0.0, %v6068
        %v6070 = vpop.f32.mrf.mxu0
        %6071 = vmatprep.mubr.f32.mxu0 0.0
        %6072 = vmatmul.mubr.f32.gmra.mxu0 %v5878
        %v6073 = vpop.f32.mrf.mxu0
        %v6074 = vadd.f32 0.0, %v6073
        %v6075 = vpop.f32.mrf.mxu0
        %6076 = vmatprep.mubr.f32.mxu0 0.0
        %6077 = vmatmul.mubr.f32.gmra.mxu0 %v5881
        %v6078 = vpop.f32.mrf.mxu0
        %v6079 = vadd.f32 0.0, %v6078
        %v6080 = vpop.f32.mrf.mxu0
        %6081 = vmatprep.mubr.f32.mxu0 0.0
        %6082 = vmatmul.mubr.f32.gmra.mxu0 %v5884
        %v6083 = vpop.f32.mrf.mxu0
        %v6084 = vadd.f32 0.0, %v6083
        %v6085 = vpop.f32.mrf.mxu0
        %6086 = vmatprep.mubr.f32.mxu0 0.0
        %6087 = vmatmul.mubr.f32.gmra.mxu0 %v5887
        %v6088 = vpop.f32.mrf.mxu0
        %v6089 = vadd.f32 0.0, %v6088
        %v6090 = vpop.f32.mrf.mxu0
        %6091 = vmatprep.mubr.f32.mxu0 0.0
        %6092 = vmatmul.mubr.f32.gmra.mxu0 %v5890
        %v6093 = vpop.f32.mrf.mxu0
        %v6094 = vadd.f32 0.0, %v6093
        %v6095 = vpop.f32.mrf.mxu0
        %6096 = vmatprep.mubr.f32.mxu0 0.0
        %6097 = vmatmul.mubr.f32.gmra.mxu0 %v5893
        %v6098 = vpop.f32.mrf.mxu0
        %v6099 = vadd.f32 0.0, %v6098
        %v6100 = vpop.f32.mrf.mxu0
        %6101 = vmatprep.mubr.f32.mxu0 0.0
        %6102 = vmatmul.mubr.f32.gmra.mxu0 %v5896
        %v6103 = vpop.f32.mrf.mxu0
        %v6104 = vadd.f32 0.0, %v6103
        %v6105 = vpop.f32.mrf.mxu0
        %6106 = vmatprep.mubr.f32.mxu0 0.0
        %6107 = vmatmul.mubr.f32.gmra.mxu0 %v5899
        %v6108 = vpop.f32.mrf.mxu0
        %v6109 = vadd.f32 0.0, %v6108
        %v6110 = vpop.f32.mrf.mxu0
        %6111 = vmatprep.mubr.f32.mxu0 0.0
        %6112 = vmatmul.mubr.f32.gmra.mxu0 %v5902
        %v6113 = vpop.f32.mrf.mxu0
        %v6114 = vadd.f32 0.0, %v6113
        %v6115 = vpop.f32.mrf.mxu0
        %6116 = vmatprep.mubr.f32.mxu0 0.0
        %6117 = vmatmul.mubr.f32.gmra.mxu0 %v5905
        %v6118 = vpop.f32.mrf.mxu0
        %v6119 = vadd.f32 0.0, %v6118
        %v6120 = vpop.f32.mrf.mxu0
        %6121 = vmatprep.mubr.f32.mxu0 0.0
        %6122 = vmatmul.mubr.f32.gmra.mxu0 %v5908
        %v6123 = vpop.f32.mrf.mxu0
        %v6124 = vadd.f32 0.0, %v6123
        %v6125 = vpop.f32.mrf.mxu0
        %6126 = vmatprep.mubr.f32.mxu0 0.0
        %6127 = vmatmul.mubr.f32.gmra.mxu0 %v5911
        %v6128 = vpop.f32.mrf.mxu0
        %v6129 = vadd.f32 0.0, %v6128
        %v6130 = vpop.f32.mrf.mxu0
        %6131 = vmatprep.mubr.f32.mxu0 0.0
        %6132 = vmatmul.mubr.f32.gmra.mxu0 %v5914
        %v6133 = vpop.f32.mrf.mxu0
        %v6134 = vadd.f32 0.0, %v6133
        %v6135 = vpop.f32.mrf.mxu0
        %6136 = vmatprep.mubr.f32.mxu0 0.0
        %6137 = vmatmul.mubr.f32.gmra.mxu0 %v5917
        %v6138 = vpop.f32.mrf.mxu0
        %v6139 = vadd.f32 0.0, %v6138
        %v6140 = vpop.f32.mrf.mxu0
        %6141 = vmatprep.mubr.f32.mxu0 0.0
        %6142 = vmatmul.mubr.f32.gmra.mxu0 %v5920
        %v6143 = vpop.f32.mrf.mxu0
        %v6144 = vadd.f32 0.0, %v6143
        %v6145 = vpop.f32.mrf.mxu0
        %6146 = vdwg.mxu0
        %v6147 = vadd.f32 %v5757, %v5989
        %v6148 = vadd.f32 %v5758, %v5994
        %v6149 = vadd.f32 %v5759, %v5999
        %v6150 = vadd.f32 %v5760, %v6004
        %v6151 = vadd.f32 %v5761, %v6009
        %v6152 = vadd.f32 %v5762, %v6014
        %v6153 = vadd.f32 %v5763, %v6019
        %v6154 = vadd.f32 %v5764, %v6024
        %v6155 = vadd.f32 %v5765, %v6029
        %v6156 = vadd.f32 %v5766, %v6034
        %v6157 = vadd.f32 %v5767, %v6039
        %v6158 = vadd.f32 %v5768, %v6044
        %v6159 = vadd.f32 %v5769, %v6049
        %v6160 = vadd.f32 %v5770, %v6054
        %v6161 = vadd.f32 %v5771, %v6059
        %v6162 = vadd.f32 %v5772, %v6064
        %v6163 = vadd.f32 %v5773, %v6069
        %v6164 = vadd.f32 %v5774, %v6074
        %v6165 = vadd.f32 %v5775, %v6079
        %v6166 = vadd.f32 %v5776, %v6084
        %v6167 = vadd.f32 %v5777, %v6089
        %v6168 = vadd.f32 %v5778, %v6094
        %v6169 = vadd.f32 %v5779, %v6099
        %v6170 = vadd.f32 %v5780, %v6104
        %v6171 = vadd.f32 %v5781, %v6109
        %v6172 = vadd.f32 %v5782, %v6114
        %v6173 = vadd.f32 %v5783, %v6119
        %v6174 = vadd.f32 %v5784, %v6124
        %v6175 = vadd.f32 %v5785, %v6129
        %v6176 = vadd.f32 %v5786, %v6134
        %v6177 = vadd.f32 %v5787, %v6139
        %v6178 = vadd.f32 %v5788, %v6144
        %s6179 = scalar_lea.vmem [#allocation2], 48
        %v6180 = vld [vmem:[%s6179] sm:$0xff]
        %v6181 = vld [vmem:[%s6179 + $0x8] sm:$0xff]
        %v6182 = vld [vmem:[%s6179 + $0x18] sm:$0xff]
        %v6183 = vld [vmem:[%s6179 + $0x20] sm:$0xff]
        %v6184 = vld [vmem:[%s6179 + $0x30] sm:$0xff]
        %v6185 = vld [vmem:[%s6179 + $0x38] sm:$0xff]
        %v6186 = vld [vmem:[%s6179 + $0x48] sm:$0xff]
        %v6187 = vld [vmem:[%s6179 + $0x50] sm:$0xff]
        %v6188 = vld [vmem:[%s6179 + $0x60] sm:$0xff]
        %v6189 = vld [vmem:[%s6179 + $0x68] sm:$0xff]
        %v6190 = vld [vmem:[%s6179 + $0x78] sm:$0xff]
        %v6191 = vld [vmem:[%s6179 + $0x80] sm:$0xff]
        %v6192 = vld [vmem:[%s6179 + $0x90] sm:$0xff]
        %v6193 = vld [vmem:[%s6179 + $0x98] sm:$0xff]
        %v6194 = vld [vmem:[%s6179 + $0xa8] sm:$0xff]
        %v6195 = vld [vmem:[%s6179 + $0xb0] sm:$0xff]
        %v6196 = vld [vmem:[%s6179 + $0xc0] sm:$0xff]
        %v6197 = vld [vmem:[%s6179 + $0xc8] sm:$0xff]
        %v6198 = vld [vmem:[%s6179 + $0xd8] sm:$0xff]
        %v6199 = vld [vmem:[%s6179 + $0xe0] sm:$0xff]
        %v6200 = vld [vmem:[%s6179 + $0xf0] sm:$0xff]
        %v6201 = vld [vmem:[%s6179 + $0xf8] sm:$0xff]
        %v6202 = vld [vmem:[%s6179 + $0x108] sm:$0xff]
        %v6203 = vld [vmem:[%s6179 + $0x110] sm:$0xff]
        %v6204 = vld [vmem:[%s6179 + $0x120] sm:$0xff]
        %v6205 = vld [vmem:[%s6179 + $0x128] sm:$0xff]
        %v6206 = vld [vmem:[%s6179 + $0x138] sm:$0xff]
        %v6207 = vld [vmem:[%s6179 + $0x140] sm:$0xff]
        %v6208 = vld [vmem:[%s6179 + $0x150] sm:$0xff]
        %v6209 = vld [vmem:[%s6179 + $0x158] sm:$0xff]
        %v6210 = vld [vmem:[%s6179 + $0x168] sm:$0xff]
        %v6211 = vld [vmem:[%s6179 + $0x170] sm:$0xff]
        %s6212 = scalar_lea.vmem %s2, 192
        %v6213 = vld [vmem:[%s6212] sm:$0xff]
        %v6214 = vld [vmem:[%s6212 + $0x8] sm:$0xff]
        %v6215 = vld [vmem:[%s6212 + $0x10] sm:$0xff]
        %v6216 = vld [vmem:[%s6212 + $0x18] sm:$0xff]
        %v6218 = vsel %vm3815, %v6180, 0
        %v6221 = vsel %vm3815, %v6181, 0
        %v6224 = vsel %vm3815, %v6182, 0
        %v6227 = vsel %vm3815, %v6183, 0
        %v6230 = vsel %vm3815, %v6184, 0
        %v6233 = vsel %vm3815, %v6185, 0
        %v6236 = vsel %vm3815, %v6186, 0
        %v6239 = vsel %vm3815, %v6187, 0
        %v6242 = vsel %vm3815, %v6188, 0
        %v6245 = vsel %vm3815, %v6189, 0
        %v6248 = vsel %vm3815, %v6190, 0
        %v6251 = vsel %vm3815, %v6191, 0
        %v6254 = vsel %vm3815, %v6192, 0
        %v6257 = vsel %vm3815, %v6193, 0
        %v6260 = vsel %vm3815, %v6194, 0
        %v6263 = vsel %vm3815, %v6195, 0
        %v6266 = vsel %vm3815, %v6196, 0
        %v6269 = vsel %vm3815, %v6197, 0
        %v6272 = vsel %vm3815, %v6198, 0
        %v6275 = vsel %vm3815, %v6199, 0
        %v6278 = vsel %vm3815, %v6200, 0
        %v6281 = vsel %vm3815, %v6201, 0
        %v6284 = vsel %vm3815, %v6202, 0
        %v6287 = vsel %vm3815, %v6203, 0
        %v6290 = vsel %vm3815, %v6204, 0
        %v6293 = vsel %vm3815, %v6205, 0
        %v6296 = vsel %vm3815, %v6206, 0
        %v6299 = vsel %vm3815, %v6207, 0
        %v6302 = vsel %vm3815, %v6208, 0
        %v6305 = vsel %vm3815, %v6209, 0
        %v6308 = vsel %vm3815, %v6210, 0
        %v6311 = vsel %vm3815, %v6211, 0
        %6313 = vmatprep.subr.mxu0 0.0
        %6314 = vmatpush1.msra.mxu0 0.0
        %6315 = vmatprep.subr.mxu0 0.0
        %6316 = vmatpush1.msra.mxu0 0.0
        %6317 = vmatprep.subr.mxu0 0.0
        %6318 = vmatpush1.msra.mxu0 0.0
        %6319 = vmatprep.subr.mxu0 0.0
        %6320 = vmatpush1.msra.mxu0 0.0
        %6321 = vmatprep.subr.mxu0 0.0
        %6322 = vmatpush1.msra.mxu0 0.0
        %6323 = vmatprep.subr.mxu0 0.0
        %6324 = vmatpush1.msra.mxu0 0.0
        %6325 = vmatprep.subr.mxu0 0.0
        %6326 = vmatpush1.msra.mxu0 0.0
        %6327 = vmatprep.subr.mxu0 0.0
        %6328 = vmatpush1.msra.mxu0 0.0
        %6329 = vmatprep.subr.mxu0 0.0
        %6330 = vmatpush1.msra.mxu0 0.0
        %6331 = vmatprep.subr.mxu0 0.0
        %6332 = vmatpush1.msra.mxu0 0.0
        %6333 = vmatprep.subr.mxu0 0.0
        %6334 = vmatpush1.msra.mxu0 0.0
        %6335 = vmatprep.subr.mxu0 0.0
        %6336 = vmatpush1.msra.mxu0 0.0
        %6337 = vmatprep.subr.mxu0 0.0
        %6338 = vmatpush1.msra.mxu0 %v6216
        %6339 = vmatprep.subr.mxu0 0.0
        %6340 = vmatpush1.msra.mxu0 %v6215
        %6341 = vmatprep.subr.mxu0 0.0
        %6342 = vmatpush1.msra.mxu0 %v6214
        %6343 = vmatprep.subr.mxu0 0.0
        %6344 = vmatpush1.msra.mxu0 %v6213
        %6345 = vmatprep.subr.mxu0 0.0
        %6346 = vmatpush2.msra.mxu0 0.0
        %6347 = vmatprep.subr.mxu0 0.0
        %6348 = vmatpush2.msra.mxu0 0.0
        %6349 = vmatprep.subr.mxu0 0.0
        %6350 = vmatpush2.msra.mxu0 0.0
        %6351 = vmatprep.subr.mxu0 0.0
        %6352 = vmatpush2.msra.mxu0 0.0
        %6353 = vmatprep.subr.mxu0 0.0
        %6354 = vmatpush2.msra.mxu0 0.0
        %6355 = vmatprep.subr.mxu0 0.0
        %6356 = vmatpush2.msra.mxu0 0.0
        %6357 = vmatprep.subr.mxu0 0.0
        %6358 = vmatpush2.msra.mxu0 0.0
        %6359 = vmatprep.subr.mxu0 0.0
        %6360 = vmatpush2.msra.mxu0 0.0
        %6361 = vmatprep.subr.mxu0 0.0
        %6362 = vmatpush2.msra.mxu0 0.0
        %6363 = vmatprep.subr.mxu0 0.0
        %6364 = vmatpush2.msra.mxu0 0.0
        %6365 = vmatprep.subr.mxu0 0.0
        %6366 = vmatpush2.msra.mxu0 0.0
        %6367 = vmatprep.subr.mxu0 0.0
        %6368 = vmatpush2.msra.mxu0 0.0
        %6369 = vmatprep.subr.mxu0 0.0
        %6370 = vmatpush2.msra.mxu0 0.0
        %6371 = vmatprep.subr.mxu0 0.0
        %6372 = vmatpush2.msra.mxu0 0.0
        %6373 = vmatprep.subr.mxu0 0.0
        %6374 = vmatpush2.msra.mxu0 0.0
        %6375 = vmatprep.subr.mxu0 0.0
        %6376 = vmatpush2.msra.mxu0 0.0
        %6377 = vmatprep.mubr.f32.mxu0 0.0
        %6378 = vmatmul.mubr.f32.gmra.mxu0 %v6218
        %v6379 = vpop.f32.mrf.mxu0
        %v6380 = vadd.f32 0.0, %v6379
        %v6381 = vpop.f32.mrf.mxu0
        %6382 = vmatprep.mubr.f32.mxu0 0.0
        %6383 = vmatmul.mubr.f32.gmra.mxu0 %v6221
        %v6384 = vpop.f32.mrf.mxu0
        %v6385 = vadd.f32 0.0, %v6384
        %v6386 = vpop.f32.mrf.mxu0
        %6387 = vmatprep.mubr.f32.mxu0 0.0
        %6388 = vmatmul.mubr.f32.gmra.mxu0 %v6224
        %v6389 = vpop.f32.mrf.mxu0
        %v6390 = vadd.f32 0.0, %v6389
        %v6391 = vpop.f32.mrf.mxu0
        %6392 = vmatprep.mubr.f32.mxu0 0.0
        %6393 = vmatmul.mubr.f32.gmra.mxu0 %v6227
        %v6394 = vpop.f32.mrf.mxu0
        %v6395 = vadd.f32 0.0, %v6394
        %v6396 = vpop.f32.mrf.mxu0
        %6397 = vmatprep.mubr.f32.mxu0 0.0
        %6398 = vmatmul.mubr.f32.gmra.mxu0 %v6230
        %v6399 = vpop.f32.mrf.mxu0
        %v6400 = vadd.f32 0.0, %v6399
        %v6401 = vpop.f32.mrf.mxu0
        %6402 = vmatprep.mubr.f32.mxu0 0.0
        %6403 = vmatmul.mubr.f32.gmra.mxu0 %v6233
        %v6404 = vpop.f32.mrf.mxu0
        %v6405 = vadd.f32 0.0, %v6404
        %v6406 = vpop.f32.mrf.mxu0
        %6407 = vmatprep.mubr.f32.mxu0 0.0
        %6408 = vmatmul.mubr.f32.gmra.mxu0 %v6236
        %v6409 = vpop.f32.mrf.mxu0
        %v6410 = vadd.f32 0.0, %v6409
        %v6411 = vpop.f32.mrf.mxu0
        %6412 = vmatprep.mubr.f32.mxu0 0.0
        %6413 = vmatmul.mubr.f32.gmra.mxu0 %v6239
        %v6414 = vpop.f32.mrf.mxu0
        %v6415 = vadd.f32 0.0, %v6414
        %v6416 = vpop.f32.mrf.mxu0
        %6417 = vmatprep.mubr.f32.mxu0 0.0
        %6418 = vmatmul.mubr.f32.gmra.mxu0 %v6242
        %v6419 = vpop.f32.mrf.mxu0
        %v6420 = vadd.f32 0.0, %v6419
        %v6421 = vpop.f32.mrf.mxu0
        %6422 = vmatprep.mubr.f32.mxu0 0.0
        %6423 = vmatmul.mubr.f32.gmra.mxu0 %v6245
        %v6424 = vpop.f32.mrf.mxu0
        %v6425 = vadd.f32 0.0, %v6424
        %v6426 = vpop.f32.mrf.mxu0
        %6427 = vmatprep.mubr.f32.mxu0 0.0
        %6428 = vmatmul.mubr.f32.gmra.mxu0 %v6248
        %v6429 = vpop.f32.mrf.mxu0
        %v6430 = vadd.f32 0.0, %v6429
        %v6431 = vpop.f32.mrf.mxu0
        %6432 = vmatprep.mubr.f32.mxu0 0.0
        %6433 = vmatmul.mubr.f32.gmra.mxu0 %v6251
        %v6434 = vpop.f32.mrf.mxu0
        %v6435 = vadd.f32 0.0, %v6434
        %v6436 = vpop.f32.mrf.mxu0
        %6437 = vmatprep.mubr.f32.mxu0 0.0
        %6438 = vmatmul.mubr.f32.gmra.mxu0 %v6254
        %v6439 = vpop.f32.mrf.mxu0
        %v6440 = vadd.f32 0.0, %v6439
        %v6441 = vpop.f32.mrf.mxu0
        %6442 = vmatprep.mubr.f32.mxu0 0.0
        %6443 = vmatmul.mubr.f32.gmra.mxu0 %v6257
        %v6444 = vpop.f32.mrf.mxu0
        %v6445 = vadd.f32 0.0, %v6444
        %v6446 = vpop.f32.mrf.mxu0
        %6447 = vmatprep.mubr.f32.mxu0 0.0
        %6448 = vmatmul.mubr.f32.gmra.mxu0 %v6260
        %v6449 = vpop.f32.mrf.mxu0
        %v6450 = vadd.f32 0.0, %v6449
        %v6451 = vpop.f32.mrf.mxu0
        %6452 = vmatprep.mubr.f32.mxu0 0.0
        %6453 = vmatmul.mubr.f32.gmra.mxu0 %v6263
        %v6454 = vpop.f32.mrf.mxu0
        %v6455 = vadd.f32 0.0, %v6454
        %v6456 = vpop.f32.mrf.mxu0
        %6457 = vmatprep.mubr.f32.mxu0 0.0
        %6458 = vmatmul.mubr.f32.gmra.mxu0 %v6266
        %v6459 = vpop.f32.mrf.mxu0
        %v6460 = vadd.f32 0.0, %v6459
        %v6461 = vpop.f32.mrf.mxu0
        %6462 = vmatprep.mubr.f32.mxu0 0.0
        %6463 = vmatmul.mubr.f32.gmra.mxu0 %v6269
        %v6464 = vpop.f32.mrf.mxu0
        %v6465 = vadd.f32 0.0, %v6464
        %v6466 = vpop.f32.mrf.mxu0
        %6467 = vmatprep.mubr.f32.mxu0 0.0
        %6468 = vmatmul.mubr.f32.gmra.mxu0 %v6272
        %v6469 = vpop.f32.mrf.mxu0
        %v6470 = vadd.f32 0.0, %v6469
        %v6471 = vpop.f32.mrf.mxu0
        %6472 = vmatprep.mubr.f32.mxu0 0.0
        %6473 = vmatmul.mubr.f32.gmra.mxu0 %v6275
        %v6474 = vpop.f32.mrf.mxu0
        %v6475 = vadd.f32 0.0, %v6474
        %v6476 = vpop.f32.mrf.mxu0
        %6477 = vmatprep.mubr.f32.mxu0 0.0
        %6478 = vmatmul.mubr.f32.gmra.mxu0 %v6278
        %v6479 = vpop.f32.mrf.mxu0
        %v6480 = vadd.f32 0.0, %v6479
        %v6481 = vpop.f32.mrf.mxu0
        %6482 = vmatprep.mubr.f32.mxu0 0.0
        %6483 = vmatmul.mubr.f32.gmra.mxu0 %v6281
        %v6484 = vpop.f32.mrf.mxu0
        %v6485 = vadd.f32 0.0, %v6484
        %v6486 = vpop.f32.mrf.mxu0
        %6487 = vmatprep.mubr.f32.mxu0 0.0
        %6488 = vmatmul.mubr.f32.gmra.mxu0 %v6284
        %v6489 = vpop.f32.mrf.mxu0
        %v6490 = vadd.f32 0.0, %v6489
        %v6491 = vpop.f32.mrf.mxu0
        %6492 = vmatprep.mubr.f32.mxu0 0.0
        %6493 = vmatmul.mubr.f32.gmra.mxu0 %v6287
        %v6494 = vpop.f32.mrf.mxu0
        %v6495 = vadd.f32 0.0, %v6494
        %v6496 = vpop.f32.mrf.mxu0
        %6497 = vmatprep.mubr.f32.mxu0 0.0
        %6498 = vmatmul.mubr.f32.gmra.mxu0 %v6290
        %v6499 = vpop.f32.mrf.mxu0
        %v6500 = vadd.f32 0.0, %v6499
        %v6501 = vpop.f32.mrf.mxu0
        %6502 = vmatprep.mubr.f32.mxu0 0.0
        %6503 = vmatmul.mubr.f32.gmra.mxu0 %v6293
        %v6504 = vpop.f32.mrf.mxu0
        %v6505 = vadd.f32 0.0, %v6504
        %v6506 = vpop.f32.mrf.mxu0
        %6507 = vmatprep.mubr.f32.mxu0 0.0
        %6508 = vmatmul.mubr.f32.gmra.mxu0 %v6296
        %v6509 = vpop.f32.mrf.mxu0
        %v6510 = vadd.f32 0.0, %v6509
        %v6511 = vpop.f32.mrf.mxu0
        %6512 = vmatprep.mubr.f32.mxu0 0.0
        %6513 = vmatmul.mubr.f32.gmra.mxu0 %v6299
        %v6514 = vpop.f32.mrf.mxu0
        %v6515 = vadd.f32 0.0, %v6514
        %v6516 = vpop.f32.mrf.mxu0
        %6517 = vmatprep.mubr.f32.mxu0 0.0
        %6518 = vmatmul.mubr.f32.gmra.mxu0 %v6302
        %v6519 = vpop.f32.mrf.mxu0
        %v6520 = vadd.f32 0.0, %v6519
        %v6521 = vpop.f32.mrf.mxu0
        %6522 = vmatprep.mubr.f32.mxu0 0.0
        %6523 = vmatmul.mubr.f32.gmra.mxu0 %v6305
        %v6524 = vpop.f32.mrf.mxu0
        %v6525 = vadd.f32 0.0, %v6524
        %v6526 = vpop.f32.mrf.mxu0
        %6527 = vmatprep.mubr.f32.mxu0 0.0
        %6528 = vmatmul.mubr.f32.gmra.mxu0 %v6308
        %v6529 = vpop.f32.mrf.mxu0
        %v6530 = vadd.f32 0.0, %v6529
        %v6531 = vpop.f32.mrf.mxu0
        %6532 = vmatprep.mubr.f32.mxu0 0.0
        %6533 = vmatmul.mubr.f32.gmra.mxu0 %v6311
        %v6534 = vpop.f32.mrf.mxu0
        %v6535 = vadd.f32 0.0, %v6534
        %v6536 = vpop.f32.mrf.mxu0
        %6537 = vdwg.mxu0
        %v6538 = vadd.f32 %v6147, %v6380
        %v6539 = vadd.f32 %v6148, %v6385
        %v6540 = vadd.f32 %v6149, %v6390
        %v6541 = vadd.f32 %v6150, %v6395
        %v6542 = vadd.f32 %v6151, %v6400
        %v6543 = vadd.f32 %v6152, %v6405
        %v6544 = vadd.f32 %v6153, %v6410
        %v6545 = vadd.f32 %v6154, %v6415
        %v6546 = vadd.f32 %v6155, %v6420
        %v6547 = vadd.f32 %v6156, %v6425
        %v6548 = vadd.f32 %v6157, %v6430
        %v6549 = vadd.f32 %v6158, %v6435
        %v6550 = vadd.f32 %v6159, %v6440
        %v6551 = vadd.f32 %v6160, %v6445
        %v6552 = vadd.f32 %v6161, %v6450
        %v6553 = vadd.f32 %v6162, %v6455
        %v6554 = vadd.f32 %v6163, %v6460
        %v6555 = vadd.f32 %v6164, %v6465
        %v6556 = vadd.f32 %v6165, %v6470
        %v6557 = vadd.f32 %v6166, %v6475
        %v6558 = vadd.f32 %v6167, %v6480
        %v6559 = vadd.f32 %v6168, %v6485
        %v6560 = vadd.f32 %v6169, %v6490
        %v6561 = vadd.f32 %v6170, %v6495
        %v6562 = vadd.f32 %v6171, %v6500
        %v6563 = vadd.f32 %v6172, %v6505
        %v6564 = vadd.f32 %v6173, %v6510
        %v6565 = vadd.f32 %v6174, %v6515
        %v6566 = vadd.f32 %v6175, %v6520
        %v6567 = vadd.f32 %v6176, %v6525
        %v6568 = vadd.f32 %v6177, %v6530
        %v6569 = vadd.f32 %v6178, %v6535
        %v6570 = vld [vmem:[%s6179 + $0x1] sm:$0xff]
        %v6571 = vld [vmem:[%s6179 + $0x9] sm:$0xff]
        %v6572 = vld [vmem:[%s6179 + $0x19] sm:$0xff]
        %v6573 = vld [vmem:[%s6179 + $0x21] sm:$0xff]
        %v6574 = vld [vmem:[%s6179 + $0x31] sm:$0xff]
        %v6575 = vld [vmem:[%s6179 + $0x39] sm:$0xff]
        %v6576 = vld [vmem:[%s6179 + $0x49] sm:$0xff]
        %v6577 = vld [vmem:[%s6179 + $0x51] sm:$0xff]
        %v6578 = vld [vmem:[%s6179 + $0x61] sm:$0xff]
        %v6579 = vld [vmem:[%s6179 + $0x69] sm:$0xff]
        %v6580 = vld [vmem:[%s6179 + $0x79] sm:$0xff]
        %v6581 = vld [vmem:[%s6179 + $0x81] sm:$0xff]
        %v6582 = vld [vmem:[%s6179 + $0x91] sm:$0xff]
        %v6583 = vld [vmem:[%s6179 + $0x99] sm:$0xff]
        %v6584 = vld [vmem:[%s6179 + $0xa9] sm:$0xff]
        %v6585 = vld [vmem:[%s6179 + $0xb1] sm:$0xff]
        %v6586 = vld [vmem:[%s6179 + $0xc1] sm:$0xff]
        %v6587 = vld [vmem:[%s6179 + $0xc9] sm:$0xff]
        %v6588 = vld [vmem:[%s6179 + $0xd9] sm:$0xff]
        %v6589 = vld [vmem:[%s6179 + $0xe1] sm:$0xff]
        %v6590 = vld [vmem:[%s6179 + $0xf1] sm:$0xff]
        %v6591 = vld [vmem:[%s6179 + $0xf9] sm:$0xff]
        %v6592 = vld [vmem:[%s6179 + $0x109] sm:$0xff]
        %v6593 = vld [vmem:[%s6179 + $0x111] sm:$0xff]
        %v6594 = vld [vmem:[%s6179 + $0x121] sm:$0xff]
        %v6595 = vld [vmem:[%s6179 + $0x129] sm:$0xff]
        %v6596 = vld [vmem:[%s6179 + $0x139] sm:$0xff]
        %v6597 = vld [vmem:[%s6179 + $0x141] sm:$0xff]
        %v6598 = vld [vmem:[%s6179 + $0x151] sm:$0xff]
        %v6599 = vld [vmem:[%s6179 + $0x159] sm:$0xff]
        %v6600 = vld [vmem:[%s6179 + $0x169] sm:$0xff]
        %v6601 = vld [vmem:[%s6179 + $0x171] sm:$0xff]
        %s6602 = scalar_lea.vmem %s2, 224
        %v6603 = vld [vmem:[%s6602] sm:$0xff]
        %v6604 = vld [vmem:[%s6602 + $0x8] sm:$0xff]
        %v6605 = vld [vmem:[%s6602 + $0x10] sm:$0xff]
        %v6606 = vld [vmem:[%s6602 + $0x18] sm:$0xff]
        %v6608 = vsel %vm3815, %v6570, 0
        %v6611 = vsel %vm3815, %v6571, 0
        %v6614 = vsel %vm3815, %v6572, 0
        %v6617 = vsel %vm3815, %v6573, 0
        %v6620 = vsel %vm3815, %v6574, 0
        %v6623 = vsel %vm3815, %v6575, 0
        %v6626 = vsel %vm3815, %v6576, 0
        %v6629 = vsel %vm3815, %v6577, 0
        %v6632 = vsel %vm3815, %v6578, 0
        %v6635 = vsel %vm3815, %v6579, 0
        %v6638 = vsel %vm3815, %v6580, 0
        %v6641 = vsel %vm3815, %v6581, 0
        %v6644 = vsel %vm3815, %v6582, 0
        %v6647 = vsel %vm3815, %v6583, 0
        %v6650 = vsel %vm3815, %v6584, 0
        %v6653 = vsel %vm3815, %v6585, 0
        %v6656 = vsel %vm3815, %v6586, 0
        %v6659 = vsel %vm3815, %v6587, 0
        %v6662 = vsel %vm3815, %v6588, 0
        %v6665 = vsel %vm3815, %v6589, 0
        %v6668 = vsel %vm3815, %v6590, 0
        %v6671 = vsel %vm3815, %v6591, 0
        %v6674 = vsel %vm3815, %v6592, 0
        %v6677 = vsel %vm3815, %v6593, 0
        %v6680 = vsel %vm3815, %v6594, 0
        %v6683 = vsel %vm3815, %v6595, 0
        %v6686 = vsel %vm3815, %v6596, 0
        %v6689 = vsel %vm3815, %v6597, 0
        %v6692 = vsel %vm3815, %v6598, 0
        %v6695 = vsel %vm3815, %v6599, 0
        %v6698 = vsel %vm3815, %v6600, 0
        %v6701 = vsel %vm3815, %v6601, 0
        %6703 = vmatprep.subr.mxu0 0.0
        %6704 = vmatpush1.msra.mxu0 0.0
        %6705 = vmatprep.subr.mxu0 0.0
        %6706 = vmatpush1.msra.mxu0 0.0
        %6707 = vmatprep.subr.mxu0 0.0
        %6708 = vmatpush1.msra.mxu0 0.0
        %6709 = vmatprep.subr.mxu0 0.0
        %6710 = vmatpush1.msra.mxu0 0.0
        %6711 = vmatprep.subr.mxu0 0.0
        %6712 = vmatpush1.msra.mxu0 0.0
        %6713 = vmatprep.subr.mxu0 0.0
        %6714 = vmatpush1.msra.mxu0 0.0
        %6715 = vmatprep.subr.mxu0 0.0
        %6716 = vmatpush1.msra.mxu0 0.0
        %6717 = vmatprep.subr.mxu0 0.0
        %6718 = vmatpush1.msra.mxu0 0.0
        %6719 = vmatprep.subr.mxu0 0.0
        %6720 = vmatpush1.msra.mxu0 0.0
        %6721 = vmatprep.subr.mxu0 0.0
        %6722 = vmatpush1.msra.mxu0 0.0
        %6723 = vmatprep.subr.mxu0 0.0
        %6724 = vmatpush1.msra.mxu0 0.0
        %6725 = vmatprep.subr.mxu0 0.0
        %6726 = vmatpush1.msra.mxu0 0.0
        %6727 = vmatprep.subr.mxu0 0.0
        %6728 = vmatpush1.msra.mxu0 %v6606
        %6729 = vmatprep.subr.mxu0 0.0
        %6730 = vmatpush1.msra.mxu0 %v6605
        %6731 = vmatprep.subr.mxu0 0.0
        %6732 = vmatpush1.msra.mxu0 %v6604
        %6733 = vmatprep.subr.mxu0 0.0
        %6734 = vmatpush1.msra.mxu0 %v6603
        %6735 = vmatprep.subr.mxu0 0.0
        %6736 = vmatpush2.msra.mxu0 0.0
        %6737 = vmatprep.subr.mxu0 0.0
        %6738 = vmatpush2.msra.mxu0 0.0
        %6739 = vmatprep.subr.mxu0 0.0
        %6740 = vmatpush2.msra.mxu0 0.0
        %6741 = vmatprep.subr.mxu0 0.0
        %6742 = vmatpush2.msra.mxu0 0.0
        %6743 = vmatprep.subr.mxu0 0.0
        %6744 = vmatpush2.msra.mxu0 0.0
        %6745 = vmatprep.subr.mxu0 0.0
        %6746 = vmatpush2.msra.mxu0 0.0
        %6747 = vmatprep.subr.mxu0 0.0
        %6748 = vmatpush2.msra.mxu0 0.0
        %6749 = vmatprep.subr.mxu0 0.0
        %6750 = vmatpush2.msra.mxu0 0.0
        %6751 = vmatprep.subr.mxu0 0.0
        %6752 = vmatpush2.msra.mxu0 0.0
        %6753 = vmatprep.subr.mxu0 0.0
        %6754 = vmatpush2.msra.mxu0 0.0
        %6755 = vmatprep.subr.mxu0 0.0
        %6756 = vmatpush2.msra.mxu0 0.0
        %6757 = vmatprep.subr.mxu0 0.0
        %6758 = vmatpush2.msra.mxu0 0.0
        %6759 = vmatprep.subr.mxu0 0.0
        %6760 = vmatpush2.msra.mxu0 0.0
        %6761 = vmatprep.subr.mxu0 0.0
        %6762 = vmatpush2.msra.mxu0 0.0
        %6763 = vmatprep.subr.mxu0 0.0
        %6764 = vmatpush2.msra.mxu0 0.0
        %6765 = vmatprep.subr.mxu0 0.0
        %6766 = vmatpush2.msra.mxu0 0.0
        %6767 = vmatprep.mubr.f32.mxu0 0.0
        %6768 = vmatmul.mubr.f32.gmra.mxu0 %v6608
        %v6769 = vpop.f32.mrf.mxu0
        %v6770 = vadd.f32 0.0, %v6769
        %v6771 = vpop.f32.mrf.mxu0
        %6772 = vmatprep.mubr.f32.mxu0 0.0
        %6773 = vmatmul.mubr.f32.gmra.mxu0 %v6611
        %v6774 = vpop.f32.mrf.mxu0
        %v6775 = vadd.f32 0.0, %v6774
        %v6776 = vpop.f32.mrf.mxu0
        %6777 = vmatprep.mubr.f32.mxu0 0.0
        %6778 = vmatmul.mubr.f32.gmra.mxu0 %v6614
        %v6779 = vpop.f32.mrf.mxu0
        %v6780 = vadd.f32 0.0, %v6779
        %v6781 = vpop.f32.mrf.mxu0
        %6782 = vmatprep.mubr.f32.mxu0 0.0
        %6783 = vmatmul.mubr.f32.gmra.mxu0 %v6617
        %v6784 = vpop.f32.mrf.mxu0
        %v6785 = vadd.f32 0.0, %v6784
        %v6786 = vpop.f32.mrf.mxu0
        %6787 = vmatprep.mubr.f32.mxu0 0.0
        %6788 = vmatmul.mubr.f32.gmra.mxu0 %v6620
        %v6789 = vpop.f32.mrf.mxu0
        %v6790 = vadd.f32 0.0, %v6789
        %v6791 = vpop.f32.mrf.mxu0
        %6792 = vmatprep.mubr.f32.mxu0 0.0
        %6793 = vmatmul.mubr.f32.gmra.mxu0 %v6623
        %v6794 = vpop.f32.mrf.mxu0
        %v6795 = vadd.f32 0.0, %v6794
        %v6796 = vpop.f32.mrf.mxu0
        %6797 = vmatprep.mubr.f32.mxu0 0.0
        %6798 = vmatmul.mubr.f32.gmra.mxu0 %v6626
        %v6799 = vpop.f32.mrf.mxu0
        %v6800 = vadd.f32 0.0, %v6799
        %v6801 = vpop.f32.mrf.mxu0
        %6802 = vmatprep.mubr.f32.mxu0 0.0
        %6803 = vmatmul.mubr.f32.gmra.mxu0 %v6629
        %v6804 = vpop.f32.mrf.mxu0
        %v6805 = vadd.f32 0.0, %v6804
        %v6806 = vpop.f32.mrf.mxu0
        %6807 = vmatprep.mubr.f32.mxu0 0.0
        %6808 = vmatmul.mubr.f32.gmra.mxu0 %v6632
        %v6809 = vpop.f32.mrf.mxu0
        %v6810 = vadd.f32 0.0, %v6809
        %v6811 = vpop.f32.mrf.mxu0
        %6812 = vmatprep.mubr.f32.mxu0 0.0
        %6813 = vmatmul.mubr.f32.gmra.mxu0 %v6635
        %v6814 = vpop.f32.mrf.mxu0
        %v6815 = vadd.f32 0.0, %v6814
        %v6816 = vpop.f32.mrf.mxu0
        %6817 = vmatprep.mubr.f32.mxu0 0.0
        %6818 = vmatmul.mubr.f32.gmra.mxu0 %v6638
        %v6819 = vpop.f32.mrf.mxu0
        %v6820 = vadd.f32 0.0, %v6819
        %v6821 = vpop.f32.mrf.mxu0
        %6822 = vmatprep.mubr.f32.mxu0 0.0
        %6823 = vmatmul.mubr.f32.gmra.mxu0 %v6641
        %v6824 = vpop.f32.mrf.mxu0
        %v6825 = vadd.f32 0.0, %v6824
        %v6826 = vpop.f32.mrf.mxu0
        %6827 = vmatprep.mubr.f32.mxu0 0.0
        %6828 = vmatmul.mubr.f32.gmra.mxu0 %v6644
        %v6829 = vpop.f32.mrf.mxu0
        %v6830 = vadd.f32 0.0, %v6829
        %v6831 = vpop.f32.mrf.mxu0
        %6832 = vmatprep.mubr.f32.mxu0 0.0
        %6833 = vmatmul.mubr.f32.gmra.mxu0 %v6647
        %v6834 = vpop.f32.mrf.mxu0
        %v6835 = vadd.f32 0.0, %v6834
        %v6836 = vpop.f32.mrf.mxu0
        %6837 = vmatprep.mubr.f32.mxu0 0.0
        %6838 = vmatmul.mubr.f32.gmra.mxu0 %v6650
        %v6839 = vpop.f32.mrf.mxu0
        %v6840 = vadd.f32 0.0, %v6839
        %v6841 = vpop.f32.mrf.mxu0
        %6842 = vmatprep.mubr.f32.mxu0 0.0
        %6843 = vmatmul.mubr.f32.gmra.mxu0 %v6653
        %v6844 = vpop.f32.mrf.mxu0
        %v6845 = vadd.f32 0.0, %v6844
        %v6846 = vpop.f32.mrf.mxu0
        %6847 = vmatprep.mubr.f32.mxu0 0.0
        %6848 = vmatmul.mubr.f32.gmra.mxu0 %v6656
        %v6849 = vpop.f32.mrf.mxu0
        %v6850 = vadd.f32 0.0, %v6849
        %v6851 = vpop.f32.mrf.mxu0
        %6852 = vmatprep.mubr.f32.mxu0 0.0
        %6853 = vmatmul.mubr.f32.gmra.mxu0 %v6659
        %v6854 = vpop.f32.mrf.mxu0
        %v6855 = vadd.f32 0.0, %v6854
        %v6856 = vpop.f32.mrf.mxu0
        %6857 = vmatprep.mubr.f32.mxu0 0.0
        %6858 = vmatmul.mubr.f32.gmra.mxu0 %v6662
        %v6859 = vpop.f32.mrf.mxu0
        %v6860 = vadd.f32 0.0, %v6859
        %v6861 = vpop.f32.mrf.mxu0
        %6862 = vmatprep.mubr.f32.mxu0 0.0
        %6863 = vmatmul.mubr.f32.gmra.mxu0 %v6665
        %v6864 = vpop.f32.mrf.mxu0
        %v6865 = vadd.f32 0.0, %v6864
        %v6866 = vpop.f32.mrf.mxu0
        %6867 = vmatprep.mubr.f32.mxu0 0.0
        %6868 = vmatmul.mubr.f32.gmra.mxu0 %v6668
        %v6869 = vpop.f32.mrf.mxu0
        %v6870 = vadd.f32 0.0, %v6869
        %v6871 = vpop.f32.mrf.mxu0
        %6872 = vmatprep.mubr.f32.mxu0 0.0
        %6873 = vmatmul.mubr.f32.gmra.mxu0 %v6671
        %v6874 = vpop.f32.mrf.mxu0
        %v6875 = vadd.f32 0.0, %v6874
        %v6876 = vpop.f32.mrf.mxu0
        %6877 = vmatprep.mubr.f32.mxu0 0.0
        %6878 = vmatmul.mubr.f32.gmra.mxu0 %v6674
        %v6879 = vpop.f32.mrf.mxu0
        %v6880 = vadd.f32 0.0, %v6879
        %v6881 = vpop.f32.mrf.mxu0
        %6882 = vmatprep.mubr.f32.mxu0 0.0
        %6883 = vmatmul.mubr.f32.gmra.mxu0 %v6677
        %v6884 = vpop.f32.mrf.mxu0
        %v6885 = vadd.f32 0.0, %v6884
        %v6886 = vpop.f32.mrf.mxu0
        %6887 = vmatprep.mubr.f32.mxu0 0.0
        %6888 = vmatmul.mubr.f32.gmra.mxu0 %v6680
        %v6889 = vpop.f32.mrf.mxu0
        %v6890 = vadd.f32 0.0, %v6889
        %v6891 = vpop.f32.mrf.mxu0
        %6892 = vmatprep.mubr.f32.mxu0 0.0
        %6893 = vmatmul.mubr.f32.gmra.mxu0 %v6683
        %v6894 = vpop.f32.mrf.mxu0
        %v6895 = vadd.f32 0.0, %v6894
        %v6896 = vpop.f32.mrf.mxu0
        %6897 = vmatprep.mubr.f32.mxu0 0.0
        %6898 = vmatmul.mubr.f32.gmra.mxu0 %v6686
        %v6899 = vpop.f32.mrf.mxu0
        %v6900 = vadd.f32 0.0, %v6899
        %v6901 = vpop.f32.mrf.mxu0
        %6902 = vmatprep.mubr.f32.mxu0 0.0
        %6903 = vmatmul.mubr.f32.gmra.mxu0 %v6689
        %v6904 = vpop.f32.mrf.mxu0
        %v6905 = vadd.f32 0.0, %v6904
        %v6906 = vpop.f32.mrf.mxu0
        %6907 = vmatprep.mubr.f32.mxu0 0.0
        %6908 = vmatmul.mubr.f32.gmra.mxu0 %v6692
        %v6909 = vpop.f32.mrf.mxu0
        %v6910 = vadd.f32 0.0, %v6909
        %v6911 = vpop.f32.mrf.mxu0
        %6912 = vmatprep.mubr.f32.mxu0 0.0
        %6913 = vmatmul.mubr.f32.gmra.mxu0 %v6695
        %v6914 = vpop.f32.mrf.mxu0
        %v6915 = vadd.f32 0.0, %v6914
        %v6916 = vpop.f32.mrf.mxu0
        %6917 = vmatprep.mubr.f32.mxu0 0.0
        %6918 = vmatmul.mubr.f32.gmra.mxu0 %v6698
        %v6919 = vpop.f32.mrf.mxu0
        %v6920 = vadd.f32 0.0, %v6919
        %v6921 = vpop.f32.mrf.mxu0
        %6922 = vmatprep.mubr.f32.mxu0 0.0
        %6923 = vmatmul.mubr.f32.gmra.mxu0 %v6701
        %v6924 = vpop.f32.mrf.mxu0
        %v6925 = vadd.f32 0.0, %v6924
        %v6926 = vpop.f32.mrf.mxu0
        %6927 = vdwg.mxu0
        %v6928 = vadd.f32 %v6538, %v6770
        %v6929 = vadd.f32 %v6539, %v6775
        %v6930 = vadd.f32 %v6540, %v6780
        %v6931 = vadd.f32 %v6541, %v6785
        %v6932 = vadd.f32 %v6542, %v6790
        %v6933 = vadd.f32 %v6543, %v6795
        %v6934 = vadd.f32 %v6544, %v6800
        %v6935 = vadd.f32 %v6545, %v6805
        %v6936 = vadd.f32 %v6546, %v6810
        %v6937 = vadd.f32 %v6547, %v6815
        %v6938 = vadd.f32 %v6548, %v6820
        %v6939 = vadd.f32 %v6549, %v6825
        %v6940 = vadd.f32 %v6550, %v6830
        %v6941 = vadd.f32 %v6551, %v6835
        %v6942 = vadd.f32 %v6552, %v6840
        %v6943 = vadd.f32 %v6553, %v6845
        %v6944 = vadd.f32 %v6554, %v6850
        %v6945 = vadd.f32 %v6555, %v6855
        %v6946 = vadd.f32 %v6556, %v6860
        %v6947 = vadd.f32 %v6557, %v6865
        %v6948 = vadd.f32 %v6558, %v6870
        %v6949 = vadd.f32 %v6559, %v6875
        %v6950 = vadd.f32 %v6560, %v6880
        %v6951 = vadd.f32 %v6561, %v6885
        %v6952 = vadd.f32 %v6562, %v6890
        %v6953 = vadd.f32 %v6563, %v6895
        %v6954 = vadd.f32 %v6564, %v6900
        %v6955 = vadd.f32 %v6565, %v6905
        %v6956 = vadd.f32 %v6566, %v6910
        %v6957 = vadd.f32 %v6567, %v6915
        %v6958 = vadd.f32 %v6568, %v6920
        %v6959 = vadd.f32 %v6569, %v6925
        %v6960 = vld [vmem:[%s6179 + $0x2] sm:$0xff]
        %v6961 = vld [vmem:[%s6179 + $0xa] sm:$0xff]
        %v6962 = vld [vmem:[%s6179 + $0x1a] sm:$0xff]
        %v6963 = vld [vmem:[%s6179 + $0x22] sm:$0xff]
        %v6964 = vld [vmem:[%s6179 + $0x32] sm:$0xff]
        %v6965 = vld [vmem:[%s6179 + $0x3a] sm:$0xff]
        %v6966 = vld [vmem:[%s6179 + $0x4a] sm:$0xff]
        %v6967 = vld [vmem:[%s6179 + $0x52] sm:$0xff]
        %v6968 = vld [vmem:[%s6179 + $0x62] sm:$0xff]
        %v6969 = vld [vmem:[%s6179 + $0x6a] sm:$0xff]
        %v6970 = vld [vmem:[%s6179 + $0x7a] sm:$0xff]
        %v6971 = vld [vmem:[%s6179 + $0x82] sm:$0xff]
        %v6972 = vld [vmem:[%s6179 + $0x92] sm:$0xff]
        %v6973 = vld [vmem:[%s6179 + $0x9a] sm:$0xff]
        %v6974 = vld [vmem:[%s6179 + $0xaa] sm:$0xff]
        %v6975 = vld [vmem:[%s6179 + $0xb2] sm:$0xff]
        %v6976 = vld [vmem:[%s6179 + $0xc2] sm:$0xff]
        %v6977 = vld [vmem:[%s6179 + $0xca] sm:$0xff]
        %v6978 = vld [vmem:[%s6179 + $0xda] sm:$0xff]
        %v6979 = vld [vmem:[%s6179 + $0xe2] sm:$0xff]
        %v6980 = vld [vmem:[%s6179 + $0xf2] sm:$0xff]
        %v6981 = vld [vmem:[%s6179 + $0xfa] sm:$0xff]
        %v6982 = vld [vmem:[%s6179 + $0x10a] sm:$0xff]
        %v6983 = vld [vmem:[%s6179 + $0x112] sm:$0xff]
        %v6984 = vld [vmem:[%s6179 + $0x122] sm:$0xff]
        %v6985 = vld [vmem:[%s6179 + $0x12a] sm:$0xff]
        %v6986 = vld [vmem:[%s6179 + $0x13a] sm:$0xff]
        %v6987 = vld [vmem:[%s6179 + $0x142] sm:$0xff]
        %v6988 = vld [vmem:[%s6179 + $0x152] sm:$0xff]
        %v6989 = vld [vmem:[%s6179 + $0x15a] sm:$0xff]
        %v6990 = vld [vmem:[%s6179 + $0x16a] sm:$0xff]
        %v6991 = vld [vmem:[%s6179 + $0x172] sm:$0xff]
        %s6992 = scalar_lea.vmem %s2, 256
        %v6993 = vld [vmem:[%s6992] sm:$0xff]
        %v6994 = vld [vmem:[%s6992 + $0x8] sm:$0xff]
        %v6995 = vld [vmem:[%s6992 + $0x10] sm:$0xff]
        %v6996 = vld [vmem:[%s6992 + $0x18] sm:$0xff]
        %v6998 = vsel %vm3815, %v6960, 0
        %v7001 = vsel %vm3815, %v6961, 0
        %v7004 = vsel %vm3815, %v6962, 0
        %v7007 = vsel %vm3815, %v6963, 0
        %v7010 = vsel %vm3815, %v6964, 0
        %v7013 = vsel %vm3815, %v6965, 0
        %v7016 = vsel %vm3815, %v6966, 0
        %v7019 = vsel %vm3815, %v6967, 0
        %v7022 = vsel %vm3815, %v6968, 0
        %v7025 = vsel %vm3815, %v6969, 0
        %v7028 = vsel %vm3815, %v6970, 0
        %v7031 = vsel %vm3815, %v6971, 0
        %v7034 = vsel %vm3815, %v6972, 0
        %v7037 = vsel %vm3815, %v6973, 0
        %v7040 = vsel %vm3815, %v6974, 0
        %v7043 = vsel %vm3815, %v6975, 0
        %v7046 = vsel %vm3815, %v6976, 0
        %v7049 = vsel %vm3815, %v6977, 0
        %v7052 = vsel %vm3815, %v6978, 0
        %v7055 = vsel %vm3815, %v6979, 0
        %v7058 = vsel %vm3815, %v6980, 0
        %v7061 = vsel %vm3815, %v6981, 0
        %v7064 = vsel %vm3815, %v6982, 0
        %v7067 = vsel %vm3815, %v6983, 0
        %v7070 = vsel %vm3815, %v6984, 0
        %v7073 = vsel %vm3815, %v6985, 0
        %v7076 = vsel %vm3815, %v6986, 0
        %v7079 = vsel %vm3815, %v6987, 0
        %v7082 = vsel %vm3815, %v6988, 0
        %v7085 = vsel %vm3815, %v6989, 0
        %v7088 = vsel %vm3815, %v6990, 0
        %v7091 = vsel %vm3815, %v6991, 0
        %7093 = vmatprep.subr.mxu0 0.0
        %7094 = vmatpush1.msra.mxu0 0.0
        %7095 = vmatprep.subr.mxu0 0.0
        %7096 = vmatpush1.msra.mxu0 0.0
        %7097 = vmatprep.subr.mxu0 0.0
        %7098 = vmatpush1.msra.mxu0 0.0
        %7099 = vmatprep.subr.mxu0 0.0
        %7100 = vmatpush1.msra.mxu0 0.0
        %7101 = vmatprep.subr.mxu0 0.0
        %7102 = vmatpush1.msra.mxu0 0.0
        %7103 = vmatprep.subr.mxu0 0.0
        %7104 = vmatpush1.msra.mxu0 0.0
        %7105 = vmatprep.subr.mxu0 0.0
        %7106 = vmatpush1.msra.mxu0 0.0
        %7107 = vmatprep.subr.mxu0 0.0
        %7108 = vmatpush1.msra.mxu0 0.0
        %7109 = vmatprep.subr.mxu0 0.0
        %7110 = vmatpush1.msra.mxu0 0.0
        %7111 = vmatprep.subr.mxu0 0.0
        %7112 = vmatpush1.msra.mxu0 0.0
        %7113 = vmatprep.subr.mxu0 0.0
        %7114 = vmatpush1.msra.mxu0 0.0
        %7115 = vmatprep.subr.mxu0 0.0
        %7116 = vmatpush1.msra.mxu0 0.0
        %7117 = vmatprep.subr.mxu0 0.0
        %7118 = vmatpush1.msra.mxu0 %v6996
        %7119 = vmatprep.subr.mxu0 0.0
        %7120 = vmatpush1.msra.mxu0 %v6995
        %7121 = vmatprep.subr.mxu0 0.0
        %7122 = vmatpush1.msra.mxu0 %v6994
        %7123 = vmatprep.subr.mxu0 0.0
        %7124 = vmatpush1.msra.mxu0 %v6993
        %7125 = vmatprep.subr.mxu0 0.0
        %7126 = vmatpush2.msra.mxu0 0.0
        %7127 = vmatprep.subr.mxu0 0.0
        %7128 = vmatpush2.msra.mxu0 0.0
        %7129 = vmatprep.subr.mxu0 0.0
        %7130 = vmatpush2.msra.mxu0 0.0
        %7131 = vmatprep.subr.mxu0 0.0
        %7132 = vmatpush2.msra.mxu0 0.0
        %7133 = vmatprep.subr.mxu0 0.0
        %7134 = vmatpush2.msra.mxu0 0.0
        %7135 = vmatprep.subr.mxu0 0.0
        %7136 = vmatpush2.msra.mxu0 0.0
        %7137 = vmatprep.subr.mxu0 0.0
        %7138 = vmatpush2.msra.mxu0 0.0
        %7139 = vmatprep.subr.mxu0 0.0
        %7140 = vmatpush2.msra.mxu0 0.0
        %7141 = vmatprep.subr.mxu0 0.0
        %7142 = vmatpush2.msra.mxu0 0.0
        %7143 = vmatprep.subr.mxu0 0.0
        %7144 = vmatpush2.msra.mxu0 0.0
        %7145 = vmatprep.subr.mxu0 0.0
        %7146 = vmatpush2.msra.mxu0 0.0
        %7147 = vmatprep.subr.mxu0 0.0
        %7148 = vmatpush2.msra.mxu0 0.0
        %7149 = vmatprep.subr.mxu0 0.0
        %7150 = vmatpush2.msra.mxu0 0.0
        %7151 = vmatprep.subr.mxu0 0.0
        %7152 = vmatpush2.msra.mxu0 0.0
        %7153 = vmatprep.subr.mxu0 0.0
        %7154 = vmatpush2.msra.mxu0 0.0
        %7155 = vmatprep.subr.mxu0 0.0
        %7156 = vmatpush2.msra.mxu0 0.0
        %7157 = vmatprep.mubr.f32.mxu0 0.0
        %7158 = vmatmul.mubr.f32.gmra.mxu0 %v6998
        %v7159 = vpop.f32.mrf.mxu0
        %v7160 = vadd.f32 0.0, %v7159
        %v7161 = vpop.f32.mrf.mxu0
        %7162 = vmatprep.mubr.f32.mxu0 0.0
        %7163 = vmatmul.mubr.f32.gmra.mxu0 %v7001
        %v7164 = vpop.f32.mrf.mxu0
        %v7165 = vadd.f32 0.0, %v7164
        %v7166 = vpop.f32.mrf.mxu0
        %7167 = vmatprep.mubr.f32.mxu0 0.0
        %7168 = vmatmul.mubr.f32.gmra.mxu0 %v7004
        %v7169 = vpop.f32.mrf.mxu0
        %v7170 = vadd.f32 0.0, %v7169
        %v7171 = vpop.f32.mrf.mxu0
        %7172 = vmatprep.mubr.f32.mxu0 0.0
        %7173 = vmatmul.mubr.f32.gmra.mxu0 %v7007
        %v7174 = vpop.f32.mrf.mxu0
        %v7175 = vadd.f32 0.0, %v7174
        %v7176 = vpop.f32.mrf.mxu0
        %7177 = vmatprep.mubr.f32.mxu0 0.0
        %7178 = vmatmul.mubr.f32.gmra.mxu0 %v7010
        %v7179 = vpop.f32.mrf.mxu0
        %v7180 = vadd.f32 0.0, %v7179
        %v7181 = vpop.f32.mrf.mxu0
        %7182 = vmatprep.mubr.f32.mxu0 0.0
        %7183 = vmatmul.mubr.f32.gmra.mxu0 %v7013
        %v7184 = vpop.f32.mrf.mxu0
        %v7185 = vadd.f32 0.0, %v7184
        %v7186 = vpop.f32.mrf.mxu0
        %7187 = vmatprep.mubr.f32.mxu0 0.0
        %7188 = vmatmul.mubr.f32.gmra.mxu0 %v7016
        %v7189 = vpop.f32.mrf.mxu0
        %v7190 = vadd.f32 0.0, %v7189
        %v7191 = vpop.f32.mrf.mxu0
        %7192 = vmatprep.mubr.f32.mxu0 0.0
        %7193 = vmatmul.mubr.f32.gmra.mxu0 %v7019
        %v7194 = vpop.f32.mrf.mxu0
        %v7195 = vadd.f32 0.0, %v7194
        %v7196 = vpop.f32.mrf.mxu0
        %7197 = vmatprep.mubr.f32.mxu0 0.0
        %7198 = vmatmul.mubr.f32.gmra.mxu0 %v7022
        %v7199 = vpop.f32.mrf.mxu0
        %v7200 = vadd.f32 0.0, %v7199
        %v7201 = vpop.f32.mrf.mxu0
        %7202 = vmatprep.mubr.f32.mxu0 0.0
        %7203 = vmatmul.mubr.f32.gmra.mxu0 %v7025
        %v7204 = vpop.f32.mrf.mxu0
        %v7205 = vadd.f32 0.0, %v7204
        %v7206 = vpop.f32.mrf.mxu0
        %7207 = vmatprep.mubr.f32.mxu0 0.0
        %7208 = vmatmul.mubr.f32.gmra.mxu0 %v7028
        %v7209 = vpop.f32.mrf.mxu0
        %v7210 = vadd.f32 0.0, %v7209
        %v7211 = vpop.f32.mrf.mxu0
        %7212 = vmatprep.mubr.f32.mxu0 0.0
        %7213 = vmatmul.mubr.f32.gmra.mxu0 %v7031
        %v7214 = vpop.f32.mrf.mxu0
        %v7215 = vadd.f32 0.0, %v7214
        %v7216 = vpop.f32.mrf.mxu0
        %7217 = vmatprep.mubr.f32.mxu0 0.0
        %7218 = vmatmul.mubr.f32.gmra.mxu0 %v7034
        %v7219 = vpop.f32.mrf.mxu0
        %v7220 = vadd.f32 0.0, %v7219
        %v7221 = vpop.f32.mrf.mxu0
        %7222 = vmatprep.mubr.f32.mxu0 0.0
        %7223 = vmatmul.mubr.f32.gmra.mxu0 %v7037
        %v7224 = vpop.f32.mrf.mxu0
        %v7225 = vadd.f32 0.0, %v7224
        %v7226 = vpop.f32.mrf.mxu0
        %7227 = vmatprep.mubr.f32.mxu0 0.0
        %7228 = vmatmul.mubr.f32.gmra.mxu0 %v7040
        %v7229 = vpop.f32.mrf.mxu0
        %v7230 = vadd.f32 0.0, %v7229
        %v7231 = vpop.f32.mrf.mxu0
        %7232 = vmatprep.mubr.f32.mxu0 0.0
        %7233 = vmatmul.mubr.f32.gmra.mxu0 %v7043
        %v7234 = vpop.f32.mrf.mxu0
        %v7235 = vadd.f32 0.0, %v7234
        %v7236 = vpop.f32.mrf.mxu0
        %7237 = vmatprep.mubr.f32.mxu0 0.0
        %7238 = vmatmul.mubr.f32.gmra.mxu0 %v7046
        %v7239 = vpop.f32.mrf.mxu0
        %v7240 = vadd.f32 0.0, %v7239
        %v7241 = vpop.f32.mrf.mxu0
        %7242 = vmatprep.mubr.f32.mxu0 0.0
        %7243 = vmatmul.mubr.f32.gmra.mxu0 %v7049
        %v7244 = vpop.f32.mrf.mxu0
        %v7245 = vadd.f32 0.0, %v7244
        %v7246 = vpop.f32.mrf.mxu0
        %7247 = vmatprep.mubr.f32.mxu0 0.0
        %7248 = vmatmul.mubr.f32.gmra.mxu0 %v7052
        %v7249 = vpop.f32.mrf.mxu0
        %v7250 = vadd.f32 0.0, %v7249
        %v7251 = vpop.f32.mrf.mxu0
        %7252 = vmatprep.mubr.f32.mxu0 0.0
        %7253 = vmatmul.mubr.f32.gmra.mxu0 %v7055
        %v7254 = vpop.f32.mrf.mxu0
        %v7255 = vadd.f32 0.0, %v7254
        %v7256 = vpop.f32.mrf.mxu0
        %7257 = vmatprep.mubr.f32.mxu0 0.0
        %7258 = vmatmul.mubr.f32.gmra.mxu0 %v7058
        %v7259 = vpop.f32.mrf.mxu0
        %v7260 = vadd.f32 0.0, %v7259
        %v7261 = vpop.f32.mrf.mxu0
        %7262 = vmatprep.mubr.f32.mxu0 0.0
        %7263 = vmatmul.mubr.f32.gmra.mxu0 %v7061
        %v7264 = vpop.f32.mrf.mxu0
        %v7265 = vadd.f32 0.0, %v7264
        %v7266 = vpop.f32.mrf.mxu0
        %7267 = vmatprep.mubr.f32.mxu0 0.0
        %7268 = vmatmul.mubr.f32.gmra.mxu0 %v7064
        %v7269 = vpop.f32.mrf.mxu0
        %v7270 = vadd.f32 0.0, %v7269
        %v7271 = vpop.f32.mrf.mxu0
        %7272 = vmatprep.mubr.f32.mxu0 0.0
        %7273 = vmatmul.mubr.f32.gmra.mxu0 %v7067
        %v7274 = vpop.f32.mrf.mxu0
        %v7275 = vadd.f32 0.0, %v7274
        %v7276 = vpop.f32.mrf.mxu0
        %7277 = vmatprep.mubr.f32.mxu0 0.0
        %7278 = vmatmul.mubr.f32.gmra.mxu0 %v7070
        %v7279 = vpop.f32.mrf.mxu0
        %v7280 = vadd.f32 0.0, %v7279
        %v7281 = vpop.f32.mrf.mxu0
        %7282 = vmatprep.mubr.f32.mxu0 0.0
        %7283 = vmatmul.mubr.f32.gmra.mxu0 %v7073
        %v7284 = vpop.f32.mrf.mxu0
        %v7285 = vadd.f32 0.0, %v7284
        %v7286 = vpop.f32.mrf.mxu0
        %7287 = vmatprep.mubr.f32.mxu0 0.0
        %7288 = vmatmul.mubr.f32.gmra.mxu0 %v7076
        %v7289 = vpop.f32.mrf.mxu0
        %v7290 = vadd.f32 0.0, %v7289
        %v7291 = vpop.f32.mrf.mxu0
        %7292 = vmatprep.mubr.f32.mxu0 0.0
        %7293 = vmatmul.mubr.f32.gmra.mxu0 %v7079
        %v7294 = vpop.f32.mrf.mxu0
        %v7295 = vadd.f32 0.0, %v7294
        %v7296 = vpop.f32.mrf.mxu0
        %7297 = vmatprep.mubr.f32.mxu0 0.0
        %7298 = vmatmul.mubr.f32.gmra.mxu0 %v7082
        %v7299 = vpop.f32.mrf.mxu0
        %v7300 = vadd.f32 0.0, %v7299
        %v7301 = vpop.f32.mrf.mxu0
        %7302 = vmatprep.mubr.f32.mxu0 0.0
        %7303 = vmatmul.mubr.f32.gmra.mxu0 %v7085
        %v7304 = vpop.f32.mrf.mxu0
        %v7305 = vadd.f32 0.0, %v7304
        %v7306 = vpop.f32.mrf.mxu0
        %7307 = vmatprep.mubr.f32.mxu0 0.0
        %7308 = vmatmul.mubr.f32.gmra.mxu0 %v7088
        %v7309 = vpop.f32.mrf.mxu0
        %v7310 = vadd.f32 0.0, %v7309
        %v7311 = vpop.f32.mrf.mxu0
        %7312 = vmatprep.mubr.f32.mxu0 0.0
        %7313 = vmatmul.mubr.f32.gmra.mxu0 %v7091
        %v7314 = vpop.f32.mrf.mxu0
        %v7315 = vadd.f32 0.0, %v7314
        %v7316 = vpop.f32.mrf.mxu0
        %7317 = vdwg.mxu0
        %v7318 = vadd.f32 %v6928, %v7160
        %v7319 = vadd.f32 %v6929, %v7165
        %v7320 = vadd.f32 %v6930, %v7170
        %v7321 = vadd.f32 %v6931, %v7175
        %v7322 = vadd.f32 %v6932, %v7180
        %v7323 = vadd.f32 %v6933, %v7185
        %v7324 = vadd.f32 %v6934, %v7190
        %v7325 = vadd.f32 %v6935, %v7195
        %v7326 = vadd.f32 %v6936, %v7200
        %v7327 = vadd.f32 %v6937, %v7205
        %v7328 = vadd.f32 %v6938, %v7210
        %v7329 = vadd.f32 %v6939, %v7215
        %v7330 = vadd.f32 %v6940, %v7220
        %v7331 = vadd.f32 %v6941, %v7225
        %v7332 = vadd.f32 %v6942, %v7230
        %v7333 = vadd.f32 %v6943, %v7235
        %v7334 = vadd.f32 %v6944, %v7240
        %v7335 = vadd.f32 %v6945, %v7245
        %v7336 = vadd.f32 %v6946, %v7250
        %v7337 = vadd.f32 %v6947, %v7255
        %v7338 = vadd.f32 %v6948, %v7260
        %v7339 = vadd.f32 %v6949, %v7265
        %v7340 = vadd.f32 %v6950, %v7270
        %v7341 = vadd.f32 %v6951, %v7275
        %v7342 = vadd.f32 %v6952, %v7280
        %v7343 = vadd.f32 %v6953, %v7285
        %v7344 = vadd.f32 %v6954, %v7290
        %v7345 = vadd.f32 %v6955, %v7295
        %v7346 = vadd.f32 %v6956, %v7300
        %v7347 = vadd.f32 %v6957, %v7305
        %v7348 = vadd.f32 %v6958, %v7310
        %v7349 = vadd.f32 %v6959, %v7315
        %v7350 = vld [vmem:[%s4] sm:$0x1]
        %v7351 = vlaneseq
        %v7352 = vshrl.u32 %v7351, 7
        %v7353 = vsub.s32 0, %v7352
        %v7354 = vrot.slane %v7350, %v7353
        %v7355 = vadd.f32 %v7318, %v7354
        %v7356 = vadd.f32 %v7319, %v7354
        %v7357 = vadd.f32 %v7320, %v7354
        %v7358 = vadd.f32 %v7321, %v7354
        %v7359 = vadd.f32 %v7322, %v7354
        %v7360 = vadd.f32 %v7323, %v7354
        %v7361 = vadd.f32 %v7324, %v7354
        %v7362 = vadd.f32 %v7325, %v7354
        %v7363 = vadd.f32 %v7326, %v7354
        %v7364 = vadd.f32 %v7327, %v7354
        %v7365 = vadd.f32 %v7328, %v7354
        %v7366 = vadd.f32 %v7329, %v7354
        %v7367 = vadd.f32 %v7330, %v7354
        %v7368 = vadd.f32 %v7331, %v7354
        %v7369 = vadd.f32 %v7332, %v7354
        %v7370 = vadd.f32 %v7333, %v7354
        %v7371 = vadd.f32 %v7334, %v7354
        %v7372 = vadd.f32 %v7335, %v7354
        %v7373 = vadd.f32 %v7336, %v7354
        %v7374 = vadd.f32 %v7337, %v7354
        %v7375 = vadd.f32 %v7338, %v7354
        %v7376 = vadd.f32 %v7339, %v7354
        %v7377 = vadd.f32 %v7340, %v7354
        %v7378 = vadd.f32 %v7341, %v7354
        %v7379 = vadd.f32 %v7342, %v7354
        %v7380 = vadd.f32 %v7343, %v7354
        %v7381 = vadd.f32 %v7344, %v7354
        %v7382 = vadd.f32 %v7345, %v7354
        %v7383 = vadd.f32 %v7346, %v7354
        %v7384 = vadd.f32 %v7347, %v7354
        %v7385 = vadd.f32 %v7348, %v7354
        %v7386 = vadd.f32 %v7349, %v7354
        %v7387 = vmax.f32 %v7355, 0.0
        %v7388 = vmax.f32 %v7356, 0.0
        %v7389 = vmax.f32 %v7357, 0.0
        %v7390 = vmax.f32 %v7358, 0.0
        %v7391 = vmax.f32 %v7359, 0.0
        %v7392 = vmax.f32 %v7360, 0.0
        %v7393 = vmax.f32 %v7361, 0.0
        %v7394 = vmax.f32 %v7362, 0.0
        %v7395 = vmax.f32 %v7363, 0.0
        %v7396 = vmax.f32 %v7364, 0.0
        %v7397 = vmax.f32 %v7365, 0.0
        %v7398 = vmax.f32 %v7366, 0.0
        %v7399 = vmax.f32 %v7367, 0.0
        %v7400 = vmax.f32 %v7368, 0.0
        %v7401 = vmax.f32 %v7369, 0.0
        %v7402 = vmax.f32 %v7370, 0.0
        %v7403 = vmax.f32 %v7371, 0.0
        %v7404 = vmax.f32 %v7372, 0.0
        %v7405 = vmax.f32 %v7373, 0.0
        %v7406 = vmax.f32 %v7374, 0.0
        %v7407 = vmax.f32 %v7375, 0.0
        %v7408 = vmax.f32 %v7376, 0.0
        %v7409 = vmax.f32 %v7377, 0.0
        %v7410 = vmax.f32 %v7378, 0.0
        %v7411 = vmax.f32 %v7379, 0.0
        %v7412 = vmax.f32 %v7380, 0.0
        %v7413 = vmax.f32 %v7381, 0.0
        %v7414 = vmax.f32 %v7382, 0.0
        %v7415 = vmax.f32 %v7383, 0.0
        %v7416 = vmax.f32 %v7384, 0.0
        %v7417 = vmax.f32 %v7385, 0.0
        %v7418 = vmax.f32 %v7386, 0.0
        %v7419 = vld [vmem:[%s4 + $0x1] sm:$0x1]
        %v7420 = vlaneseq
        %v7421 = vshrl.u32 %v7420, 7
        %v7422 = vsub.s32 0, %v7421
        %v7423 = vrot.slane %v7419, %v7422
        %v7424 = vmul.f32 %v7387, %v7423
        %v7425 = vmul.f32 %v7388, %v7423
        %v7426 = vmul.f32 %v7389, %v7423
        %v7427 = vmul.f32 %v7390, %v7423
        %v7428 = vmul.f32 %v7391, %v7423
        %v7429 = vmul.f32 %v7392, %v7423
        %v7430 = vmul.f32 %v7393, %v7423
        %v7431 = vmul.f32 %v7394, %v7423
        %v7432 = vmul.f32 %v7395, %v7423
        %v7433 = vmul.f32 %v7396, %v7423
        %v7434 = vmul.f32 %v7397, %v7423
        %v7435 = vmul.f32 %v7398, %v7423
        %v7436 = vmul.f32 %v7399, %v7423
        %v7437 = vmul.f32 %v7400, %v7423
        %v7438 = vmul.f32 %v7401, %v7423
        %v7439 = vmul.f32 %v7402, %v7423
        %v7440 = vmul.f32 %v7403, %v7423
        %v7441 = vmul.f32 %v7404, %v7423
        %v7442 = vmul.f32 %v7405, %v7423
        %v7443 = vmul.f32 %v7406, %v7423
        %v7444 = vmul.f32 %v7407, %v7423
        %v7445 = vmul.f32 %v7408, %v7423
        %v7446 = vmul.f32 %v7409, %v7423
        %v7447 = vmul.f32 %v7410, %v7423
        %v7448 = vmul.f32 %v7411, %v7423
        %v7449 = vmul.f32 %v7412, %v7423
        %v7450 = vmul.f32 %v7413, %v7423
        %v7451 = vmul.f32 %v7414, %v7423
        %v7452 = vmul.f32 %v7415, %v7423
        %v7453 = vmul.f32 %v7416, %v7423
        %v7454 = vmul.f32 %v7417, %v7423
        %v7455 = vmul.f32 %v7418, %v7423
        %v7456 = vld [vmem:[%s4 + $0x2] sm:$0x1]
        %v7457 = vlaneseq
        %v7458 = vshrl.u32 %v7457, 7
        %v7459 = vsub.s32 0, %v7458
        %v7460 = vrot.slane %v7456, %v7459
        %v7461 = vadd.f32 %v7424, %v7460
        %v7462 = vadd.f32 %v7425, %v7460
        %v7463 = vadd.f32 %v7426, %v7460
        %v7464 = vadd.f32 %v7427, %v7460
        %v7465 = vadd.f32 %v7428, %v7460
        %v7466 = vadd.f32 %v7429, %v7460
        %v7467 = vadd.f32 %v7430, %v7460
        %v7468 = vadd.f32 %v7431, %v7460
        %v7469 = vadd.f32 %v7432, %v7460
        %v7470 = vadd.f32 %v7433, %v7460
        %v7471 = vadd.f32 %v7434, %v7460
        %v7472 = vadd.f32 %v7435, %v7460
        %v7473 = vadd.f32 %v7436, %v7460
        %v7474 = vadd.f32 %v7437, %v7460
        %v7475 = vadd.f32 %v7438, %v7460
        %v7476 = vadd.f32 %v7439, %v7460
        %v7477 = vadd.f32 %v7440, %v7460
        %v7478 = vadd.f32 %v7441, %v7460
        %v7479 = vadd.f32 %v7442, %v7460
        %v7480 = vadd.f32 %v7443, %v7460
        %v7481 = vadd.f32 %v7444, %v7460
        %v7482 = vadd.f32 %v7445, %v7460
        %v7483 = vadd.f32 %v7446, %v7460
        %v7484 = vadd.f32 %v7447, %v7460
        %v7485 = vadd.f32 %v7448, %v7460
        %v7486 = vadd.f32 %v7449, %v7460
        %v7487 = vadd.f32 %v7450, %v7460
        %v7488 = vadd.f32 %v7451, %v7460
        %v7489 = vadd.f32 %v7452, %v7460
        %v7490 = vadd.f32 %v7453, %v7460
        %v7491 = vadd.f32 %v7454, %v7460
        %v7492 = vadd.f32 %v7455, %v7460
        %7493 = vst.msk [vmem:[%s217] sm:$0xff] %vm3815, %v7461
        %7494 = vst.msk [vmem:[%s217 + $0x8] sm:$0xff] %vm3815, %v7462
        %7495 = vst.msk [vmem:[%s217 + $0x10] sm:$0xff] %vm3815, %v7463
        %7496 = vst.msk [vmem:[%s217 + $0x18] sm:$0xff] %vm3815, %v7464
        %7497 = vst.msk [vmem:[%s217 + $0x20] sm:$0xff] %vm3815, %v7465
        %7498 = vst.msk [vmem:[%s217 + $0x28] sm:$0xff] %vm3815, %v7466
        %7499 = vst.msk [vmem:[%s217 + $0x30] sm:$0xff] %vm3815, %v7467
        %7500 = vst.msk [vmem:[%s217 + $0x38] sm:$0xff] %vm3815, %v7468
        %7501 = vst.msk [vmem:[%s217 + $0x40] sm:$0xff] %vm3815, %v7469
        %7502 = vst.msk [vmem:[%s217 + $0x48] sm:$0xff] %vm3815, %v7470
        %7503 = vst.msk [vmem:[%s217 + $0x50] sm:$0xff] %vm3815, %v7471
        %7504 = vst.msk [vmem:[%s217 + $0x58] sm:$0xff] %vm3815, %v7472
        %7505 = vst.msk [vmem:[%s217 + $0x60] sm:$0xff] %vm3815, %v7473
        %7506 = vst.msk [vmem:[%s217 + $0x68] sm:$0xff] %vm3815, %v7474
        %7507 = vst.msk [vmem:[%s217 + $0x70] sm:$0xff] %vm3815, %v7475
        %7508 = vst.msk [vmem:[%s217 + $0x78] sm:$0xff] %vm3815, %v7476
        %7509 = vst.msk [vmem:[%s217 + $0x80] sm:$0xff] %vm3815, %v7477
        %7510 = vst.msk [vmem:[%s217 + $0x88] sm:$0xff] %vm3815, %v7478
        %7511 = vst.msk [vmem:[%s217 + $0x90] sm:$0xff] %vm3815, %v7479
        %7512 = vst.msk [vmem:[%s217 + $0x98] sm:$0xff] %vm3815, %v7480
        %7513 = vst.msk [vmem:[%s217 + $0xa0] sm:$0xff] %vm3815, %v7481
        %7514 = vst.msk [vmem:[%s217 + $0xa8] sm:$0xff] %vm3815, %v7482
        %7515 = vst.msk [vmem:[%s217 + $0xb0] sm:$0xff] %vm3815, %v7483
        %7516 = vst.msk [vmem:[%s217 + $0xb8] sm:$0xff] %vm3815, %v7484
        %7517 = vst.msk [vmem:[%s217 + $0xc0] sm:$0xff] %vm3815, %v7485
        %7518 = vst.msk [vmem:[%s217 + $0xc8] sm:$0xff] %vm3815, %v7486
        %7519 = vst.msk [vmem:[%s217 + $0xd0] sm:$0xff] %vm3815, %v7487
        %7520 = vst.msk [vmem:[%s217 + $0xd8] sm:$0xff] %vm3815, %v7488
        %7521 = vst.msk [vmem:[%s217 + $0xe0] sm:$0xff] %vm3815, %v7489
        %7522 = vst.msk [vmem:[%s217 + $0xe8] sm:$0xff] %vm3815, %v7490
        %7523 = vst.msk [vmem:[%s217 + $0xf0] sm:$0xff] %vm3815, %v7491
        %7524 = vst.msk [vmem:[%s217 + $0xf8] sm:$0xff] %vm3815, %v7492
        %s7525 = sand.u32 %s137, 1
        %s7526 = scalar_lea.sflag [#allocation4], %s7525
        %s7527 = sand.u32 %s137, 1
        %s7528 = smul.addr %s7527, 256
        %s7529 = scalar_lea.vmem [#allocation3], %s7528
        // Predicated region
        $region41: #{unet_conv_block.1} parent=39 // pred_check
          %p7530 = pneg %p147
        $region42: #{unet_conv_block.1} parent=39 // pred_check_branch
          %7532 = sbr.rel (%p7530) target = $region44
        $region43: #{unet_conv_block.1} parent=39 // pred_region
          %s7534 = ssub.s32 4096, 4096
          %7535 = vsyncadd %s7526, %s7534
          %s7536 = smul.addr %s19, 32
          %s7537 = smul.addr %s7536, 128
          %s7538 = scalar_lea.hbm %s5, %s7537
          %s7539 = sshll.u32 %s7529, 4
          %s7540 = int_to_ptr.vmem [resolvable:$true] %s7539
          %7545 = dma.vmem_to_hbm [thread:$0]  %s7540, 4096, %s7538, %s7526, 128, 128, 8
        $region44: #{unet_conv_block.1} parent=39 // pred_fallthru
          _
      $region40: #{unet_conv_block.1} parent=5 // pred_fallthru
        _
      %p7546 = scmp.le.s32.totalorder 2, %s14
      // Predicated region
      $region45: #{unet_conv_block.1} parent=5 // pred_check
        %p7547 = pneg %p7546
      $region46: #{unet_conv_block.1} parent=5 // pred_check_branch
        %7549 = sbr.rel (%p7547) target = $region48
      $region47: #{unet_conv_block.1} parent=5 // pred_region
        %s7550 = ssub.s32 %s14, 2
        // Predicated region
        $region49: #{unet_conv_block.1} parent=47 // pred_check
          %p7551 = pneg %p153
        $region50: #{unet_conv_block.1} parent=47 // pred_check_branch
          %7553 = sbr.rel (%p7551) target = $region52
        $region51: #{unet_conv_block.1} parent=47 // pred_region
          %s7554 = sand.u32 %s138, 1
          %s7555 = scalar_lea.sflag [#allocation4], %s7554
          %s7556 = sand.u32 %s138, 1
          %s7557 = smul.addr %s7556, 256
          %s7558 = scalar_lea.vmem [#allocation3], %s7557
          %7559 = dma.done %s7555, 4096
        $region52: #{unet_conv_block.1} parent=47 // pred_fallthru
          _
      $region48: #{unet_conv_block.1} parent=5 // pred_fallthru
        _
    $region6: #{unet_conv_block.1} parent=1 // loop_footer
      %s18 = sadd.s32 1, %s14
    $region7: #{unet_conv_block.1} parent=1 // loop_footer_branch
      %13 = sbr.rel target = $region3
    $region8: #{unet_conv_block.1} parent=1 // loop_exit
      _
    %7560 = vsyncpa [#allocation4], 1
    %s7561 = scalar_lea.sflag [#allocation4], 1
    %7562 = vsyncpa %s7561, 1

</llo_original>
